<compile_context>
chip_gen: v6e
topology: v6e:2x2x1
jax: 0.10.0
libtpu: 0.0.40
codegen_flags: <defaults>
</compile_context>

<pallas_src>
import functools

import jax
import jax.numpy as jnp
from jax import lax
from jax.experimental import pallas as pl
from jax.experimental.pallas import tpu as pltpu

NULL_TOK, START_TOK, END_TOK = 0, 1, 2
LANE = 128                       # TPU lane width; per-gate padded width
IMG_MM_DTYPE = jnp.bfloat16      # MXU input dtype for the 3200-wide matmul

# PyTorch LSTM gate order [i, f, g, o] -> kernel order [i, f, o, g]
_PT2KERNEL_GATES = (0, 1, 3, 2)


# ---------------------------------------------------------------------------
# helpers
# ---------------------------------------------------------------------------
def _full_spec(shape):
    """BlockSpec covering the whole array (grid=(1,))."""
    nd = len(shape)
    return pl.BlockSpec(shape, lambda i, nd=nd: (0,) * nd)


def _pad_gate_weight(w, rows_out, h, hp):
    """(rows_in, 4*h) [i,f,g,o] -> (rows_out, 4*hp) [i,f,o,g], zero padded."""
    rows_in = w.shape[0]
    w4 = w.reshape(rows_in, 4, h)[:, _PT2KERNEL_GATES, :]
    w4 = jnp.pad(w4, ((0, rows_out - rows_in), (0, 0), (0, hp - h)))
    return w4.reshape(rows_out, 4 * hp)


def _pad_gate_bias(b, h, hp):
    b4 = b.reshape(1, 4, h)[:, _PT2KERNEL_GATES, :]
    b4 = jnp.pad(b4, ((0, 0), (0, 0), (0, hp - h)))
    return b4.reshape(1, 4 * hp)


# ---------------------------------------------------------------------------
# fused kernel: cnn_fc + img_tr + embedding + 2-layer LSTM + attention + clf
# ---------------------------------------------------------------------------
def _vqa_fused_kernel(
        # image branch
        x_img_ref, w_cnn_ref, b_cnn_ref, w_imgtr_ref, b_imgtr_ref,
        # question branch (tokens, embed table, gate-padded LSTM weights)
        q_ref, emb_ref, wih0p_ref, b0p_ref, whh0p_ref,
        wih1p_ref, whh1p_ref, b1p_ref,
        # attention + classifier
        w_questr_ref, b_questr_ref, wa_i_ref, wa_q_ref, ba_ref,
        wc1_ref, bc1_ref, wc2_ref, bc2_ref,
        # outputs
        scores_ref, probs_ref,
        *, t_valid):
    H = w_cnn_ref.shape[1]
    N, L = q_ref.shape
    V = emb_ref.shape[0]
    HP = whh0p_ref.shape[0]
    Tp = probs_ref.shape[1]

    # ---------------- image branch: Linear(3200,64)+ReLU, Linear(64,64) -----
    fc = jnp.dot(x_img_ref[...], w_cnn_ref[...],
                 preferred_element_type=jnp.float32) + b_cnn_ref[...]
    fc = jnp.maximum(fc, 0.0)                                      # (N*Tp, H)
    tr = jnp.dot(fc, w_imgtr_ref[...],
                 preferred_element_type=jnp.float32) + b_imgtr_ref[...]

    # ---------------- embedding lookup fused into the input projection ------
    # xp = onehot(questions) @ (embed @ Wih0) + b0  (hoisted for all steps)
    tok = q_ref[...]                                               # (N, L) i32
    oh = (tok[:, :, None] ==
          lax.broadcasted_iota(jnp.int32, (N, L, V), 2)).astype(jnp.float32)
    embw = jnp.dot(emb_ref[...], wih0p_ref[...],
                   preferred_element_type=jnp.float32)             # (V, 4HP)
    xp = jnp.dot(oh.reshape(N * L, V), embw,
                 preferred_element_type=jnp.float32) + b0p_ref[...]
    xp3 = xp.reshape(N, L, 4 * HP)                                 # free view

    # ---------------- idx: first (non-NULL -> NULL) transition, default L-1 -
    cond = (tok[:, :L - 1] != NULL_TOK) & (tok[:, 1:] == NULL_TOK)
    tpos = lax.broadcasted_iota(jnp.int32, (N, L - 1), 1).astype(jnp.float32)
    idx = jnp.min(jnp.where(cond, tpos, float(L - 1)),
                  axis=1, keepdims=True)                           # (N, 1) f32

    # ---------------- 2-layer LSTM (fully unrolled, static slices) ----------
    whh0 = whh0p_ref[...]                                          # (HP, 4HP)
    wih1 = wih1p_ref[...]
    whh1 = whh1p_ref[...]
    b1 = jnp.broadcast_to(b1p_ref[...], (N, 4 * HP))               # hoisted

    def gates(g):
        # gate order [i, f, o, g]: one sigmoid (3 lane-groups) + one tanh
        s = jax.nn.sigmoid(g[:, :3 * HP])
        u = jnp.tanh(g[:, 3 * HP:])
        return s[:, :HP], s[:, HP:2 * HP], s[:, 2 * HP:3 * HP], u

    z = jnp.zeros((N, HP), jnp.float32)
    h0 = c0 = h1 = c1 = ques = z
    for t in range(L):
        x_t = xp3[:, t, :]                                         # static slice
        # h1 @ Whh1 depends only on the previous step -> overlaps layer 0
        r1 = jnp.dot(h1, whh1, preferred_element_type=jnp.float32)
        g0 = x_t + jnp.dot(h0, whh0, preferred_element_type=jnp.float32)
        i0, f0, o0, u0 = gates(g0)
        c0 = f0 * c0 + i0 * u0
        h0 = o0 * jnp.tanh(c0)
        g1 = jnp.dot(h0, wih1, preferred_element_type=jnp.float32) + r1 + b1
        i1, f1, o1, u1 = gates(g1)
        c1 = f1 * c1 + i1 * u1
        h1 = o1 * jnp.tanh(c1)
        # hs.gather(1, idx): keep the hidden state at position idx
        ques = jnp.where(idx == float(t), h1, ques)
    ques = ques[:, :H]                                             # drop pads

    # ---------------- ques_tr + attention + softmax + pooling ---------------
    ques_tr = jnp.dot(ques, w_questr_ref[...],
                      preferred_element_type=jnp.float32) + b_questr_ref[...]
    # Linear(128,1)(tanh(cat([img_tr, ques_tr]))) decomposed; logits via MXU.
    logit_img = jnp.dot(jnp.tanh(tr), wa_i_ref[...],
                        preferred_element_type=jnp.float32)        # (N*Tp, 1)
    logit_q = jnp.dot(jnp.tanh(ques_tr), wa_q_ref[...],
                      preferred_element_type=jnp.float32)          # (N, 1)
    logits = logit_img.reshape(N, Tp, 1) + logit_q[:, None, :] + ba_ref[...]

    # mask padded T positions before the softmax
    tmask = lax.broadcasted_iota(jnp.int32, (N, Tp, 1), 1) < t_valid
    logits = jnp.where(tmask, logits, -1e30)

    m = jnp.max(logits, axis=1, keepdims=True)
    e = jnp.exp(logits - m)
    s = jnp.sum(e, axis=1, keepdims=True)
    probs = e * pl.reciprocal(s, approx=True)                      # (N, Tp, 1)
    probs_ref[...] = probs

    attn_img = jnp.sum(probs * fc.reshape(N, Tp, H), axis=1)       # (N, H)
    mul = ques * attn_img

    # classifier: Linear(64,64) -> ReLU -> Linear(64, A)
    h = jnp.dot(mul, wc1_ref[...],
                preferred_element_type=jnp.float32) + bc1_ref[...]
    h = jnp.maximum(h, 0.0)
    scores_ref[...] = jnp.dot(h, wc2_ref[...],
                              preferred_element_type=jnp.float32) + bc2_ref[...]


# ---------------------------------------------------------------------------
# full forward (glue: T padding, weight prep, single pallas_call)
# ---------------------------------------------------------------------------
@jax.jit
def vqa_forward(params, img_feats, questions):
    N, T, F = img_feats.shape
    L = questions.shape[1]
    H = params["w_cnn"].shape[1]
    A = params["wc2"].shape[1]
    HP = ((H + LANE - 1) // LANE) * LANE      # padded per-gate width (128)
    Tp = ((T + 7) // 8) * 8                   # 8-aligned T (free reshapes)

    x3 = img_feats if Tp == T else jnp.pad(img_feats,
                                           ((0, 0), (0, Tp - T), (0, 0)))
    x_img = x3.reshape(N * Tp, F).astype(IMG_MM_DTYPE)
    w_cnn = params["w_cnn"].astype(IMG_MM_DTYPE)

    # gate-padded, [i,f,o,g]-ordered LSTM weights; zero rows for pad lanes
    D = params["embed"].shape[1]
    wih0p = _pad_gate_weight(params["wih0"], D, H, HP)             # (D, 4HP)
    b0p = _pad_gate_bias(params["b0"], H, HP)                      # (1, 4HP)
    whh0p = _pad_gate_weight(params["whh0"], HP, H, HP)            # (HP, 4HP)
    wih1p = _pad_gate_weight(params["wih1"], HP, H, HP)            # (HP, 4HP)
    whh1p = _pad_gate_weight(params["whh1"], HP, H, HP)            # (HP, 4HP)
    b1p = _pad_gate_bias(params["b1"], H, HP)                      # (1, 4HP)

    args = (x_img, w_cnn, params["b_cnn"], params["w_imgtr"], params["b_imgtr"],
            questions.astype(jnp.int32), params["embed"],
            wih0p, b0p, whh0p, wih1p, whh1p, b1p,
            params["w_questr"], params["b_questr"],
            params["wa_i"], params["wa_q"], params["ba"],
            params["wc1"], params["bc1"], params["wc2"], params["bc2"])

    kernel = functools.partial(_vqa_fused_kernel, t_valid=T)
    scores, probs3 = pl.pallas_call(
        kernel,
        grid=(1,),
        in_specs=[_full_spec(a.shape) for a in args],
        out_specs=(_full_spec((N, A)), _full_spec((N, Tp, 1))),
        out_shape=(jax.ShapeDtypeStruct((N, A), jnp.float32),
                   jax.ShapeDtypeStruct((N, Tp, 1), jnp.float32)),
        compiler_params=pltpu.CompilerParams(dimension_semantics=("arbitrary",)),
    )(*args)

    return scores, probs3.reshape(N, Tp)[:, :T]


# ---------------------------------------------------------------------------
# pure-JAX reference (for correctness check only)
# ---------------------------------------------------------------------------
@jax.jit
def vqa_forward_ref(params, img_feats, questions):
    N, T, F = img_feats.shape
    L = questions.shape[1]
    H = params["w_cnn"].shape[1]

    fc = jax.nn.relu(img_feats.reshape(N * T, F) @ params["w_cnn"]
                     + params["b_cnn"])
    tr = fc @ params["w_imgtr"] + params["b_imgtr"]

    emb = params["embed"][questions]                               # (N, L, D)

    def lstm_layer(x, wih, whh, b):
        Hh = whh.shape[0]

        def step(carry, xt):
            h, c = carry
            g = xt @ wih + h @ whh + b[0]
            i, f, u, o = jnp.split(g, 4, axis=-1)                  # [i,f,g,o]
            i, f, o = jax.nn.sigmoid(i), jax.nn.sigmoid(f), jax.nn.sigmoid(o)
            u = jnp.tanh(u)
            c = f * c + i * u
            h = o * jnp.tanh(c)
            return (h, c), h

        init = (jnp.zeros((N, Hh), jnp.float32), jnp.zeros((N, Hh), jnp.float32))
        _, hs = lax.scan(step, init, jnp.swapaxes(x, 0, 1))
        return jnp.swapaxes(hs, 0, 1)                              # (N, L, Hh)

    h0s = lstm_layer(emb, params["wih0"], params["whh0"], params["b0"])
    h1s = lstm_layer(h0s, params["wih1"], params["whh1"], params["b1"])

    cond = (questions[:, :-1] != NULL_TOK) & (questions[:, 1:] == NULL_TOK)
    idx = jnp.where(jnp.any(cond, axis=1), jnp.argmax(cond, axis=1), L - 1)
    ques = h1s[jnp.arange(N), idx]                                 # (N, H)

    ques_tr = ques @ params["w_questr"] + params["b_questr"]
    logit_img = (jnp.tanh(tr) @ params["wa_i"]).reshape(N, T)
    logit_q = jnp.tanh(ques_tr) @ params["wa_q"]
    logits = logit_img + logit_q + params["ba"][0, 0]
    probs = jax.nn.softmax(logits, axis=1)                         # (N, T)

    attn_img = jnp.sum(probs[:, :, None] * fc.reshape(N, T, H), axis=1)
    mul = ques * attn_img
    h = jax.nn.relu(mul @ params["wc1"] + params["bc1"])
    scores = h @ params["wc2"] + params["bc2"]
    return scores, probs


# ---------------------------------------------------------------------------
# deterministic parameter init + example run
# ---------------------------------------------------------------------------
def init_params(key, feat_in=3200, hidden=64, vocab_q=20, n_answers=10):
    ks = jax.random.split(key, 20)
    u = lambda k, s, sc=0.1: jax.random.uniform(k, s, jnp.float32, -sc, sc)
    H = hidden
    return {
        "w_cnn": u(ks[0], (feat_in, H), 0.02), "b_cnn": u(ks[1], (1, H)),
        "w_imgtr": u(ks[2], (H, H)),           "b_imgtr": u(ks[3], (1, H)),
        "embed": u(ks[4], (vocab_q, H)),
        "wih0": u(ks[5], (H, 4 * H)), "whh0": u(ks[6], (H, 4 * H)),
        "b0": u(ks[7], (1, 4 * H)),
        "wih1": u(ks[8], (H, 4 * H)), "whh1": u(ks[9], (H, 4 * H)),
        "b1": u(ks[10], (1, 4 * H)),
        "w_questr": u(ks[11], (H, H)), "b_questr": u(ks[12], (1, H)),
        "wa_i": u(ks[13], (H, 1)), "wa_q": u(ks[14], (H, 1)),
        "ba": u(ks[15], (1, 1)),
        "wc1": u(ks[16], (H, H)), "bc1": u(ks[17], (1, H)),
        "wc2": u(ks[18], (H, n_answers)), "bc2": u(ks[19], (1, n_answers)),
    }


if __name__ == "__main__":
    N, T, F_IN, L = 2, 15, 3200, 8      # T = 3*5 as in the module docstring
    VOCAB_Q, N_ANSWERS = 20, 10

    key = jax.random.PRNGKey(0)
    k_img, k_tok, k_par = jax.random.split(key, 3)

    img_feats = jax.random.normal(k_img, (N, T, F_IN), jnp.float32)

    # questions: <START> tok ... tok <END> <NULL> ...
    body = jax.random.randint(k_tok, (N, L), 3, VOCAB_Q)
    lengths = jnp.array([6, 4], dtype=jnp.int32)
    pos = jnp.arange(L)[None, :]
    questions = jnp.where(pos == 0, START_TOK, body)
    questions = jnp.where(pos == lengths[:, None] - 1, END_TOK, questions)
    questions = jnp.where(pos >= lengths[:, None], NULL_TOK, questions)
    questions = questions.astype(jnp.int32)

    params = init_params(k_par, F_IN, 64, VOCAB_Q, N_ANSWERS)

    scores, attn_probs = vqa_forward(params, img_feats, questions)
    scores = jax.block_until_ready(scores)
    attn_probs = jax.block_until_ready(attn_probs)

    ref_scores, ref_probs = vqa_forward_ref(params, img_feats, questions)

    assert scores.shape == (N, N_ANSWERS) and attn_probs.shape == (N, T)
    assert bool(jnp.all(jnp.isfinite(scores)))
    # approx reciprocal -> rows sum to 1 within ~1e-3
    assert bool(jnp.allclose(jnp.sum(attn_probs, axis=1), 1.0, atol=2e-3))
    # bf16 image matmul + approx reciprocal -> loose parity vs f32 reference
    assert bool(jnp.allclose(attn_probs, ref_probs, atol=3e-2, rtol=3e-2))
    assert bool(jnp.allclose(scores, ref_scores, atol=3e-2, rtol=3e-2))
    print("KERNEL_OK")
</pallas_src>

<mosaic_0001>
module attributes {stable_mosaic.version = 11 : i64} {
  func.func @_vqa_fused_kernel(%arg0: i32, %arg1: memref<32x3200xbf16, #tpu.memory_space<vmem>>, %arg2: memref<3200x64xbf16, #tpu.memory_space<vmem>>, %arg3: memref<1x64xf32, #tpu.memory_space<vmem>>, %arg4: memref<64x64xf32, #tpu.memory_space<vmem>>, %arg5: memref<1x64xf32, #tpu.memory_space<vmem>>, %arg6: memref<2x8xi32, #tpu.memory_space<vmem>>, %arg7: memref<20x64xf32, #tpu.memory_space<vmem>>, %arg8: memref<64x512xf32, #tpu.memory_space<vmem>>, %arg9: memref<1x512xf32, #tpu.memory_space<vmem>>, %arg10: memref<128x512xf32, #tpu.memory_space<vmem>>, %arg11: memref<128x512xf32, #tpu.memory_space<vmem>>, %arg12: memref<128x512xf32, #tpu.memory_space<vmem>>, %arg13: memref<1x512xf32, #tpu.memory_space<vmem>>, %arg14: memref<64x64xf32, #tpu.memory_space<vmem>>, %arg15: memref<1x64xf32, #tpu.memory_space<vmem>>, %arg16: memref<64x1xf32, #tpu.memory_space<vmem>>, %arg17: memref<64x1xf32, #tpu.memory_space<vmem>>, %arg18: memref<1x1xf32, #tpu.memory_space<vmem>>, %arg19: memref<64x64xf32, #tpu.memory_space<vmem>>, %arg20: memref<1x64xf32, #tpu.memory_space<vmem>>, %arg21: memref<64x10xf32, #tpu.memory_space<vmem>>, %arg22: memref<1x10xf32, #tpu.memory_space<vmem>>, %arg23: memref<2x10xf32, #tpu.memory_space<vmem>>, %arg24: memref<2x16x1xf32, #tpu.memory_space<vmem>>) attributes {dimension_semantics = [#tpu.dimension_semantics<arbitrary>], iteration_bounds = array<i64: 1>, scalar_prefetch = 0 : i64, scratch_operands = 0 : i64, tpu.core_type = #tpu.core_type<tc>, window_params = [{pipeline_mode = #tpu.pipeline_mode<synchronous>, transform_indices = @transform_0, window_bounds = array<i64: 32, 3200>}, {pipeline_mode = #tpu.pipeline_mode<synchronous>, transform_indices = @transform_1, window_bounds = array<i64: 3200, 64>}, {pipeline_mode = #tpu.pipeline_mode<synchronous>, transform_indices = @transform_2, window_bounds = array<i64: 1, 64>}, {pipeline_mode = #tpu.pipeline_mode<synchronous>, transform_indices = @transform_3, window_bounds = array<i64: 64, 64>}, {pipeline_mode = #tpu.pipeline_mode<synchronous>, transform_indices = @transform_4, window_bounds = array<i64: 1, 64>}, {pipeline_mode = #tpu.pipeline_mode<synchronous>, transform_indices = @transform_5, window_bounds = array<i64: 2, 8>}, {pipeline_mode = #tpu.pipeline_mode<synchronous>, transform_indices = @transform_6, window_bounds = array<i64: 20, 64>}, {pipeline_mode = #tpu.pipeline_mode<synchronous>, transform_indices = @transform_7, window_bounds = array<i64: 64, 512>}, {pipeline_mode = #tpu.pipeline_mode<synchronous>, transform_indices = @transform_8, window_bounds = array<i64: 1, 512>}, {pipeline_mode = #tpu.pipeline_mode<synchronous>, transform_indices = @transform_9, window_bounds = array<i64: 128, 512>}, {pipeline_mode = #tpu.pipeline_mode<synchronous>, transform_indices = @transform_10, window_bounds = array<i64: 128, 512>}, {pipeline_mode = #tpu.pipeline_mode<synchronous>, transform_indices = @transform_11, window_bounds = array<i64: 128, 512>}, {pipeline_mode = #tpu.pipeline_mode<synchronous>, transform_indices = @transform_12, window_bounds = array<i64: 1, 512>}, {pipeline_mode = #tpu.pipeline_mode<synchronous>, transform_indices = @transform_13, window_bounds = array<i64: 64, 64>}, {pipeline_mode = #tpu.pipeline_mode<synchronous>, transform_indices = @transform_14, window_bounds = array<i64: 1, 64>}, {pipeline_mode = #tpu.pipeline_mode<synchronous>, transform_indices = @transform_15, window_bounds = array<i64: 64, 1>}, {pipeline_mode = #tpu.pipeline_mode<synchronous>, transform_indices = @transform_16, window_bounds = array<i64: 64, 1>}, {pipeline_mode = #tpu.pipeline_mode<synchronous>, transform_indices = @transform_17, window_bounds = array<i64: 1, 1>}, {pipeline_mode = #tpu.pipeline_mode<synchronous>, transform_indices = @transform_18, window_bounds = array<i64: 64, 64>}, {pipeline_mode = #tpu.pipeline_mode<synchronous>, transform_indices = @transform_19, window_bounds = array<i64: 1, 64>}, {pipeline_mode = #tpu.pipeline_mode<synchronous>, transform_indices = @transform_20, window_bounds = array<i64: 64, 10>}, {pipeline_mode = #tpu.pipeline_mode<synchronous>, transform_indices = @transform_21, window_bounds = array<i64: 1, 10>}, {pipeline_mode = #tpu.pipeline_mode<synchronous>, transform_indices = @transform_22, window_bounds = array<i64: 2, 10>}, {pipeline_mode = #tpu.pipeline_mode<synchronous>, transform_indices = @transform_23, window_bounds = array<i64: 2, 16, 1>}]} {
    %c0 = arith.constant 0 : index
    %c0_0 = arith.constant 0 : index
    %0 = vector.load %arg1[%c0, %c0_0] : memref<32x3200xbf16, #tpu.memory_space<vmem>>, vector<32x3200xbf16>
    %c0_1 = arith.constant 0 : index
    %c0_2 = arith.constant 0 : index
    %1 = vector.load %arg2[%c0_1, %c0_2] : memref<3200x64xbf16, #tpu.memory_space<vmem>>, vector<3200x64xbf16>
    %cst = arith.constant dense<0.000000e+00> : vector<32x64xf32>
    %2 = tpu.matmul %0, %1, %cst {dimension_numbers = #tpu.dot_dimension_numbers<[1], [0], [0], [1], [0, 0, 1, 1], [], []>} : vector<32x3200xbf16>, vector<3200x64xbf16>, vector<32x64xf32> -> vector<32x64xf32>
    %c0_3 = arith.constant 0 : index
    %c0_4 = arith.constant 0 : index
    %3 = vector.load %arg3[%c0_3, %c0_4] : memref<1x64xf32, #tpu.memory_space<vmem>>, vector<1x64xf32>
    %4 = vector.broadcast %3 : vector<1x64xf32> to vector<32x64xf32>
    %5 = arith.addf %2, %4 : vector<32x64xf32>
    %cst_5 = arith.constant 0.000000e+00 : f32
    %6 = vector.broadcast %cst_5 : f32 to vector<32x64xf32>
    %7 = arith.maximumf %5, %6 : vector<32x64xf32>
    %c0_6 = arith.constant 0 : index
    %c0_7 = arith.constant 0 : index
    %8 = vector.load %arg4[%c0_6, %c0_7] : memref<64x64xf32, #tpu.memory_space<vmem>>, vector<64x64xf32>
    %cst_8 = arith.constant dense<0.000000e+00> : vector<32x64xf32>
    %9 = tpu.matmul %7, %8, %cst_8 {dimension_numbers = #tpu.dot_dimension_numbers<[1], [0], [0], [1], [0, 0, 1, 1], [], []>} : vector<32x64xf32>, vector<64x64xf32>, vector<32x64xf32> -> vector<32x64xf32>
    %c0_9 = arith.constant 0 : index
    %c0_10 = arith.constant 0 : index
    %10 = vector.load %arg5[%c0_9, %c0_10] : memref<1x64xf32, #tpu.memory_space<vmem>>, vector<1x64xf32>
    %11 = vector.broadcast %10 : vector<1x64xf32> to vector<32x64xf32>
    %12 = arith.addf %9, %11 : vector<32x64xf32>
    %c0_11 = arith.constant 0 : index
    %c0_12 = arith.constant 0 : index
    %13 = vector.load %arg6[%c0_11, %c0_12] : memref<2x8xi32, #tpu.memory_space<vmem>>, vector<2x8xi32>
    %14 = vector.shape_cast %13 : vector<2x8xi32> to vector<2x8x1xi32>
    %15 = tpu.iota {dimensions = array<i32: 2>} : vector<2x8x20xi32>
    %16 = vector.broadcast %14 : vector<2x8x1xi32> to vector<2x8x20xi32>
    %17 = arith.cmpi eq, %16, %15 : vector<2x8x20xi32>
    %18 = arith.extui %17 : vector<2x8x20xi1> to vector<2x8x20xi32>
    %19 = arith.sitofp %18 : vector<2x8x20xi32> to vector<2x8x20xf32>
    %c0_13 = arith.constant 0 : index
    %c0_14 = arith.constant 0 : index
    %20 = vector.load %arg7[%c0_13, %c0_14] : memref<20x64xf32, #tpu.memory_space<vmem>>, vector<20x64xf32>
    %c0_15 = arith.constant 0 : index
    %c0_16 = arith.constant 0 : index
    %21 = vector.load %arg8[%c0_15, %c0_16] : memref<64x512xf32, #tpu.memory_space<vmem>>, vector<64x512xf32>
    %cst_17 = arith.constant dense<0.000000e+00> : vector<20x512xf32>
    %22 = tpu.matmul %20, %21, %cst_17 {dimension_numbers = #tpu.dot_dimension_numbers<[1], [0], [0], [1], [0, 0, 1, 1], [], []>} : vector<20x64xf32>, vector<64x512xf32>, vector<20x512xf32> -> vector<20x512xf32>
    %23 = vector.shape_cast %19 : vector<2x8x20xf32> to vector<16x20xf32>
    %cst_18 = arith.constant dense<0.000000e+00> : vector<16x512xf32>
    %24 = tpu.matmul %23, %22, %cst_18 {dimension_numbers = #tpu.dot_dimension_numbers<[1], [0], [0], [1], [0, 0, 1, 1], [], []>} : vector<16x20xf32>, vector<20x512xf32>, vector<16x512xf32> -> vector<16x512xf32>
    %c0_19 = arith.constant 0 : index
    %c0_20 = arith.constant 0 : index
    %25 = vector.load %arg9[%c0_19, %c0_20] : memref<1x512xf32, #tpu.memory_space<vmem>>, vector<1x512xf32>
    %26 = vector.broadcast %25 : vector<1x512xf32> to vector<16x512xf32>
    %27 = arith.addf %24, %26 : vector<16x512xf32>
    %28 = vector.shape_cast %27 : vector<16x512xf32> to vector<2x8x512xf32>
    %29 = vector.extract_strided_slice %13 {offsets = [0, 0], sizes = [2, 7], strides = [1, 1]} : vector<2x8xi32> to vector<2x7xi32>
    %c0_i32 = arith.constant 0 : i32
    %30 = vector.broadcast %c0_i32 : i32 to vector<2x7xi32>
    %31 = arith.cmpi ne, %29, %30 : vector<2x7xi32>
    %32 = vector.extract_strided_slice %13 {offsets = [0, 1], sizes = [2, 7], strides = [1, 1]} : vector<2x8xi32> to vector<2x7xi32>
    %c0_i32_21 = arith.constant 0 : i32
    %33 = vector.broadcast %c0_i32_21 : i32 to vector<2x7xi32>
    %34 = arith.cmpi eq, %32, %33 : vector<2x7xi32>
    %35 = arith.andi %31, %34 : vector<2x7xi1>
    %36 = tpu.iota {dimensions = array<i32: 1>} : vector<2x7xi32>
    %37 = arith.sitofp %36 : vector<2x7xi32> to vector<2x7xf32>
    %cst_22 = arith.constant 7.000000e+00 : f32
    %38 = vector.broadcast %cst_22 : f32 to vector<2x7xf32>
    %39 = arith.select %35, %37, %38 : vector<2x7xi1>, vector<2x7xf32>
    %cst_23 = arith.constant dense<0x7F800000> : vector<2xf32>
    %40 = vector.multi_reduction <minimumf>, %39, %cst_23 [1] : vector<2x7xf32> to vector<2xf32>
    %41 = vector.shape_cast %40 : vector<2xf32> to vector<2x1xf32>
    %c0_24 = arith.constant 0 : index
    %c0_25 = arith.constant 0 : index
    %42 = vector.load %arg10[%c0_24, %c0_25] : memref<128x512xf32, #tpu.memory_space<vmem>>, vector<128x512xf32>
    %c0_26 = arith.constant 0 : index
    %c0_27 = arith.constant 0 : index
    %43 = vector.load %arg11[%c0_26, %c0_27] : memref<128x512xf32, #tpu.memory_space<vmem>>, vector<128x512xf32>
    %c0_28 = arith.constant 0 : index
    %c0_29 = arith.constant 0 : index
    %44 = vector.load %arg12[%c0_28, %c0_29] : memref<128x512xf32, #tpu.memory_space<vmem>>, vector<128x512xf32>
    %c0_30 = arith.constant 0 : index
    %c0_31 = arith.constant 0 : index
    %45 = vector.load %arg13[%c0_30, %c0_31] : memref<1x512xf32, #tpu.memory_space<vmem>>, vector<1x512xf32>
    %46 = vector.shape_cast %45 : vector<1x512xf32> to vector<1x512xf32>
    %47 = vector.broadcast %46 : vector<1x512xf32> to vector<2x512xf32>
    %cst_32 = arith.constant 0.000000e+00 : f32
    %48 = vector.broadcast %cst_32 : f32 to vector<2x128xf32>
    %49 = vector.extract_strided_slice %28 {offsets = [0, 0, 0], sizes = [2, 1, 512], strides = [1, 1, 1]} : vector<2x8x512xf32> to vector<2x1x512xf32>
    %50 = vector.shape_cast %49 : vector<2x1x512xf32> to vector<2x512xf32>
    %cst_33 = arith.constant dense<0.000000e+00> : vector<2x512xf32>
    %51 = tpu.matmul %48, %44, %cst_33 {dimension_numbers = #tpu.dot_dimension_numbers<[1], [0], [0], [1], [0, 0, 1, 1], [], []>} : vector<2x128xf32>, vector<128x512xf32>, vector<2x512xf32> -> vector<2x512xf32>
    %cst_34 = arith.constant dense<0.000000e+00> : vector<2x512xf32>
    %52 = tpu.matmul %48, %42, %cst_34 {dimension_numbers = #tpu.dot_dimension_numbers<[1], [0], [0], [1], [0, 0, 1, 1], [], []>} : vector<2x128xf32>, vector<128x512xf32>, vector<2x512xf32> -> vector<2x512xf32>
    %53 = arith.addf %50, %52 : vector<2x512xf32>
    %54 = vector.extract_strided_slice %53 {offsets = [0, 0], sizes = [2, 384], strides = [1, 1]} : vector<2x512xf32> to vector<2x384xf32>
    %55 = arith.negf %54 : vector<2x384xf32>
    %56 = math.exp %55 : vector<2x384xf32>
    %cst_35 = arith.constant 1.000000e+00 : f32
    %57 = vector.broadcast %cst_35 : f32 to vector<2x384xf32>
    %58 = arith.addf %57, %56 : vector<2x384xf32>
    %59 = arith.divf %57, %58 : vector<2x384xf32>
    %60 = vector.extract_strided_slice %53 {offsets = [0, 384], sizes = [2, 128], strides = [1, 1]} : vector<2x512xf32> to vector<2x128xf32>
    %61 = math.tanh %60 : vector<2x128xf32>
    %62 = vector.extract_strided_slice %59 {offsets = [0, 0], sizes = [2, 128], strides = [1, 1]} : vector<2x384xf32> to vector<2x128xf32>
    %63 = vector.extract_strided_slice %59 {offsets = [0, 128], sizes = [2, 128], strides = [1, 1]} : vector<2x384xf32> to vector<2x128xf32>
    %64 = vector.extract_strided_slice %59 {offsets = [0, 256], sizes = [2, 128], strides = [1, 1]} : vector<2x384xf32> to vector<2x128xf32>
    %65 = arith.mulf %63, %48 : vector<2x128xf32>
    %66 = arith.mulf %62, %61 : vector<2x128xf32>
    %67 = arith.addf %65, %66 : vector<2x128xf32>
    %68 = math.tanh %67 : vector<2x128xf32>
    %69 = arith.mulf %64, %68 : vector<2x128xf32>
    %cst_36 = arith.constant dense<0.000000e+00> : vector<2x512xf32>
    %70 = tpu.matmul %69, %43, %cst_36 {dimension_numbers = #tpu.dot_dimension_numbers<[1], [0], [0], [1], [0, 0, 1, 1], [], []>} : vector<2x128xf32>, vector<128x512xf32>, vector<2x512xf32> -> vector<2x512xf32>
    %71 = arith.addf %70, %51 : vector<2x512xf32>
    %72 = arith.addf %71, %47 : vector<2x512xf32>
    %73 = vector.extract_strided_slice %72 {offsets = [0, 0], sizes = [2, 384], strides = [1, 1]} : vector<2x512xf32> to vector<2x384xf32>
    %74 = arith.negf %73 : vector<2x384xf32>
    %75 = math.exp %74 : vector<2x384xf32>
    %cst_37 = arith.constant 1.000000e+00 : f32
    %76 = vector.broadcast %cst_37 : f32 to vector<2x384xf32>
    %77 = arith.addf %76, %75 : vector<2x384xf32>
    %78 = arith.divf %76, %77 : vector<2x384xf32>
    %79 = vector.extract_strided_slice %72 {offsets = [0, 384], sizes = [2, 128], strides = [1, 1]} : vector<2x512xf32> to vector<2x128xf32>
    %80 = math.tanh %79 : vector<2x128xf32>
    %81 = vector.extract_strided_slice %78 {offsets = [0, 0], sizes = [2, 128], strides = [1, 1]} : vector<2x384xf32> to vector<2x128xf32>
    %82 = vector.extract_strided_slice %78 {offsets = [0, 128], sizes = [2, 128], strides = [1, 1]} : vector<2x384xf32> to vector<2x128xf32>
    %83 = vector.extract_strided_slice %78 {offsets = [0, 256], sizes = [2, 128], strides = [1, 1]} : vector<2x384xf32> to vector<2x128xf32>
    %84 = arith.mulf %82, %48 : vector<2x128xf32>
    %85 = arith.mulf %81, %80 : vector<2x128xf32>
    %86 = arith.addf %84, %85 : vector<2x128xf32>
    %87 = math.tanh %86 : vector<2x128xf32>
    %88 = arith.mulf %83, %87 : vector<2x128xf32>
    %cst_38 = arith.constant 0.000000e+00 : f32
    %89 = vector.broadcast %cst_38 : f32 to vector<2x1xf32>
    %90 = arith.cmpf oeq, %41, %89 : vector<2x1xf32>
    %91 = vector.shape_cast %90 : vector<2x1xi1> to vector<2x1xi1>
    %92 = vector.broadcast %91 : vector<2x1xi1> to vector<2x128xi1>
    %93 = arith.select %92, %88, %48 : vector<2x128xi1>, vector<2x128xf32>
    %94 = vector.extract_strided_slice %28 {offsets = [0, 1, 0], sizes = [2, 1, 512], strides = [1, 1, 1]} : vector<2x8x512xf32> to vector<2x1x512xf32>
    %95 = vector.shape_cast %94 : vector<2x1x512xf32> to vector<2x512xf32>
    %cst_39 = arith.constant dense<0.000000e+00> : vector<2x512xf32>
    %96 = tpu.matmul %88, %44, %cst_39 {dimension_numbers = #tpu.dot_dimension_numbers<[1], [0], [0], [1], [0, 0, 1, 1], [], []>} : vector<2x128xf32>, vector<128x512xf32>, vector<2x512xf32> -> vector<2x512xf32>
    %cst_40 = arith.constant dense<0.000000e+00> : vector<2x512xf32>
    %97 = tpu.matmul %69, %42, %cst_40 {dimension_numbers = #tpu.dot_dimension_numbers<[1], [0], [0], [1], [0, 0, 1, 1], [], []>} : vector<2x128xf32>, vector<128x512xf32>, vector<2x512xf32> -> vector<2x512xf32>
    %98 = arith.addf %95, %97 : vector<2x512xf32>
    %99 = vector.extract_strided_slice %98 {offsets = [0, 0], sizes = [2, 384], strides = [1, 1]} : vector<2x512xf32> to vector<2x384xf32>
    %100 = arith.negf %99 : vector<2x384xf32>
    %101 = math.exp %100 : vector<2x384xf32>
    %cst_41 = arith.constant 1.000000e+00 : f32
    %102 = vector.broadcast %cst_41 : f32 to vector<2x384xf32>
    %103 = arith.addf %102, %101 : vector<2x384xf32>
    %104 = arith.divf %102, %103 : vector<2x384xf32>
    %105 = vector.extract_strided_slice %98 {offsets = [0, 384], sizes = [2, 128], strides = [1, 1]} : vector<2x512xf32> to vector<2x128xf32>
    %106 = math.tanh %105 : vector<2x128xf32>
    %107 = vector.extract_strided_slice %104 {offsets = [0, 0], sizes = [2, 128], strides = [1, 1]} : vector<2x384xf32> to vector<2x128xf32>
    %108 = vector.extract_strided_slice %104 {offsets = [0, 128], sizes = [2, 128], strides = [1, 1]} : vector<2x384xf32> to vector<2x128xf32>
    %109 = vector.extract_strided_slice %104 {offsets = [0, 256], sizes = [2, 128], strides = [1, 1]} : vector<2x384xf32> to vector<2x128xf32>
    %110 = arith.mulf %108, %67 : vector<2x128xf32>
    %111 = arith.mulf %107, %106 : vector<2x128xf32>
    %112 = arith.addf %110, %111 : vector<2x128xf32>
    %113 = math.tanh %112 : vector<2x128xf32>
    %114 = arith.mulf %109, %113 : vector<2x128xf32>
    %cst_42 = arith.constant dense<0.000000e+00> : vector<2x512xf32>
    %115 = tpu.matmul %114, %43, %cst_42 {dimension_numbers = #tpu.dot_dimension_numbers<[1], [0], [0], [1], [0, 0, 1, 1], [], []>} : vector<2x128xf32>, vector<128x512xf32>, vector<2x512xf32> -> vector<2x512xf32>
    %116 = arith.addf %115, %96 : vector<2x512xf32>
    %117 = arith.addf %116, %47 : vector<2x512xf32>
    %118 = vector.extract_strided_slice %117 {offsets = [0, 0], sizes = [2, 384], strides = [1, 1]} : vector<2x512xf32> to vector<2x384xf32>
    %119 = arith.negf %118 : vector<2x384xf32>
    %120 = math.exp %119 : vector<2x384xf32>
    %cst_43 = arith.constant 1.000000e+00 : f32
    %121 = vector.broadcast %cst_43 : f32 to vector<2x384xf32>
    %122 = arith.addf %121, %120 : vector<2x384xf32>
    %123 = arith.divf %121, %122 : vector<2x384xf32>
    %124 = vector.extract_strided_slice %117 {offsets = [0, 384], sizes = [2, 128], strides = [1, 1]} : vector<2x512xf32> to vector<2x128xf32>
    %125 = math.tanh %124 : vector<2x128xf32>
    %126 = vector.extract_strided_slice %123 {offsets = [0, 0], sizes = [2, 128], strides = [1, 1]} : vector<2x384xf32> to vector<2x128xf32>
    %127 = vector.extract_strided_slice %123 {offsets = [0, 128], sizes = [2, 128], strides = [1, 1]} : vector<2x384xf32> to vector<2x128xf32>
    %128 = vector.extract_strided_slice %123 {offsets = [0, 256], sizes = [2, 128], strides = [1, 1]} : vector<2x384xf32> to vector<2x128xf32>
    %129 = arith.mulf %127, %86 : vector<2x128xf32>
    %130 = arith.mulf %126, %125 : vector<2x128xf32>
    %131 = arith.addf %129, %130 : vector<2x128xf32>
    %132 = math.tanh %131 : vector<2x128xf32>
    %133 = arith.mulf %128, %132 : vector<2x128xf32>
    %cst_44 = arith.constant 1.000000e+00 : f32
    %134 = vector.broadcast %cst_44 : f32 to vector<2x1xf32>
    %135 = arith.cmpf oeq, %41, %134 : vector<2x1xf32>
    %136 = vector.shape_cast %135 : vector<2x1xi1> to vector<2x1xi1>
    %137 = vector.broadcast %136 : vector<2x1xi1> to vector<2x128xi1>
    %138 = arith.select %137, %133, %93 : vector<2x128xi1>, vector<2x128xf32>
    %139 = vector.extract_strided_slice %28 {offsets = [0, 2, 0], sizes = [2, 1, 512], strides = [1, 1, 1]} : vector<2x8x512xf32> to vector<2x1x512xf32>
    %140 = vector.shape_cast %139 : vector<2x1x512xf32> to vector<2x512xf32>
    %cst_45 = arith.constant dense<0.000000e+00> : vector<2x512xf32>
    %141 = tpu.matmul %133, %44, %cst_45 {dimension_numbers = #tpu.dot_dimension_numbers<[1], [0], [0], [1], [0, 0, 1, 1], [], []>} : vector<2x128xf32>, vector<128x512xf32>, vector<2x512xf32> -> vector<2x512xf32>
    %cst_46 = arith.constant dense<0.000000e+00> : vector<2x512xf32>
    %142 = tpu.matmul %114, %42, %cst_46 {dimension_numbers = #tpu.dot_dimension_numbers<[1], [0], [0], [1], [0, 0, 1, 1], [], []>} : vector<2x128xf32>, vector<128x512xf32>, vector<2x512xf32> -> vector<2x512xf32>
    %143 = arith.addf %140, %142 : vector<2x512xf32>
    %144 = vector.extract_strided_slice %143 {offsets = [0, 0], sizes = [2, 384], strides = [1, 1]} : vector<2x512xf32> to vector<2x384xf32>
    %145 = arith.negf %144 : vector<2x384xf32>
    %146 = math.exp %145 : vector<2x384xf32>
    %cst_47 = arith.constant 1.000000e+00 : f32
    %147 = vector.broadcast %cst_47 : f32 to vector<2x384xf32>
    %148 = arith.addf %147, %146 : vector<2x384xf32>
    %149 = arith.divf %147, %148 : vector<2x384xf32>
    %150 = vector.extract_strided_slice %143 {offsets = [0, 384], sizes = [2, 128], strides = [1, 1]} : vector<2x512xf32> to vector<2x128xf32>
    %151 = math.tanh %150 : vector<2x128xf32>
    %152 = vector.extract_strided_slice %149 {offsets = [0, 0], sizes = [2, 128], strides = [1, 1]} : vector<2x384xf32> to vector<2x128xf32>
    %153 = vector.extract_strided_slice %149 {offsets = [0, 128], sizes = [2, 128], strides = [1, 1]} : vector<2x384xf32> to vector<2x128xf32>
    %154 = vector.extract_strided_slice %149 {offsets = [0, 256], sizes = [2, 128], strides = [1, 1]} : vector<2x384xf32> to vector<2x128xf32>
    %155 = arith.mulf %153, %112 : vector<2x128xf32>
    %156 = arith.mulf %152, %151 : vector<2x128xf32>
    %157 = arith.addf %155, %156 : vector<2x128xf32>
    %158 = math.tanh %157 : vector<2x128xf32>
    %159 = arith.mulf %154, %158 : vector<2x128xf32>
    %cst_48 = arith.constant dense<0.000000e+00> : vector<2x512xf32>
    %160 = tpu.matmul %159, %43, %cst_48 {dimension_numbers = #tpu.dot_dimension_numbers<[1], [0], [0], [1], [0, 0, 1, 1], [], []>} : vector<2x128xf32>, vector<128x512xf32>, vector<2x512xf32> -> vector<2x512xf32>
    %161 = arith.addf %160, %141 : vector<2x512xf32>
    %162 = arith.addf %161, %47 : vector<2x512xf32>
    %163 = vector.extract_strided_slice %162 {offsets = [0, 0], sizes = [2, 384], strides = [1, 1]} : vector<2x512xf32> to vector<2x384xf32>
    %164 = arith.negf %163 : vector<2x384xf32>
    %165 = math.exp %164 : vector<2x384xf32>
    %cst_49 = arith.constant 1.000000e+00 : f32
    %166 = vector.broadcast %cst_49 : f32 to vector<2x384xf32>
    %167 = arith.addf %166, %165 : vector<2x384xf32>
    %168 = arith.divf %166, %167 : vector<2x384xf32>
    %169 = vector.extract_strided_slice %162 {offsets = [0, 384], sizes = [2, 128], strides = [1, 1]} : vector<2x512xf32> to vector<2x128xf32>
    %170 = math.tanh %169 : vector<2x128xf32>
    %171 = vector.extract_strided_slice %168 {offsets = [0, 0], sizes = [2, 128], strides = [1, 1]} : vector<2x384xf32> to vector<2x128xf32>
    %172 = vector.extract_strided_slice %168 {offsets = [0, 128], sizes = [2, 128], strides = [1, 1]} : vector<2x384xf32> to vector<2x128xf32>
    %173 = vector.extract_strided_slice %168 {offsets = [0, 256], sizes = [2, 128], strides = [1, 1]} : vector<2x384xf32> to vector<2x128xf32>
    %174 = arith.mulf %172, %131 : vector<2x128xf32>
    %175 = arith.mulf %171, %170 : vector<2x128xf32>
    %176 = arith.addf %174, %175 : vector<2x128xf32>
    %177 = math.tanh %176 : vector<2x128xf32>
    %178 = arith.mulf %173, %177 : vector<2x128xf32>
    %cst_50 = arith.constant 2.000000e+00 : f32
    %179 = vector.broadcast %cst_50 : f32 to vector<2x1xf32>
    %180 = arith.cmpf oeq, %41, %179 : vector<2x1xf32>
    %181 = vector.shape_cast %180 : vector<2x1xi1> to vector<2x1xi1>
    %182 = vector.broadcast %181 : vector<2x1xi1> to vector<2x128xi1>
    %183 = arith.select %182, %178, %138 : vector<2x128xi1>, vector<2x128xf32>
    %184 = vector.extract_strided_slice %28 {offsets = [0, 3, 0], sizes = [2, 1, 512], strides = [1, 1, 1]} : vector<2x8x512xf32> to vector<2x1x512xf32>
    %185 = vector.shape_cast %184 : vector<2x1x512xf32> to vector<2x512xf32>
    %cst_51 = arith.constant dense<0.000000e+00> : vector<2x512xf32>
    %186 = tpu.matmul %178, %44, %cst_51 {dimension_numbers = #tpu.dot_dimension_numbers<[1], [0], [0], [1], [0, 0, 1, 1], [], []>} : vector<2x128xf32>, vector<128x512xf32>, vector<2x512xf32> -> vector<2x512xf32>
    %cst_52 = arith.constant dense<0.000000e+00> : vector<2x512xf32>
    %187 = tpu.matmul %159, %42, %cst_52 {dimension_numbers = #tpu.dot_dimension_numbers<[1], [0], [0], [1], [0, 0, 1, 1], [], []>} : vector<2x128xf32>, vector<128x512xf32>, vector<2x512xf32> -> vector<2x512xf32>
    %188 = arith.addf %185, %187 : vector<2x512xf32>
    %189 = vector.extract_strided_slice %188 {offsets = [0, 0], sizes = [2, 384], strides = [1, 1]} : vector<2x512xf32> to vector<2x384xf32>
    %190 = arith.negf %189 : vector<2x384xf32>
    %191 = math.exp %190 : vector<2x384xf32>
    %cst_53 = arith.constant 1.000000e+00 : f32
    %192 = vector.broadcast %cst_53 : f32 to vector<2x384xf32>
    %193 = arith.addf %192, %191 : vector<2x384xf32>
    %194 = arith.divf %192, %193 : vector<2x384xf32>
    %195 = vector.extract_strided_slice %188 {offsets = [0, 384], sizes = [2, 128], strides = [1, 1]} : vector<2x512xf32> to vector<2x128xf32>
    %196 = math.tanh %195 : vector<2x128xf32>
    %197 = vector.extract_strided_slice %194 {offsets = [0, 0], sizes = [2, 128], strides = [1, 1]} : vector<2x384xf32> to vector<2x128xf32>
    %198 = vector.extract_strided_slice %194 {offsets = [0, 128], sizes = [2, 128], strides = [1, 1]} : vector<2x384xf32> to vector<2x128xf32>
    %199 = vector.extract_strided_slice %194 {offsets = [0, 256], sizes = [2, 128], strides = [1, 1]} : vector<2x384xf32> to vector<2x128xf32>
    %200 = arith.mulf %198, %157 : vector<2x128xf32>
    %201 = arith.mulf %197, %196 : vector<2x128xf32>
    %202 = arith.addf %200, %201 : vector<2x128xf32>
    %203 = math.tanh %202 : vector<2x128xf32>
    %204 = arith.mulf %199, %203 : vector<2x128xf32>
    %cst_54 = arith.constant dense<0.000000e+00> : vector<2x512xf32>
    %205 = tpu.matmul %204, %43, %cst_54 {dimension_numbers = #tpu.dot_dimension_numbers<[1], [0], [0], [1], [0, 0, 1, 1], [], []>} : vector<2x128xf32>, vector<128x512xf32>, vector<2x512xf32> -> vector<2x512xf32>
    %206 = arith.addf %205, %186 : vector<2x512xf32>
    %207 = arith.addf %206, %47 : vector<2x512xf32>
    %208 = vector.extract_strided_slice %207 {offsets = [0, 0], sizes = [2, 384], strides = [1, 1]} : vector<2x512xf32> to vector<2x384xf32>
    %209 = arith.negf %208 : vector<2x384xf32>
    %210 = math.exp %209 : vector<2x384xf32>
    %cst_55 = arith.constant 1.000000e+00 : f32
    %211 = vector.broadcast %cst_55 : f32 to vector<2x384xf32>
    %212 = arith.addf %211, %210 : vector<2x384xf32>
    %213 = arith.divf %211, %212 : vector<2x384xf32>
    %214 = vector.extract_strided_slice %207 {offsets = [0, 384], sizes = [2, 128], strides = [1, 1]} : vector<2x512xf32> to vector<2x128xf32>
    %215 = math.tanh %214 : vector<2x128xf32>
    %216 = vector.extract_strided_slice %213 {offsets = [0, 0], sizes = [2, 128], strides = [1, 1]} : vector<2x384xf32> to vector<2x128xf32>
    %217 = vector.extract_strided_slice %213 {offsets = [0, 128], sizes = [2, 128], strides = [1, 1]} : vector<2x384xf32> to vector<2x128xf32>
    %218 = vector.extract_strided_slice %213 {offsets = [0, 256], sizes = [2, 128], strides = [1, 1]} : vector<2x384xf32> to vector<2x128xf32>
    %219 = arith.mulf %217, %176 : vector<2x128xf32>
    %220 = arith.mulf %216, %215 : vector<2x128xf32>
    %221 = arith.addf %219, %220 : vector<2x128xf32>
    %222 = math.tanh %221 : vector<2x128xf32>
    %223 = arith.mulf %218, %222 : vector<2x128xf32>
    %cst_56 = arith.constant 3.000000e+00 : f32
    %224 = vector.broadcast %cst_56 : f32 to vector<2x1xf32>
    %225 = arith.cmpf oeq, %41, %224 : vector<2x1xf32>
    %226 = vector.shape_cast %225 : vector<2x1xi1> to vector<2x1xi1>
    %227 = vector.broadcast %226 : vector<2x1xi1> to vector<2x128xi1>
    %228 = arith.select %227, %223, %183 : vector<2x128xi1>, vector<2x128xf32>
    %229 = vector.extract_strided_slice %28 {offsets = [0, 4, 0], sizes = [2, 1, 512], strides = [1, 1, 1]} : vector<2x8x512xf32> to vector<2x1x512xf32>
    %230 = vector.shape_cast %229 : vector<2x1x512xf32> to vector<2x512xf32>
    %cst_57 = arith.constant dense<0.000000e+00> : vector<2x512xf32>
    %231 = tpu.matmul %223, %44, %cst_57 {dimension_numbers = #tpu.dot_dimension_numbers<[1], [0], [0], [1], [0, 0, 1, 1], [], []>} : vector<2x128xf32>, vector<128x512xf32>, vector<2x512xf32> -> vector<2x512xf32>
    %cst_58 = arith.constant dense<0.000000e+00> : vector<2x512xf32>
    %232 = tpu.matmul %204, %42, %cst_58 {dimension_numbers = #tpu.dot_dimension_numbers<[1], [0], [0], [1], [0, 0, 1, 1], [], []>} : vector<2x128xf32>, vector<128x512xf32>, vector<2x512xf32> -> vector<2x512xf32>
    %233 = arith.addf %230, %232 : vector<2x512xf32>
    %234 = vector.extract_strided_slice %233 {offsets = [0, 0], sizes = [2, 384], strides = [1, 1]} : vector<2x512xf32> to vector<2x384xf32>
    %235 = arith.negf %234 : vector<2x384xf32>
    %236 = math.exp %235 : vector<2x384xf32>
    %cst_59 = arith.constant 1.000000e+00 : f32
    %237 = vector.broadcast %cst_59 : f32 to vector<2x384xf32>
    %238 = arith.addf %237, %236 : vector<2x384xf32>
    %239 = arith.divf %237, %238 : vector<2x384xf32>
    %240 = vector.extract_strided_slice %233 {offsets = [0, 384], sizes = [2, 128], strides = [1, 1]} : vector<2x512xf32> to vector<2x128xf32>
    %241 = math.tanh %240 : vector<2x128xf32>
    %242 = vector.extract_strided_slice %239 {offsets = [0, 0], sizes = [2, 128], strides = [1, 1]} : vector<2x384xf32> to vector<2x128xf32>
    %243 = vector.extract_strided_slice %239 {offsets = [0, 128], sizes = [2, 128], strides = [1, 1]} : vector<2x384xf32> to vector<2x128xf32>
    %244 = vector.extract_strided_slice %239 {offsets = [0, 256], sizes = [2, 128], strides = [1, 1]} : vector<2x384xf32> to vector<2x128xf32>
    %245 = arith.mulf %243, %202 : vector<2x128xf32>
    %246 = arith.mulf %242, %241 : vector<2x128xf32>
    %247 = arith.addf %245, %246 : vector<2x128xf32>
    %248 = math.tanh %247 : vector<2x128xf32>
    %249 = arith.mulf %244, %248 : vector<2x128xf32>
    %cst_60 = arith.constant dense<0.000000e+00> : vector<2x512xf32>
    %250 = tpu.matmul %249, %43, %cst_60 {dimension_numbers = #tpu.dot_dimension_numbers<[1], [0], [0], [1], [0, 0, 1, 1], [], []>} : vector<2x128xf32>, vector<128x512xf32>, vector<2x512xf32> -> vector<2x512xf32>
    %251 = arith.addf %250, %231 : vector<2x512xf32>
    %252 = arith.addf %251, %47 : vector<2x512xf32>
    %253 = vector.extract_strided_slice %252 {offsets = [0, 0], sizes = [2, 384], strides = [1, 1]} : vector<2x512xf32> to vector<2x384xf32>
    %254 = arith.negf %253 : vector<2x384xf32>
    %255 = math.exp %254 : vector<2x384xf32>
    %cst_61 = arith.constant 1.000000e+00 : f32
    %256 = vector.broadcast %cst_61 : f32 to vector<2x384xf32>
    %257 = arith.addf %256, %255 : vector<2x384xf32>
    %258 = arith.divf %256, %257 : vector<2x384xf32>
    %259 = vector.extract_strided_slice %252 {offsets = [0, 384], sizes = [2, 128], strides = [1, 1]} : vector<2x512xf32> to vector<2x128xf32>
    %260 = math.tanh %259 : vector<2x128xf32>
    %261 = vector.extract_strided_slice %258 {offsets = [0, 0], sizes = [2, 128], strides = [1, 1]} : vector<2x384xf32> to vector<2x128xf32>
    %262 = vector.extract_strided_slice %258 {offsets = [0, 128], sizes = [2, 128], strides = [1, 1]} : vector<2x384xf32> to vector<2x128xf32>
    %263 = vector.extract_strided_slice %258 {offsets = [0, 256], sizes = [2, 128], strides = [1, 1]} : vector<2x384xf32> to vector<2x128xf32>
    %264 = arith.mulf %262, %221 : vector<2x128xf32>
    %265 = arith.mulf %261, %260 : vector<2x128xf32>
    %266 = arith.addf %264, %265 : vector<2x128xf32>
    %267 = math.tanh %266 : vector<2x128xf32>
    %268 = arith.mulf %263, %267 : vector<2x128xf32>
    %cst_62 = arith.constant 4.000000e+00 : f32
    %269 = vector.broadcast %cst_62 : f32 to vector<2x1xf32>
    %270 = arith.cmpf oeq, %41, %269 : vector<2x1xf32>
    %271 = vector.shape_cast %270 : vector<2x1xi1> to vector<2x1xi1>
    %272 = vector.broadcast %271 : vector<2x1xi1> to vector<2x128xi1>
    %273 = arith.select %272, %268, %228 : vector<2x128xi1>, vector<2x128xf32>
    %274 = vector.extract_strided_slice %28 {offsets = [0, 5, 0], sizes = [2, 1, 512], strides = [1, 1, 1]} : vector<2x8x512xf32> to vector<2x1x512xf32>
    %275 = vector.shape_cast %274 : vector<2x1x512xf32> to vector<2x512xf32>
    %cst_63 = arith.constant dense<0.000000e+00> : vector<2x512xf32>
    %276 = tpu.matmul %268, %44, %cst_63 {dimension_numbers = #tpu.dot_dimension_numbers<[1], [0], [0], [1], [0, 0, 1, 1], [], []>} : vector<2x128xf32>, vector<128x512xf32>, vector<2x512xf32> -> vector<2x512xf32>
    %cst_64 = arith.constant dense<0.000000e+00> : vector<2x512xf32>
    %277 = tpu.matmul %249, %42, %cst_64 {dimension_numbers = #tpu.dot_dimension_numbers<[1], [0], [0], [1], [0, 0, 1, 1], [], []>} : vector<2x128xf32>, vector<128x512xf32>, vector<2x512xf32> -> vector<2x512xf32>
    %278 = arith.addf %275, %277 : vector<2x512xf32>
    %279 = vector.extract_strided_slice %278 {offsets = [0, 0], sizes = [2, 384], strides = [1, 1]} : vector<2x512xf32> to vector<2x384xf32>
    %280 = arith.negf %279 : vector<2x384xf32>
    %281 = math.exp %280 : vector<2x384xf32>
    %cst_65 = arith.constant 1.000000e+00 : f32
    %282 = vector.broadcast %cst_65 : f32 to vector<2x384xf32>
    %283 = arith.addf %282, %281 : vector<2x384xf32>
    %284 = arith.divf %282, %283 : vector<2x384xf32>
    %285 = vector.extract_strided_slice %278 {offsets = [0, 384], sizes = [2, 128], strides = [1, 1]} : vector<2x512xf32> to vector<2x128xf32>
    %286 = math.tanh %285 : vector<2x128xf32>
    %287 = vector.extract_strided_slice %284 {offsets = [0, 0], sizes = [2, 128], strides = [1, 1]} : vector<2x384xf32> to vector<2x128xf32>
    %288 = vector.extract_strided_slice %284 {offsets = [0, 128], sizes = [2, 128], strides = [1, 1]} : vector<2x384xf32> to vector<2x128xf32>
    %289 = vector.extract_strided_slice %284 {offsets = [0, 256], sizes = [2, 128], strides = [1, 1]} : vector<2x384xf32> to vector<2x128xf32>
    %290 = arith.mulf %288, %247 : vector<2x128xf32>
    %291 = arith.mulf %287, %286 : vector<2x128xf32>
    %292 = arith.addf %290, %291 : vector<2x128xf32>
    %293 = math.tanh %292 : vector<2x128xf32>
    %294 = arith.mulf %289, %293 : vector<2x128xf32>
    %cst_66 = arith.constant dense<0.000000e+00> : vector<2x512xf32>
    %295 = tpu.matmul %294, %43, %cst_66 {dimension_numbers = #tpu.dot_dimension_numbers<[1], [0], [0], [1], [0, 0, 1, 1], [], []>} : vector<2x128xf32>, vector<128x512xf32>, vector<2x512xf32> -> vector<2x512xf32>
    %296 = arith.addf %295, %276 : vector<2x512xf32>
    %297 = arith.addf %296, %47 : vector<2x512xf32>
    %298 = vector.extract_strided_slice %297 {offsets = [0, 0], sizes = [2, 384], strides = [1, 1]} : vector<2x512xf32> to vector<2x384xf32>
    %299 = arith.negf %298 : vector<2x384xf32>
    %300 = math.exp %299 : vector<2x384xf32>
    %cst_67 = arith.constant 1.000000e+00 : f32
    %301 = vector.broadcast %cst_67 : f32 to vector<2x384xf32>
    %302 = arith.addf %301, %300 : vector<2x384xf32>
    %303 = arith.divf %301, %302 : vector<2x384xf32>
    %304 = vector.extract_strided_slice %297 {offsets = [0, 384], sizes = [2, 128], strides = [1, 1]} : vector<2x512xf32> to vector<2x128xf32>
    %305 = math.tanh %304 : vector<2x128xf32>
    %306 = vector.extract_strided_slice %303 {offsets = [0, 0], sizes = [2, 128], strides = [1, 1]} : vector<2x384xf32> to vector<2x128xf32>
    %307 = vector.extract_strided_slice %303 {offsets = [0, 128], sizes = [2, 128], strides = [1, 1]} : vector<2x384xf32> to vector<2x128xf32>
    %308 = vector.extract_strided_slice %303 {offsets = [0, 256], sizes = [2, 128], strides = [1, 1]} : vector<2x384xf32> to vector<2x128xf32>
    %309 = arith.mulf %307, %266 : vector<2x128xf32>
    %310 = arith.mulf %306, %305 : vector<2x128xf32>
    %311 = arith.addf %309, %310 : vector<2x128xf32>
    %312 = math.tanh %311 : vector<2x128xf32>
    %313 = arith.mulf %308, %312 : vector<2x128xf32>
    %cst_68 = arith.constant 5.000000e+00 : f32
    %314 = vector.broadcast %cst_68 : f32 to vector<2x1xf32>
    %315 = arith.cmpf oeq, %41, %314 : vector<2x1xf32>
    %316 = vector.shape_cast %315 : vector<2x1xi1> to vector<2x1xi1>
    %317 = vector.broadcast %316 : vector<2x1xi1> to vector<2x128xi1>
    %318 = arith.select %317, %313, %273 : vector<2x128xi1>, vector<2x128xf32>
    %319 = vector.extract_strided_slice %28 {offsets = [0, 6, 0], sizes = [2, 1, 512], strides = [1, 1, 1]} : vector<2x8x512xf32> to vector<2x1x512xf32>
    %320 = vector.shape_cast %319 : vector<2x1x512xf32> to vector<2x512xf32>
    %cst_69 = arith.constant dense<0.000000e+00> : vector<2x512xf32>
    %321 = tpu.matmul %313, %44, %cst_69 {dimension_numbers = #tpu.dot_dimension_numbers<[1], [0], [0], [1], [0, 0, 1, 1], [], []>} : vector<2x128xf32>, vector<128x512xf32>, vector<2x512xf32> -> vector<2x512xf32>
    %cst_70 = arith.constant dense<0.000000e+00> : vector<2x512xf32>
    %322 = tpu.matmul %294, %42, %cst_70 {dimension_numbers = #tpu.dot_dimension_numbers<[1], [0], [0], [1], [0, 0, 1, 1], [], []>} : vector<2x128xf32>, vector<128x512xf32>, vector<2x512xf32> -> vector<2x512xf32>
    %323 = arith.addf %320, %322 : vector<2x512xf32>
    %324 = vector.extract_strided_slice %323 {offsets = [0, 0], sizes = [2, 384], strides = [1, 1]} : vector<2x512xf32> to vector<2x384xf32>
    %325 = arith.negf %324 : vector<2x384xf32>
    %326 = math.exp %325 : vector<2x384xf32>
    %cst_71 = arith.constant 1.000000e+00 : f32
    %327 = vector.broadcast %cst_71 : f32 to vector<2x384xf32>
    %328 = arith.addf %327, %326 : vector<2x384xf32>
    %329 = arith.divf %327, %328 : vector<2x384xf32>
    %330 = vector.extract_strided_slice %323 {offsets = [0, 384], sizes = [2, 128], strides = [1, 1]} : vector<2x512xf32> to vector<2x128xf32>
    %331 = math.tanh %330 : vector<2x128xf32>
    %332 = vector.extract_strided_slice %329 {offsets = [0, 0], sizes = [2, 128], strides = [1, 1]} : vector<2x384xf32> to vector<2x128xf32>
    %333 = vector.extract_strided_slice %329 {offsets = [0, 128], sizes = [2, 128], strides = [1, 1]} : vector<2x384xf32> to vector<2x128xf32>
    %334 = vector.extract_strided_slice %329 {offsets = [0, 256], sizes = [2, 128], strides = [1, 1]} : vector<2x384xf32> to vector<2x128xf32>
    %335 = arith.mulf %333, %292 : vector<2x128xf32>
    %336 = arith.mulf %332, %331 : vector<2x128xf32>
    %337 = arith.addf %335, %336 : vector<2x128xf32>
    %338 = math.tanh %337 : vector<2x128xf32>
    %339 = arith.mulf %334, %338 : vector<2x128xf32>
    %cst_72 = arith.constant dense<0.000000e+00> : vector<2x512xf32>
    %340 = tpu.matmul %339, %43, %cst_72 {dimension_numbers = #tpu.dot_dimension_numbers<[1], [0], [0], [1], [0, 0, 1, 1], [], []>} : vector<2x128xf32>, vector<128x512xf32>, vector<2x512xf32> -> vector<2x512xf32>
    %341 = arith.addf %340, %321 : vector<2x512xf32>
    %342 = arith.addf %341, %47 : vector<2x512xf32>
    %343 = vector.extract_strided_slice %342 {offsets = [0, 0], sizes = [2, 384], strides = [1, 1]} : vector<2x512xf32> to vector<2x384xf32>
    %344 = arith.negf %343 : vector<2x384xf32>
    %345 = math.exp %344 : vector<2x384xf32>
    %cst_73 = arith.constant 1.000000e+00 : f32
    %346 = vector.broadcast %cst_73 : f32 to vector<2x384xf32>
    %347 = arith.addf %346, %345 : vector<2x384xf32>
    %348 = arith.divf %346, %347 : vector<2x384xf32>
    %349 = vector.extract_strided_slice %342 {offsets = [0, 384], sizes = [2, 128], strides = [1, 1]} : vector<2x512xf32> to vector<2x128xf32>
    %350 = math.tanh %349 : vector<2x128xf32>
    %351 = vector.extract_strided_slice %348 {offsets = [0, 0], sizes = [2, 128], strides = [1, 1]} : vector<2x384xf32> to vector<2x128xf32>
    %352 = vector.extract_strided_slice %348 {offsets = [0, 128], sizes = [2, 128], strides = [1, 1]} : vector<2x384xf32> to vector<2x128xf32>
    %353 = vector.extract_strided_slice %348 {offsets = [0, 256], sizes = [2, 128], strides = [1, 1]} : vector<2x384xf32> to vector<2x128xf32>
    %354 = arith.mulf %352, %311 : vector<2x128xf32>
    %355 = arith.mulf %351, %350 : vector<2x128xf32>
    %356 = arith.addf %354, %355 : vector<2x128xf32>
    %357 = math.tanh %356 : vector<2x128xf32>
    %358 = arith.mulf %353, %357 : vector<2x128xf32>
    %cst_74 = arith.constant 6.000000e+00 : f32
    %359 = vector.broadcast %cst_74 : f32 to vector<2x1xf32>
    %360 = arith.cmpf oeq, %41, %359 : vector<2x1xf32>
    %361 = vector.shape_cast %360 : vector<2x1xi1> to vector<2x1xi1>
    %362 = vector.broadcast %361 : vector<2x1xi1> to vector<2x128xi1>
    %363 = arith.select %362, %358, %318 : vector<2x128xi1>, vector<2x128xf32>
    %364 = vector.extract_strided_slice %28 {offsets = [0, 7, 0], sizes = [2, 1, 512], strides = [1, 1, 1]} : vector<2x8x512xf32> to vector<2x1x512xf32>
    %365 = vector.shape_cast %364 : vector<2x1x512xf32> to vector<2x512xf32>
    %cst_75 = arith.constant dense<0.000000e+00> : vector<2x512xf32>
    %366 = tpu.matmul %358, %44, %cst_75 {dimension_numbers = #tpu.dot_dimension_numbers<[1], [0], [0], [1], [0, 0, 1, 1], [], []>} : vector<2x128xf32>, vector<128x512xf32>, vector<2x512xf32> -> vector<2x512xf32>
    %cst_76 = arith.constant dense<0.000000e+00> : vector<2x512xf32>
    %367 = tpu.matmul %339, %42, %cst_76 {dimension_numbers = #tpu.dot_dimension_numbers<[1], [0], [0], [1], [0, 0, 1, 1], [], []>} : vector<2x128xf32>, vector<128x512xf32>, vector<2x512xf32> -> vector<2x512xf32>
    %368 = arith.addf %365, %367 : vector<2x512xf32>
    %369 = vector.extract_strided_slice %368 {offsets = [0, 0], sizes = [2, 384], strides = [1, 1]} : vector<2x512xf32> to vector<2x384xf32>
    %370 = arith.negf %369 : vector<2x384xf32>
    %371 = math.exp %370 : vector<2x384xf32>
    %cst_77 = arith.constant 1.000000e+00 : f32
    %372 = vector.broadcast %cst_77 : f32 to vector<2x384xf32>
    %373 = arith.addf %372, %371 : vector<2x384xf32>
    %374 = arith.divf %372, %373 : vector<2x384xf32>
    %375 = vector.extract_strided_slice %368 {offsets = [0, 384], sizes = [2, 128], strides = [1, 1]} : vector<2x512xf32> to vector<2x128xf32>
    %376 = math.tanh %375 : vector<2x128xf32>
    %377 = vector.extract_strided_slice %374 {offsets = [0, 0], sizes = [2, 128], strides = [1, 1]} : vector<2x384xf32> to vector<2x128xf32>
    %378 = vector.extract_strided_slice %374 {offsets = [0, 128], sizes = [2, 128], strides = [1, 1]} : vector<2x384xf32> to vector<2x128xf32>
    %379 = vector.extract_strided_slice %374 {offsets = [0, 256], sizes = [2, 128], strides = [1, 1]} : vector<2x384xf32> to vector<2x128xf32>
    %380 = arith.mulf %378, %337 : vector<2x128xf32>
    %381 = arith.mulf %377, %376 : vector<2x128xf32>
    %382 = arith.addf %380, %381 : vector<2x128xf32>
    %383 = math.tanh %382 : vector<2x128xf32>
    %384 = arith.mulf %379, %383 : vector<2x128xf32>
    %cst_78 = arith.constant dense<0.000000e+00> : vector<2x512xf32>
    %385 = tpu.matmul %384, %43, %cst_78 {dimension_numbers = #tpu.dot_dimension_numbers<[1], [0], [0], [1], [0, 0, 1, 1], [], []>} : vector<2x128xf32>, vector<128x512xf32>, vector<2x512xf32> -> vector<2x512xf32>
    %386 = arith.addf %385, %366 : vector<2x512xf32>
    %387 = arith.addf %386, %47 : vector<2x512xf32>
    %388 = vector.extract_strided_slice %387 {offsets = [0, 0], sizes = [2, 384], strides = [1, 1]} : vector<2x512xf32> to vector<2x384xf32>
    %389 = arith.negf %388 : vector<2x384xf32>
    %390 = math.exp %389 : vector<2x384xf32>
    %cst_79 = arith.constant 1.000000e+00 : f32
    %391 = vector.broadcast %cst_79 : f32 to vector<2x384xf32>
    %392 = arith.addf %391, %390 : vector<2x384xf32>
    %393 = arith.divf %391, %392 : vector<2x384xf32>
    %394 = vector.extract_strided_slice %387 {offsets = [0, 384], sizes = [2, 128], strides = [1, 1]} : vector<2x512xf32> to vector<2x128xf32>
    %395 = math.tanh %394 : vector<2x128xf32>
    %396 = vector.extract_strided_slice %393 {offsets = [0, 0], sizes = [2, 128], strides = [1, 1]} : vector<2x384xf32> to vector<2x128xf32>
    %397 = vector.extract_strided_slice %393 {offsets = [0, 128], sizes = [2, 128], strides = [1, 1]} : vector<2x384xf32> to vector<2x128xf32>
    %398 = vector.extract_strided_slice %393 {offsets = [0, 256], sizes = [2, 128], strides = [1, 1]} : vector<2x384xf32> to vector<2x128xf32>
    %399 = arith.mulf %397, %356 : vector<2x128xf32>
    %400 = arith.mulf %396, %395 : vector<2x128xf32>
    %401 = arith.addf %399, %400 : vector<2x128xf32>
    %402 = math.tanh %401 : vector<2x128xf32>
    %403 = arith.mulf %398, %402 : vector<2x128xf32>
    %cst_80 = arith.constant 7.000000e+00 : f32
    %404 = vector.broadcast %cst_80 : f32 to vector<2x1xf32>
    %405 = arith.cmpf oeq, %41, %404 : vector<2x1xf32>
    %406 = vector.shape_cast %405 : vector<2x1xi1> to vector<2x1xi1>
    %407 = vector.broadcast %406 : vector<2x1xi1> to vector<2x128xi1>
    %408 = arith.select %407, %403, %363 : vector<2x128xi1>, vector<2x128xf32>
    %409 = vector.extract_strided_slice %408 {offsets = [0, 0], sizes = [2, 64], strides = [1, 1]} : vector<2x128xf32> to vector<2x64xf32>
    %c0_81 = arith.constant 0 : index
    %c0_82 = arith.constant 0 : index
    %410 = vector.load %arg14[%c0_81, %c0_82] : memref<64x64xf32, #tpu.memory_space<vmem>>, vector<64x64xf32>
    %cst_83 = arith.constant dense<0.000000e+00> : vector<2x64xf32>
    %411 = tpu.matmul %409, %410, %cst_83 {dimension_numbers = #tpu.dot_dimension_numbers<[1], [0], [0], [1], [0, 0, 1, 1], [], []>} : vector<2x64xf32>, vector<64x64xf32>, vector<2x64xf32> -> vector<2x64xf32>
    %c0_84 = arith.constant 0 : index
    %c0_85 = arith.constant 0 : index
    %412 = vector.load %arg15[%c0_84, %c0_85] : memref<1x64xf32, #tpu.memory_space<vmem>>, vector<1x64xf32>
    %413 = vector.broadcast %412 : vector<1x64xf32> to vector<2x64xf32>
    %414 = arith.addf %411, %413 : vector<2x64xf32>
    %415 = math.tanh %12 : vector<32x64xf32>
    %c0_86 = arith.constant 0 : index
    %c0_87 = arith.constant 0 : index
    %416 = vector.load %arg16[%c0_86, %c0_87] : memref<64x1xf32, #tpu.memory_space<vmem>>, vector<64x1xf32>
    %cst_88 = arith.constant dense<0.000000e+00> : vector<32x1xf32>
    %417 = tpu.matmul %415, %416, %cst_88 {dimension_numbers = #tpu.dot_dimension_numbers<[1], [0], [0], [1], [0, 0, 1, 1], [], []>} : vector<32x64xf32>, vector<64x1xf32>, vector<32x1xf32> -> vector<32x1xf32>
    %418 = math.tanh %414 : vector<2x64xf32>
    %c0_89 = arith.constant 0 : index
    %c0_90 = arith.constant 0 : index
    %419 = vector.load %arg17[%c0_89, %c0_90] : memref<64x1xf32, #tpu.memory_space<vmem>>, vector<64x1xf32>
    %cst_91 = arith.constant dense<0.000000e+00> : vector<2x1xf32>
    %420 = tpu.matmul %418, %419, %cst_91 {dimension_numbers = #tpu.dot_dimension_numbers<[1], [0], [0], [1], [0, 0, 1, 1], [], []>} : vector<2x64xf32>, vector<64x1xf32>, vector<2x1xf32> -> vector<2x1xf32>
    %421 = vector.shape_cast %417 : vector<32x1xf32> to vector<2x16x1xf32>
    %422 = vector.shape_cast %420 : vector<2x1xf32> to vector<2x1x1xf32>
    %423 = vector.broadcast %422 : vector<2x1x1xf32> to vector<2x16x1xf32>
    %424 = arith.addf %421, %423 : vector<2x16x1xf32>
    %c0_92 = arith.constant 0 : index
    %c0_93 = arith.constant 0 : index
    %425 = vector.load %arg18[%c0_92, %c0_93] : memref<1x1xf32, #tpu.memory_space<vmem>>, vector<1x1xf32>
    %426 = vector.shape_cast %425 : vector<1x1xf32> to vector<1x1x1xf32>
    %427 = vector.broadcast %426 : vector<1x1x1xf32> to vector<2x16x1xf32>
    %428 = arith.addf %424, %427 : vector<2x16x1xf32>
    %429 = tpu.iota {dimensions = array<i32: 1>} : vector<2x16x1xi32>
    %c15_i32 = arith.constant 15 : i32
    %430 = vector.broadcast %c15_i32 : i32 to vector<2x16x1xi32>
    %431 = arith.cmpi slt, %429, %430 : vector<2x16x1xi32>
    %cst_94 = arith.constant -1.000000e+30 : f32
    %432 = vector.broadcast %cst_94 : f32 to vector<2x16x1xf32>
    %433 = arith.select %431, %428, %432 : vector<2x16x1xi1>, vector<2x16x1xf32>
    %cst_95 = arith.constant dense<0xFF800000> : vector<2x1xf32>
    %434 = vector.multi_reduction <maximumf>, %433, %cst_95 [1] : vector<2x16x1xf32> to vector<2x1xf32>
    %435 = vector.shape_cast %434 : vector<2x1xf32> to vector<2x1x1xf32>
    %436 = vector.broadcast %435 : vector<2x1x1xf32> to vector<2x16x1xf32>
    %437 = arith.subf %433, %436 : vector<2x16x1xf32>
    %438 = math.exp %437 : vector<2x16x1xf32>
    %cst_96 = arith.constant dense<0.000000e+00> : vector<2x1xf32>
    %439 = vector.multi_reduction <add>, %438, %cst_96 [1] : vector<2x16x1xf32> to vector<2x1xf32>
    %440 = vector.shape_cast %439 : vector<2x1xf32> to vector<2x1x1xf32>
    %441 = tpu.reciprocal %440 {approx = true} : vector<2x1x1xf32> -> vector<2x1x1xf32>
    %442 = vector.broadcast %441 : vector<2x1x1xf32> to vector<2x16x1xf32>
    %443 = arith.mulf %438, %442 : vector<2x16x1xf32>
    %c0_97 = arith.constant 0 : index
    %c0_98 = arith.constant 0 : index
    %c0_99 = arith.constant 0 : index
    %444 = vector.load %arg24[%c0_97, %c0_98, %c0_99] : memref<2x16x1xf32, #tpu.memory_space<vmem>>, vector<2x16x1xf32>
    tpu.vector_store %arg24[%c0_97, %c0_98, %c0_99], %443 {strides = array<i32>} : memref<2x16x1xf32, #tpu.memory_space<vmem>>, vector<2x16x1xf32>,
    %445 = vector.shape_cast %7 : vector<32x64xf32> to vector<2x16x64xf32>
    %446 = vector.broadcast %443 : vector<2x16x1xf32> to vector<2x16x64xf32>
    %447 = arith.mulf %446, %445 : vector<2x16x64xf32>
    %cst_100 = arith.constant dense<0.000000e+00> : vector<2x64xf32>
    %448 = vector.multi_reduction <add>, %447, %cst_100 [1] : vector<2x16x64xf32> to vector<2x64xf32>
    %449 = arith.mulf %409, %448 : vector<2x64xf32>
    %c0_101 = arith.constant 0 : index
    %c0_102 = arith.constant 0 : index
    %450 = vector.load %arg19[%c0_101, %c0_102] : memref<64x64xf32, #tpu.memory_space<vmem>>, vector<64x64xf32>
    %cst_103 = arith.constant dense<0.000000e+00> : vector<2x64xf32>
    %451 = tpu.matmul %449, %450, %cst_103 {dimension_numbers = #tpu.dot_dimension_numbers<[1], [0], [0], [1], [0, 0, 1, 1], [], []>} : vector<2x64xf32>, vector<64x64xf32>, vector<2x64xf32> -> vector<2x64xf32>
    %c0_104 = arith.constant 0 : index
    %c0_105 = arith.constant 0 : index
    %452 = vector.load %arg20[%c0_104, %c0_105] : memref<1x64xf32, #tpu.memory_space<vmem>>, vector<1x64xf32>
    %453 = vector.broadcast %452 : vector<1x64xf32> to vector<2x64xf32>
    %454 = arith.addf %451, %453 : vector<2x64xf32>
    %cst_106 = arith.constant 0.000000e+00 : f32
    %455 = vector.broadcast %cst_106 : f32 to vector<2x64xf32>
    %456 = arith.maximumf %454, %455 : vector<2x64xf32>
    %c0_107 = arith.constant 0 : index
    %c0_108 = arith.constant 0 : index
    %457 = vector.load %arg21[%c0_107, %c0_108] : memref<64x10xf32, #tpu.memory_space<vmem>>, vector<64x10xf32>
    %cst_109 = arith.constant dense<0.000000e+00> : vector<2x10xf32>
    %458 = tpu.matmul %456, %457, %cst_109 {dimension_numbers = #tpu.dot_dimension_numbers<[1], [0], [0], [1], [0, 0, 1, 1], [], []>} : vector<2x64xf32>, vector<64x10xf32>, vector<2x10xf32> -> vector<2x10xf32>
    %c0_110 = arith.constant 0 : index
    %c0_111 = arith.constant 0 : index
    %459 = vector.load %arg22[%c0_110, %c0_111] : memref<1x10xf32, #tpu.memory_space<vmem>>, vector<1x10xf32>
    %460 = vector.broadcast %459 : vector<1x10xf32> to vector<2x10xf32>
    %461 = arith.addf %458, %460 : vector<2x10xf32>
    %c0_112 = arith.constant 0 : index
    %c0_113 = arith.constant 0 : index
    %462 = vector.load %arg23[%c0_112, %c0_113] : memref<2x10xf32, #tpu.memory_space<vmem>>, vector<2x10xf32>
    tpu.vector_store %arg23[%c0_112, %c0_113], %461 {strides = array<i32>} : memref<2x10xf32, #tpu.memory_space<vmem>>, vector<2x10xf32>,
    return
  }
  func.func @transform_0(%arg0: i32) -> (i32, i32) {
    %c0_i32 = arith.constant 0 : i32
    %c0_i32_0 = arith.constant 0 : i32
    %c0_i32_1 = arith.constant 0 : i32
    return %c0_i32, %c0_i32_0 : i32, i32
  }
  func.func @transform_1(%arg0: i32) -> (i32, i32) {
    %c0_i32 = arith.constant 0 : i32
    %c0_i32_0 = arith.constant 0 : i32
    %c0_i32_1 = arith.constant 0 : i32
    return %c0_i32, %c0_i32_0 : i32, i32
  }
  func.func @transform_2(%arg0: i32) -> (i32, i32) {
    %c0_i32 = arith.constant 0 : i32
    %c0_i32_0 = arith.constant 0 : i32
    %c0_i32_1 = arith.constant 0 : i32
    return %c0_i32, %c0_i32_0 : i32, i32
  }
  func.func @transform_3(%arg0: i32) -> (i32, i32) {
    %c0_i32 = arith.constant 0 : i32
    %c0_i32_0 = arith.constant 0 : i32
    %c0_i32_1 = arith.constant 0 : i32
    return %c0_i32, %c0_i32_0 : i32, i32
  }
  func.func @transform_4(%arg0: i32) -> (i32, i32) {
    %c0_i32 = arith.constant 0 : i32
    %c0_i32_0 = arith.constant 0 : i32
    %c0_i32_1 = arith.constant 0 : i32
    return %c0_i32, %c0_i32_0 : i32, i32
  }
  func.func @transform_5(%arg0: i32) -> (i32, i32) {
    %c0_i32 = arith.constant 0 : i32
    %c0_i32_0 = arith.constant 0 : i32
    %c0_i32_1 = arith.constant 0 : i32
    return %c0_i32, %c0_i32_0 : i32, i32
  }
  func.func @transform_6(%arg0: i32) -> (i32, i32) {
    %c0_i32 = arith.constant 0 : i32
    %c0_i32_0 = arith.constant 0 : i32
    %c0_i32_1 = arith.constant 0 : i32
    return %c0_i32, %c0_i32_0 : i32, i32
  }
  func.func @transform_7(%arg0: i32) -> (i32, i32) {
    %c0_i32 = arith.constant 0 : i32
    %c0_i32_0 = arith.constant 0 : i32
    %c0_i32_1 = arith.constant 0 : i32
    return %c0_i32, %c0_i32_0 : i32, i32
  }
  func.func @transform_8(%arg0: i32) -> (i32, i32) {
    %c0_i32 = arith.constant 0 : i32
    %c0_i32_0 = arith.constant 0 : i32
    %c0_i32_1 = arith.constant 0 : i32
    return %c0_i32, %c0_i32_0 : i32, i32
  }
  func.func @transform_9(%arg0: i32) -> (i32, i32) {
    %c0_i32 = arith.constant 0 : i32
    %c0_i32_0 = arith.constant 0 : i32
    %c0_i32_1 = arith.constant 0 : i32
    return %c0_i32, %c0_i32_0 : i32, i32
  }
  func.func @transform_10(%arg0: i32) -> (i32, i32) {
    %c0_i32 = arith.constant 0 : i32
    %c0_i32_0 = arith.constant 0 : i32
    %c0_i32_1 = arith.constant 0 : i32
    return %c0_i32, %c0_i32_0 : i32, i32
  }
  func.func @transform_11(%arg0: i32) -> (i32, i32) {
    %c0_i32 = arith.constant 0 : i32
    %c0_i32_0 = arith.constant 0 : i32
    %c0_i32_1 = arith.constant 0 : i32
    return %c0_i32, %c0_i32_0 : i32, i32
  }
  func.func @transform_12(%arg0: i32) -> (i32, i32) {
    %c0_i32 = arith.constant 0 : i32
    %c0_i32_0 = arith.constant 0 : i32
    %c0_i32_1 = arith.constant 0 : i32
    return %c0_i32, %c0_i32_0 : i32, i32
  }
  func.func @transform_13(%arg0: i32) -> (i32, i32) {
    %c0_i32 = arith.constant 0 : i32
    %c0_i32_0 = arith.constant 0 : i32
    %c0_i32_1 = arith.constant 0 : i32
    return %c0_i32, %c0_i32_0 : i32, i32
  }
  func.func @transform_14(%arg0: i32) -> (i32, i32) {
    %c0_i32 = arith.constant 0 : i32
    %c0_i32_0 = arith.constant 0 : i32
    %c0_i32_1 = arith.constant 0 : i32
    return %c0_i32, %c0_i32_0 : i32, i32
  }
  func.func @transform_15(%arg0: i32) -> (i32, i32) {
    %c0_i32 = arith.constant 0 : i32
    %c0_i32_0 = arith.constant 0 : i32
    %c0_i32_1 = arith.constant 0 : i32
    return %c0_i32, %c0_i32_0 : i32, i32
  }
  func.func @transform_16(%arg0: i32) -> (i32, i32) {
    %c0_i32 = arith.constant 0 : i32
    %c0_i32_0 = arith.constant 0 : i32
    %c0_i32_1 = arith.constant 0 : i32
    return %c0_i32, %c0_i32_0 : i32, i32
  }
  func.func @transform_17(%arg0: i32) -> (i32, i32) {
    %c0_i32 = arith.constant 0 : i32
    %c0_i32_0 = arith.constant 0 : i32
    %c0_i32_1 = arith.constant 0 : i32
    return %c0_i32, %c0_i32_0 : i32, i32
  }
  func.func @transform_18(%arg0: i32) -> (i32, i32) {
    %c0_i32 = arith.constant 0 : i32
    %c0_i32_0 = arith.constant 0 : i32
    %c0_i32_1 = arith.constant 0 : i32
    return %c0_i32, %c0_i32_0 : i32, i32
  }
  func.func @transform_19(%arg0: i32) -> (i32, i32) {
    %c0_i32 = arith.constant 0 : i32
    %c0_i32_0 = arith.constant 0 : i32
    %c0_i32_1 = arith.constant 0 : i32
    return %c0_i32, %c0_i32_0 : i32, i32
  }
  func.func @transform_20(%arg0: i32) -> (i32, i32) {
    %c0_i32 = arith.constant 0 : i32
    %c0_i32_0 = arith.constant 0 : i32
    %c0_i32_1 = arith.constant 0 : i32
    return %c0_i32, %c0_i32_0 : i32, i32
  }
  func.func @transform_21(%arg0: i32) -> (i32, i32) {
    %c0_i32 = arith.constant 0 : i32
    %c0_i32_0 = arith.constant 0 : i32
    %c0_i32_1 = arith.constant 0 : i32
    return %c0_i32, %c0_i32_0 : i32, i32
  }
  func.func @transform_22(%arg0: i32) -> (i32, i32) {
    %c0_i32 = arith.constant 0 : i32
    %c0_i32_0 = arith.constant 0 : i32
    %c0_i32_1 = arith.constant 0 : i32
    return %c0_i32, %c0_i32_0 : i32, i32
  }
  func.func @transform_23(%arg0: i32) -> (i32, i32, i32) {
    %c0_i32 = arith.constant 0 : i32
    %c0_i32_0 = arith.constant 0 : i32
    %c0_i32_1 = arith.constant 0 : i32
    %c0_i32_2 = arith.constant 0 : i32
    return %c0_i32, %c0_i32_0, %c0_i32_1 : i32, i32, i32
  }
}

</mosaic_0001>

<llo_original>
// kernel: vqa_forward.1
$region0: #{vqa_forward.1}
  #allocation0 [shape = 'u32[]', space=smem, size = 0x4, offset = 0x4, fixed_abs, tag = 'smem constant byte address 0x4 - core index']
  #allocation1 [shape = 'u32[144,128]{1,0:T(1,128)}', space=vmem, size = 0x12000, scoped, tag = 'internal scratch']
  #allocation2 [shape = 'f32[1,1]{1,0:T(1,128)S(1)}', space=vmem, size = 0x200, scoped, tag = 'scoped memory for vqa_forward.1']
  %s0 = inlined_call_operand.vmem [shape: bf16[32,3200], index: 0, kind: input, shape index: {}]
  %s1 = inlined_call_operand.vmem [shape: bf16[3200,64], index: 1, kind: input, shape index: {}]
  %s2 = inlined_call_operand.vmem [shape: f32[1,64], index: 2, kind: input, shape index: {}]
  %s3 = inlined_call_operand.vmem [shape: f32[64,64], index: 3, kind: input, shape index: {}]
  %s4 = inlined_call_operand.vmem [shape: f32[1,64], index: 4, kind: input, shape index: {}]
  %s5 = inlined_call_operand.vmem [shape: s32[2,8], index: 5, kind: input, shape index: {}]
  %s6 = inlined_call_operand.vmem [shape: f32[20,64], index: 6, kind: input, shape index: {}]
  %s7 = inlined_call_operand.vmem [shape: f32[64,512], index: 7, kind: input, shape index: {}]
  %s8 = inlined_call_operand.vmem [shape: f32[1,512], index: 8, kind: input, shape index: {}]
  %s9 = inlined_call_operand.vmem [shape: f32[128,512], index: 9, kind: input, shape index: {}]
  %s10 = inlined_call_operand.vmem [shape: f32[128,512], index: 10, kind: input, shape index: {}]
  %s11 = inlined_call_operand.vmem [shape: f32[128,512], index: 11, kind: input, shape index: {}]
  %s12 = inlined_call_operand.vmem [shape: f32[1,512], index: 12, kind: input, shape index: {}]
  %s13 = inlined_call_operand.vmem [shape: f32[64,64], index: 13, kind: input, shape index: {}]
  %s14 = inlined_call_operand.vmem [shape: f32[1,64], index: 14, kind: input, shape index: {}]
  %s15 = inlined_call_operand.vmem [shape: f32[64,1], index: 15, kind: input, shape index: {}]
  %s16 = inlined_call_operand.vmem [shape: f32[64,1], index: 16, kind: input, shape index: {}]
  %s17 = inlined_call_operand.<no memory space> [shape: f32[1,1], index: 17, kind: input, shape index: {}]
  %s18 = inlined_call_operand.vmem [shape: f32[64,64], index: 18, kind: input, shape index: {}]
  %s19 = inlined_call_operand.vmem [shape: f32[1,64], index: 19, kind: input, shape index: {}]
  %s20 = inlined_call_operand.vmem [shape: f32[64,10], index: 20, kind: input, shape index: {}]
  %s21 = inlined_call_operand.vmem [shape: f32[1,10], index: 21, kind: input, shape index: {}]
  %s22 = inlined_call_operand.hbm [shape: f32[2,10], index: 22, kind: output, shape index: {0}]
  %s23 = inlined_call_operand.vmem [shape: f32[2,16,1], index: 23, kind: output, shape index: {1}]
  %24 = xla_tuple %s22, %s23
  %s25 = sld [smem:[#allocation0]]
  $region106: #{vqa_forward.1} parent=0
    _
  %s27 = ssub.s32 1, %s25
  %s28 = scalar_select 0, %s27, %s25
  %v29 = vstv %s17
  %30 = vst [vmem:[#allocation2] sm:$0x1] %v29
  $region1: #{vqa_forward.1} parent=0
    #allocation3 [shape = 'u8[1024]{0}', space=vmem, size = 0x400, scoped, tag = 'output window, operand 0, single buffered']
    #allocation4 [shape = 's32[1]{0}', space=sflag, size = 0x4, scoped, tag = 'scoped memory for vqa_forward.1']
    %31 = vsyncpa [#allocation4], 0
    // Predicated region
    $region2: #{vqa_forward.1} parent=1 // pred_check
      _
    $region3: #{vqa_forward.1} parent=1 // pred_check_branch
      %33 = sbr.rel (0) target = $region5
    $region4: #{vqa_forward.1} parent=1 // pred_region
      _
    $region5: #{vqa_forward.1} parent=1 // pred_fallthru
      _
    // Predicated region
    $region6: #{vqa_forward.1} parent=1 // pred_check
      _
    $region7: #{vqa_forward.1} parent=1 // pred_check_branch
      %35 = sbr.rel (0) target = $region9
    $region8: #{vqa_forward.1} parent=1 // pred_region
      _
    $region9: #{vqa_forward.1} parent=1 // pred_fallthru
      _
    // Predicated region
    $region10: #{vqa_forward.1} parent=1 // pred_check
      _
    $region11: #{vqa_forward.1} parent=1 // pred_check_branch
      %37 = sbr.rel (0) target = $region13
    $region12: #{vqa_forward.1} parent=1 // pred_region
      _
    $region13: #{vqa_forward.1} parent=1 // pred_fallthru
      _
    // Predicated region
    $region14: #{vqa_forward.1} parent=1 // pred_check
      _
    $region15: #{vqa_forward.1} parent=1 // pred_check_branch
      %39 = sbr.rel (0) target = $region17
    $region16: #{vqa_forward.1} parent=1 // pred_region
      _
    $region17: #{vqa_forward.1} parent=1 // pred_fallthru
      _
    // Predicated region
    $region18: #{vqa_forward.1} parent=1 // pred_check
      _
    $region19: #{vqa_forward.1} parent=1 // pred_check_branch
      %41 = sbr.rel (0) target = $region21
    $region20: #{vqa_forward.1} parent=1 // pred_region
      _
    $region21: #{vqa_forward.1} parent=1 // pred_fallthru
      _
    // Predicated region
    $region22: #{vqa_forward.1} parent=1 // pred_check
      _
    $region23: #{vqa_forward.1} parent=1 // pred_check_branch
      %43 = sbr.rel (0) target = $region25
    $region24: #{vqa_forward.1} parent=1 // pred_region
      _
    $region25: #{vqa_forward.1} parent=1 // pred_fallthru
      _
    // Predicated region
    $region26: #{vqa_forward.1} parent=1 // pred_check
      _
    $region27: #{vqa_forward.1} parent=1 // pred_check_branch
      %45 = sbr.rel (0) target = $region29
    $region28: #{vqa_forward.1} parent=1 // pred_region
      _
    $region29: #{vqa_forward.1} parent=1 // pred_fallthru
      _
    // Predicated region
    $region30: #{vqa_forward.1} parent=1 // pred_check
      _
    $region31: #{vqa_forward.1} parent=1 // pred_check_branch
      %47 = sbr.rel (0) target = $region33
    $region32: #{vqa_forward.1} parent=1 // pred_region
      _
    $region33: #{vqa_forward.1} parent=1 // pred_fallthru
      _
    // Predicated region
    $region34: #{vqa_forward.1} parent=1 // pred_check
      _
    $region35: #{vqa_forward.1} parent=1 // pred_check_branch
      %49 = sbr.rel (0) target = $region37
    $region36: #{vqa_forward.1} parent=1 // pred_region
      _
    $region37: #{vqa_forward.1} parent=1 // pred_fallthru
      _
    // Predicated region
    $region38: #{vqa_forward.1} parent=1 // pred_check
      _
    $region39: #{vqa_forward.1} parent=1 // pred_check_branch
      %51 = sbr.rel (0) target = $region41
    $region40: #{vqa_forward.1} parent=1 // pred_region
      _
    $region41: #{vqa_forward.1} parent=1 // pred_fallthru
      _
    // Predicated region
    $region42: #{vqa_forward.1} parent=1 // pred_check
      _
    $region43: #{vqa_forward.1} parent=1 // pred_check_branch
      %53 = sbr.rel (0) target = $region45
    $region44: #{vqa_forward.1} parent=1 // pred_region
      _
    $region45: #{vqa_forward.1} parent=1 // pred_fallthru
      _
    // Predicated region
    $region46: #{vqa_forward.1} parent=1 // pred_check
      _
    $region47: #{vqa_forward.1} parent=1 // pred_check_branch
      %55 = sbr.rel (0) target = $region49
    $region48: #{vqa_forward.1} parent=1 // pred_region
      _
    $region49: #{vqa_forward.1} parent=1 // pred_fallthru
      _
    // Predicated region
    $region50: #{vqa_forward.1} parent=1 // pred_check
      _
    $region51: #{vqa_forward.1} parent=1 // pred_check_branch
      %57 = sbr.rel (0) target = $region53
    $region52: #{vqa_forward.1} parent=1 // pred_region
      _
    $region53: #{vqa_forward.1} parent=1 // pred_fallthru
      _
    // Predicated region
    $region54: #{vqa_forward.1} parent=1 // pred_check
      _
    $region55: #{vqa_forward.1} parent=1 // pred_check_branch
      %59 = sbr.rel (0) target = $region57
    $region56: #{vqa_forward.1} parent=1 // pred_region
      _
    $region57: #{vqa_forward.1} parent=1 // pred_fallthru
      _
    // Predicated region
    $region58: #{vqa_forward.1} parent=1 // pred_check
      _
    $region59: #{vqa_forward.1} parent=1 // pred_check_branch
      %61 = sbr.rel (0) target = $region61
    $region60: #{vqa_forward.1} parent=1 // pred_region
      _
    $region61: #{vqa_forward.1} parent=1 // pred_fallthru
      _
    // Predicated region
    $region62: #{vqa_forward.1} parent=1 // pred_check
      _
    $region63: #{vqa_forward.1} parent=1 // pred_check_branch
      %63 = sbr.rel (0) target = $region65
    $region64: #{vqa_forward.1} parent=1 // pred_region
      _
    $region65: #{vqa_forward.1} parent=1 // pred_fallthru
      _
    // Predicated region
    $region66: #{vqa_forward.1} parent=1 // pred_check
      _
    $region67: #{vqa_forward.1} parent=1 // pred_check_branch
      %65 = sbr.rel (0) target = $region69
    $region68: #{vqa_forward.1} parent=1 // pred_region
      _
    $region69: #{vqa_forward.1} parent=1 // pred_fallthru
      _
    // Predicated region
    $region70: #{vqa_forward.1} parent=1 // pred_check
      _
    $region71: #{vqa_forward.1} parent=1 // pred_check_branch
      %67 = sbr.rel (0) target = $region73
    $region72: #{vqa_forward.1} parent=1 // pred_region
      _
    $region73: #{vqa_forward.1} parent=1 // pred_fallthru
      _
    // Predicated region
    $region74: #{vqa_forward.1} parent=1 // pred_check
      _
    $region75: #{vqa_forward.1} parent=1 // pred_check_branch
      %69 = sbr.rel (0) target = $region77
    $region76: #{vqa_forward.1} parent=1 // pred_region
      _
    $region77: #{vqa_forward.1} parent=1 // pred_fallthru
      _
    // Predicated region
    $region78: #{vqa_forward.1} parent=1 // pred_check
      _
    $region79: #{vqa_forward.1} parent=1 // pred_check_branch
      %71 = sbr.rel (0) target = $region81
    $region80: #{vqa_forward.1} parent=1 // pred_region
      _
    $region81: #{vqa_forward.1} parent=1 // pred_fallthru
      _
    // Predicated region
    $region82: #{vqa_forward.1} parent=1 // pred_check
      _
    $region83: #{vqa_forward.1} parent=1 // pred_check_branch
      %73 = sbr.rel (0) target = $region85
    $region84: #{vqa_forward.1} parent=1 // pred_region
      _
    $region85: #{vqa_forward.1} parent=1 // pred_fallthru
      _
    // Predicated region
    $region86: #{vqa_forward.1} parent=1 // pred_check
      _
    $region87: #{vqa_forward.1} parent=1 // pred_check_branch
      %75 = sbr.rel (0) target = $region89
    $region88: #{vqa_forward.1} parent=1 // pred_region
      _
    $region89: #{vqa_forward.1} parent=1 // pred_fallthru
      _
    %v77 = vld [vmem:[%s0] sm:$0xff]
    %v78 = vld [vmem:[%s0 + $0x8] sm:$0xff]
    %v79 = vld [vmem:[%s0 + $0x10] sm:$0xff]
    %v80 = vld [vmem:[%s0 + $0x18] sm:$0xff]
    %v81 = vld [vmem:[%s0 + $0x20] sm:$0xff]
    %v82 = vld [vmem:[%s0 + $0x28] sm:$0xff]
    %v83 = vld [vmem:[%s0 + $0x30] sm:$0xff]
    %v84 = vld [vmem:[%s0 + $0x38] sm:$0xff]
    %v85 = vld [vmem:[%s0 + $0x40] sm:$0xff]
    %v86 = vld [vmem:[%s0 + $0x48] sm:$0xff]
    %v87 = vld [vmem:[%s0 + $0x50] sm:$0xff]
    %v88 = vld [vmem:[%s0 + $0x58] sm:$0xff]
    %v89 = vld [vmem:[%s0 + $0x60] sm:$0xf]
    %v90 = vld [vmem:[%s0 + $0x64] sm:$0xff]
    %v91 = vld [vmem:[%s0 + $0x6c] sm:$0xff]
    %v92 = vld [vmem:[%s0 + $0x74] sm:$0xff]
    %v93 = vld [vmem:[%s0 + $0x7c] sm:$0xff]
    %v94 = vld [vmem:[%s0 + $0x84] sm:$0xff]
    %v95 = vld [vmem:[%s0 + $0x8c] sm:$0xff]
    %v96 = vld [vmem:[%s0 + $0x94] sm:$0xff]
    %v97 = vld [vmem:[%s0 + $0x9c] sm:$0xff]
    %v98 = vld [vmem:[%s0 + $0xa4] sm:$0xff]
    %v99 = vld [vmem:[%s0 + $0xac] sm:$0xff]
    %v100 = vld [vmem:[%s0 + $0xb4] sm:$0xff]
    %v101 = vld [vmem:[%s0 + $0xbc] sm:$0xff]
    %v102 = vld [vmem:[%s0 + $0xc4] sm:$0xf]
    %v103 = vld [vmem:[%s0 + $0xc8] sm:$0xff]
    %v104 = vld [vmem:[%s0 + $0xd0] sm:$0xff]
    %v105 = vld [vmem:[%s0 + $0xd8] sm:$0xff]
    %v106 = vld [vmem:[%s0 + $0xe0] sm:$0xff]
    %v107 = vld [vmem:[%s0 + $0xe8] sm:$0xff]
    %v108 = vld [vmem:[%s0 + $0xf0] sm:$0xff]
    %v109 = vld [vmem:[%s0 + $0xf8] sm:$0xff]
    %v110 = vld [vmem:[%s0 + $0x100] sm:$0xff]
    %v111 = vld [vmem:[%s0 + $0x108] sm:$0xff]
    %v112 = vld [vmem:[%s0 + $0x110] sm:$0xff]
    %v113 = vld [vmem:[%s0 + $0x118] sm:$0xff]
    %v114 = vld [vmem:[%s0 + $0x120] sm:$0xff]
    %v115 = vld [vmem:[%s0 + $0x128] sm:$0xf]
    %v116 = vld [vmem:[%s0 + $0x12c] sm:$0xff]
    %v117 = vld [vmem:[%s0 + $0x134] sm:$0xff]
    %v118 = vld [vmem:[%s0 + $0x13c] sm:$0xff]
    %v119 = vld [vmem:[%s0 + $0x144] sm:$0xff]
    %v120 = vld [vmem:[%s0 + $0x14c] sm:$0xff]
    %v121 = vld [vmem:[%s0 + $0x154] sm:$0xff]
    %v122 = vld [vmem:[%s0 + $0x15c] sm:$0xff]
    %v123 = vld [vmem:[%s0 + $0x164] sm:$0xff]
    %v124 = vld [vmem:[%s0 + $0x16c] sm:$0xff]
    %v125 = vld [vmem:[%s0 + $0x174] sm:$0xff]
    %v126 = vld [vmem:[%s0 + $0x17c] sm:$0xff]
    %v127 = vld [vmem:[%s0 + $0x184] sm:$0xff]
    %v128 = vld [vmem:[%s0 + $0x18c] sm:$0xf]
    %v129 = vld [vmem:[%s1] sm:$0xf]
    %v130 = vld [vmem:[%s1 + $0x4] sm:$0xf]
    %v131 = vld [vmem:[%s1 + $0x8] sm:$0xf]
    %v132 = vld [vmem:[%s1 + $0xc] sm:$0xf]
    %v133 = vld [vmem:[%s1 + $0x10] sm:$0xf]
    %v134 = vld [vmem:[%s1 + $0x14] sm:$0xf]
    %v135 = vld [vmem:[%s1 + $0x18] sm:$0xf]
    %v136 = vld [vmem:[%s1 + $0x1c] sm:$0xf]
    %v137 = vld [vmem:[%s1 + $0x20] sm:$0xf]
    %v138 = vld [vmem:[%s1 + $0x24] sm:$0xf]
    %v139 = vld [vmem:[%s1 + $0x28] sm:$0xf]
    %v140 = vld [vmem:[%s1 + $0x2c] sm:$0xf]
    %v141 = vld [vmem:[%s1 + $0x30] sm:$0xf]
    %v142 = vld [vmem:[%s1 + $0x34] sm:$0xf]
    %v143 = vld [vmem:[%s1 + $0x38] sm:$0xf]
    %v144 = vld [vmem:[%s1 + $0x3c] sm:$0xf]
    %v145 = vld [vmem:[%s1 + $0x40] sm:$0xf]
    %v146 = vld [vmem:[%s1 + $0x44] sm:$0xf]
    %v147 = vld [vmem:[%s1 + $0x48] sm:$0xf]
    %v148 = vld [vmem:[%s1 + $0x4c] sm:$0xf]
    %v149 = vld [vmem:[%s1 + $0x50] sm:$0xf]
    %v150 = vld [vmem:[%s1 + $0x54] sm:$0xf]
    %v151 = vld [vmem:[%s1 + $0x58] sm:$0xf]
    %v152 = vld [vmem:[%s1 + $0x5c] sm:$0xf]
    %v153 = vld [vmem:[%s1 + $0x60] sm:$0xf]
    %v154 = vld [vmem:[%s1 + $0x64] sm:$0xf]
    %v155 = vld [vmem:[%s1 + $0x68] sm:$0xf]
    %v156 = vld [vmem:[%s1 + $0x6c] sm:$0xf]
    %v157 = vld [vmem:[%s1 + $0x70] sm:$0xf]
    %v158 = vld [vmem:[%s1 + $0x74] sm:$0xf]
    %v159 = vld [vmem:[%s1 + $0x78] sm:$0xf]
    %v160 = vld [vmem:[%s1 + $0x7c] sm:$0xf]
    %v161 = vld [vmem:[%s1 + $0x80] sm:$0xf]
    %v162 = vld [vmem:[%s1 + $0x84] sm:$0xf]
    %v163 = vld [vmem:[%s1 + $0x88] sm:$0xf]
    %v164 = vld [vmem:[%s1 + $0x8c] sm:$0xf]
    %v165 = vld [vmem:[%s1 + $0x90] sm:$0xf]
    %v166 = vld [vmem:[%s1 + $0x94] sm:$0xf]
    %v167 = vld [vmem:[%s1 + $0x98] sm:$0xf]
    %v168 = vld [vmem:[%s1 + $0x9c] sm:$0xf]
    %v169 = vld [vmem:[%s1 + $0xa0] sm:$0xf]
    %v170 = vld [vmem:[%s1 + $0xa4] sm:$0xf]
    %v171 = vld [vmem:[%s1 + $0xa8] sm:$0xf]
    %v172 = vld [vmem:[%s1 + $0xac] sm:$0xf]
    %v173 = vld [vmem:[%s1 + $0xb0] sm:$0xf]
    %v174 = vld [vmem:[%s1 + $0xb4] sm:$0xf]
    %v175 = vld [vmem:[%s1 + $0xb8] sm:$0xf]
    %v176 = vld [vmem:[%s1 + $0xbc] sm:$0xf]
    %v177 = vld [vmem:[%s1 + $0xc0] sm:$0xf]
    %v178 = vld [vmem:[%s1 + $0xc4] sm:$0xf]
    %v179 = vld [vmem:[%s1 + $0xc8] sm:$0xf]
    %v180 = vld [vmem:[%s1 + $0xcc] sm:$0xf]
    %v181 = vld [vmem:[%s1 + $0xd0] sm:$0xf]
    %v182 = vld [vmem:[%s1 + $0xd4] sm:$0xf]
    %v183 = vld [vmem:[%s1 + $0xd8] sm:$0xf]
    %v184 = vld [vmem:[%s1 + $0xdc] sm:$0xf]
    %v185 = vld [vmem:[%s1 + $0xe0] sm:$0xf]
    %v186 = vld [vmem:[%s1 + $0xe4] sm:$0xf]
    %v187 = vld [vmem:[%s1 + $0xe8] sm:$0xf]
    %v188 = vld [vmem:[%s1 + $0xec] sm:$0xf]
    %v189 = vld [vmem:[%s1 + $0xf0] sm:$0xf]
    %v190 = vld [vmem:[%s1 + $0xf4] sm:$0xf]
    %v191 = vld [vmem:[%s1 + $0xf8] sm:$0xf]
    %v192 = vld [vmem:[%s1 + $0xfc] sm:$0xf]
    %v193 = vld [vmem:[%s1 + $0x100] sm:$0xf]
    %v194 = vld [vmem:[%s1 + $0x104] sm:$0xf]
    %v195 = vld [vmem:[%s1 + $0x108] sm:$0xf]
    %v196 = vld [vmem:[%s1 + $0x10c] sm:$0xf]
    %v197 = vld [vmem:[%s1 + $0x110] sm:$0xf]
    %v198 = vld [vmem:[%s1 + $0x114] sm:$0xf]
    %v199 = vld [vmem:[%s1 + $0x118] sm:$0xf]
    %v200 = vld [vmem:[%s1 + $0x11c] sm:$0xf]
    %v201 = vld [vmem:[%s1 + $0x120] sm:$0xf]
    %v202 = vld [vmem:[%s1 + $0x124] sm:$0xf]
    %v203 = vld [vmem:[%s1 + $0x128] sm:$0xf]
    %v204 = vld [vmem:[%s1 + $0x12c] sm:$0xf]
    %v205 = vld [vmem:[%s1 + $0x130] sm:$0xf]
    %v206 = vld [vmem:[%s1 + $0x134] sm:$0xf]
    %v207 = vld [vmem:[%s1 + $0x138] sm:$0xf]
    %v208 = vld [vmem:[%s1 + $0x13c] sm:$0xf]
    %v209 = vld [vmem:[%s1 + $0x140] sm:$0xf]
    %v210 = vld [vmem:[%s1 + $0x144] sm:$0xf]
    %v211 = vld [vmem:[%s1 + $0x148] sm:$0xf]
    %v212 = vld [vmem:[%s1 + $0x14c] sm:$0xf]
    %v213 = vld [vmem:[%s1 + $0x150] sm:$0xf]
    %v214 = vld [vmem:[%s1 + $0x154] sm:$0xf]
    %v215 = vld [vmem:[%s1 + $0x158] sm:$0xf]
    %v216 = vld [vmem:[%s1 + $0x15c] sm:$0xf]
    %v217 = vld [vmem:[%s1 + $0x160] sm:$0xf]
    %v218 = vld [vmem:[%s1 + $0x164] sm:$0xf]
    %v219 = vld [vmem:[%s1 + $0x168] sm:$0xf]
    %v220 = vld [vmem:[%s1 + $0x16c] sm:$0xf]
    %v221 = vld [vmem:[%s1 + $0x170] sm:$0xf]
    %v222 = vld [vmem:[%s1 + $0x174] sm:$0xf]
    %v223 = vld [vmem:[%s1 + $0x178] sm:$0xf]
    %v224 = vld [vmem:[%s1 + $0x17c] sm:$0xf]
    %v225 = vld [vmem:[%s1 + $0x180] sm:$0xf]
    %v226 = vld [vmem:[%s1 + $0x184] sm:$0xf]
    %v227 = vld [vmem:[%s1 + $0x188] sm:$0xf]
    %v228 = vld [vmem:[%s1 + $0x18c] sm:$0xf]
    %v229 = vld [vmem:[%s1 + $0x190] sm:$0xf]
    %v230 = vld [vmem:[%s1 + $0x194] sm:$0xf]
    %v231 = vld [vmem:[%s1 + $0x198] sm:$0xf]
    %v232 = vld [vmem:[%s1 + $0x19c] sm:$0xf]
    %v233 = vld [vmem:[%s1 + $0x1a0] sm:$0xf]
    %v234 = vld [vmem:[%s1 + $0x1a4] sm:$0xf]
    %v235 = vld [vmem:[%s1 + $0x1a8] sm:$0xf]
    %v236 = vld [vmem:[%s1 + $0x1ac] sm:$0xf]
    %v237 = vld [vmem:[%s1 + $0x1b0] sm:$0xf]
    %v238 = vld [vmem:[%s1 + $0x1b4] sm:$0xf]
    %v239 = vld [vmem:[%s1 + $0x1b8] sm:$0xf]
    %v240 = vld [vmem:[%s1 + $0x1bc] sm:$0xf]
    %v241 = vld [vmem:[%s1 + $0x1c0] sm:$0xf]
    %v242 = vld [vmem:[%s1 + $0x1c4] sm:$0xf]
    %v243 = vld [vmem:[%s1 + $0x1c8] sm:$0xf]
    %v244 = vld [vmem:[%s1 + $0x1cc] sm:$0xf]
    %v245 = vld [vmem:[%s1 + $0x1d0] sm:$0xf]
    %v246 = vld [vmem:[%s1 + $0x1d4] sm:$0xf]
    %v247 = vld [vmem:[%s1 + $0x1d8] sm:$0xf]
    %v248 = vld [vmem:[%s1 + $0x1dc] sm:$0xf]
    %v249 = vld [vmem:[%s1 + $0x1e0] sm:$0xf]
    %v250 = vld [vmem:[%s1 + $0x1e4] sm:$0xf]
    %v251 = vld [vmem:[%s1 + $0x1e8] sm:$0xf]
    %v252 = vld [vmem:[%s1 + $0x1ec] sm:$0xf]
    %v253 = vld [vmem:[%s1 + $0x1f0] sm:$0xf]
    %v254 = vld [vmem:[%s1 + $0x1f4] sm:$0xf]
    %v255 = vld [vmem:[%s1 + $0x1f8] sm:$0xf]
    %v256 = vld [vmem:[%s1 + $0x1fc] sm:$0xf]
    %v257 = vld [vmem:[%s1 + $0x200] sm:$0xf]
    %v258 = vld [vmem:[%s1 + $0x204] sm:$0xf]
    %v259 = vld [vmem:[%s1 + $0x208] sm:$0xf]
    %v260 = vld [vmem:[%s1 + $0x20c] sm:$0xf]
    %v261 = vld [vmem:[%s1 + $0x210] sm:$0xf]
    %v262 = vld [vmem:[%s1 + $0x214] sm:$0xf]
    %v263 = vld [vmem:[%s1 + $0x218] sm:$0xf]
    %v264 = vld [vmem:[%s1 + $0x21c] sm:$0xf]
    %v265 = vld [vmem:[%s1 + $0x220] sm:$0xf]
    %v266 = vld [vmem:[%s1 + $0x224] sm:$0xf]
    %v267 = vld [vmem:[%s1 + $0x228] sm:$0xf]
    %v268 = vld [vmem:[%s1 + $0x22c] sm:$0xf]
    %v269 = vld [vmem:[%s1 + $0x230] sm:$0xf]
    %v270 = vld [vmem:[%s1 + $0x234] sm:$0xf]
    %v271 = vld [vmem:[%s1 + $0x238] sm:$0xf]
    %v272 = vld [vmem:[%s1 + $0x23c] sm:$0xf]
    %v273 = vld [vmem:[%s1 + $0x240] sm:$0xf]
    %v274 = vld [vmem:[%s1 + $0x244] sm:$0xf]
    %v275 = vld [vmem:[%s1 + $0x248] sm:$0xf]
    %v276 = vld [vmem:[%s1 + $0x24c] sm:$0xf]
    %v277 = vld [vmem:[%s1 + $0x250] sm:$0xf]
    %v278 = vld [vmem:[%s1 + $0x254] sm:$0xf]
    %v279 = vld [vmem:[%s1 + $0x258] sm:$0xf]
    %v280 = vld [vmem:[%s1 + $0x25c] sm:$0xf]
    %v281 = vld [vmem:[%s1 + $0x260] sm:$0xf]
    %v282 = vld [vmem:[%s1 + $0x264] sm:$0xf]
    %v283 = vld [vmem:[%s1 + $0x268] sm:$0xf]
    %v284 = vld [vmem:[%s1 + $0x26c] sm:$0xf]
    %v285 = vld [vmem:[%s1 + $0x270] sm:$0xf]
    %v286 = vld [vmem:[%s1 + $0x274] sm:$0xf]
    %v287 = vld [vmem:[%s1 + $0x278] sm:$0xf]
    %v288 = vld [vmem:[%s1 + $0x27c] sm:$0xf]
    %v289 = vld [vmem:[%s1 + $0x280] sm:$0xf]
    %v290 = vld [vmem:[%s1 + $0x284] sm:$0xf]
    %v291 = vld [vmem:[%s1 + $0x288] sm:$0xf]
    %v292 = vld [vmem:[%s1 + $0x28c] sm:$0xf]
    %v293 = vld [vmem:[%s1 + $0x290] sm:$0xf]
    %v294 = vld [vmem:[%s1 + $0x294] sm:$0xf]
    %v295 = vld [vmem:[%s1 + $0x298] sm:$0xf]
    %v296 = vld [vmem:[%s1 + $0x29c] sm:$0xf]
    %v297 = vld [vmem:[%s1 + $0x2a0] sm:$0xf]
    %v298 = vld [vmem:[%s1 + $0x2a4] sm:$0xf]
    %v299 = vld [vmem:[%s1 + $0x2a8] sm:$0xf]
    %v300 = vld [vmem:[%s1 + $0x2ac] sm:$0xf]
    %v301 = vld [vmem:[%s1 + $0x2b0] sm:$0xf]
    %v302 = vld [vmem:[%s1 + $0x2b4] sm:$0xf]
    %v303 = vld [vmem:[%s1 + $0x2b8] sm:$0xf]
    %v304 = vld [vmem:[%s1 + $0x2bc] sm:$0xf]
    %v305 = vld [vmem:[%s1 + $0x2c0] sm:$0xf]
    %v306 = vld [vmem:[%s1 + $0x2c4] sm:$0xf]
    %v307 = vld [vmem:[%s1 + $0x2c8] sm:$0xf]
    %v308 = vld [vmem:[%s1 + $0x2cc] sm:$0xf]
    %v309 = vld [vmem:[%s1 + $0x2d0] sm:$0xf]
    %v310 = vld [vmem:[%s1 + $0x2d4] sm:$0xf]
    %v311 = vld [vmem:[%s1 + $0x2d8] sm:$0xf]
    %v312 = vld [vmem:[%s1 + $0x2dc] sm:$0xf]
    %v313 = vld [vmem:[%s1 + $0x2e0] sm:$0xf]
    %v314 = vld [vmem:[%s1 + $0x2e4] sm:$0xf]
    %v315 = vld [vmem:[%s1 + $0x2e8] sm:$0xf]
    %v316 = vld [vmem:[%s1 + $0x2ec] sm:$0xf]
    %v317 = vld [vmem:[%s1 + $0x2f0] sm:$0xf]
    %v318 = vld [vmem:[%s1 + $0x2f4] sm:$0xf]
    %v319 = vld [vmem:[%s1 + $0x2f8] sm:$0xf]
    %v320 = vld [vmem:[%s1 + $0x2fc] sm:$0xf]
    %v321 = vld [vmem:[%s1 + $0x300] sm:$0xf]
    %v322 = vld [vmem:[%s1 + $0x304] sm:$0xf]
    %v323 = vld [vmem:[%s1 + $0x308] sm:$0xf]
    %v324 = vld [vmem:[%s1 + $0x30c] sm:$0xf]
    %v325 = vld [vmem:[%s1 + $0x310] sm:$0xf]
    %v326 = vld [vmem:[%s1 + $0x314] sm:$0xf]
    %v327 = vld [vmem:[%s1 + $0x318] sm:$0xf]
    %v328 = vld [vmem:[%s1 + $0x31c] sm:$0xf]
    %v329 = vld [vmem:[%s1 + $0x320] sm:$0xf]
    %v330 = vld [vmem:[%s1 + $0x324] sm:$0xf]
    %v331 = vld [vmem:[%s1 + $0x328] sm:$0xf]
    %v332 = vld [vmem:[%s1 + $0x32c] sm:$0xf]
    %v333 = vld [vmem:[%s1 + $0x330] sm:$0xf]
    %v334 = vld [vmem:[%s1 + $0x334] sm:$0xf]
    %v335 = vld [vmem:[%s1 + $0x338] sm:$0xf]
    %v336 = vld [vmem:[%s1 + $0x33c] sm:$0xf]
    %v337 = vld [vmem:[%s1 + $0x340] sm:$0xf]
    %v338 = vld [vmem:[%s1 + $0x344] sm:$0xf]
    %v339 = vld [vmem:[%s1 + $0x348] sm:$0xf]
    %v340 = vld [vmem:[%s1 + $0x34c] sm:$0xf]
    %v341 = vld [vmem:[%s1 + $0x350] sm:$0xf]
    %v342 = vld [vmem:[%s1 + $0x354] sm:$0xf]
    %v343 = vld [vmem:[%s1 + $0x358] sm:$0xf]
    %v344 = vld [vmem:[%s1 + $0x35c] sm:$0xf]
    %v345 = vld [vmem:[%s1 + $0x360] sm:$0xf]
    %v346 = vld [vmem:[%s1 + $0x364] sm:$0xf]
    %v347 = vld [vmem:[%s1 + $0x368] sm:$0xf]
    %v348 = vld [vmem:[%s1 + $0x36c] sm:$0xf]
    %v349 = vld [vmem:[%s1 + $0x370] sm:$0xf]
    %v350 = vld [vmem:[%s1 + $0x374] sm:$0xf]
    %v351 = vld [vmem:[%s1 + $0x378] sm:$0xf]
    %v352 = vld [vmem:[%s1 + $0x37c] sm:$0xf]
    %v353 = vld [vmem:[%s1 + $0x380] sm:$0xf]
    %v354 = vld [vmem:[%s1 + $0x384] sm:$0xf]
    %v355 = vld [vmem:[%s1 + $0x388] sm:$0xf]
    %v356 = vld [vmem:[%s1 + $0x38c] sm:$0xf]
    %v357 = vld [vmem:[%s1 + $0x390] sm:$0xf]
    %v358 = vld [vmem:[%s1 + $0x394] sm:$0xf]
    %v359 = vld [vmem:[%s1 + $0x398] sm:$0xf]
    %v360 = vld [vmem:[%s1 + $0x39c] sm:$0xf]
    %v361 = vld [vmem:[%s1 + $0x3a0] sm:$0xf]
    %v362 = vld [vmem:[%s1 + $0x3a4] sm:$0xf]
    %v363 = vld [vmem:[%s1 + $0x3a8] sm:$0xf]
    %v364 = vld [vmem:[%s1 + $0x3ac] sm:$0xf]
    %v365 = vld [vmem:[%s1 + $0x3b0] sm:$0xf]
    %v366 = vld [vmem:[%s1 + $0x3b4] sm:$0xf]
    %v367 = vld [vmem:[%s1 + $0x3b8] sm:$0xf]
    %v368 = vld [vmem:[%s1 + $0x3bc] sm:$0xf]
    %v369 = vld [vmem:[%s1 + $0x3c0] sm:$0xf]
    %v370 = vld [vmem:[%s1 + $0x3c4] sm:$0xf]
    %v371 = vld [vmem:[%s1 + $0x3c8] sm:$0xf]
    %v372 = vld [vmem:[%s1 + $0x3cc] sm:$0xf]
    %v373 = vld [vmem:[%s1 + $0x3d0] sm:$0xf]
    %v374 = vld [vmem:[%s1 + $0x3d4] sm:$0xf]
    %v375 = vld [vmem:[%s1 + $0x3d8] sm:$0xf]
    %v376 = vld [vmem:[%s1 + $0x3dc] sm:$0xf]
    %v377 = vld [vmem:[%s1 + $0x3e0] sm:$0xf]
    %v378 = vld [vmem:[%s1 + $0x3e4] sm:$0xf]
    %v379 = vld [vmem:[%s1 + $0x3e8] sm:$0xf]
    %v380 = vld [vmem:[%s1 + $0x3ec] sm:$0xf]
    %v381 = vld [vmem:[%s1 + $0x3f0] sm:$0xf]
    %v382 = vld [vmem:[%s1 + $0x3f4] sm:$0xf]
    %v383 = vld [vmem:[%s1 + $0x3f8] sm:$0xf]
    %v384 = vld [vmem:[%s1 + $0x3fc] sm:$0xf]
    %v385 = vld [vmem:[%s1 + $0x400] sm:$0xf]
    %v386 = vld [vmem:[%s1 + $0x404] sm:$0xf]
    %v387 = vld [vmem:[%s1 + $0x408] sm:$0xf]
    %v388 = vld [vmem:[%s1 + $0x40c] sm:$0xf]
    %v389 = vld [vmem:[%s1 + $0x410] sm:$0xf]
    %v390 = vld [vmem:[%s1 + $0x414] sm:$0xf]
    %v391 = vld [vmem:[%s1 + $0x418] sm:$0xf]
    %v392 = vld [vmem:[%s1 + $0x41c] sm:$0xf]
    %v393 = vld [vmem:[%s1 + $0x420] sm:$0xf]
    %v394 = vld [vmem:[%s1 + $0x424] sm:$0xf]
    %v395 = vld [vmem:[%s1 + $0x428] sm:$0xf]
    %v396 = vld [vmem:[%s1 + $0x42c] sm:$0xf]
    %v397 = vld [vmem:[%s1 + $0x430] sm:$0xf]
    %v398 = vld [vmem:[%s1 + $0x434] sm:$0xf]
    %v399 = vld [vmem:[%s1 + $0x438] sm:$0xf]
    %v400 = vld [vmem:[%s1 + $0x43c] sm:$0xf]
    %v401 = vld [vmem:[%s1 + $0x440] sm:$0xf]
    %v402 = vld [vmem:[%s1 + $0x444] sm:$0xf]
    %v403 = vld [vmem:[%s1 + $0x448] sm:$0xf]
    %v404 = vld [vmem:[%s1 + $0x44c] sm:$0xf]
    %v405 = vld [vmem:[%s1 + $0x450] sm:$0xf]
    %v406 = vld [vmem:[%s1 + $0x454] sm:$0xf]
    %v407 = vld [vmem:[%s1 + $0x458] sm:$0xf]
    %v408 = vld [vmem:[%s1 + $0x45c] sm:$0xf]
    %v409 = vld [vmem:[%s1 + $0x460] sm:$0xf]
    %v410 = vld [vmem:[%s1 + $0x464] sm:$0xf]
    %v411 = vld [vmem:[%s1 + $0x468] sm:$0xf]
    %v412 = vld [vmem:[%s1 + $0x46c] sm:$0xf]
    %v413 = vld [vmem:[%s1 + $0x470] sm:$0xf]
    %v414 = vld [vmem:[%s1 + $0x474] sm:$0xf]
    %v415 = vld [vmem:[%s1 + $0x478] sm:$0xf]
    %v416 = vld [vmem:[%s1 + $0x47c] sm:$0xf]
    %v417 = vld [vmem:[%s1 + $0x480] sm:$0xf]
    %v418 = vld [vmem:[%s1 + $0x484] sm:$0xf]
    %v419 = vld [vmem:[%s1 + $0x488] sm:$0xf]
    %v420 = vld [vmem:[%s1 + $0x48c] sm:$0xf]
    %v421 = vld [vmem:[%s1 + $0x490] sm:$0xf]
    %v422 = vld [vmem:[%s1 + $0x494] sm:$0xf]
    %v423 = vld [vmem:[%s1 + $0x498] sm:$0xf]
    %v424 = vld [vmem:[%s1 + $0x49c] sm:$0xf]
    %v425 = vld [vmem:[%s1 + $0x4a0] sm:$0xf]
    %v426 = vld [vmem:[%s1 + $0x4a4] sm:$0xf]
    %v427 = vld [vmem:[%s1 + $0x4a8] sm:$0xf]
    %v428 = vld [vmem:[%s1 + $0x4ac] sm:$0xf]
    %v429 = vld [vmem:[%s1 + $0x4b0] sm:$0xf]
    %v430 = vld [vmem:[%s1 + $0x4b4] sm:$0xf]
    %v431 = vld [vmem:[%s1 + $0x4b8] sm:$0xf]
    %v432 = vld [vmem:[%s1 + $0x4bc] sm:$0xf]
    %v433 = vld [vmem:[%s1 + $0x4c0] sm:$0xf]
    %v434 = vld [vmem:[%s1 + $0x4c4] sm:$0xf]
    %v435 = vld [vmem:[%s1 + $0x4c8] sm:$0xf]
    %v436 = vld [vmem:[%s1 + $0x4cc] sm:$0xf]
    %v437 = vld [vmem:[%s1 + $0x4d0] sm:$0xf]
    %v438 = vld [vmem:[%s1 + $0x4d4] sm:$0xf]
    %v439 = vld [vmem:[%s1 + $0x4d8] sm:$0xf]
    %v440 = vld [vmem:[%s1 + $0x4dc] sm:$0xf]
    %v441 = vld [vmem:[%s1 + $0x4e0] sm:$0xf]
    %v442 = vld [vmem:[%s1 + $0x4e4] sm:$0xf]
    %v443 = vld [vmem:[%s1 + $0x4e8] sm:$0xf]
    %v444 = vld [vmem:[%s1 + $0x4ec] sm:$0xf]
    %v445 = vld [vmem:[%s1 + $0x4f0] sm:$0xf]
    %v446 = vld [vmem:[%s1 + $0x4f4] sm:$0xf]
    %v447 = vld [vmem:[%s1 + $0x4f8] sm:$0xf]
    %v448 = vld [vmem:[%s1 + $0x4fc] sm:$0xf]
    %v449 = vld [vmem:[%s1 + $0x500] sm:$0xf]
    %v450 = vld [vmem:[%s1 + $0x504] sm:$0xf]
    %v451 = vld [vmem:[%s1 + $0x508] sm:$0xf]
    %v452 = vld [vmem:[%s1 + $0x50c] sm:$0xf]
    %v453 = vld [vmem:[%s1 + $0x510] sm:$0xf]
    %v454 = vld [vmem:[%s1 + $0x514] sm:$0xf]
    %v455 = vld [vmem:[%s1 + $0x518] sm:$0xf]
    %v456 = vld [vmem:[%s1 + $0x51c] sm:$0xf]
    %v457 = vld [vmem:[%s1 + $0x520] sm:$0xf]
    %v458 = vld [vmem:[%s1 + $0x524] sm:$0xf]
    %v459 = vld [vmem:[%s1 + $0x528] sm:$0xf]
    %v460 = vld [vmem:[%s1 + $0x52c] sm:$0xf]
    %v461 = vld [vmem:[%s1 + $0x530] sm:$0xf]
    %v462 = vld [vmem:[%s1 + $0x534] sm:$0xf]
    %v463 = vld [vmem:[%s1 + $0x538] sm:$0xf]
    %v464 = vld [vmem:[%s1 + $0x53c] sm:$0xf]
    %v465 = vld [vmem:[%s1 + $0x540] sm:$0xf]
    %v466 = vld [vmem:[%s1 + $0x544] sm:$0xf]
    %v467 = vld [vmem:[%s1 + $0x548] sm:$0xf]
    %v468 = vld [vmem:[%s1 + $0x54c] sm:$0xf]
    %v469 = vld [vmem:[%s1 + $0x550] sm:$0xf]
    %v470 = vld [vmem:[%s1 + $0x554] sm:$0xf]
    %v471 = vld [vmem:[%s1 + $0x558] sm:$0xf]
    %v472 = vld [vmem:[%s1 + $0x55c] sm:$0xf]
    %v473 = vld [vmem:[%s1 + $0x560] sm:$0xf]
    %v474 = vld [vmem:[%s1 + $0x564] sm:$0xf]
    %v475 = vld [vmem:[%s1 + $0x568] sm:$0xf]
    %v476 = vld [vmem:[%s1 + $0x56c] sm:$0xf]
    %v477 = vld [vmem:[%s1 + $0x570] sm:$0xf]
    %v478 = vld [vmem:[%s1 + $0x574] sm:$0xf]
    %v479 = vld [vmem:[%s1 + $0x578] sm:$0xf]
    %v480 = vld [vmem:[%s1 + $0x57c] sm:$0xf]
    %v481 = vld [vmem:[%s1 + $0x580] sm:$0xf]
    %v482 = vld [vmem:[%s1 + $0x584] sm:$0xf]
    %v483 = vld [vmem:[%s1 + $0x588] sm:$0xf]
    %v484 = vld [vmem:[%s1 + $0x58c] sm:$0xf]
    %v485 = vld [vmem:[%s1 + $0x590] sm:$0xf]
    %v486 = vld [vmem:[%s1 + $0x594] sm:$0xf]
    %v487 = vld [vmem:[%s1 + $0x598] sm:$0xf]
    %v488 = vld [vmem:[%s1 + $0x59c] sm:$0xf]
    %v489 = vld [vmem:[%s1 + $0x5a0] sm:$0xf]
    %v490 = vld [vmem:[%s1 + $0x5a4] sm:$0xf]
    %v491 = vld [vmem:[%s1 + $0x5a8] sm:$0xf]
    %v492 = vld [vmem:[%s1 + $0x5ac] sm:$0xf]
    %v493 = vld [vmem:[%s1 + $0x5b0] sm:$0xf]
    %v494 = vld [vmem:[%s1 + $0x5b4] sm:$0xf]
    %v495 = vld [vmem:[%s1 + $0x5b8] sm:$0xf]
    %v496 = vld [vmem:[%s1 + $0x5bc] sm:$0xf]
    %v497 = vld [vmem:[%s1 + $0x5c0] sm:$0xf]
    %v498 = vld [vmem:[%s1 + $0x5c4] sm:$0xf]
    %v499 = vld [vmem:[%s1 + $0x5c8] sm:$0xf]
    %v500 = vld [vmem:[%s1 + $0x5cc] sm:$0xf]
    %v501 = vld [vmem:[%s1 + $0x5d0] sm:$0xf]
    %v502 = vld [vmem:[%s1 + $0x5d4] sm:$0xf]
    %v503 = vld [vmem:[%s1 + $0x5d8] sm:$0xf]
    %v504 = vld [vmem:[%s1 + $0x5dc] sm:$0xf]
    %v505 = vld [vmem:[%s1 + $0x5e0] sm:$0xf]
    %v506 = vld [vmem:[%s1 + $0x5e4] sm:$0xf]
    %v507 = vld [vmem:[%s1 + $0x5e8] sm:$0xf]
    %v508 = vld [vmem:[%s1 + $0x5ec] sm:$0xf]
    %v509 = vld [vmem:[%s1 + $0x5f0] sm:$0xf]
    %v510 = vld [vmem:[%s1 + $0x5f4] sm:$0xf]
    %v511 = vld [vmem:[%s1 + $0x5f8] sm:$0xf]
    %v512 = vld [vmem:[%s1 + $0x5fc] sm:$0xf]
    %v513 = vld [vmem:[%s1 + $0x600] sm:$0xf]
    %v514 = vld [vmem:[%s1 + $0x604] sm:$0xf]
    %v515 = vld [vmem:[%s1 + $0x608] sm:$0xf]
    %v516 = vld [vmem:[%s1 + $0x60c] sm:$0xf]
    %v517 = vld [vmem:[%s1 + $0x610] sm:$0xf]
    %v518 = vld [vmem:[%s1 + $0x614] sm:$0xf]
    %v519 = vld [vmem:[%s1 + $0x618] sm:$0xf]
    %v520 = vld [vmem:[%s1 + $0x61c] sm:$0xf]
    %v521 = vld [vmem:[%s1 + $0x620] sm:$0xf]
    %v522 = vld [vmem:[%s1 + $0x624] sm:$0xf]
    %v523 = vld [vmem:[%s1 + $0x628] sm:$0xf]
    %v524 = vld [vmem:[%s1 + $0x62c] sm:$0xf]
    %v525 = vld [vmem:[%s1 + $0x630] sm:$0xf]
    %v526 = vld [vmem:[%s1 + $0x634] sm:$0xf]
    %v527 = vld [vmem:[%s1 + $0x638] sm:$0xf]
    %v528 = vld [vmem:[%s1 + $0x63c] sm:$0xf]
    %v529 = vld [vmem:[%s2] sm:$0x1]
    %v531 = vlaneseq
    %v532 = vshrl.u32 %v531, 7
    %v533 = vsub.s32 0, %v532
    %v534 = vrot.slane %v529, %v533
    %v588 = vunpack.c.l.b16 %v77
    %v589 = vunpack.c.h.b16 %v77
    %v590 = vunpack.c.l.b16 %v78
    %v591 = vunpack.c.h.b16 %v78
    %v592 = vunpack.c.l.b16 %v79
    %v593 = vunpack.c.h.b16 %v79
    %v594 = vunpack.c.l.b16 %v80
    %v595 = vunpack.c.h.b16 %v80
    %v596 = vunpack.c.l.b16 %v81
    %v597 = vunpack.c.h.b16 %v81
    %v598 = vunpack.c.l.b16 %v82
    %v599 = vunpack.c.h.b16 %v82
    %v600 = vunpack.c.l.b16 %v83
    %v601 = vunpack.c.h.b16 %v83
    %v602 = vunpack.c.l.b16 %v84
    %v603 = vunpack.c.h.b16 %v84
    %v604 = vunpack.c.l.b16 %v85
    %v605 = vunpack.c.h.b16 %v85
    %v606 = vunpack.c.l.b16 %v86
    %v607 = vunpack.c.h.b16 %v86
    %v608 = vunpack.c.l.b16 %v87
    %v609 = vunpack.c.h.b16 %v87
    %v610 = vunpack.c.l.b16 %v88
    %v611 = vunpack.c.h.b16 %v88
    %v612 = vunpack.c.l.b16 %v89
    %v613 = vunpack.c.l.b16 %v90
    %v614 = vunpack.c.h.b16 %v90
    %v615 = vunpack.c.l.b16 %v91
    %v616 = vunpack.c.h.b16 %v91
    %v617 = vunpack.c.l.b16 %v92
    %v618 = vunpack.c.h.b16 %v92
    %v619 = vunpack.c.l.b16 %v93
    %v620 = vunpack.c.h.b16 %v93
    %v621 = vunpack.c.l.b16 %v94
    %v622 = vunpack.c.h.b16 %v94
    %v623 = vunpack.c.l.b16 %v95
    %v624 = vunpack.c.h.b16 %v95
    %v625 = vunpack.c.l.b16 %v96
    %v626 = vunpack.c.h.b16 %v96
    %v627 = vunpack.c.l.b16 %v97
    %v628 = vunpack.c.h.b16 %v97
    %v629 = vunpack.c.l.b16 %v98
    %v630 = vunpack.c.h.b16 %v98
    %v631 = vunpack.c.l.b16 %v99
    %v632 = vunpack.c.h.b16 %v99
    %v633 = vunpack.c.l.b16 %v100
    %v634 = vunpack.c.h.b16 %v100
    %v635 = vunpack.c.l.b16 %v101
    %v636 = vunpack.c.h.b16 %v101
    %v637 = vunpack.c.l.b16 %v102
    %v638 = vunpack.c.l.b16 %v103
    %v639 = vunpack.c.h.b16 %v103
    %v640 = vunpack.c.l.b16 %v104
    %v641 = vunpack.c.h.b16 %v104
    %v642 = vunpack.c.l.b16 %v105
    %v643 = vunpack.c.h.b16 %v105
    %v644 = vunpack.c.l.b16 %v106
    %v645 = vunpack.c.h.b16 %v106
    %v646 = vunpack.c.l.b16 %v107
    %v647 = vunpack.c.h.b16 %v107
    %v648 = vunpack.c.l.b16 %v108
    %v649 = vunpack.c.h.b16 %v108
    %v650 = vunpack.c.l.b16 %v109
    %v651 = vunpack.c.h.b16 %v109
    %v652 = vunpack.c.l.b16 %v110
    %v653 = vunpack.c.h.b16 %v110
    %v654 = vunpack.c.l.b16 %v111
    %v655 = vunpack.c.h.b16 %v111
    %v656 = vunpack.c.l.b16 %v112
    %v657 = vunpack.c.h.b16 %v112
    %v658 = vunpack.c.l.b16 %v113
    %v659 = vunpack.c.h.b16 %v113
    %v660 = vunpack.c.l.b16 %v114
    %v661 = vunpack.c.h.b16 %v114
    %v662 = vunpack.c.l.b16 %v115
    %v663 = vunpack.c.l.b16 %v116
    %v664 = vunpack.c.h.b16 %v116
    %v665 = vunpack.c.l.b16 %v117
    %v666 = vunpack.c.h.b16 %v117
    %v667 = vunpack.c.l.b16 %v118
    %v668 = vunpack.c.h.b16 %v118
    %v669 = vunpack.c.l.b16 %v119
    %v670 = vunpack.c.h.b16 %v119
    %v671 = vunpack.c.l.b16 %v120
    %v672 = vunpack.c.h.b16 %v120
    %v673 = vunpack.c.l.b16 %v121
    %v674 = vunpack.c.h.b16 %v121
    %v675 = vunpack.c.l.b16 %v122
    %v676 = vunpack.c.h.b16 %v122
    %v677 = vunpack.c.l.b16 %v123
    %v678 = vunpack.c.h.b16 %v123
    %v679 = vunpack.c.l.b16 %v124
    %v680 = vunpack.c.h.b16 %v124
    %v681 = vunpack.c.l.b16 %v125
    %v682 = vunpack.c.h.b16 %v125
    %v683 = vunpack.c.l.b16 %v126
    %v684 = vunpack.c.h.b16 %v126
    %v685 = vunpack.c.l.b16 %v127
    %v686 = vunpack.c.h.b16 %v127
    %v687 = vunpack.c.l.b16 %v128
    %v688 = vpack.c.b16 %v613, %v588
    %v689 = vpack.c.b16 %v614, %v589
    %v690 = vpack.c.b16 %v615, %v590
    %v691 = vpack.c.b16 %v616, %v591
    %v692 = vpack.c.b16 %v617, %v592
    %v693 = vpack.c.b16 %v618, %v593
    %v694 = vpack.c.b16 %v619, %v594
    %v695 = vpack.c.b16 %v620, %v595
    %v696 = vpack.c.b16 %v621, %v596
    %v697 = vpack.c.b16 %v622, %v597
    %v698 = vpack.c.b16 %v623, %v598
    %v699 = vpack.c.b16 %v624, %v599
    %v700 = vpack.c.b16 %v625, %v600
    %v701 = vpack.c.b16 %v626, %v601
    %v702 = vpack.c.b16 %v627, %v602
    %v703 = vpack.c.b16 %v628, %v603
    %v704 = vpack.c.b16 %v629, %v604
    %v705 = vpack.c.b16 %v630, %v605
    %v706 = vpack.c.b16 %v631, %v606
    %v707 = vpack.c.b16 %v632, %v607
    %v708 = vpack.c.b16 %v633, %v608
    %v709 = vpack.c.b16 %v634, %v609
    %v710 = vpack.c.b16 %v635, %v610
    %v711 = vpack.c.b16 %v636, %v611
    %v712 = vpack.c.b16 %v637, %v612
    %v713 = vpack.c.b16 %v663, %v638
    %v714 = vpack.c.b16 %v664, %v639
    %v715 = vpack.c.b16 %v665, %v640
    %v716 = vpack.c.b16 %v666, %v641
    %v717 = vpack.c.b16 %v667, %v642
    %v718 = vpack.c.b16 %v668, %v643
    %v719 = vpack.c.b16 %v669, %v644
    %v720 = vpack.c.b16 %v670, %v645
    %v721 = vpack.c.b16 %v671, %v646
    %v722 = vpack.c.b16 %v672, %v647
    %v723 = vpack.c.b16 %v673, %v648
    %v724 = vpack.c.b16 %v674, %v649
    %v725 = vpack.c.b16 %v675, %v650
    %v726 = vpack.c.b16 %v676, %v651
    %v727 = vpack.c.b16 %v677, %v652
    %v728 = vpack.c.b16 %v678, %v653
    %v729 = vpack.c.b16 %v679, %v654
    %v730 = vpack.c.b16 %v680, %v655
    %v731 = vpack.c.b16 %v681, %v656
    %v732 = vpack.c.b16 %v682, %v657
    %v733 = vpack.c.b16 %v683, %v658
    %v734 = vpack.c.b16 %v684, %v659
    %v735 = vpack.c.b16 %v685, %v660
    %v736 = vpack.c.b16 %v686, %v661
    %v737 = vpack.c.b16 %v687, %v662
    %v1188 = vunpack.c.l.b16 %v129
    %v1189 = vunpack.c.l.b16 %v130
    %v1190 = vunpack.c.l.b16 %v131
    %v1191 = vunpack.c.l.b16 %v132
    %v1192 = vunpack.c.l.b16 %v133
    %v1193 = vunpack.c.l.b16 %v134
    %v1194 = vunpack.c.l.b16 %v135
    %v1195 = vunpack.c.l.b16 %v136
    %v1196 = vunpack.c.l.b16 %v137
    %v1197 = vunpack.c.l.b16 %v138
    %v1198 = vunpack.c.l.b16 %v139
    %v1199 = vunpack.c.l.b16 %v140
    %v1200 = vunpack.c.l.b16 %v141
    %v1201 = vunpack.c.l.b16 %v142
    %v1202 = vunpack.c.l.b16 %v143
    %v1203 = vunpack.c.l.b16 %v144
    %v1204 = vunpack.c.l.b16 %v145
    %v1205 = vunpack.c.l.b16 %v146
    %v1206 = vunpack.c.l.b16 %v147
    %v1207 = vunpack.c.l.b16 %v148
    %v1208 = vunpack.c.l.b16 %v149
    %v1209 = vunpack.c.l.b16 %v150
    %v1210 = vunpack.c.l.b16 %v151
    %v1211 = vunpack.c.l.b16 %v152
    %v1212 = vunpack.c.l.b16 %v153
    %v1213 = vunpack.c.l.b16 %v154
    %v1214 = vunpack.c.l.b16 %v155
    %v1215 = vunpack.c.l.b16 %v156
    %v1216 = vunpack.c.l.b16 %v157
    %v1217 = vunpack.c.l.b16 %v158
    %v1218 = vunpack.c.l.b16 %v159
    %v1219 = vunpack.c.l.b16 %v160
    %v1220 = vunpack.c.l.b16 %v161
    %v1221 = vunpack.c.l.b16 %v162
    %v1222 = vunpack.c.l.b16 %v163
    %v1223 = vunpack.c.l.b16 %v164
    %v1224 = vunpack.c.l.b16 %v165
    %v1225 = vunpack.c.l.b16 %v166
    %v1226 = vunpack.c.l.b16 %v167
    %v1227 = vunpack.c.l.b16 %v168
    %v1228 = vunpack.c.l.b16 %v169
    %v1229 = vunpack.c.l.b16 %v170
    %v1230 = vunpack.c.l.b16 %v171
    %v1231 = vunpack.c.l.b16 %v172
    %v1232 = vunpack.c.l.b16 %v173
    %v1233 = vunpack.c.l.b16 %v174
    %v1234 = vunpack.c.l.b16 %v175
    %v1235 = vunpack.c.l.b16 %v176
    %v1236 = vunpack.c.l.b16 %v177
    %v1237 = vunpack.c.l.b16 %v178
    %v1238 = vunpack.c.l.b16 %v179
    %v1239 = vunpack.c.l.b16 %v180
    %v1240 = vunpack.c.l.b16 %v181
    %v1241 = vunpack.c.l.b16 %v182
    %v1242 = vunpack.c.l.b16 %v183
    %v1243 = vunpack.c.l.b16 %v184
    %v1244 = vunpack.c.l.b16 %v185
    %v1245 = vunpack.c.l.b16 %v186
    %v1246 = vunpack.c.l.b16 %v187
    %v1247 = vunpack.c.l.b16 %v188
    %v1248 = vunpack.c.l.b16 %v189
    %v1249 = vunpack.c.l.b16 %v190
    %v1250 = vunpack.c.l.b16 %v191
    %v1251 = vunpack.c.l.b16 %v192
    %v1252 = vunpack.c.l.b16 %v193
    %v1253 = vunpack.c.l.b16 %v194
    %v1254 = vunpack.c.l.b16 %v195
    %v1255 = vunpack.c.l.b16 %v196
    %v1256 = vunpack.c.l.b16 %v197
    %v1257 = vunpack.c.l.b16 %v198
    %v1258 = vunpack.c.l.b16 %v199
    %v1259 = vunpack.c.l.b16 %v200
    %v1260 = vunpack.c.l.b16 %v201
    %v1261 = vunpack.c.l.b16 %v202
    %v1262 = vunpack.c.l.b16 %v203
    %v1263 = vunpack.c.l.b16 %v204
    %v1264 = vunpack.c.l.b16 %v205
    %v1265 = vunpack.c.l.b16 %v206
    %v1266 = vunpack.c.l.b16 %v207
    %v1267 = vunpack.c.l.b16 %v208
    %v1268 = vunpack.c.l.b16 %v209
    %v1269 = vunpack.c.l.b16 %v210
    %v1270 = vunpack.c.l.b16 %v211
    %v1271 = vunpack.c.l.b16 %v212
    %v1272 = vunpack.c.l.b16 %v213
    %v1273 = vunpack.c.l.b16 %v214
    %v1274 = vunpack.c.l.b16 %v215
    %v1275 = vunpack.c.l.b16 %v216
    %v1276 = vunpack.c.l.b16 %v217
    %v1277 = vunpack.c.l.b16 %v218
    %v1278 = vunpack.c.l.b16 %v219
    %v1279 = vunpack.c.l.b16 %v220
    %v1280 = vunpack.c.l.b16 %v221
    %v1281 = vunpack.c.l.b16 %v222
    %v1282 = vunpack.c.l.b16 %v223
    %v1283 = vunpack.c.l.b16 %v224
    %v1284 = vunpack.c.l.b16 %v225
    %v1285 = vunpack.c.l.b16 %v226
    %v1286 = vunpack.c.l.b16 %v227
    %v1287 = vunpack.c.l.b16 %v228
    %v1288 = vunpack.c.l.b16 %v229
    %v1289 = vunpack.c.l.b16 %v230
    %v1290 = vunpack.c.l.b16 %v231
    %v1291 = vunpack.c.l.b16 %v232
    %v1292 = vunpack.c.l.b16 %v233
    %v1293 = vunpack.c.l.b16 %v234
    %v1294 = vunpack.c.l.b16 %v235
    %v1295 = vunpack.c.l.b16 %v236
    %v1296 = vunpack.c.l.b16 %v237
    %v1297 = vunpack.c.l.b16 %v238
    %v1298 = vunpack.c.l.b16 %v239
    %v1299 = vunpack.c.l.b16 %v240
    %v1300 = vunpack.c.l.b16 %v241
    %v1301 = vunpack.c.l.b16 %v242
    %v1302 = vunpack.c.l.b16 %v243
    %v1303 = vunpack.c.l.b16 %v244
    %v1304 = vunpack.c.l.b16 %v245
    %v1305 = vunpack.c.l.b16 %v246
    %v1306 = vunpack.c.l.b16 %v247
    %v1307 = vunpack.c.l.b16 %v248
    %v1308 = vunpack.c.l.b16 %v249
    %v1309 = vunpack.c.l.b16 %v250
    %v1310 = vunpack.c.l.b16 %v251
    %v1311 = vunpack.c.l.b16 %v252
    %v1312 = vunpack.c.l.b16 %v253
    %v1313 = vunpack.c.l.b16 %v254
    %v1314 = vunpack.c.l.b16 %v255
    %v1315 = vunpack.c.l.b16 %v256
    %v1316 = vunpack.c.l.b16 %v257
    %v1317 = vunpack.c.l.b16 %v258
    %v1318 = vunpack.c.l.b16 %v259
    %v1319 = vunpack.c.l.b16 %v260
    %v1320 = vunpack.c.l.b16 %v261
    %v1321 = vunpack.c.l.b16 %v262
    %v1322 = vunpack.c.l.b16 %v263
    %v1323 = vunpack.c.l.b16 %v264
    %v1324 = vunpack.c.l.b16 %v265
    %v1325 = vunpack.c.l.b16 %v266
    %v1326 = vunpack.c.l.b16 %v267
    %v1327 = vunpack.c.l.b16 %v268
    %v1328 = vunpack.c.l.b16 %v269
    %v1329 = vunpack.c.l.b16 %v270
    %v1330 = vunpack.c.l.b16 %v271
    %v1331 = vunpack.c.l.b16 %v272
    %v1332 = vunpack.c.l.b16 %v273
    %v1333 = vunpack.c.l.b16 %v274
    %v1334 = vunpack.c.l.b16 %v275
    %v1335 = vunpack.c.l.b16 %v276
    %v1336 = vunpack.c.l.b16 %v277
    %v1337 = vunpack.c.l.b16 %v278
    %v1338 = vunpack.c.l.b16 %v279
    %v1339 = vunpack.c.l.b16 %v280
    %v1340 = vunpack.c.l.b16 %v281
    %v1341 = vunpack.c.l.b16 %v282
    %v1342 = vunpack.c.l.b16 %v283
    %v1343 = vunpack.c.l.b16 %v284
    %v1344 = vunpack.c.l.b16 %v285
    %v1345 = vunpack.c.l.b16 %v286
    %v1346 = vunpack.c.l.b16 %v287
    %v1347 = vunpack.c.l.b16 %v288
    %v1348 = vunpack.c.l.b16 %v289
    %v1349 = vunpack.c.l.b16 %v290
    %v1350 = vunpack.c.l.b16 %v291
    %v1351 = vunpack.c.l.b16 %v292
    %v1352 = vunpack.c.l.b16 %v293
    %v1353 = vunpack.c.l.b16 %v294
    %v1354 = vunpack.c.l.b16 %v295
    %v1355 = vunpack.c.l.b16 %v296
    %v1356 = vunpack.c.l.b16 %v297
    %v1357 = vunpack.c.l.b16 %v298
    %v1358 = vunpack.c.l.b16 %v299
    %v1359 = vunpack.c.l.b16 %v300
    %v1360 = vunpack.c.l.b16 %v301
    %v1361 = vunpack.c.l.b16 %v302
    %v1362 = vunpack.c.l.b16 %v303
    %v1363 = vunpack.c.l.b16 %v304
    %v1364 = vunpack.c.l.b16 %v305
    %v1365 = vunpack.c.l.b16 %v306
    %v1366 = vunpack.c.l.b16 %v307
    %v1367 = vunpack.c.l.b16 %v308
    %v1368 = vunpack.c.l.b16 %v309
    %v1369 = vunpack.c.l.b16 %v310
    %v1370 = vunpack.c.l.b16 %v311
    %v1371 = vunpack.c.l.b16 %v312
    %v1372 = vunpack.c.l.b16 %v313
    %v1373 = vunpack.c.l.b16 %v314
    %v1374 = vunpack.c.l.b16 %v315
    %v1375 = vunpack.c.l.b16 %v316
    %v1376 = vunpack.c.l.b16 %v317
    %v1377 = vunpack.c.l.b16 %v318
    %v1378 = vunpack.c.l.b16 %v319
    %v1379 = vunpack.c.l.b16 %v320
    %v1380 = vunpack.c.l.b16 %v321
    %v1381 = vunpack.c.l.b16 %v322
    %v1382 = vunpack.c.l.b16 %v323
    %v1383 = vunpack.c.l.b16 %v324
    %v1384 = vunpack.c.l.b16 %v325
    %v1385 = vunpack.c.l.b16 %v326
    %v1386 = vunpack.c.l.b16 %v327
    %v1387 = vunpack.c.l.b16 %v328
    %v1388 = vunpack.c.l.b16 %v329
    %v1389 = vunpack.c.l.b16 %v330
    %v1390 = vunpack.c.l.b16 %v331
    %v1391 = vunpack.c.l.b16 %v332
    %v1392 = vunpack.c.l.b16 %v333
    %v1393 = vunpack.c.l.b16 %v334
    %v1394 = vunpack.c.l.b16 %v335
    %v1395 = vunpack.c.l.b16 %v336
    %v1396 = vunpack.c.l.b16 %v337
    %v1397 = vunpack.c.l.b16 %v338
    %v1398 = vunpack.c.l.b16 %v339
    %v1399 = vunpack.c.l.b16 %v340
    %v1400 = vunpack.c.l.b16 %v341
    %v1401 = vunpack.c.l.b16 %v342
    %v1402 = vunpack.c.l.b16 %v343
    %v1403 = vunpack.c.l.b16 %v344
    %v1404 = vunpack.c.l.b16 %v345
    %v1405 = vunpack.c.l.b16 %v346
    %v1406 = vunpack.c.l.b16 %v347
    %v1407 = vunpack.c.l.b16 %v348
    %v1408 = vunpack.c.l.b16 %v349
    %v1409 = vunpack.c.l.b16 %v350
    %v1410 = vunpack.c.l.b16 %v351
    %v1411 = vunpack.c.l.b16 %v352
    %v1412 = vunpack.c.l.b16 %v353
    %v1413 = vunpack.c.l.b16 %v354
    %v1414 = vunpack.c.l.b16 %v355
    %v1415 = vunpack.c.l.b16 %v356
    %v1416 = vunpack.c.l.b16 %v357
    %v1417 = vunpack.c.l.b16 %v358
    %v1418 = vunpack.c.l.b16 %v359
    %v1419 = vunpack.c.l.b16 %v360
    %v1420 = vunpack.c.l.b16 %v361
    %v1421 = vunpack.c.l.b16 %v362
    %v1422 = vunpack.c.l.b16 %v363
    %v1423 = vunpack.c.l.b16 %v364
    %v1424 = vunpack.c.l.b16 %v365
    %v1425 = vunpack.c.l.b16 %v366
    %v1426 = vunpack.c.l.b16 %v367
    %v1427 = vunpack.c.l.b16 %v368
    %v1428 = vunpack.c.l.b16 %v369
    %v1429 = vunpack.c.l.b16 %v370
    %v1430 = vunpack.c.l.b16 %v371
    %v1431 = vunpack.c.l.b16 %v372
    %v1432 = vunpack.c.l.b16 %v373
    %v1433 = vunpack.c.l.b16 %v374
    %v1434 = vunpack.c.l.b16 %v375
    %v1435 = vunpack.c.l.b16 %v376
    %v1436 = vunpack.c.l.b16 %v377
    %v1437 = vunpack.c.l.b16 %v378
    %v1438 = vunpack.c.l.b16 %v379
    %v1439 = vunpack.c.l.b16 %v380
    %v1440 = vunpack.c.l.b16 %v381
    %v1441 = vunpack.c.l.b16 %v382
    %v1442 = vunpack.c.l.b16 %v383
    %v1443 = vunpack.c.l.b16 %v384
    %v1444 = vunpack.c.l.b16 %v385
    %v1445 = vunpack.c.l.b16 %v386
    %v1446 = vunpack.c.l.b16 %v387
    %v1447 = vunpack.c.l.b16 %v388
    %v1448 = vunpack.c.l.b16 %v389
    %v1449 = vunpack.c.l.b16 %v390
    %v1450 = vunpack.c.l.b16 %v391
    %v1451 = vunpack.c.l.b16 %v392
    %v1452 = vunpack.c.l.b16 %v393
    %v1453 = vunpack.c.l.b16 %v394
    %v1454 = vunpack.c.l.b16 %v395
    %v1455 = vunpack.c.l.b16 %v396
    %v1456 = vunpack.c.l.b16 %v397
    %v1457 = vunpack.c.l.b16 %v398
    %v1458 = vunpack.c.l.b16 %v399
    %v1459 = vunpack.c.l.b16 %v400
    %v1460 = vunpack.c.l.b16 %v401
    %v1461 = vunpack.c.l.b16 %v402
    %v1462 = vunpack.c.l.b16 %v403
    %v1463 = vunpack.c.l.b16 %v404
    %v1464 = vunpack.c.l.b16 %v405
    %v1465 = vunpack.c.l.b16 %v406
    %v1466 = vunpack.c.l.b16 %v407
    %v1467 = vunpack.c.l.b16 %v408
    %v1468 = vunpack.c.l.b16 %v409
    %v1469 = vunpack.c.l.b16 %v410
    %v1470 = vunpack.c.l.b16 %v411
    %v1471 = vunpack.c.l.b16 %v412
    %v1472 = vunpack.c.l.b16 %v413
    %v1473 = vunpack.c.l.b16 %v414
    %v1474 = vunpack.c.l.b16 %v415
    %v1475 = vunpack.c.l.b16 %v416
    %v1476 = vunpack.c.l.b16 %v417
    %v1477 = vunpack.c.l.b16 %v418
    %v1478 = vunpack.c.l.b16 %v419
    %v1479 = vunpack.c.l.b16 %v420
    %v1480 = vunpack.c.l.b16 %v421
    %v1481 = vunpack.c.l.b16 %v422
    %v1482 = vunpack.c.l.b16 %v423
    %v1483 = vunpack.c.l.b16 %v424
    %v1484 = vunpack.c.l.b16 %v425
    %v1485 = vunpack.c.l.b16 %v426
    %v1486 = vunpack.c.l.b16 %v427
    %v1487 = vunpack.c.l.b16 %v428
    %v1488 = vunpack.c.l.b16 %v429
    %v1489 = vunpack.c.l.b16 %v430
    %v1490 = vunpack.c.l.b16 %v431
    %v1491 = vunpack.c.l.b16 %v432
    %v1492 = vunpack.c.l.b16 %v433
    %v1493 = vunpack.c.l.b16 %v434
    %v1494 = vunpack.c.l.b16 %v435
    %v1495 = vunpack.c.l.b16 %v436
    %v1496 = vunpack.c.l.b16 %v437
    %v1497 = vunpack.c.l.b16 %v438
    %v1498 = vunpack.c.l.b16 %v439
    %v1499 = vunpack.c.l.b16 %v440
    %v1500 = vunpack.c.l.b16 %v441
    %v1501 = vunpack.c.l.b16 %v442
    %v1502 = vunpack.c.l.b16 %v443
    %v1503 = vunpack.c.l.b16 %v444
    %v1504 = vunpack.c.l.b16 %v445
    %v1505 = vunpack.c.l.b16 %v446
    %v1506 = vunpack.c.l.b16 %v447
    %v1507 = vunpack.c.l.b16 %v448
    %v1508 = vunpack.c.l.b16 %v449
    %v1509 = vunpack.c.l.b16 %v450
    %v1510 = vunpack.c.l.b16 %v451
    %v1511 = vunpack.c.l.b16 %v452
    %v1512 = vunpack.c.l.b16 %v453
    %v1513 = vunpack.c.l.b16 %v454
    %v1514 = vunpack.c.l.b16 %v455
    %v1515 = vunpack.c.l.b16 %v456
    %v1516 = vunpack.c.l.b16 %v457
    %v1517 = vunpack.c.l.b16 %v458
    %v1518 = vunpack.c.l.b16 %v459
    %v1519 = vunpack.c.l.b16 %v460
    %v1520 = vunpack.c.l.b16 %v461
    %v1521 = vunpack.c.l.b16 %v462
    %v1522 = vunpack.c.l.b16 %v463
    %v1523 = vunpack.c.l.b16 %v464
    %v1524 = vunpack.c.l.b16 %v465
    %v1525 = vunpack.c.l.b16 %v466
    %v1526 = vunpack.c.l.b16 %v467
    %v1527 = vunpack.c.l.b16 %v468
    %v1528 = vunpack.c.l.b16 %v469
    %v1529 = vunpack.c.l.b16 %v470
    %v1530 = vunpack.c.l.b16 %v471
    %v1531 = vunpack.c.l.b16 %v472
    %v1532 = vunpack.c.l.b16 %v473
    %v1533 = vunpack.c.l.b16 %v474
    %v1534 = vunpack.c.l.b16 %v475
    %v1535 = vunpack.c.l.b16 %v476
    %v1536 = vunpack.c.l.b16 %v477
    %v1537 = vunpack.c.l.b16 %v478
    %v1538 = vunpack.c.l.b16 %v479
    %v1539 = vunpack.c.l.b16 %v480
    %v1540 = vunpack.c.l.b16 %v481
    %v1541 = vunpack.c.l.b16 %v482
    %v1542 = vunpack.c.l.b16 %v483
    %v1543 = vunpack.c.l.b16 %v484
    %v1544 = vunpack.c.l.b16 %v485
    %v1545 = vunpack.c.l.b16 %v486
    %v1546 = vunpack.c.l.b16 %v487
    %v1547 = vunpack.c.l.b16 %v488
    %v1548 = vunpack.c.l.b16 %v489
    %v1549 = vunpack.c.l.b16 %v490
    %v1550 = vunpack.c.l.b16 %v491
    %v1551 = vunpack.c.l.b16 %v492
    %v1552 = vunpack.c.l.b16 %v493
    %v1553 = vunpack.c.l.b16 %v494
    %v1554 = vunpack.c.l.b16 %v495
    %v1555 = vunpack.c.l.b16 %v496
    %v1556 = vunpack.c.l.b16 %v497
    %v1557 = vunpack.c.l.b16 %v498
    %v1558 = vunpack.c.l.b16 %v499
    %v1559 = vunpack.c.l.b16 %v500
    %v1560 = vunpack.c.l.b16 %v501
    %v1561 = vunpack.c.l.b16 %v502
    %v1562 = vunpack.c.l.b16 %v503
    %v1563 = vunpack.c.l.b16 %v504
    %v1564 = vunpack.c.l.b16 %v505
    %v1565 = vunpack.c.l.b16 %v506
    %v1566 = vunpack.c.l.b16 %v507
    %v1567 = vunpack.c.l.b16 %v508
    %v1568 = vunpack.c.l.b16 %v509
    %v1569 = vunpack.c.l.b16 %v510
    %v1570 = vunpack.c.l.b16 %v511
    %v1571 = vunpack.c.l.b16 %v512
    %v1572 = vunpack.c.l.b16 %v513
    %v1573 = vunpack.c.l.b16 %v514
    %v1574 = vunpack.c.l.b16 %v515
    %v1575 = vunpack.c.l.b16 %v516
    %v1576 = vunpack.c.l.b16 %v517
    %v1577 = vunpack.c.l.b16 %v518
    %v1578 = vunpack.c.l.b16 %v519
    %v1579 = vunpack.c.l.b16 %v520
    %v1580 = vunpack.c.l.b16 %v521
    %v1581 = vunpack.c.l.b16 %v522
    %v1582 = vunpack.c.l.b16 %v523
    %v1583 = vunpack.c.l.b16 %v524
    %v1584 = vunpack.c.l.b16 %v525
    %v1585 = vunpack.c.l.b16 %v526
    %v1586 = vunpack.c.l.b16 %v527
    %v1587 = vunpack.c.l.b16 %v528
    %v1588 = vpack.c.b16 %v1189, %v1188
    %v1589 = vpack.c.b16 %v1191, %v1190
    %v1590 = vpack.c.b16 %v1193, %v1192
    %v1591 = vpack.c.b16 %v1195, %v1194
    %v1592 = vpack.c.b16 %v1197, %v1196
    %v1593 = vpack.c.b16 %v1199, %v1198
    %v1594 = vpack.c.b16 %v1201, %v1200
    %v1595 = vpack.c.b16 %v1203, %v1202
    %v1596 = vpack.c.b16 %v1205, %v1204
    %v1597 = vpack.c.b16 %v1207, %v1206
    %v1598 = vpack.c.b16 %v1209, %v1208
    %v1599 = vpack.c.b16 %v1211, %v1210
    %v1600 = vpack.c.b16 %v1213, %v1212
    %v1601 = vpack.c.b16 %v1215, %v1214
    %v1602 = vpack.c.b16 %v1217, %v1216
    %v1603 = vpack.c.b16 %v1219, %v1218
    %v1604 = vpack.c.b16 %v1221, %v1220
    %v1605 = vpack.c.b16 %v1223, %v1222
    %v1606 = vpack.c.b16 %v1225, %v1224
    %v1607 = vpack.c.b16 %v1227, %v1226
    %v1608 = vpack.c.b16 %v1229, %v1228
    %v1609 = vpack.c.b16 %v1231, %v1230
    %v1610 = vpack.c.b16 %v1233, %v1232
    %v1611 = vpack.c.b16 %v1235, %v1234
    %v1612 = vpack.c.b16 %v1237, %v1236
    %v1613 = vpack.c.b16 %v1239, %v1238
    %v1614 = vpack.c.b16 %v1241, %v1240
    %v1615 = vpack.c.b16 %v1243, %v1242
    %v1616 = vpack.c.b16 %v1245, %v1244
    %v1617 = vpack.c.b16 %v1247, %v1246
    %v1618 = vpack.c.b16 %v1249, %v1248
    %v1619 = vpack.c.b16 %v1251, %v1250
    %v1620 = vpack.c.b16 %v1253, %v1252
    %v1621 = vpack.c.b16 %v1255, %v1254
    %v1622 = vpack.c.b16 %v1257, %v1256
    %v1623 = vpack.c.b16 %v1259, %v1258
    %v1624 = vpack.c.b16 %v1261, %v1260
    %v1625 = vpack.c.b16 %v1263, %v1262
    %v1626 = vpack.c.b16 %v1265, %v1264
    %v1627 = vpack.c.b16 %v1267, %v1266
    %v1628 = vpack.c.b16 %v1269, %v1268
    %v1629 = vpack.c.b16 %v1271, %v1270
    %v1630 = vpack.c.b16 %v1273, %v1272
    %v1631 = vpack.c.b16 %v1275, %v1274
    %v1632 = vpack.c.b16 %v1277, %v1276
    %v1633 = vpack.c.b16 %v1279, %v1278
    %v1634 = vpack.c.b16 %v1281, %v1280
    %v1635 = vpack.c.b16 %v1283, %v1282
    %v1636 = vpack.c.b16 %v1285, %v1284
    %v1637 = vpack.c.b16 %v1287, %v1286
    %v1638 = vpack.c.b16 %v1289, %v1288
    %v1639 = vpack.c.b16 %v1291, %v1290
    %v1640 = vpack.c.b16 %v1293, %v1292
    %v1641 = vpack.c.b16 %v1295, %v1294
    %v1642 = vpack.c.b16 %v1297, %v1296
    %v1643 = vpack.c.b16 %v1299, %v1298
    %v1644 = vpack.c.b16 %v1301, %v1300
    %v1645 = vpack.c.b16 %v1303, %v1302
    %v1646 = vpack.c.b16 %v1305, %v1304
    %v1647 = vpack.c.b16 %v1307, %v1306
    %v1648 = vpack.c.b16 %v1309, %v1308
    %v1649 = vpack.c.b16 %v1311, %v1310
    %v1650 = vpack.c.b16 %v1313, %v1312
    %v1651 = vpack.c.b16 %v1315, %v1314
    %v1652 = vpack.c.b16 %v1317, %v1316
    %v1653 = vpack.c.b16 %v1319, %v1318
    %v1654 = vpack.c.b16 %v1321, %v1320
    %v1655 = vpack.c.b16 %v1323, %v1322
    %v1656 = vpack.c.b16 %v1325, %v1324
    %v1657 = vpack.c.b16 %v1327, %v1326
    %v1658 = vpack.c.b16 %v1329, %v1328
    %v1659 = vpack.c.b16 %v1331, %v1330
    %v1660 = vpack.c.b16 %v1333, %v1332
    %v1661 = vpack.c.b16 %v1335, %v1334
    %v1662 = vpack.c.b16 %v1337, %v1336
    %v1663 = vpack.c.b16 %v1339, %v1338
    %v1664 = vpack.c.b16 %v1341, %v1340
    %v1665 = vpack.c.b16 %v1343, %v1342
    %v1666 = vpack.c.b16 %v1345, %v1344
    %v1667 = vpack.c.b16 %v1347, %v1346
    %v1668 = vpack.c.b16 %v1349, %v1348
    %v1669 = vpack.c.b16 %v1351, %v1350
    %v1670 = vpack.c.b16 %v1353, %v1352
    %v1671 = vpack.c.b16 %v1355, %v1354
    %v1672 = vpack.c.b16 %v1357, %v1356
    %v1673 = vpack.c.b16 %v1359, %v1358
    %v1674 = vpack.c.b16 %v1361, %v1360
    %v1675 = vpack.c.b16 %v1363, %v1362
    %v1676 = vpack.c.b16 %v1365, %v1364
    %v1677 = vpack.c.b16 %v1367, %v1366
    %v1678 = vpack.c.b16 %v1369, %v1368
    %v1679 = vpack.c.b16 %v1371, %v1370
    %v1680 = vpack.c.b16 %v1373, %v1372
    %v1681 = vpack.c.b16 %v1375, %v1374
    %v1682 = vpack.c.b16 %v1377, %v1376
    %v1683 = vpack.c.b16 %v1379, %v1378
    %v1684 = vpack.c.b16 %v1381, %v1380
    %v1685 = vpack.c.b16 %v1383, %v1382
    %v1686 = vpack.c.b16 %v1385, %v1384
    %v1687 = vpack.c.b16 %v1387, %v1386
    %v1688 = vpack.c.b16 %v1389, %v1388
    %v1689 = vpack.c.b16 %v1391, %v1390
    %v1690 = vpack.c.b16 %v1393, %v1392
    %v1691 = vpack.c.b16 %v1395, %v1394
    %v1692 = vpack.c.b16 %v1397, %v1396
    %v1693 = vpack.c.b16 %v1399, %v1398
    %v1694 = vpack.c.b16 %v1401, %v1400
    %v1695 = vpack.c.b16 %v1403, %v1402
    %v1696 = vpack.c.b16 %v1405, %v1404
    %v1697 = vpack.c.b16 %v1407, %v1406
    %v1698 = vpack.c.b16 %v1409, %v1408
    %v1699 = vpack.c.b16 %v1411, %v1410
    %v1700 = vpack.c.b16 %v1413, %v1412
    %v1701 = vpack.c.b16 %v1415, %v1414
    %v1702 = vpack.c.b16 %v1417, %v1416
    %v1703 = vpack.c.b16 %v1419, %v1418
    %v1704 = vpack.c.b16 %v1421, %v1420
    %v1705 = vpack.c.b16 %v1423, %v1422
    %v1706 = vpack.c.b16 %v1425, %v1424
    %v1707 = vpack.c.b16 %v1427, %v1426
    %v1708 = vpack.c.b16 %v1429, %v1428
    %v1709 = vpack.c.b16 %v1431, %v1430
    %v1710 = vpack.c.b16 %v1433, %v1432
    %v1711 = vpack.c.b16 %v1435, %v1434
    %v1712 = vpack.c.b16 %v1437, %v1436
    %v1713 = vpack.c.b16 %v1439, %v1438
    %v1714 = vpack.c.b16 %v1441, %v1440
    %v1715 = vpack.c.b16 %v1443, %v1442
    %v1716 = vpack.c.b16 %v1445, %v1444
    %v1717 = vpack.c.b16 %v1447, %v1446
    %v1718 = vpack.c.b16 %v1449, %v1448
    %v1719 = vpack.c.b16 %v1451, %v1450
    %v1720 = vpack.c.b16 %v1453, %v1452
    %v1721 = vpack.c.b16 %v1455, %v1454
    %v1722 = vpack.c.b16 %v1457, %v1456
    %v1723 = vpack.c.b16 %v1459, %v1458
    %v1724 = vpack.c.b16 %v1461, %v1460
    %v1725 = vpack.c.b16 %v1463, %v1462
    %v1726 = vpack.c.b16 %v1465, %v1464
    %v1727 = vpack.c.b16 %v1467, %v1466
    %v1728 = vpack.c.b16 %v1469, %v1468
    %v1729 = vpack.c.b16 %v1471, %v1470
    %v1730 = vpack.c.b16 %v1473, %v1472
    %v1731 = vpack.c.b16 %v1475, %v1474
    %v1732 = vpack.c.b16 %v1477, %v1476
    %v1733 = vpack.c.b16 %v1479, %v1478
    %v1734 = vpack.c.b16 %v1481, %v1480
    %v1735 = vpack.c.b16 %v1483, %v1482
    %v1736 = vpack.c.b16 %v1485, %v1484
    %v1737 = vpack.c.b16 %v1487, %v1486
    %v1738 = vpack.c.b16 %v1489, %v1488
    %v1739 = vpack.c.b16 %v1491, %v1490
    %v1740 = vpack.c.b16 %v1493, %v1492
    %v1741 = vpack.c.b16 %v1495, %v1494
    %v1742 = vpack.c.b16 %v1497, %v1496
    %v1743 = vpack.c.b16 %v1499, %v1498
    %v1744 = vpack.c.b16 %v1501, %v1500
    %v1745 = vpack.c.b16 %v1503, %v1502
    %v1746 = vpack.c.b16 %v1505, %v1504
    %v1747 = vpack.c.b16 %v1507, %v1506
    %v1748 = vpack.c.b16 %v1509, %v1508
    %v1749 = vpack.c.b16 %v1511, %v1510
    %v1750 = vpack.c.b16 %v1513, %v1512
    %v1751 = vpack.c.b16 %v1515, %v1514
    %v1752 = vpack.c.b16 %v1517, %v1516
    %v1753 = vpack.c.b16 %v1519, %v1518
    %v1754 = vpack.c.b16 %v1521, %v1520
    %v1755 = vpack.c.b16 %v1523, %v1522
    %v1756 = vpack.c.b16 %v1525, %v1524
    %v1757 = vpack.c.b16 %v1527, %v1526
    %v1758 = vpack.c.b16 %v1529, %v1528
    %v1759 = vpack.c.b16 %v1531, %v1530
    %v1760 = vpack.c.b16 %v1533, %v1532
    %v1761 = vpack.c.b16 %v1535, %v1534
    %v1762 = vpack.c.b16 %v1537, %v1536
    %v1763 = vpack.c.b16 %v1539, %v1538
    %v1764 = vpack.c.b16 %v1541, %v1540
    %v1765 = vpack.c.b16 %v1543, %v1542
    %v1766 = vpack.c.b16 %v1545, %v1544
    %v1767 = vpack.c.b16 %v1547, %v1546
    %v1768 = vpack.c.b16 %v1549, %v1548
    %v1769 = vpack.c.b16 %v1551, %v1550
    %v1770 = vpack.c.b16 %v1553, %v1552
    %v1771 = vpack.c.b16 %v1555, %v1554
    %v1772 = vpack.c.b16 %v1557, %v1556
    %v1773 = vpack.c.b16 %v1559, %v1558
    %v1774 = vpack.c.b16 %v1561, %v1560
    %v1775 = vpack.c.b16 %v1563, %v1562
    %v1776 = vpack.c.b16 %v1565, %v1564
    %v1777 = vpack.c.b16 %v1567, %v1566
    %v1778 = vpack.c.b16 %v1569, %v1568
    %v1779 = vpack.c.b16 %v1571, %v1570
    %v1780 = vpack.c.b16 %v1573, %v1572
    %v1781 = vpack.c.b16 %v1575, %v1574
    %v1782 = vpack.c.b16 %v1577, %v1576
    %v1783 = vpack.c.b16 %v1579, %v1578
    %v1784 = vpack.c.b16 %v1581, %v1580
    %v1785 = vpack.c.b16 %v1583, %v1582
    %v1786 = vpack.c.b16 %v1585, %v1584
    %v1787 = vpack.c.b16 %v1587, %v1586
    %1988 = vmatprep.subr.bf16.mxu0 0
    %1989 = vmatpush1.bf16.msra.mxu0 %v1595
    %1990 = vmatprep.subr.bf16.mxu0 0
    %1991 = vmatpush1.bf16.msra.mxu0 %v1594
    %1992 = vmatprep.subr.bf16.mxu0 0
    %1993 = vmatpush1.bf16.msra.mxu0 %v1593
    %1994 = vmatprep.subr.bf16.mxu0 0
    %1995 = vmatpush1.bf16.msra.mxu0 %v1592
    %1996 = vmatprep.subr.bf16.mxu0 0
    %1997 = vmatpush1.bf16.msra.mxu0 %v1591
    %1998 = vmatprep.subr.bf16.mxu0 0
    %1999 = vmatpush1.bf16.msra.mxu0 %v1590
    %2000 = vmatprep.subr.bf16.mxu0 0
    %2001 = vmatpush1.bf16.msra.mxu0 %v1589
    %2002 = vmatprep.subr.bf16.mxu0 0
    %2003 = vmatpush1.bf16.msra.mxu0 %v1588
    %2004 = vmatprep.subr.bf16.mxu0 0
    %2005 = vmatpush2.bf16.msra.mxu0 %v1603
    %2006 = vmatprep.subr.bf16.mxu0 0
    %2007 = vmatpush2.bf16.msra.mxu0 %v1602
    %2008 = vmatprep.subr.bf16.mxu0 0
    %2009 = vmatpush2.bf16.msra.mxu0 %v1601
    %2010 = vmatprep.subr.bf16.mxu0 0
    %2011 = vmatpush2.bf16.msra.mxu0 %v1600
    %2012 = vmatprep.subr.bf16.mxu0 0
    %2013 = vmatpush2.bf16.msra.mxu0 %v1599
    %2014 = vmatprep.subr.bf16.mxu0 0
    %2015 = vmatpush2.bf16.msra.mxu0 %v1598
    %2016 = vmatprep.subr.bf16.mxu0 0
    %2017 = vmatpush2.bf16.msra.mxu0 %v1597
    %2018 = vmatprep.subr.bf16.mxu0 0
    %2019 = vmatpush2.bf16.msra.mxu0 %v1596
    %2020 = vmatprep.mubr.bf16.mxu0 %v689
    %2021 = vmatmul.mubr.bf16.gmra.mxu0 %v688
    %v2022 = vpop.f32.mrf.mxu0
    %v2023 = vadd.f32 %v534, %v2022
    %v2024 = vpop.f32.mrf.mxu0
    %v2025 = vpop.f32.mrf.mxu0
    %v2026 = vadd.f32 %v534, %v2025
    %v2027 = vpop.f32.mrf.mxu0
    %2028 = vmatprep.mubr.bf16.mxu0 %v714
    %2029 = vmatmul.mubr.bf16.gmra.mxu0 %v713
    %v2030 = vpop.f32.mrf.mxu0
    %v2031 = vadd.f32 %v534, %v2030
    %v2032 = vpop.f32.mrf.mxu0
    %v2033 = vpop.f32.mrf.mxu0
    %v2034 = vadd.f32 %v534, %v2033
    %v2035 = vpop.f32.mrf.mxu0
    %2036 = vdwg.mxu0
    %2037 = vmatprep.subr.bf16.mxu0 0
    %2038 = vmatpush1.bf16.msra.mxu0 %v1611
    %2039 = vmatprep.subr.bf16.mxu0 0
    %2040 = vmatpush1.bf16.msra.mxu0 %v1610
    %2041 = vmatprep.subr.bf16.mxu0 0
    %2042 = vmatpush1.bf16.msra.mxu0 %v1609
    %2043 = vmatprep.subr.bf16.mxu0 0
    %2044 = vmatpush1.bf16.msra.mxu0 %v1608
    %2045 = vmatprep.subr.bf16.mxu0 0
    %2046 = vmatpush1.bf16.msra.mxu0 %v1607
    %2047 = vmatprep.subr.bf16.mxu0 0
    %2048 = vmatpush1.bf16.msra.mxu0 %v1606
    %2049 = vmatprep.subr.bf16.mxu0 0
    %2050 = vmatpush1.bf16.msra.mxu0 %v1605
    %2051 = vmatprep.subr.bf16.mxu0 0
    %2052 = vmatpush1.bf16.msra.mxu0 %v1604
    %2053 = vmatprep.subr.bf16.mxu0 0
    %2054 = vmatpush2.bf16.msra.mxu0 %v1619
    %2055 = vmatprep.subr.bf16.mxu0 0
    %2056 = vmatpush2.bf16.msra.mxu0 %v1618
    %2057 = vmatprep.subr.bf16.mxu0 0
    %2058 = vmatpush2.bf16.msra.mxu0 %v1617
    %2059 = vmatprep.subr.bf16.mxu0 0
    %2060 = vmatpush2.bf16.msra.mxu0 %v1616
    %2061 = vmatprep.subr.bf16.mxu0 0
    %2062 = vmatpush2.bf16.msra.mxu0 %v1615
    %2063 = vmatprep.subr.bf16.mxu0 0
    %2064 = vmatpush2.bf16.msra.mxu0 %v1614
    %2065 = vmatprep.subr.bf16.mxu0 0
    %2066 = vmatpush2.bf16.msra.mxu0 %v1613
    %2067 = vmatprep.subr.bf16.mxu0 0
    %2068 = vmatpush2.bf16.msra.mxu0 %v1612
    %2069 = vmatprep.mubr.bf16.mxu0 %v691
    %2070 = vmatmul.mubr.bf16.gmra.mxu0 %v690
    %v2071 = vpop.f32.mrf.mxu0
    %v2072 = vadd.f32 %v2023, %v2071
    %v2073 = vpop.f32.mrf.mxu0
    %v2074 = vpop.f32.mrf.mxu0
    %v2075 = vadd.f32 %v2026, %v2074
    %v2076 = vpop.f32.mrf.mxu0
    %2077 = vmatprep.mubr.bf16.mxu0 %v716
    %2078 = vmatmul.mubr.bf16.gmra.mxu0 %v715
    %v2079 = vpop.f32.mrf.mxu0
    %v2080 = vadd.f32 %v2031, %v2079
    %v2081 = vpop.f32.mrf.mxu0
    %v2082 = vpop.f32.mrf.mxu0
    %v2083 = vadd.f32 %v2034, %v2082
    %v2084 = vpop.f32.mrf.mxu0
    %2085 = vdwg.mxu0
    %2086 = vmatprep.subr.bf16.mxu0 0
    %2087 = vmatpush1.bf16.msra.mxu0 %v1627
    %2088 = vmatprep.subr.bf16.mxu0 0
    %2089 = vmatpush1.bf16.msra.mxu0 %v1626
    %2090 = vmatprep.subr.bf16.mxu0 0
    %2091 = vmatpush1.bf16.msra.mxu0 %v1625
    %2092 = vmatprep.subr.bf16.mxu0 0
    %2093 = vmatpush1.bf16.msra.mxu0 %v1624
    %2094 = vmatprep.subr.bf16.mxu0 0
    %2095 = vmatpush1.bf16.msra.mxu0 %v1623
    %2096 = vmatprep.subr.bf16.mxu0 0
    %2097 = vmatpush1.bf16.msra.mxu0 %v1622
    %2098 = vmatprep.subr.bf16.mxu0 0
    %2099 = vmatpush1.bf16.msra.mxu0 %v1621
    %2100 = vmatprep.subr.bf16.mxu0 0
    %2101 = vmatpush1.bf16.msra.mxu0 %v1620
    %2102 = vmatprep.subr.bf16.mxu0 0
    %2103 = vmatpush2.bf16.msra.mxu0 %v1635
    %2104 = vmatprep.subr.bf16.mxu0 0
    %2105 = vmatpush2.bf16.msra.mxu0 %v1634
    %2106 = vmatprep.subr.bf16.mxu0 0
    %2107 = vmatpush2.bf16.msra.mxu0 %v1633
    %2108 = vmatprep.subr.bf16.mxu0 0
    %2109 = vmatpush2.bf16.msra.mxu0 %v1632
    %2110 = vmatprep.subr.bf16.mxu0 0
    %2111 = vmatpush2.bf16.msra.mxu0 %v1631
    %2112 = vmatprep.subr.bf16.mxu0 0
    %2113 = vmatpush2.bf16.msra.mxu0 %v1630
    %2114 = vmatprep.subr.bf16.mxu0 0
    %2115 = vmatpush2.bf16.msra.mxu0 %v1629
    %2116 = vmatprep.subr.bf16.mxu0 0
    %2117 = vmatpush2.bf16.msra.mxu0 %v1628
    %2118 = vmatprep.mubr.bf16.mxu0 %v693
    %2119 = vmatmul.mubr.bf16.gmra.mxu0 %v692
    %v2120 = vpop.f32.mrf.mxu0
    %v2121 = vadd.f32 %v2072, %v2120
    %v2122 = vpop.f32.mrf.mxu0
    %v2123 = vpop.f32.mrf.mxu0
    %v2124 = vadd.f32 %v2075, %v2123
    %v2125 = vpop.f32.mrf.mxu0
    %2126 = vmatprep.mubr.bf16.mxu0 %v718
    %2127 = vmatmul.mubr.bf16.gmra.mxu0 %v717
    %v2128 = vpop.f32.mrf.mxu0
    %v2129 = vadd.f32 %v2080, %v2128
    %v2130 = vpop.f32.mrf.mxu0
    %v2131 = vpop.f32.mrf.mxu0
    %v2132 = vadd.f32 %v2083, %v2131
    %v2133 = vpop.f32.mrf.mxu0
    %2134 = vdwg.mxu0
    %2135 = vmatprep.subr.bf16.mxu0 0
    %2136 = vmatpush1.bf16.msra.mxu0 %v1643
    %2137 = vmatprep.subr.bf16.mxu0 0
    %2138 = vmatpush1.bf16.msra.mxu0 %v1642
    %2139 = vmatprep.subr.bf16.mxu0 0
    %2140 = vmatpush1.bf16.msra.mxu0 %v1641
    %2141 = vmatprep.subr.bf16.mxu0 0
    %2142 = vmatpush1.bf16.msra.mxu0 %v1640
    %2143 = vmatprep.subr.bf16.mxu0 0
    %2144 = vmatpush1.bf16.msra.mxu0 %v1639
    %2145 = vmatprep.subr.bf16.mxu0 0
    %2146 = vmatpush1.bf16.msra.mxu0 %v1638
    %2147 = vmatprep.subr.bf16.mxu0 0
    %2148 = vmatpush1.bf16.msra.mxu0 %v1637
    %2149 = vmatprep.subr.bf16.mxu0 0
    %2150 = vmatpush1.bf16.msra.mxu0 %v1636
    %2151 = vmatprep.subr.bf16.mxu0 0
    %2152 = vmatpush2.bf16.msra.mxu0 %v1651
    %2153 = vmatprep.subr.bf16.mxu0 0
    %2154 = vmatpush2.bf16.msra.mxu0 %v1650
    %2155 = vmatprep.subr.bf16.mxu0 0
    %2156 = vmatpush2.bf16.msra.mxu0 %v1649
    %2157 = vmatprep.subr.bf16.mxu0 0
    %2158 = vmatpush2.bf16.msra.mxu0 %v1648
    %2159 = vmatprep.subr.bf16.mxu0 0
    %2160 = vmatpush2.bf16.msra.mxu0 %v1647
    %2161 = vmatprep.subr.bf16.mxu0 0
    %2162 = vmatpush2.bf16.msra.mxu0 %v1646
    %2163 = vmatprep.subr.bf16.mxu0 0
    %2164 = vmatpush2.bf16.msra.mxu0 %v1645
    %2165 = vmatprep.subr.bf16.mxu0 0
    %2166 = vmatpush2.bf16.msra.mxu0 %v1644
    %2167 = vmatprep.mubr.bf16.mxu0 %v695
    %2168 = vmatmul.mubr.bf16.gmra.mxu0 %v694
    %v2169 = vpop.f32.mrf.mxu0
    %v2170 = vadd.f32 %v2121, %v2169
    %v2171 = vpop.f32.mrf.mxu0
    %v2172 = vpop.f32.mrf.mxu0
    %v2173 = vadd.f32 %v2124, %v2172
    %v2174 = vpop.f32.mrf.mxu0
    %2175 = vmatprep.mubr.bf16.mxu0 %v720
    %2176 = vmatmul.mubr.bf16.gmra.mxu0 %v719
    %v2177 = vpop.f32.mrf.mxu0
    %v2178 = vadd.f32 %v2129, %v2177
    %v2179 = vpop.f32.mrf.mxu0
    %v2180 = vpop.f32.mrf.mxu0
    %v2181 = vadd.f32 %v2132, %v2180
    %v2182 = vpop.f32.mrf.mxu0
    %2183 = vdwg.mxu0
    %2184 = vmatprep.subr.bf16.mxu0 0
    %2185 = vmatpush1.bf16.msra.mxu0 %v1659
    %2186 = vmatprep.subr.bf16.mxu0 0
    %2187 = vmatpush1.bf16.msra.mxu0 %v1658
    %2188 = vmatprep.subr.bf16.mxu0 0
    %2189 = vmatpush1.bf16.msra.mxu0 %v1657
    %2190 = vmatprep.subr.bf16.mxu0 0
    %2191 = vmatpush1.bf16.msra.mxu0 %v1656
    %2192 = vmatprep.subr.bf16.mxu0 0
    %2193 = vmatpush1.bf16.msra.mxu0 %v1655
    %2194 = vmatprep.subr.bf16.mxu0 0
    %2195 = vmatpush1.bf16.msra.mxu0 %v1654
    %2196 = vmatprep.subr.bf16.mxu0 0
    %2197 = vmatpush1.bf16.msra.mxu0 %v1653
    %2198 = vmatprep.subr.bf16.mxu0 0
    %2199 = vmatpush1.bf16.msra.mxu0 %v1652
    %2200 = vmatprep.subr.bf16.mxu0 0
    %2201 = vmatpush2.bf16.msra.mxu0 %v1667
    %2202 = vmatprep.subr.bf16.mxu0 0
    %2203 = vmatpush2.bf16.msra.mxu0 %v1666
    %2204 = vmatprep.subr.bf16.mxu0 0
    %2205 = vmatpush2.bf16.msra.mxu0 %v1665
    %2206 = vmatprep.subr.bf16.mxu0 0
    %2207 = vmatpush2.bf16.msra.mxu0 %v1664
    %2208 = vmatprep.subr.bf16.mxu0 0
    %2209 = vmatpush2.bf16.msra.mxu0 %v1663
    %2210 = vmatprep.subr.bf16.mxu0 0
    %2211 = vmatpush2.bf16.msra.mxu0 %v1662
    %2212 = vmatprep.subr.bf16.mxu0 0
    %2213 = vmatpush2.bf16.msra.mxu0 %v1661
    %2214 = vmatprep.subr.bf16.mxu0 0
    %2215 = vmatpush2.bf16.msra.mxu0 %v1660
    %2216 = vmatprep.mubr.bf16.mxu0 %v697
    %2217 = vmatmul.mubr.bf16.gmra.mxu0 %v696
    %v2218 = vpop.f32.mrf.mxu0
    %v2219 = vadd.f32 %v2170, %v2218
    %v2220 = vpop.f32.mrf.mxu0
    %v2221 = vpop.f32.mrf.mxu0
    %v2222 = vadd.f32 %v2173, %v2221
    %v2223 = vpop.f32.mrf.mxu0
    %2224 = vmatprep.mubr.bf16.mxu0 %v722
    %2225 = vmatmul.mubr.bf16.gmra.mxu0 %v721
    %v2226 = vpop.f32.mrf.mxu0
    %v2227 = vadd.f32 %v2178, %v2226
    %v2228 = vpop.f32.mrf.mxu0
    %v2229 = vpop.f32.mrf.mxu0
    %v2230 = vadd.f32 %v2181, %v2229
    %v2231 = vpop.f32.mrf.mxu0
    %2232 = vdwg.mxu0
    %2233 = vmatprep.subr.bf16.mxu0 0
    %2234 = vmatpush1.bf16.msra.mxu0 %v1675
    %2235 = vmatprep.subr.bf16.mxu0 0
    %2236 = vmatpush1.bf16.msra.mxu0 %v1674
    %2237 = vmatprep.subr.bf16.mxu0 0
    %2238 = vmatpush1.bf16.msra.mxu0 %v1673
    %2239 = vmatprep.subr.bf16.mxu0 0
    %2240 = vmatpush1.bf16.msra.mxu0 %v1672
    %2241 = vmatprep.subr.bf16.mxu0 0
    %2242 = vmatpush1.bf16.msra.mxu0 %v1671
    %2243 = vmatprep.subr.bf16.mxu0 0
    %2244 = vmatpush1.bf16.msra.mxu0 %v1670
    %2245 = vmatprep.subr.bf16.mxu0 0
    %2246 = vmatpush1.bf16.msra.mxu0 %v1669
    %2247 = vmatprep.subr.bf16.mxu0 0
    %2248 = vmatpush1.bf16.msra.mxu0 %v1668
    %2249 = vmatprep.subr.bf16.mxu0 0
    %2250 = vmatpush2.bf16.msra.mxu0 %v1683
    %2251 = vmatprep.subr.bf16.mxu0 0
    %2252 = vmatpush2.bf16.msra.mxu0 %v1682
    %2253 = vmatprep.subr.bf16.mxu0 0
    %2254 = vmatpush2.bf16.msra.mxu0 %v1681
    %2255 = vmatprep.subr.bf16.mxu0 0
    %2256 = vmatpush2.bf16.msra.mxu0 %v1680
    %2257 = vmatprep.subr.bf16.mxu0 0
    %2258 = vmatpush2.bf16.msra.mxu0 %v1679
    %2259 = vmatprep.subr.bf16.mxu0 0
    %2260 = vmatpush2.bf16.msra.mxu0 %v1678
    %2261 = vmatprep.subr.bf16.mxu0 0
    %2262 = vmatpush2.bf16.msra.mxu0 %v1677
    %2263 = vmatprep.subr.bf16.mxu0 0
    %2264 = vmatpush2.bf16.msra.mxu0 %v1676
    %2265 = vmatprep.mubr.bf16.mxu0 %v699
    %2266 = vmatmul.mubr.bf16.gmra.mxu0 %v698
    %v2267 = vpop.f32.mrf.mxu0
    %v2268 = vadd.f32 %v2219, %v2267
    %v2269 = vpop.f32.mrf.mxu0
    %v2270 = vpop.f32.mrf.mxu0
    %v2271 = vadd.f32 %v2222, %v2270
    %v2272 = vpop.f32.mrf.mxu0
    %2273 = vmatprep.mubr.bf16.mxu0 %v724
    %2274 = vmatmul.mubr.bf16.gmra.mxu0 %v723
    %v2275 = vpop.f32.mrf.mxu0
    %v2276 = vadd.f32 %v2227, %v2275
    %v2277 = vpop.f32.mrf.mxu0
    %v2278 = vpop.f32.mrf.mxu0
    %v2279 = vadd.f32 %v2230, %v2278
    %v2280 = vpop.f32.mrf.mxu0
    %2281 = vdwg.mxu0
    %2282 = vmatprep.subr.bf16.mxu0 0
    %2283 = vmatpush1.bf16.msra.mxu0 %v1691
    %2284 = vmatprep.subr.bf16.mxu0 0
    %2285 = vmatpush1.bf16.msra.mxu0 %v1690
    %2286 = vmatprep.subr.bf16.mxu0 0
    %2287 = vmatpush1.bf16.msra.mxu0 %v1689
    %2288 = vmatprep.subr.bf16.mxu0 0
    %2289 = vmatpush1.bf16.msra.mxu0 %v1688
    %2290 = vmatprep.subr.bf16.mxu0 0
    %2291 = vmatpush1.bf16.msra.mxu0 %v1687
    %2292 = vmatprep.subr.bf16.mxu0 0
    %2293 = vmatpush1.bf16.msra.mxu0 %v1686
    %2294 = vmatprep.subr.bf16.mxu0 0
    %2295 = vmatpush1.bf16.msra.mxu0 %v1685
    %2296 = vmatprep.subr.bf16.mxu0 0
    %2297 = vmatpush1.bf16.msra.mxu0 %v1684
    %2298 = vmatprep.subr.bf16.mxu0 0
    %2299 = vmatpush2.bf16.msra.mxu0 %v1699
    %2300 = vmatprep.subr.bf16.mxu0 0
    %2301 = vmatpush2.bf16.msra.mxu0 %v1698
    %2302 = vmatprep.subr.bf16.mxu0 0
    %2303 = vmatpush2.bf16.msra.mxu0 %v1697
    %2304 = vmatprep.subr.bf16.mxu0 0
    %2305 = vmatpush2.bf16.msra.mxu0 %v1696
    %2306 = vmatprep.subr.bf16.mxu0 0
    %2307 = vmatpush2.bf16.msra.mxu0 %v1695
    %2308 = vmatprep.subr.bf16.mxu0 0
    %2309 = vmatpush2.bf16.msra.mxu0 %v1694
    %2310 = vmatprep.subr.bf16.mxu0 0
    %2311 = vmatpush2.bf16.msra.mxu0 %v1693
    %2312 = vmatprep.subr.bf16.mxu0 0
    %2313 = vmatpush2.bf16.msra.mxu0 %v1692
    %2314 = vmatprep.mubr.bf16.mxu0 %v701
    %2315 = vmatmul.mubr.bf16.gmra.mxu0 %v700
    %v2316 = vpop.f32.mrf.mxu0
    %v2317 = vadd.f32 %v2268, %v2316
    %v2318 = vpop.f32.mrf.mxu0
    %v2319 = vpop.f32.mrf.mxu0
    %v2320 = vadd.f32 %v2271, %v2319
    %v2321 = vpop.f32.mrf.mxu0
    %2322 = vmatprep.mubr.bf16.mxu0 %v726
    %2323 = vmatmul.mubr.bf16.gmra.mxu0 %v725
    %v2324 = vpop.f32.mrf.mxu0
    %v2325 = vadd.f32 %v2276, %v2324
    %v2326 = vpop.f32.mrf.mxu0
    %v2327 = vpop.f32.mrf.mxu0
    %v2328 = vadd.f32 %v2279, %v2327
    %v2329 = vpop.f32.mrf.mxu0
    %2330 = vdwg.mxu0
    %2331 = vmatprep.subr.bf16.mxu0 0
    %2332 = vmatpush1.bf16.msra.mxu0 %v1707
    %2333 = vmatprep.subr.bf16.mxu0 0
    %2334 = vmatpush1.bf16.msra.mxu0 %v1706
    %2335 = vmatprep.subr.bf16.mxu0 0
    %2336 = vmatpush1.bf16.msra.mxu0 %v1705
    %2337 = vmatprep.subr.bf16.mxu0 0
    %2338 = vmatpush1.bf16.msra.mxu0 %v1704
    %2339 = vmatprep.subr.bf16.mxu0 0
    %2340 = vmatpush1.bf16.msra.mxu0 %v1703
    %2341 = vmatprep.subr.bf16.mxu0 0
    %2342 = vmatpush1.bf16.msra.mxu0 %v1702
    %2343 = vmatprep.subr.bf16.mxu0 0
    %2344 = vmatpush1.bf16.msra.mxu0 %v1701
    %2345 = vmatprep.subr.bf16.mxu0 0
    %2346 = vmatpush1.bf16.msra.mxu0 %v1700
    %2347 = vmatprep.subr.bf16.mxu0 0
    %2348 = vmatpush2.bf16.msra.mxu0 %v1715
    %2349 = vmatprep.subr.bf16.mxu0 0
    %2350 = vmatpush2.bf16.msra.mxu0 %v1714
    %2351 = vmatprep.subr.bf16.mxu0 0
    %2352 = vmatpush2.bf16.msra.mxu0 %v1713
    %2353 = vmatprep.subr.bf16.mxu0 0
    %2354 = vmatpush2.bf16.msra.mxu0 %v1712
    %2355 = vmatprep.subr.bf16.mxu0 0
    %2356 = vmatpush2.bf16.msra.mxu0 %v1711
    %2357 = vmatprep.subr.bf16.mxu0 0
    %2358 = vmatpush2.bf16.msra.mxu0 %v1710
    %2359 = vmatprep.subr.bf16.mxu0 0
    %2360 = vmatpush2.bf16.msra.mxu0 %v1709
    %2361 = vmatprep.subr.bf16.mxu0 0
    %2362 = vmatpush2.bf16.msra.mxu0 %v1708
    %2363 = vmatprep.mubr.bf16.mxu0 %v703
    %2364 = vmatmul.mubr.bf16.gmra.mxu0 %v702
    %v2365 = vpop.f32.mrf.mxu0
    %v2366 = vadd.f32 %v2317, %v2365
    %v2367 = vpop.f32.mrf.mxu0
    %v2368 = vpop.f32.mrf.mxu0
    %v2369 = vadd.f32 %v2320, %v2368
    %v2370 = vpop.f32.mrf.mxu0
    %2371 = vmatprep.mubr.bf16.mxu0 %v728
    %2372 = vmatmul.mubr.bf16.gmra.mxu0 %v727
    %v2373 = vpop.f32.mrf.mxu0
    %v2374 = vadd.f32 %v2325, %v2373
    %v2375 = vpop.f32.mrf.mxu0
    %v2376 = vpop.f32.mrf.mxu0
    %v2377 = vadd.f32 %v2328, %v2376
    %v2378 = vpop.f32.mrf.mxu0
    %2379 = vdwg.mxu0
    %2380 = vmatprep.subr.bf16.mxu0 0
    %2381 = vmatpush1.bf16.msra.mxu0 %v1723
    %2382 = vmatprep.subr.bf16.mxu0 0
    %2383 = vmatpush1.bf16.msra.mxu0 %v1722
    %2384 = vmatprep.subr.bf16.mxu0 0
    %2385 = vmatpush1.bf16.msra.mxu0 %v1721
    %2386 = vmatprep.subr.bf16.mxu0 0
    %2387 = vmatpush1.bf16.msra.mxu0 %v1720
    %2388 = vmatprep.subr.bf16.mxu0 0
    %2389 = vmatpush1.bf16.msra.mxu0 %v1719
    %2390 = vmatprep.subr.bf16.mxu0 0
    %2391 = vmatpush1.bf16.msra.mxu0 %v1718
    %2392 = vmatprep.subr.bf16.mxu0 0
    %2393 = vmatpush1.bf16.msra.mxu0 %v1717
    %2394 = vmatprep.subr.bf16.mxu0 0
    %2395 = vmatpush1.bf16.msra.mxu0 %v1716
    %2396 = vmatprep.subr.bf16.mxu0 0
    %2397 = vmatpush2.bf16.msra.mxu0 %v1731
    %2398 = vmatprep.subr.bf16.mxu0 0
    %2399 = vmatpush2.bf16.msra.mxu0 %v1730
    %2400 = vmatprep.subr.bf16.mxu0 0
    %2401 = vmatpush2.bf16.msra.mxu0 %v1729
    %2402 = vmatprep.subr.bf16.mxu0 0
    %2403 = vmatpush2.bf16.msra.mxu0 %v1728
    %2404 = vmatprep.subr.bf16.mxu0 0
    %2405 = vmatpush2.bf16.msra.mxu0 %v1727
    %2406 = vmatprep.subr.bf16.mxu0 0
    %2407 = vmatpush2.bf16.msra.mxu0 %v1726
    %2408 = vmatprep.subr.bf16.mxu0 0
    %2409 = vmatpush2.bf16.msra.mxu0 %v1725
    %2410 = vmatprep.subr.bf16.mxu0 0
    %2411 = vmatpush2.bf16.msra.mxu0 %v1724
    %2412 = vmatprep.mubr.bf16.mxu0 %v705
    %2413 = vmatmul.mubr.bf16.gmra.mxu0 %v704
    %v2414 = vpop.f32.mrf.mxu0
    %v2415 = vadd.f32 %v2366, %v2414
    %v2416 = vpop.f32.mrf.mxu0
    %v2417 = vpop.f32.mrf.mxu0
    %v2418 = vadd.f32 %v2369, %v2417
    %v2419 = vpop.f32.mrf.mxu0
    %2420 = vmatprep.mubr.bf16.mxu0 %v730
    %2421 = vmatmul.mubr.bf16.gmra.mxu0 %v729
    %v2422 = vpop.f32.mrf.mxu0
    %v2423 = vadd.f32 %v2374, %v2422
    %v2424 = vpop.f32.mrf.mxu0
    %v2425 = vpop.f32.mrf.mxu0
    %v2426 = vadd.f32 %v2377, %v2425
    %v2427 = vpop.f32.mrf.mxu0
    %2428 = vdwg.mxu0
    %2429 = vmatprep.subr.bf16.mxu0 0
    %2430 = vmatpush1.bf16.msra.mxu0 %v1739
    %2431 = vmatprep.subr.bf16.mxu0 0
    %2432 = vmatpush1.bf16.msra.mxu0 %v1738
    %2433 = vmatprep.subr.bf16.mxu0 0
    %2434 = vmatpush1.bf16.msra.mxu0 %v1737
    %2435 = vmatprep.subr.bf16.mxu0 0
    %2436 = vmatpush1.bf16.msra.mxu0 %v1736
    %2437 = vmatprep.subr.bf16.mxu0 0
    %2438 = vmatpush1.bf16.msra.mxu0 %v1735
    %2439 = vmatprep.subr.bf16.mxu0 0
    %2440 = vmatpush1.bf16.msra.mxu0 %v1734
    %2441 = vmatprep.subr.bf16.mxu0 0
    %2442 = vmatpush1.bf16.msra.mxu0 %v1733
    %2443 = vmatprep.subr.bf16.mxu0 0
    %2444 = vmatpush1.bf16.msra.mxu0 %v1732
    %2445 = vmatprep.subr.bf16.mxu0 0
    %2446 = vmatpush2.bf16.msra.mxu0 %v1747
    %2447 = vmatprep.subr.bf16.mxu0 0
    %2448 = vmatpush2.bf16.msra.mxu0 %v1746
    %2449 = vmatprep.subr.bf16.mxu0 0
    %2450 = vmatpush2.bf16.msra.mxu0 %v1745
    %2451 = vmatprep.subr.bf16.mxu0 0
    %2452 = vmatpush2.bf16.msra.mxu0 %v1744
    %2453 = vmatprep.subr.bf16.mxu0 0
    %2454 = vmatpush2.bf16.msra.mxu0 %v1743
    %2455 = vmatprep.subr.bf16.mxu0 0
    %2456 = vmatpush2.bf16.msra.mxu0 %v1742
    %2457 = vmatprep.subr.bf16.mxu0 0
    %2458 = vmatpush2.bf16.msra.mxu0 %v1741
    %2459 = vmatprep.subr.bf16.mxu0 0
    %2460 = vmatpush2.bf16.msra.mxu0 %v1740
    %2461 = vmatprep.mubr.bf16.mxu0 %v707
    %2462 = vmatmul.mubr.bf16.gmra.mxu0 %v706
    %v2463 = vpop.f32.mrf.mxu0
    %v2464 = vadd.f32 %v2415, %v2463
    %v2465 = vpop.f32.mrf.mxu0
    %v2466 = vpop.f32.mrf.mxu0
    %v2467 = vadd.f32 %v2418, %v2466
    %v2468 = vpop.f32.mrf.mxu0
    %2469 = vmatprep.mubr.bf16.mxu0 %v732
    %2470 = vmatmul.mubr.bf16.gmra.mxu0 %v731
    %v2471 = vpop.f32.mrf.mxu0
    %v2472 = vadd.f32 %v2423, %v2471
    %v2473 = vpop.f32.mrf.mxu0
    %v2474 = vpop.f32.mrf.mxu0
    %v2475 = vadd.f32 %v2426, %v2474
    %v2476 = vpop.f32.mrf.mxu0
    %2477 = vdwg.mxu0
    %2478 = vmatprep.subr.bf16.mxu0 0
    %2479 = vmatpush1.bf16.msra.mxu0 %v1755
    %2480 = vmatprep.subr.bf16.mxu0 0
    %2481 = vmatpush1.bf16.msra.mxu0 %v1754
    %2482 = vmatprep.subr.bf16.mxu0 0
    %2483 = vmatpush1.bf16.msra.mxu0 %v1753
    %2484 = vmatprep.subr.bf16.mxu0 0
    %2485 = vmatpush1.bf16.msra.mxu0 %v1752
    %2486 = vmatprep.subr.bf16.mxu0 0
    %2487 = vmatpush1.bf16.msra.mxu0 %v1751
    %2488 = vmatprep.subr.bf16.mxu0 0
    %2489 = vmatpush1.bf16.msra.mxu0 %v1750
    %2490 = vmatprep.subr.bf16.mxu0 0
    %2491 = vmatpush1.bf16.msra.mxu0 %v1749
    %2492 = vmatprep.subr.bf16.mxu0 0
    %2493 = vmatpush1.bf16.msra.mxu0 %v1748
    %2494 = vmatprep.subr.bf16.mxu0 0
    %2495 = vmatpush2.bf16.msra.mxu0 %v1763
    %2496 = vmatprep.subr.bf16.mxu0 0
    %2497 = vmatpush2.bf16.msra.mxu0 %v1762
    %2498 = vmatprep.subr.bf16.mxu0 0
    %2499 = vmatpush2.bf16.msra.mxu0 %v1761
    %2500 = vmatprep.subr.bf16.mxu0 0
    %2501 = vmatpush2.bf16.msra.mxu0 %v1760
    %2502 = vmatprep.subr.bf16.mxu0 0
    %2503 = vmatpush2.bf16.msra.mxu0 %v1759
    %2504 = vmatprep.subr.bf16.mxu0 0
    %2505 = vmatpush2.bf16.msra.mxu0 %v1758
    %2506 = vmatprep.subr.bf16.mxu0 0
    %2507 = vmatpush2.bf16.msra.mxu0 %v1757
    %2508 = vmatprep.subr.bf16.mxu0 0
    %2509 = vmatpush2.bf16.msra.mxu0 %v1756
    %2510 = vmatprep.mubr.bf16.mxu0 %v709
    %2511 = vmatmul.mubr.bf16.gmra.mxu0 %v708
    %v2512 = vpop.f32.mrf.mxu0
    %v2513 = vadd.f32 %v2464, %v2512
    %v2514 = vpop.f32.mrf.mxu0
    %v2515 = vpop.f32.mrf.mxu0
    %v2516 = vadd.f32 %v2467, %v2515
    %v2517 = vpop.f32.mrf.mxu0
    %2518 = vmatprep.mubr.bf16.mxu0 %v734
    %2519 = vmatmul.mubr.bf16.gmra.mxu0 %v733
    %v2520 = vpop.f32.mrf.mxu0
    %v2521 = vadd.f32 %v2472, %v2520
    %v2522 = vpop.f32.mrf.mxu0
    %v2523 = vpop.f32.mrf.mxu0
    %v2524 = vadd.f32 %v2475, %v2523
    %v2525 = vpop.f32.mrf.mxu0
    %2526 = vdwg.mxu0
    %2527 = vmatprep.subr.bf16.mxu0 0
    %2528 = vmatpush1.bf16.msra.mxu0 %v1771
    %2529 = vmatprep.subr.bf16.mxu0 0
    %2530 = vmatpush1.bf16.msra.mxu0 %v1770
    %2531 = vmatprep.subr.bf16.mxu0 0
    %2532 = vmatpush1.bf16.msra.mxu0 %v1769
    %2533 = vmatprep.subr.bf16.mxu0 0
    %2534 = vmatpush1.bf16.msra.mxu0 %v1768
    %2535 = vmatprep.subr.bf16.mxu0 0
    %2536 = vmatpush1.bf16.msra.mxu0 %v1767
    %2537 = vmatprep.subr.bf16.mxu0 0
    %2538 = vmatpush1.bf16.msra.mxu0 %v1766
    %2539 = vmatprep.subr.bf16.mxu0 0
    %2540 = vmatpush1.bf16.msra.mxu0 %v1765
    %2541 = vmatprep.subr.bf16.mxu0 0
    %2542 = vmatpush1.bf16.msra.mxu0 %v1764
    %2543 = vmatprep.subr.bf16.mxu0 0
    %2544 = vmatpush2.bf16.msra.mxu0 %v1779
    %2545 = vmatprep.subr.bf16.mxu0 0
    %2546 = vmatpush2.bf16.msra.mxu0 %v1778
    %2547 = vmatprep.subr.bf16.mxu0 0
    %2548 = vmatpush2.bf16.msra.mxu0 %v1777
    %2549 = vmatprep.subr.bf16.mxu0 0
    %2550 = vmatpush2.bf16.msra.mxu0 %v1776
    %2551 = vmatprep.subr.bf16.mxu0 0
    %2552 = vmatpush2.bf16.msra.mxu0 %v1775
    %2553 = vmatprep.subr.bf16.mxu0 0
    %2554 = vmatpush2.bf16.msra.mxu0 %v1774
    %2555 = vmatprep.subr.bf16.mxu0 0
    %2556 = vmatpush2.bf16.msra.mxu0 %v1773
    %2557 = vmatprep.subr.bf16.mxu0 0
    %2558 = vmatpush2.bf16.msra.mxu0 %v1772
    %2559 = vmatprep.mubr.bf16.mxu0 %v711
    %2560 = vmatmul.mubr.bf16.gmra.mxu0 %v710
    %v2561 = vpop.f32.mrf.mxu0
    %v2562 = vadd.f32 %v2513, %v2561
    %v2563 = vpop.f32.mrf.mxu0
    %v2564 = vpop.f32.mrf.mxu0
    %v2565 = vadd.f32 %v2516, %v2564
    %v2566 = vpop.f32.mrf.mxu0
    %2567 = vmatprep.mubr.bf16.mxu0 %v736
    %2568 = vmatmul.mubr.bf16.gmra.mxu0 %v735
    %v2569 = vpop.f32.mrf.mxu0
    %v2570 = vadd.f32 %v2521, %v2569
    %v2571 = vpop.f32.mrf.mxu0
    %v2572 = vpop.f32.mrf.mxu0
    %v2573 = vadd.f32 %v2524, %v2572
    %v2574 = vpop.f32.mrf.mxu0
    %2575 = vdwg.mxu0
    %2576 = vmatprep.subr.bf16.mxu0 0
    %2577 = vmatpush1.bf16.msra.mxu0 %v1787
    %2578 = vmatprep.subr.bf16.mxu0 0
    %2579 = vmatpush1.bf16.msra.mxu0 %v1786
    %2580 = vmatprep.subr.bf16.mxu0 0
    %2581 = vmatpush1.bf16.msra.mxu0 %v1785
    %2582 = vmatprep.subr.bf16.mxu0 0
    %2583 = vmatpush1.bf16.msra.mxu0 %v1784
    %2584 = vmatprep.subr.bf16.mxu0 0
    %2585 = vmatpush1.bf16.msra.mxu0 %v1783
    %2586 = vmatprep.subr.bf16.mxu0 0
    %2587 = vmatpush1.bf16.msra.mxu0 %v1782
    %2588 = vmatprep.subr.bf16.mxu0 0
    %2589 = vmatpush1.bf16.msra.mxu0 %v1781
    %2590 = vmatprep.subr.bf16.mxu0 0
    %2591 = vmatpush1.bf16.msra.mxu0 %v1780
    %2592 = vmatprep.subr.bf16.mxu0 0
    %2593 = vmatpush2.bf16.msra.mxu0 0
    %2594 = vmatprep.subr.bf16.mxu0 0
    %2595 = vmatpush2.bf16.msra.mxu0 0
    %2596 = vmatprep.subr.bf16.mxu0 0
    %2597 = vmatpush2.bf16.msra.mxu0 0
    %2598 = vmatprep.subr.bf16.mxu0 0
    %2599 = vmatpush2.bf16.msra.mxu0 0
    %2600 = vmatprep.subr.bf16.mxu0 0
    %2601 = vmatpush2.bf16.msra.mxu0 0
    %2602 = vmatprep.subr.bf16.mxu0 0
    %2603 = vmatpush2.bf16.msra.mxu0 0
    %2604 = vmatprep.subr.bf16.mxu0 0
    %2605 = vmatpush2.bf16.msra.mxu0 0
    %2606 = vmatprep.subr.bf16.mxu0 0
    %2607 = vmatpush2.bf16.msra.mxu0 0
    %2608 = vmatprep.mubr.bf16.mxu0 0
    %2609 = vmatmul.mubr.bf16.gmra.mxu0 %v712
    %v2610 = vpop.f32.mrf.mxu0
    %v2611 = vadd.f32 %v2562, %v2610
    %v2612 = vpop.f32.mrf.mxu0
    %v2613 = vpop.f32.mrf.mxu0
    %v2614 = vadd.f32 %v2565, %v2613
    %v2615 = vpop.f32.mrf.mxu0
    %2616 = vmatprep.mubr.bf16.mxu0 0
    %2617 = vmatmul.mubr.bf16.gmra.mxu0 %v737
    %v2618 = vpop.f32.mrf.mxu0
    %v2619 = vadd.f32 %v2570, %v2618
    %v2620 = vpop.f32.mrf.mxu0
    %v2621 = vpop.f32.mrf.mxu0
    %v2622 = vadd.f32 %v2573, %v2621
    %v2623 = vpop.f32.mrf.mxu0
    %2624 = vdwg.mxu0
    %v2625 = vmax.f32 %v2611, 0.0
    %v2626 = vmax.f32 %v2614, 0.0
    %v2627 = vmax.f32 %v2619, 0.0
    %v2628 = vmax.f32 %v2622, 0.0
    %v2629 = vld [vmem:[%s3] sm:$0xff]
    %v2630 = vld [vmem:[%s3 + $0x8] sm:$0xff]
    %v2631 = vld [vmem:[%s3 + $0x10] sm:$0xff]
    %v2632 = vld [vmem:[%s3 + $0x18] sm:$0xff]
    %v2633 = vld [vmem:[%s3 + $0x20] sm:$0xff]
    %v2634 = vld [vmem:[%s3 + $0x28] sm:$0xff]
    %v2635 = vld [vmem:[%s3 + $0x30] sm:$0xff]
    %v2636 = vld [vmem:[%s3 + $0x38] sm:$0xff]
    %v2637 = vld [vmem:[%s4] sm:$0x1]
    %v2639 = vlaneseq
    %v2640 = vshrl.u32 %v2639, 7
    %v2641 = vsub.s32 0, %v2640
    %v2642 = vrot.slane %v2637, %v2641
    %vm2644 = vcmask 523264
    %v2646 = vsel %vm2644, %v2625, 0
    %v2649 = vsel %vm2644, %v2626, 0
    %v2652 = vsel %vm2644, %v2627, 0
    %v2655 = vsel %vm2644, %v2628, 0
    %2657 = vmatprep.subr.mxu0 0.0
    %2658 = vmatpush1.msra.mxu0 0.0
    %2659 = vmatprep.subr.mxu0 0.0
    %2660 = vmatpush1.msra.mxu0 0.0
    %2661 = vmatprep.subr.mxu0 0.0
    %2662 = vmatpush1.msra.mxu0 0.0
    %2663 = vmatprep.subr.mxu0 0.0
    %2664 = vmatpush1.msra.mxu0 0.0
    %2665 = vmatprep.subr.mxu0 0.0
    %2666 = vmatpush1.msra.mxu0 0.0
    %2667 = vmatprep.subr.mxu0 0.0
    %2668 = vmatpush1.msra.mxu0 0.0
    %2669 = vmatprep.subr.mxu0 0.0
    %2670 = vmatpush1.msra.mxu0 0.0
    %2671 = vmatprep.subr.mxu0 0.0
    %2672 = vmatpush1.msra.mxu0 0.0
    %2673 = vmatprep.subr.mxu0 0.0
    %2674 = vmatpush1.msra.mxu0 %v2636
    %2675 = vmatprep.subr.mxu0 0.0
    %2676 = vmatpush1.msra.mxu0 %v2635
    %2677 = vmatprep.subr.mxu0 0.0
    %2678 = vmatpush1.msra.mxu0 %v2634
    %2679 = vmatprep.subr.mxu0 0.0
    %2680 = vmatpush1.msra.mxu0 %v2633
    %2681 = vmatprep.subr.mxu0 0.0
    %2682 = vmatpush1.msra.mxu0 %v2632
    %2683 = vmatprep.subr.mxu0 0.0
    %2684 = vmatpush1.msra.mxu0 %v2631
    %2685 = vmatprep.subr.mxu0 0.0
    %2686 = vmatpush1.msra.mxu0 %v2630
    %2687 = vmatprep.subr.mxu0 0.0
    %2688 = vmatpush1.msra.mxu0 %v2629
    %2689 = vmatprep.subr.mxu0 0.0
    %2690 = vmatpush2.msra.mxu0 0.0
    %2691 = vmatprep.subr.mxu0 0.0
    %2692 = vmatpush2.msra.mxu0 0.0
    %2693 = vmatprep.subr.mxu0 0.0
    %2694 = vmatpush2.msra.mxu0 0.0
    %2695 = vmatprep.subr.mxu0 0.0
    %2696 = vmatpush2.msra.mxu0 0.0
    %2697 = vmatprep.subr.mxu0 0.0
    %2698 = vmatpush2.msra.mxu0 0.0
    %2699 = vmatprep.subr.mxu0 0.0
    %2700 = vmatpush2.msra.mxu0 0.0
    %2701 = vmatprep.subr.mxu0 0.0
    %2702 = vmatpush2.msra.mxu0 0.0
    %2703 = vmatprep.subr.mxu0 0.0
    %2704 = vmatpush2.msra.mxu0 0.0
    %2705 = vmatprep.subr.mxu0 0.0
    %2706 = vmatpush2.msra.mxu0 0.0
    %2707 = vmatprep.subr.mxu0 0.0
    %2708 = vmatpush2.msra.mxu0 0.0
    %2709 = vmatprep.subr.mxu0 0.0
    %2710 = vmatpush2.msra.mxu0 0.0
    %2711 = vmatprep.subr.mxu0 0.0
    %2712 = vmatpush2.msra.mxu0 0.0
    %2713 = vmatprep.subr.mxu0 0.0
    %2714 = vmatpush2.msra.mxu0 0.0
    %2715 = vmatprep.subr.mxu0 0.0
    %2716 = vmatpush2.msra.mxu0 0.0
    %2717 = vmatprep.subr.mxu0 0.0
    %2718 = vmatpush2.msra.mxu0 0.0
    %2719 = vmatprep.subr.mxu0 0.0
    %2720 = vmatpush2.msra.mxu0 0.0
    %2721 = vmatprep.mubr.f32.mxu0 0.0
    %2722 = vmatmul.mubr.f32.gmra.mxu0 %v2646
    %v2723 = vpop.f32.mrf.mxu0
    %v2724 = vadd.f32 %v2642, %v2723
    %v2725 = vpop.f32.mrf.mxu0
    %2726 = vmatprep.mubr.f32.mxu0 0.0
    %2727 = vmatmul.mubr.f32.gmra.mxu0 %v2649
    %v2728 = vpop.f32.mrf.mxu0
    %v2729 = vadd.f32 %v2642, %v2728
    %v2730 = vpop.f32.mrf.mxu0
    %2731 = vmatprep.mubr.f32.mxu0 0.0
    %2732 = vmatmul.mubr.f32.gmra.mxu0 %v2652
    %v2733 = vpop.f32.mrf.mxu0
    %v2734 = vadd.f32 %v2642, %v2733
    %v2735 = vpop.f32.mrf.mxu0
    %2736 = vmatprep.mubr.f32.mxu0 0.0
    %2737 = vmatmul.mubr.f32.gmra.mxu0 %v2655
    %v2738 = vpop.f32.mrf.mxu0
    %v2739 = vadd.f32 %v2642, %v2738
    %v2740 = vpop.f32.mrf.mxu0
    %2741 = vdwg.mxu0
    %v2742 = vld [vmem:[%s5] sm:$0x3]
    %v2743 = vlaneseq
    %v2744 = vshrl.u32 %v2743, 7
    %v2745 = vsub.s32 0, %v2744
    %v2746 = vrot.slane %v2742, %v2745
    %2748 = vbcast.lane.b32.xlu0 %v2746, 256
    %v2749 = vpop.permute.xlu0 %2748
    %v2750 = vlaneseq
    %v2751 = vshrl.u32 %v2750, 7
    %v2752 = vsub.s32 1, %v2751
    %v2753 = vrot.slane %v2742, %v2752
    %2755 = vbcast.lane.b32.xlu0 %v2753, 256
    %v2756 = vpop.permute.xlu0 %2755
    %v2757 = vlaneseq
    %v2758 = vand.u32 %v2757, 127
    %vm2759 = vcmp.eq.s32.totalorder %v2749, %v2758
    %vm2760 = vcmp.eq.s32.totalorder %v2756, %v2758
    %v2761 = vsel %vm2759, 1, 0
    %v2762 = vsel %vm2760, 1, 0
    %v2763 = vcvt.s32.f32 %v2761
    %v2764 = vcvt.s32.f32 %v2762
    %v2765 = vld [vmem:[%s6] sm:$0xff]
    %v2766 = vld [vmem:[%s6 + $0x8] sm:$0xff]
    %v2767 = vld [vmem:[%s6 + $0x10] sm:$0xf]
    %v2768 = vld [vmem:[%s7] sm:$0xff]
    %v2769 = vld [vmem:[%s7 + $0x8] sm:$0xff]
    %v2770 = vld [vmem:[%s7 + $0x10] sm:$0xff]
    %v2771 = vld [vmem:[%s7 + $0x18] sm:$0xff]
    %v2772 = vld [vmem:[%s7 + $0x20] sm:$0xff]
    %v2773 = vld [vmem:[%s7 + $0x28] sm:$0xff]
    %v2774 = vld [vmem:[%s7 + $0x30] sm:$0xff]
    %v2775 = vld [vmem:[%s7 + $0x38] sm:$0xff]
    %v2776 = vld [vmem:[%s7 + $0x40] sm:$0xff]
    %v2777 = vld [vmem:[%s7 + $0x48] sm:$0xff]
    %v2778 = vld [vmem:[%s7 + $0x50] sm:$0xff]
    %v2779 = vld [vmem:[%s7 + $0x58] sm:$0xff]
    %v2780 = vld [vmem:[%s7 + $0x60] sm:$0xff]
    %v2781 = vld [vmem:[%s7 + $0x68] sm:$0xff]
    %v2782 = vld [vmem:[%s7 + $0x70] sm:$0xff]
    %v2783 = vld [vmem:[%s7 + $0x78] sm:$0xff]
    %v2784 = vld [vmem:[%s7 + $0x80] sm:$0xff]
    %v2785 = vld [vmem:[%s7 + $0x88] sm:$0xff]
    %v2786 = vld [vmem:[%s7 + $0x90] sm:$0xff]
    %v2787 = vld [vmem:[%s7 + $0x98] sm:$0xff]
    %v2788 = vld [vmem:[%s7 + $0xa0] sm:$0xff]
    %v2789 = vld [vmem:[%s7 + $0xa8] sm:$0xff]
    %v2790 = vld [vmem:[%s7 + $0xb0] sm:$0xff]
    %v2791 = vld [vmem:[%s7 + $0xb8] sm:$0xff]
    %v2792 = vld [vmem:[%s7 + $0xc0] sm:$0xff]
    %v2793 = vld [vmem:[%s7 + $0xc8] sm:$0xff]
    %v2794 = vld [vmem:[%s7 + $0xd0] sm:$0xff]
    %v2795 = vld [vmem:[%s7 + $0xd8] sm:$0xff]
    %v2796 = vld [vmem:[%s7 + $0xe0] sm:$0xff]
    %v2797 = vld [vmem:[%s7 + $0xe8] sm:$0xff]
    %v2798 = vld [vmem:[%s7 + $0xf0] sm:$0xff]
    %v2799 = vld [vmem:[%s7 + $0xf8] sm:$0xff]
    %v2801 = vsel %vm2644, %v2765, 0
    %v2804 = vsel %vm2644, %v2766, 0
    %v2807 = vsel %vm2644, %v2767, 0
    %2809 = vmatprep.subr.mxu0 0.0
    %2810 = vmatpush1.msra.mxu0 0.0
    %2811 = vmatprep.subr.mxu0 0.0
    %2812 = vmatpush1.msra.mxu0 0.0
    %2813 = vmatprep.subr.mxu0 0.0
    %2814 = vmatpush1.msra.mxu0 0.0
    %2815 = vmatprep.subr.mxu0 0.0
    %2816 = vmatpush1.msra.mxu0 0.0
    %2817 = vmatprep.subr.mxu0 0.0
    %2818 = vmatpush1.msra.mxu0 0.0
    %2819 = vmatprep.subr.mxu0 0.0
    %2820 = vmatpush1.msra.mxu0 0.0
    %2821 = vmatprep.subr.mxu0 0.0
    %2822 = vmatpush1.msra.mxu0 0.0
    %2823 = vmatprep.subr.mxu0 0.0
    %2824 = vmatpush1.msra.mxu0 0.0
    %2825 = vmatprep.subr.mxu0 %v2797
    %2826 = vmatpush1.msra.mxu0 %v2796
    %2827 = vmatprep.subr.mxu0 %v2793
    %2828 = vmatpush1.msra.mxu0 %v2792
    %2829 = vmatprep.subr.mxu0 %v2789
    %2830 = vmatpush1.msra.mxu0 %v2788
    %2831 = vmatprep.subr.mxu0 %v2785
    %2832 = vmatpush1.msra.mxu0 %v2784
    %2833 = vmatprep.subr.mxu0 %v2781
    %2834 = vmatpush1.msra.mxu0 %v2780
    %2835 = vmatprep.subr.mxu0 %v2777
    %2836 = vmatpush1.msra.mxu0 %v2776
    %2837 = vmatprep.subr.mxu0 %v2773
    %2838 = vmatpush1.msra.mxu0 %v2772
    %2839 = vmatprep.subr.mxu0 %v2769
    %2840 = vmatpush1.msra.mxu0 %v2768
    %2841 = vmatprep.subr.mxu0 0.0
    %2842 = vmatpush2.msra.mxu0 0.0
    %2843 = vmatprep.subr.mxu0 0.0
    %2844 = vmatpush2.msra.mxu0 0.0
    %2845 = vmatprep.subr.mxu0 0.0
    %2846 = vmatpush2.msra.mxu0 0.0
    %2847 = vmatprep.subr.mxu0 0.0
    %2848 = vmatpush2.msra.mxu0 0.0
    %2849 = vmatprep.subr.mxu0 0.0
    %2850 = vmatpush2.msra.mxu0 0.0
    %2851 = vmatprep.subr.mxu0 0.0
    %2852 = vmatpush2.msra.mxu0 0.0
    %2853 = vmatprep.subr.mxu0 0.0
    %2854 = vmatpush2.msra.mxu0 0.0
    %2855 = vmatprep.subr.mxu0 0.0
    %2856 = vmatpush2.msra.mxu0 0.0
    %2857 = vmatprep.subr.mxu0 0.0
    %2858 = vmatpush2.msra.mxu0 0.0
    %2859 = vmatprep.subr.mxu0 0.0
    %2860 = vmatpush2.msra.mxu0 0.0
    %2861 = vmatprep.subr.mxu0 0.0
    %2862 = vmatpush2.msra.mxu0 0.0
    %2863 = vmatprep.subr.mxu0 0.0
    %2864 = vmatpush2.msra.mxu0 0.0
    %2865 = vmatprep.subr.mxu0 0.0
    %2866 = vmatpush2.msra.mxu0 0.0
    %2867 = vmatprep.subr.mxu0 0.0
    %2868 = vmatpush2.msra.mxu0 0.0
    %2869 = vmatprep.subr.mxu0 0.0
    %2870 = vmatpush2.msra.mxu0 0.0
    %2871 = vmatprep.subr.mxu0 0.0
    %2872 = vmatpush2.msra.mxu0 0.0
    %2873 = vmatprep.mubr.f32.mxu0 0.0
    %2874 = vmatmul.mubr.f32.gmra.mxu0 %v2801
    %v2875 = vpop.f32.mrf.mxu0
    %v2876 = vadd.f32 0.0, %v2875
    %v2877 = vpop.f32.mrf.mxu0
    %v2878 = vadd.f32 0.0, %v2877
    %2879 = vmatprep.mubr.f32.mxu0 0.0
    %2880 = vmatmul.mubr.f32.gmra.mxu0 %v2804
    %v2881 = vpop.f32.mrf.mxu0
    %v2882 = vadd.f32 0.0, %v2881
    %v2883 = vpop.f32.mrf.mxu0
    %v2884 = vadd.f32 0.0, %v2883
    %2885 = vmatprep.mubr.f32.mxu0 0.0
    %2886 = vmatmul.mubr.f32.gmra.mxu0 %v2807
    %v2887 = vpop.f32.mrf.mxu0
    %v2888 = vadd.f32 0.0, %v2887
    %v2889 = vpop.f32.mrf.mxu0
    %v2890 = vadd.f32 0.0, %v2889
    %2891 = vdwg.mxu0
    %2892 = vmatprep.subr.mxu0 0.0
    %2893 = vmatpush1.msra.mxu0 0.0
    %2894 = vmatprep.subr.mxu0 0.0
    %2895 = vmatpush1.msra.mxu0 0.0
    %2896 = vmatprep.subr.mxu0 0.0
    %2897 = vmatpush1.msra.mxu0 0.0
    %2898 = vmatprep.subr.mxu0 0.0
    %2899 = vmatpush1.msra.mxu0 0.0
    %2900 = vmatprep.subr.mxu0 0.0
    %2901 = vmatpush1.msra.mxu0 0.0
    %2902 = vmatprep.subr.mxu0 0.0
    %2903 = vmatpush1.msra.mxu0 0.0
    %2904 = vmatprep.subr.mxu0 0.0
    %2905 = vmatpush1.msra.mxu0 0.0
    %2906 = vmatprep.subr.mxu0 0.0
    %2907 = vmatpush1.msra.mxu0 0.0
    %2908 = vmatprep.subr.mxu0 %v2799
    %2909 = vmatpush1.msra.mxu0 %v2798
    %2910 = vmatprep.subr.mxu0 %v2795
    %2911 = vmatpush1.msra.mxu0 %v2794
    %2912 = vmatprep.subr.mxu0 %v2791
    %2913 = vmatpush1.msra.mxu0 %v2790
    %2914 = vmatprep.subr.mxu0 %v2787
    %2915 = vmatpush1.msra.mxu0 %v2786
    %2916 = vmatprep.subr.mxu0 %v2783
    %2917 = vmatpush1.msra.mxu0 %v2782
    %2918 = vmatprep.subr.mxu0 %v2779
    %2919 = vmatpush1.msra.mxu0 %v2778
    %2920 = vmatprep.subr.mxu0 %v2775
    %2921 = vmatpush1.msra.mxu0 %v2774
    %2922 = vmatprep.subr.mxu0 %v2771
    %2923 = vmatpush1.msra.mxu0 %v2770
    %2924 = vmatprep.subr.mxu0 0.0
    %2925 = vmatpush2.msra.mxu0 0.0
    %2926 = vmatprep.subr.mxu0 0.0
    %2927 = vmatpush2.msra.mxu0 0.0
    %2928 = vmatprep.subr.mxu0 0.0
    %2929 = vmatpush2.msra.mxu0 0.0
    %2930 = vmatprep.subr.mxu0 0.0
    %2931 = vmatpush2.msra.mxu0 0.0
    %2932 = vmatprep.subr.mxu0 0.0
    %2933 = vmatpush2.msra.mxu0 0.0
    %2934 = vmatprep.subr.mxu0 0.0
    %2935 = vmatpush2.msra.mxu0 0.0
    %2936 = vmatprep.subr.mxu0 0.0
    %2937 = vmatpush2.msra.mxu0 0.0
    %2938 = vmatprep.subr.mxu0 0.0
    %2939 = vmatpush2.msra.mxu0 0.0
    %2940 = vmatprep.subr.mxu0 0.0
    %2941 = vmatpush2.msra.mxu0 0.0
    %2942 = vmatprep.subr.mxu0 0.0
    %2943 = vmatpush2.msra.mxu0 0.0
    %2944 = vmatprep.subr.mxu0 0.0
    %2945 = vmatpush2.msra.mxu0 0.0
    %2946 = vmatprep.subr.mxu0 0.0
    %2947 = vmatpush2.msra.mxu0 0.0
    %2948 = vmatprep.subr.mxu0 0.0
    %2949 = vmatpush2.msra.mxu0 0.0
    %2950 = vmatprep.subr.mxu0 0.0
    %2951 = vmatpush2.msra.mxu0 0.0
    %2952 = vmatprep.subr.mxu0 0.0
    %2953 = vmatpush2.msra.mxu0 0.0
    %2954 = vmatprep.subr.mxu0 0.0
    %2955 = vmatpush2.msra.mxu0 0.0
    %2956 = vmatprep.mubr.f32.mxu0 0.0
    %2957 = vmatmul.mubr.f32.gmra.mxu0 %v2801
    %v2958 = vpop.f32.mrf.mxu0
    %v2959 = vadd.f32 0.0, %v2958
    %v2960 = vpop.f32.mrf.mxu0
    %v2961 = vadd.f32 0.0, %v2960
    %2962 = vmatprep.mubr.f32.mxu0 0.0
    %2963 = vmatmul.mubr.f32.gmra.mxu0 %v2804
    %v2964 = vpop.f32.mrf.mxu0
    %v2965 = vadd.f32 0.0, %v2964
    %v2966 = vpop.f32.mrf.mxu0
    %v2967 = vadd.f32 0.0, %v2966
    %2968 = vmatprep.mubr.f32.mxu0 0.0
    %2969 = vmatmul.mubr.f32.gmra.mxu0 %v2807
    %v2970 = vpop.f32.mrf.mxu0
    %v2971 = vadd.f32 0.0, %v2970
    %v2972 = vpop.f32.mrf.mxu0
    %v2973 = vadd.f32 0.0, %v2972
    %2974 = vdwg.mxu0
    %v2975 = vld [vmem:[%s8] sm:$0xf]
    %v2977 = vlaneseq
    %v2978 = vshrl.u32 %v2977, 7
    %v2979 = vsub.s32 0, %v2978
    %v2980 = vrot.slane %v2975, %v2979
    %v2981 = vlaneseq
    %v2982 = vshrl.u32 %v2981, 7
    %v2983 = vsub.s32 1, %v2982
    %v2984 = vrot.slane %v2975, %v2983
    %v2985 = vlaneseq
    %v2986 = vshrl.u32 %v2985, 7
    %v2987 = vsub.s32 2, %v2986
    %v2988 = vrot.slane %v2975, %v2987
    %v2989 = vlaneseq
    %v2990 = vshrl.u32 %v2989, 7
    %v2991 = vsub.s32 3, %v2990
    %v2992 = vrot.slane %v2975, %v2991
    %vm2997 = vcmask 162816
    %v2999 = vsel %vm2997, %v2763, 0
    %v3002 = vsel %vm2997, %v2764, 0
    %vm3004 = vcmask 1043456
    %v3006 = vsel %vm3004, %v2888, 0
    %v3009 = vsel %vm3004, %v2890, 0
    %v3012 = vsel %vm3004, %v2971, 0
    %v3015 = vsel %vm3004, %v2973, 0
    %3017 = vmatprep.subr.mxu0 0.0
    %3018 = vmatpush1.msra.mxu0 0.0
    %3019 = vmatprep.subr.mxu0 0.0
    %3020 = vmatpush1.msra.mxu0 0.0
    %3021 = vmatprep.subr.mxu0 0.0
    %3022 = vmatpush1.msra.mxu0 0.0
    %3023 = vmatprep.subr.mxu0 0.0
    %3024 = vmatpush1.msra.mxu0 0.0
    %3025 = vmatprep.subr.mxu0 0.0
    %3026 = vmatpush1.msra.mxu0 0.0
    %3027 = vmatprep.subr.mxu0 0.0
    %3028 = vmatpush1.msra.mxu0 0.0
    %3029 = vmatprep.subr.mxu0 0.0
    %3030 = vmatpush1.msra.mxu0 0.0
    %3031 = vmatprep.subr.mxu0 0.0
    %3032 = vmatpush1.msra.mxu0 0.0
    %3033 = vmatprep.subr.mxu0 0.0
    %3034 = vmatpush1.msra.mxu0 0.0
    %3035 = vmatprep.subr.mxu0 0.0
    %3036 = vmatpush1.msra.mxu0 0.0
    %3037 = vmatprep.subr.mxu0 0.0
    %3038 = vmatpush1.msra.mxu0 0.0
    %3039 = vmatprep.subr.mxu0 0.0
    %3040 = vmatpush1.msra.mxu0 0.0
    %3041 = vmatprep.subr.mxu0 0.0
    %3042 = vmatpush1.msra.mxu0 0.0
    %3043 = vmatprep.subr.mxu0 %v3009
    %3044 = vmatpush1.msra.mxu0 %v3006
    %3045 = vmatprep.subr.mxu0 %v2884
    %3046 = vmatpush1.msra.mxu0 %v2882
    %3047 = vmatprep.subr.mxu0 %v2878
    %3048 = vmatpush1.msra.mxu0 %v2876
    %3049 = vmatprep.subr.mxu0 0.0
    %3050 = vmatpush2.msra.mxu0 0.0
    %3051 = vmatprep.subr.mxu0 0.0
    %3052 = vmatpush2.msra.mxu0 0.0
    %3053 = vmatprep.subr.mxu0 0.0
    %3054 = vmatpush2.msra.mxu0 0.0
    %3055 = vmatprep.subr.mxu0 0.0
    %3056 = vmatpush2.msra.mxu0 0.0
    %3057 = vmatprep.subr.mxu0 0.0
    %3058 = vmatpush2.msra.mxu0 0.0
    %3059 = vmatprep.subr.mxu0 0.0
    %3060 = vmatpush2.msra.mxu0 0.0
    %3061 = vmatprep.subr.mxu0 0.0
    %3062 = vmatpush2.msra.mxu0 0.0
    %3063 = vmatprep.subr.mxu0 0.0
    %3064 = vmatpush2.msra.mxu0 0.0
    %3065 = vmatprep.subr.mxu0 0.0
    %3066 = vmatpush2.msra.mxu0 0.0
    %3067 = vmatprep.subr.mxu0 0.0
    %3068 = vmatpush2.msra.mxu0 0.0
    %3069 = vmatprep.subr.mxu0 0.0
    %3070 = vmatpush2.msra.mxu0 0.0
    %3071 = vmatprep.subr.mxu0 0.0
    %3072 = vmatpush2.msra.mxu0 0.0
    %3073 = vmatprep.subr.mxu0 0.0
    %3074 = vmatpush2.msra.mxu0 0.0
    %3075 = vmatprep.subr.mxu0 0.0
    %3076 = vmatpush2.msra.mxu0 0.0
    %3077 = vmatprep.subr.mxu0 0.0
    %3078 = vmatpush2.msra.mxu0 0.0
    %3079 = vmatprep.subr.mxu0 0.0
    %3080 = vmatpush2.msra.mxu0 0.0
    %3081 = vmatprep.mubr.f32.mxu0 0.0
    %3082 = vmatmul.mubr.f32.gmra.mxu0 %v2999
    %v3083 = vpop.f32.mrf.mxu0
    %v3084 = vadd.f32 %v2980, %v3083
    %v3085 = vpop.f32.mrf.mxu0
    %v3086 = vadd.f32 %v2984, %v3085
    %3087 = vmatprep.mubr.f32.mxu0 0.0
    %3088 = vmatmul.mubr.f32.gmra.mxu0 %v3002
    %v3089 = vpop.f32.mrf.mxu0
    %v3090 = vadd.f32 %v2980, %v3089
    %v3091 = vpop.f32.mrf.mxu0
    %v3092 = vadd.f32 %v2984, %v3091
    %3093 = vdwg.mxu0
    %3094 = vmatprep.subr.mxu0 0.0
    %3095 = vmatpush1.msra.mxu0 0.0
    %3096 = vmatprep.subr.mxu0 0.0
    %3097 = vmatpush1.msra.mxu0 0.0
    %3098 = vmatprep.subr.mxu0 0.0
    %3099 = vmatpush1.msra.mxu0 0.0
    %3100 = vmatprep.subr.mxu0 0.0
    %3101 = vmatpush1.msra.mxu0 0.0
    %3102 = vmatprep.subr.mxu0 0.0
    %3103 = vmatpush1.msra.mxu0 0.0
    %3104 = vmatprep.subr.mxu0 0.0
    %3105 = vmatpush1.msra.mxu0 0.0
    %3106 = vmatprep.subr.mxu0 0.0
    %3107 = vmatpush1.msra.mxu0 0.0
    %3108 = vmatprep.subr.mxu0 0.0
    %3109 = vmatpush1.msra.mxu0 0.0
    %3110 = vmatprep.subr.mxu0 0.0
    %3111 = vmatpush1.msra.mxu0 0.0
    %3112 = vmatprep.subr.mxu0 0.0
    %3113 = vmatpush1.msra.mxu0 0.0
    %3114 = vmatprep.subr.mxu0 0.0
    %3115 = vmatpush1.msra.mxu0 0.0
    %3116 = vmatprep.subr.mxu0 0.0
    %3117 = vmatpush1.msra.mxu0 0.0
    %3118 = vmatprep.subr.mxu0 0.0
    %3119 = vmatpush1.msra.mxu0 0.0
    %3120 = vmatprep.subr.mxu0 %v3015
    %3121 = vmatpush1.msra.mxu0 %v3012
    %3122 = vmatprep.subr.mxu0 %v2967
    %3123 = vmatpush1.msra.mxu0 %v2965
    %3124 = vmatprep.subr.mxu0 %v2961
    %3125 = vmatpush1.msra.mxu0 %v2959
    %3126 = vmatprep.subr.mxu0 0.0
    %3127 = vmatpush2.msra.mxu0 0.0
    %3128 = vmatprep.subr.mxu0 0.0
    %3129 = vmatpush2.msra.mxu0 0.0
    %3130 = vmatprep.subr.mxu0 0.0
    %3131 = vmatpush2.msra.mxu0 0.0
    %3132 = vmatprep.subr.mxu0 0.0
    %3133 = vmatpush2.msra.mxu0 0.0
    %3134 = vmatprep.subr.mxu0 0.0
    %3135 = vmatpush2.msra.mxu0 0.0
    %3136 = vmatprep.subr.mxu0 0.0
    %3137 = vmatpush2.msra.mxu0 0.0
    %3138 = vmatprep.subr.mxu0 0.0
    %3139 = vmatpush2.msra.mxu0 0.0
    %3140 = vmatprep.subr.mxu0 0.0
    %3141 = vmatpush2.msra.mxu0 0.0
    %3142 = vmatprep.subr.mxu0 0.0
    %3143 = vmatpush2.msra.mxu0 0.0
    %3144 = vmatprep.subr.mxu0 0.0
    %3145 = vmatpush2.msra.mxu0 0.0
    %3146 = vmatprep.subr.mxu0 0.0
    %3147 = vmatpush2.msra.mxu0 0.0
    %3148 = vmatprep.subr.mxu0 0.0
    %3149 = vmatpush2.msra.mxu0 0.0
    %3150 = vmatprep.subr.mxu0 0.0
    %3151 = vmatpush2.msra.mxu0 0.0
    %3152 = vmatprep.subr.mxu0 0.0
    %3153 = vmatpush2.msra.mxu0 0.0
    %3154 = vmatprep.subr.mxu0 0.0
    %3155 = vmatpush2.msra.mxu0 0.0
    %3156 = vmatprep.subr.mxu0 0.0
    %3157 = vmatpush2.msra.mxu0 0.0
    %3158 = vmatprep.mubr.f32.mxu0 0.0
    %3159 = vmatmul.mubr.f32.gmra.mxu0 %v2999
    %v3160 = vpop.f32.mrf.mxu0
    %v3161 = vadd.f32 %v2988, %v3160
    %v3162 = vpop.f32.mrf.mxu0
    %v3163 = vadd.f32 %v2992, %v3162
    %3164 = vmatprep.mubr.f32.mxu0 0.0
    %3165 = vmatmul.mubr.f32.gmra.mxu0 %v3002
    %v3166 = vpop.f32.mrf.mxu0
    %v3167 = vadd.f32 %v2988, %v3166
    %v3168 = vpop.f32.mrf.mxu0
    %v3169 = vadd.f32 %v2992, %v3168
    %3170 = vdwg.mxu0
    %vm3171 = vcmp.ne.s32.totalorder %v2742, 0
    %vm3172 = vcmp.eq.s32.totalorder %v2742, 0
    %v3173 = vsel %vm3172, 1, 0
    %3174 = vrot.lane.b32.xlu0 %v3173, 127
    %v3175 = vpop.permute.xlu0 %3174
    %vm3176 = vcmp.ne.s32.totalorder %v3175, 0
    %vm3177 = vmand %vm3171, %vm3176
    %v3178 = vcvt.s32.f32 %v2758
    %v3179 = vsel %vm3177, %v3178, 7.0
    %vm3180 = vcmask 50176
    %v3181 = vsel %vm3180, %v3179, inf
    %3182 = vmin.xlane.f32.xlu0 %v3181
    %v3183 = vpop.xlane.xlu0 %3182
    %v3184 = vld [vmem:[%s9] sm:$0xff]
    %v3185 = vld [vmem:[%s9 + $0x8] sm:$0xff]
    %v3186 = vld [vmem:[%s9 + $0x10] sm:$0xff]
    %v3187 = vld [vmem:[%s9 + $0x18] sm:$0xff]
    %v3188 = vld [vmem:[%s9 + $0x20] sm:$0xff]
    %v3189 = vld [vmem:[%s9 + $0x28] sm:$0xff]
    %v3190 = vld [vmem:[%s9 + $0x30] sm:$0xff]
    %v3191 = vld [vmem:[%s9 + $0x38] sm:$0xff]
    %v3192 = vld [vmem:[%s9 + $0x40] sm:$0xff]
    %v3193 = vld [vmem:[%s9 + $0x48] sm:$0xff]
    %v3194 = vld [vmem:[%s9 + $0x50] sm:$0xff]
    %v3195 = vld [vmem:[%s9 + $0x58] sm:$0xff]
    %v3196 = vld [vmem:[%s9 + $0x60] sm:$0xff]
    %v3197 = vld [vmem:[%s9 + $0x68] sm:$0xff]
    %v3198 = vld [vmem:[%s9 + $0x70] sm:$0xff]
    %v3199 = vld [vmem:[%s9 + $0x78] sm:$0xff]
    %v3200 = vld [vmem:[%s9 + $0x80] sm:$0xff]
    %v3201 = vld [vmem:[%s9 + $0x88] sm:$0xff]
    %v3202 = vld [vmem:[%s9 + $0x90] sm:$0xff]
    %v3203 = vld [vmem:[%s9 + $0x98] sm:$0xff]
    %v3204 = vld [vmem:[%s9 + $0xa0] sm:$0xff]
    %v3205 = vld [vmem:[%s9 + $0xa8] sm:$0xff]
    %v3206 = vld [vmem:[%s9 + $0xb0] sm:$0xff]
    %v3207 = vld [vmem:[%s9 + $0xb8] sm:$0xff]
    %v3208 = vld [vmem:[%s9 + $0xc0] sm:$0xff]
    %v3209 = vld [vmem:[%s9 + $0xc8] sm:$0xff]
    %v3210 = vld [vmem:[%s9 + $0xd0] sm:$0xff]
    %v3211 = vld [vmem:[%s9 + $0xd8] sm:$0xff]
    %v3212 = vld [vmem:[%s9 + $0xe0] sm:$0xff]
    %v3213 = vld [vmem:[%s9 + $0xe8] sm:$0xff]
    %v3214 = vld [vmem:[%s9 + $0xf0] sm:$0xff]
    %v3215 = vld [vmem:[%s9 + $0xf8] sm:$0xff]
    %v3216 = vld [vmem:[%s9 + $0x100] sm:$0xff]
    %v3217 = vld [vmem:[%s9 + $0x108] sm:$0xff]
    %v3218 = vld [vmem:[%s9 + $0x110] sm:$0xff]
    %v3219 = vld [vmem:[%s9 + $0x118] sm:$0xff]
    %v3220 = vld [vmem:[%s9 + $0x120] sm:$0xff]
    %v3221 = vld [vmem:[%s9 + $0x128] sm:$0xff]
    %v3222 = vld [vmem:[%s9 + $0x130] sm:$0xff]
    %v3223 = vld [vmem:[%s9 + $0x138] sm:$0xff]
    %v3224 = vld [vmem:[%s9 + $0x140] sm:$0xff]
    %v3225 = vld [vmem:[%s9 + $0x148] sm:$0xff]
    %v3226 = vld [vmem:[%s9 + $0x150] sm:$0xff]
    %v3227 = vld [vmem:[%s9 + $0x158] sm:$0xff]
    %v3228 = vld [vmem:[%s9 + $0x160] sm:$0xff]
    %v3229 = vld [vmem:[%s9 + $0x168] sm:$0xff]
    %v3230 = vld [vmem:[%s9 + $0x170] sm:$0xff]
    %v3231 = vld [vmem:[%s9 + $0x178] sm:$0xff]
    %v3232 = vld [vmem:[%s9 + $0x180] sm:$0xff]
    %v3233 = vld [vmem:[%s9 + $0x188] sm:$0xff]
    %v3234 = vld [vmem:[%s9 + $0x190] sm:$0xff]
    %v3235 = vld [vmem:[%s9 + $0x198] sm:$0xff]
    %v3236 = vld [vmem:[%s9 + $0x1a0] sm:$0xff]
    %v3237 = vld [vmem:[%s9 + $0x1a8] sm:$0xff]
    %v3238 = vld [vmem:[%s9 + $0x1b0] sm:$0xff]
    %v3239 = vld [vmem:[%s9 + $0x1b8] sm:$0xff]
    %v3240 = vld [vmem:[%s9 + $0x1c0] sm:$0xff]
    %v3241 = vld [vmem:[%s9 + $0x1c8] sm:$0xff]
    %v3242 = vld [vmem:[%s9 + $0x1d0] sm:$0xff]
    %v3243 = vld [vmem:[%s9 + $0x1d8] sm:$0xff]
    %v3244 = vld [vmem:[%s9 + $0x1e0] sm:$0xff]
    %v3245 = vld [vmem:[%s9 + $0x1e8] sm:$0xff]
    %v3246 = vld [vmem:[%s9 + $0x1f0] sm:$0xff]
    %v3247 = vld [vmem:[%s9 + $0x1f8] sm:$0xff]
    %v3248 = vld [vmem:[%s10] sm:$0xff]
    %v3249 = vld [vmem:[%s10 + $0x8] sm:$0xff]
    %v3250 = vld [vmem:[%s10 + $0x10] sm:$0xff]
    %v3251 = vld [vmem:[%s10 + $0x18] sm:$0xff]
    %v3252 = vld [vmem:[%s10 + $0x20] sm:$0xff]
    %v3253 = vld [vmem:[%s10 + $0x28] sm:$0xff]
    %v3254 = vld [vmem:[%s10 + $0x30] sm:$0xff]
    %v3255 = vld [vmem:[%s10 + $0x38] sm:$0xff]
    %v3256 = vld [vmem:[%s10 + $0x40] sm:$0xff]
    %v3257 = vld [vmem:[%s10 + $0x48] sm:$0xff]
    %v3258 = vld [vmem:[%s10 + $0x50] sm:$0xff]
    %v3259 = vld [vmem:[%s10 + $0x58] sm:$0xff]
    %v3260 = vld [vmem:[%s10 + $0x60] sm:$0xff]
    %v3261 = vld [vmem:[%s10 + $0x68] sm:$0xff]
    %v3262 = vld [vmem:[%s10 + $0x70] sm:$0xff]
    %v3263 = vld [vmem:[%s10 + $0x78] sm:$0xff]
    %v3264 = vld [vmem:[%s10 + $0x80] sm:$0xff]
    %v3265 = vld [vmem:[%s10 + $0x88] sm:$0xff]
    %v3266 = vld [vmem:[%s10 + $0x90] sm:$0xff]
    %v3267 = vld [vmem:[%s10 + $0x98] sm:$0xff]
    %v3268 = vld [vmem:[%s10 + $0xa0] sm:$0xff]
    %v3269 = vld [vmem:[%s10 + $0xa8] sm:$0xff]
    %v3270 = vld [vmem:[%s10 + $0xb0] sm:$0xff]
    %v3271 = vld [vmem:[%s10 + $0xb8] sm:$0xff]
    %v3272 = vld [vmem:[%s10 + $0xc0] sm:$0xff]
    %v3273 = vld [vmem:[%s10 + $0xc8] sm:$0xff]
    %v3274 = vld [vmem:[%s10 + $0xd0] sm:$0xff]
    %v3275 = vld [vmem:[%s10 + $0xd8] sm:$0xff]
    %v3276 = vld [vmem:[%s10 + $0xe0] sm:$0xff]
    %v3277 = vld [vmem:[%s10 + $0xe8] sm:$0xff]
    %v3278 = vld [vmem:[%s10 + $0xf0] sm:$0xff]
    %v3279 = vld [vmem:[%s10 + $0xf8] sm:$0xff]
    %v3280 = vld [vmem:[%s10 + $0x100] sm:$0xff]
    %v3281 = vld [vmem:[%s10 + $0x108] sm:$0xff]
    %v3282 = vld [vmem:[%s10 + $0x110] sm:$0xff]
    %v3283 = vld [vmem:[%s10 + $0x118] sm:$0xff]
    %v3284 = vld [vmem:[%s10 + $0x120] sm:$0xff]
    %v3285 = vld [vmem:[%s10 + $0x128] sm:$0xff]
    %v3286 = vld [vmem:[%s10 + $0x130] sm:$0xff]
    %v3287 = vld [vmem:[%s10 + $0x138] sm:$0xff]
    %v3288 = vld [vmem:[%s10 + $0x140] sm:$0xff]
    %v3289 = vld [vmem:[%s10 + $0x148] sm:$0xff]
    %v3290 = vld [vmem:[%s10 + $0x150] sm:$0xff]
    %v3291 = vld [vmem:[%s10 + $0x158] sm:$0xff]
    %v3292 = vld [vmem:[%s10 + $0x160] sm:$0xff]
    %v3293 = vld [vmem:[%s10 + $0x168] sm:$0xff]
    %v3294 = vld [vmem:[%s10 + $0x170] sm:$0xff]
    %v3295 = vld [vmem:[%s10 + $0x178] sm:$0xff]
    %v3296 = vld [vmem:[%s10 + $0x180] sm:$0xff]
    %v3297 = vld [vmem:[%s10 + $0x188] sm:$0xff]
    %v3298 = vld [vmem:[%s10 + $0x190] sm:$0xff]
    %v3299 = vld [vmem:[%s10 + $0x198] sm:$0xff]
    %v3300 = vld [vmem:[%s10 + $0x1a0] sm:$0xff]
    %v3301 = vld [vmem:[%s10 + $0x1a8] sm:$0xff]
    %v3302 = vld [vmem:[%s10 + $0x1b0] sm:$0xff]
    %v3303 = vld [vmem:[%s10 + $0x1b8] sm:$0xff]
    %v3304 = vld [vmem:[%s10 + $0x1c0] sm:$0xff]
    %v3305 = vld [vmem:[%s10 + $0x1c8] sm:$0xff]
    %v3306 = vld [vmem:[%s10 + $0x1d0] sm:$0xff]
    %v3307 = vld [vmem:[%s10 + $0x1d8] sm:$0xff]
    %v3308 = vld [vmem:[%s10 + $0x1e0] sm:$0xff]
    %v3309 = vld [vmem:[%s10 + $0x1e8] sm:$0xff]
    %v3310 = vld [vmem:[%s10 + $0x1f0] sm:$0xff]
    %v3311 = vld [vmem:[%s10 + $0x1f8] sm:$0xff]
    %v3312 = vld [vmem:[%s11] sm:$0xff]
    %v3313 = vld [vmem:[%s11 + $0x8] sm:$0xff]
    %v3314 = vld [vmem:[%s11 + $0x10] sm:$0xff]
    %v3315 = vld [vmem:[%s11 + $0x18] sm:$0xff]
    %v3316 = vld [vmem:[%s11 + $0x20] sm:$0xff]
    %v3317 = vld [vmem:[%s11 + $0x28] sm:$0xff]
    %v3318 = vld [vmem:[%s11 + $0x30] sm:$0xff]
    %v3319 = vld [vmem:[%s11 + $0x38] sm:$0xff]
    %v3320 = vld [vmem:[%s11 + $0x40] sm:$0xff]
    %v3321 = vld [vmem:[%s11 + $0x48] sm:$0xff]
    %v3322 = vld [vmem:[%s11 + $0x50] sm:$0xff]
    %v3323 = vld [vmem:[%s11 + $0x58] sm:$0xff]
    %v3324 = vld [vmem:[%s11 + $0x60] sm:$0xff]
    %v3325 = vld [vmem:[%s11 + $0x68] sm:$0xff]
    %v3326 = vld [vmem:[%s11 + $0x70] sm:$0xff]
    %v3327 = vld [vmem:[%s11 + $0x78] sm:$0xff]
    %v3328 = vld [vmem:[%s11 + $0x80] sm:$0xff]
    %v3329 = vld [vmem:[%s11 + $0x88] sm:$0xff]
    %v3330 = vld [vmem:[%s11 + $0x90] sm:$0xff]
    %v3331 = vld [vmem:[%s11 + $0x98] sm:$0xff]
    %v3332 = vld [vmem:[%s11 + $0xa0] sm:$0xff]
    %v3333 = vld [vmem:[%s11 + $0xa8] sm:$0xff]
    %v3334 = vld [vmem:[%s11 + $0xb0] sm:$0xff]
    %v3335 = vld [vmem:[%s11 + $0xb8] sm:$0xff]
    %v3336 = vld [vmem:[%s11 + $0xc0] sm:$0xff]
    %v3337 = vld [vmem:[%s11 + $0xc8] sm:$0xff]
    %v3338 = vld [vmem:[%s11 + $0xd0] sm:$0xff]
    %v3339 = vld [vmem:[%s11 + $0xd8] sm:$0xff]
    %v3340 = vld [vmem:[%s11 + $0xe0] sm:$0xff]
    %v3341 = vld [vmem:[%s11 + $0xe8] sm:$0xff]
    %v3342 = vld [vmem:[%s11 + $0xf0] sm:$0xff]
    %v3343 = vld [vmem:[%s11 + $0xf8] sm:$0xff]
    %v3344 = vld [vmem:[%s11 + $0x100] sm:$0xff]
    %v3345 = vld [vmem:[%s11 + $0x108] sm:$0xff]
    %v3346 = vld [vmem:[%s11 + $0x110] sm:$0xff]
    %v3347 = vld [vmem:[%s11 + $0x118] sm:$0xff]
    %v3348 = vld [vmem:[%s11 + $0x120] sm:$0xff]
    %v3349 = vld [vmem:[%s11 + $0x128] sm:$0xff]
    %v3350 = vld [vmem:[%s11 + $0x130] sm:$0xff]
    %v3351 = vld [vmem:[%s11 + $0x138] sm:$0xff]
    %v3352 = vld [vmem:[%s11 + $0x140] sm:$0xff]
    %v3353 = vld [vmem:[%s11 + $0x148] sm:$0xff]
    %v3354 = vld [vmem:[%s11 + $0x150] sm:$0xff]
    %v3355 = vld [vmem:[%s11 + $0x158] sm:$0xff]
    %v3356 = vld [vmem:[%s11 + $0x160] sm:$0xff]
    %v3357 = vld [vmem:[%s11 + $0x168] sm:$0xff]
    %v3358 = vld [vmem:[%s11 + $0x170] sm:$0xff]
    %v3359 = vld [vmem:[%s11 + $0x178] sm:$0xff]
    %v3360 = vld [vmem:[%s11 + $0x180] sm:$0xff]
    %v3361 = vld [vmem:[%s11 + $0x188] sm:$0xff]
    %v3362 = vld [vmem:[%s11 + $0x190] sm:$0xff]
    %v3363 = vld [vmem:[%s11 + $0x198] sm:$0xff]
    %v3364 = vld [vmem:[%s11 + $0x1a0] sm:$0xff]
    %v3365 = vld [vmem:[%s11 + $0x1a8] sm:$0xff]
    %v3366 = vld [vmem:[%s11 + $0x1b0] sm:$0xff]
    %v3367 = vld [vmem:[%s11 + $0x1b8] sm:$0xff]
    %v3368 = vld [vmem:[%s11 + $0x1c0] sm:$0xff]
    %v3369 = vld [vmem:[%s11 + $0x1c8] sm:$0xff]
    %v3370 = vld [vmem:[%s11 + $0x1d0] sm:$0xff]
    %v3371 = vld [vmem:[%s11 + $0x1d8] sm:$0xff]
    %v3372 = vld [vmem:[%s11 + $0x1e0] sm:$0xff]
    %v3373 = vld [vmem:[%s11 + $0x1e8] sm:$0xff]
    %v3374 = vld [vmem:[%s11 + $0x1f0] sm:$0xff]
    %v3375 = vld [vmem:[%s11 + $0x1f8] sm:$0xff]
    %v3376 = vld [vmem:[%s12] sm:$0xf]
    %v3378 = vlaneseq
    %v3379 = vshrl.u32 %v3378, 7
    %v3380 = vsub.s32 0, %v3379
    %v3381 = vrot.slane %v3376, %v3380
    %v3382 = vlaneseq
    %v3383 = vshrl.u32 %v3382, 7
    %v3384 = vsub.s32 1, %v3383
    %v3385 = vrot.slane %v3376, %v3384
    %v3386 = vlaneseq
    %v3387 = vshrl.u32 %v3386, 7
    %v3388 = vsub.s32 2, %v3387
    %v3389 = vrot.slane %v3376, %v3388
    %v3390 = vlaneseq
    %v3391 = vshrl.u32 %v3390, 7
    %v3392 = vsub.s32 3, %v3391
    %v3393 = vrot.slane %v3376, %v3392
    %3398 = vmatprep.subr.mxu0 %v3373
    %3399 = vmatpush1.msra.mxu0 %v3372
    %3400 = vmatprep.subr.mxu0 %v3369
    %3401 = vmatpush1.msra.mxu0 %v3368
    %3402 = vmatprep.subr.mxu0 %v3365
    %3403 = vmatpush1.msra.mxu0 %v3364
    %3404 = vmatprep.subr.mxu0 %v3361
    %3405 = vmatpush1.msra.mxu0 %v3360
    %3406 = vmatprep.subr.mxu0 %v3357
    %3407 = vmatpush1.msra.mxu0 %v3356
    %3408 = vmatprep.subr.mxu0 %v3353
    %3409 = vmatpush1.msra.mxu0 %v3352
    %3410 = vmatprep.subr.mxu0 %v3349
    %3411 = vmatpush1.msra.mxu0 %v3348
    %3412 = vmatprep.subr.mxu0 %v3345
    %3413 = vmatpush1.msra.mxu0 %v3344
    %3414 = vmatprep.subr.mxu0 %v3341
    %3415 = vmatpush1.msra.mxu0 %v3340
    %3416 = vmatprep.subr.mxu0 %v3337
    %3417 = vmatpush1.msra.mxu0 %v3336
    %3418 = vmatprep.subr.mxu0 %v3333
    %3419 = vmatpush1.msra.mxu0 %v3332
    %3420 = vmatprep.subr.mxu0 %v3329
    %3421 = vmatpush1.msra.mxu0 %v3328
    %3422 = vmatprep.subr.mxu0 %v3325
    %3423 = vmatpush1.msra.mxu0 %v3324
    %3424 = vmatprep.subr.mxu0 %v3321
    %3425 = vmatpush1.msra.mxu0 %v3320
    %3426 = vmatprep.subr.mxu0 %v3317
    %3427 = vmatpush1.msra.mxu0 %v3316
    %3428 = vmatprep.subr.mxu0 %v3313
    %3429 = vmatpush1.msra.mxu0 %v3312
    %3430 = vmatprep.subr.mxu0 0.0
    %3431 = vmatpush2.msra.mxu0 0.0
    %3432 = vmatprep.subr.mxu0 0.0
    %3433 = vmatpush2.msra.mxu0 0.0
    %3434 = vmatprep.subr.mxu0 0.0
    %3435 = vmatpush2.msra.mxu0 0.0
    %3436 = vmatprep.subr.mxu0 0.0
    %3437 = vmatpush2.msra.mxu0 0.0
    %3438 = vmatprep.subr.mxu0 0.0
    %3439 = vmatpush2.msra.mxu0 0.0
    %3440 = vmatprep.subr.mxu0 0.0
    %3441 = vmatpush2.msra.mxu0 0.0
    %3442 = vmatprep.subr.mxu0 0.0
    %3443 = vmatpush2.msra.mxu0 0.0
    %3444 = vmatprep.subr.mxu0 0.0
    %3445 = vmatpush2.msra.mxu0 0.0
    %3446 = vmatprep.subr.mxu0 0.0
    %3447 = vmatpush2.msra.mxu0 0.0
    %3448 = vmatprep.subr.mxu0 0.0
    %3449 = vmatpush2.msra.mxu0 0.0
    %3450 = vmatprep.subr.mxu0 0.0
    %3451 = vmatpush2.msra.mxu0 0.0
    %3452 = vmatprep.subr.mxu0 0.0
    %3453 = vmatpush2.msra.mxu0 0.0
    %3454 = vmatprep.subr.mxu0 0.0
    %3455 = vmatpush2.msra.mxu0 0.0
    %3456 = vmatprep.subr.mxu0 0.0
    %3457 = vmatpush2.msra.mxu0 0.0
    %3458 = vmatprep.subr.mxu0 0.0
    %3459 = vmatpush2.msra.mxu0 0.0
    %3460 = vmatprep.subr.mxu0 0.0
    %3461 = vmatpush2.msra.mxu0 0.0
    %3462 = vmatprep.mubr.f32.mxu0 0.0
    %3463 = vmatmul.mubr.f32.gmra.mxu0 0.0
    %v3464 = vpop.f32.mrf.mxu0
    %v3465 = vadd.f32 0.0, %v3464
    %v3466 = vpop.f32.mrf.mxu0
    %v3467 = vadd.f32 0.0, %v3466
    %3468 = vdwg.mxu0
    %3469 = vmatprep.subr.mxu0 %v3375
    %3470 = vmatpush1.msra.mxu0 %v3374
    %3471 = vmatprep.subr.mxu0 %v3371
    %3472 = vmatpush1.msra.mxu0 %v3370
    %3473 = vmatprep.subr.mxu0 %v3367
    %3474 = vmatpush1.msra.mxu0 %v3366
    %3475 = vmatprep.subr.mxu0 %v3363
    %3476 = vmatpush1.msra.mxu0 %v3362
    %3477 = vmatprep.subr.mxu0 %v3359
    %3478 = vmatpush1.msra.mxu0 %v3358
    %3479 = vmatprep.subr.mxu0 %v3355
    %3480 = vmatpush1.msra.mxu0 %v3354
    %3481 = vmatprep.subr.mxu0 %v3351
    %3482 = vmatpush1.msra.mxu0 %v3350
    %3483 = vmatprep.subr.mxu0 %v3347
    %3484 = vmatpush1.msra.mxu0 %v3346
    %3485 = vmatprep.subr.mxu0 %v3343
    %3486 = vmatpush1.msra.mxu0 %v3342
    %3487 = vmatprep.subr.mxu0 %v3339
    %3488 = vmatpush1.msra.mxu0 %v3338
    %3489 = vmatprep.subr.mxu0 %v3335
    %3490 = vmatpush1.msra.mxu0 %v3334
    %3491 = vmatprep.subr.mxu0 %v3331
    %3492 = vmatpush1.msra.mxu0 %v3330
    %3493 = vmatprep.subr.mxu0 %v3327
    %3494 = vmatpush1.msra.mxu0 %v3326
    %3495 = vmatprep.subr.mxu0 %v3323
    %3496 = vmatpush1.msra.mxu0 %v3322
    %3497 = vmatprep.subr.mxu0 %v3319
    %3498 = vmatpush1.msra.mxu0 %v3318
    %3499 = vmatprep.subr.mxu0 %v3315
    %3500 = vmatpush1.msra.mxu0 %v3314
    %3501 = vmatprep.subr.mxu0 0.0
    %3502 = vmatpush2.msra.mxu0 0.0
    %3503 = vmatprep.subr.mxu0 0.0
    %3504 = vmatpush2.msra.mxu0 0.0
    %3505 = vmatprep.subr.mxu0 0.0
    %3506 = vmatpush2.msra.mxu0 0.0
    %3507 = vmatprep.subr.mxu0 0.0
    %3508 = vmatpush2.msra.mxu0 0.0
    %3509 = vmatprep.subr.mxu0 0.0
    %3510 = vmatpush2.msra.mxu0 0.0
    %3511 = vmatprep.subr.mxu0 0.0
    %3512 = vmatpush2.msra.mxu0 0.0
    %3513 = vmatprep.subr.mxu0 0.0
    %3514 = vmatpush2.msra.mxu0 0.0
    %3515 = vmatprep.subr.mxu0 0.0
    %3516 = vmatpush2.msra.mxu0 0.0
    %3517 = vmatprep.subr.mxu0 0.0
    %3518 = vmatpush2.msra.mxu0 0.0
    %3519 = vmatprep.subr.mxu0 0.0
    %3520 = vmatpush2.msra.mxu0 0.0
    %3521 = vmatprep.subr.mxu0 0.0
    %3522 = vmatpush2.msra.mxu0 0.0
    %3523 = vmatprep.subr.mxu0 0.0
    %3524 = vmatpush2.msra.mxu0 0.0
    %3525 = vmatprep.subr.mxu0 0.0
    %3526 = vmatpush2.msra.mxu0 0.0
    %3527 = vmatprep.subr.mxu0 0.0
    %3528 = vmatpush2.msra.mxu0 0.0
    %3529 = vmatprep.subr.mxu0 0.0
    %3530 = vmatpush2.msra.mxu0 0.0
    %3531 = vmatprep.subr.mxu0 0.0
    %3532 = vmatpush2.msra.mxu0 0.0
    %3533 = vmatprep.mubr.f32.mxu0 0.0
    %3534 = vmatmul.mubr.f32.gmra.mxu0 0.0
    %v3535 = vpop.f32.mrf.mxu0
    %v3536 = vadd.f32 0.0, %v3535
    %v3537 = vpop.f32.mrf.mxu0
    %v3538 = vadd.f32 0.0, %v3537
    %3539 = vdwg.mxu0
    %3540 = vmatprep.subr.mxu0 %v3245
    %3541 = vmatpush1.msra.mxu0 %v3244
    %3542 = vmatprep.subr.mxu0 %v3241
    %3543 = vmatpush1.msra.mxu0 %v3240
    %3544 = vmatprep.subr.mxu0 %v3237
    %3545 = vmatpush1.msra.mxu0 %v3236
    %3546 = vmatprep.subr.mxu0 %v3233
    %3547 = vmatpush1.msra.mxu0 %v3232
    %3548 = vmatprep.subr.mxu0 %v3229
    %3549 = vmatpush1.msra.mxu0 %v3228
    %3550 = vmatprep.subr.mxu0 %v3225
    %3551 = vmatpush1.msra.mxu0 %v3224
    %3552 = vmatprep.subr.mxu0 %v3221
    %3553 = vmatpush1.msra.mxu0 %v3220
    %3554 = vmatprep.subr.mxu0 %v3217
    %3555 = vmatpush1.msra.mxu0 %v3216
    %3556 = vmatprep.subr.mxu0 %v3213
    %3557 = vmatpush1.msra.mxu0 %v3212
    %3558 = vmatprep.subr.mxu0 %v3209
    %3559 = vmatpush1.msra.mxu0 %v3208
    %3560 = vmatprep.subr.mxu0 %v3205
    %3561 = vmatpush1.msra.mxu0 %v3204
    %3562 = vmatprep.subr.mxu0 %v3201
    %3563 = vmatpush1.msra.mxu0 %v3200
    %3564 = vmatprep.subr.mxu0 %v3197
    %3565 = vmatpush1.msra.mxu0 %v3196
    %3566 = vmatprep.subr.mxu0 %v3193
    %3567 = vmatpush1.msra.mxu0 %v3192
    %3568 = vmatprep.subr.mxu0 %v3189
    %3569 = vmatpush1.msra.mxu0 %v3188
    %3570 = vmatprep.subr.mxu0 %v3185
    %3571 = vmatpush1.msra.mxu0 %v3184
    %3572 = vmatprep.subr.mxu0 0.0
    %3573 = vmatpush2.msra.mxu0 0.0
    %3574 = vmatprep.subr.mxu0 0.0
    %3575 = vmatpush2.msra.mxu0 0.0
    %3576 = vmatprep.subr.mxu0 0.0
    %3577 = vmatpush2.msra.mxu0 0.0
    %3578 = vmatprep.subr.mxu0 0.0
    %3579 = vmatpush2.msra.mxu0 0.0
    %3580 = vmatprep.subr.mxu0 0.0
    %3581 = vmatpush2.msra.mxu0 0.0
    %3582 = vmatprep.subr.mxu0 0.0
    %3583 = vmatpush2.msra.mxu0 0.0
    %3584 = vmatprep.subr.mxu0 0.0
    %3585 = vmatpush2.msra.mxu0 0.0
    %3586 = vmatprep.subr.mxu0 0.0
    %3587 = vmatpush2.msra.mxu0 0.0
    %3588 = vmatprep.subr.mxu0 0.0
    %3589 = vmatpush2.msra.mxu0 0.0
    %3590 = vmatprep.subr.mxu0 0.0
    %3591 = vmatpush2.msra.mxu0 0.0
    %3592 = vmatprep.subr.mxu0 0.0
    %3593 = vmatpush2.msra.mxu0 0.0
    %3594 = vmatprep.subr.mxu0 0.0
    %3595 = vmatpush2.msra.mxu0 0.0
    %3596 = vmatprep.subr.mxu0 0.0
    %3597 = vmatpush2.msra.mxu0 0.0
    %3598 = vmatprep.subr.mxu0 0.0
    %3599 = vmatpush2.msra.mxu0 0.0
    %3600 = vmatprep.subr.mxu0 0.0
    %3601 = vmatpush2.msra.mxu0 0.0
    %3602 = vmatprep.subr.mxu0 0.0
    %3603 = vmatpush2.msra.mxu0 0.0
    %3604 = vmatprep.mubr.f32.mxu0 0.0
    %3605 = vmatmul.mubr.f32.gmra.mxu0 0.0
    %v3606 = vpop.f32.mrf.mxu0
    %v3607 = vadd.f32 0.0, %v3606
    %v3608 = vpop.f32.mrf.mxu0
    %v3609 = vadd.f32 0.0, %v3608
    %3610 = vdwg.mxu0
    %3611 = vmatprep.subr.mxu0 %v3247
    %3612 = vmatpush1.msra.mxu0 %v3246
    %3613 = vmatprep.subr.mxu0 %v3243
    %3614 = vmatpush1.msra.mxu0 %v3242
    %3615 = vmatprep.subr.mxu0 %v3239
    %3616 = vmatpush1.msra.mxu0 %v3238
    %3617 = vmatprep.subr.mxu0 %v3235
    %3618 = vmatpush1.msra.mxu0 %v3234
    %3619 = vmatprep.subr.mxu0 %v3231
    %3620 = vmatpush1.msra.mxu0 %v3230
    %3621 = vmatprep.subr.mxu0 %v3227
    %3622 = vmatpush1.msra.mxu0 %v3226
    %3623 = vmatprep.subr.mxu0 %v3223
    %3624 = vmatpush1.msra.mxu0 %v3222
    %3625 = vmatprep.subr.mxu0 %v3219
    %3626 = vmatpush1.msra.mxu0 %v3218
    %3627 = vmatprep.subr.mxu0 %v3215
    %3628 = vmatpush1.msra.mxu0 %v3214
    %3629 = vmatprep.subr.mxu0 %v3211
    %3630 = vmatpush1.msra.mxu0 %v3210
    %3631 = vmatprep.subr.mxu0 %v3207
    %3632 = vmatpush1.msra.mxu0 %v3206
    %3633 = vmatprep.subr.mxu0 %v3203
    %3634 = vmatpush1.msra.mxu0 %v3202
    %3635 = vmatprep.subr.mxu0 %v3199
    %3636 = vmatpush1.msra.mxu0 %v3198
    %3637 = vmatprep.subr.mxu0 %v3195
    %3638 = vmatpush1.msra.mxu0 %v3194
    %3639 = vmatprep.subr.mxu0 %v3191
    %3640 = vmatpush1.msra.mxu0 %v3190
    %3641 = vmatprep.subr.mxu0 %v3187
    %3642 = vmatpush1.msra.mxu0 %v3186
    %3643 = vmatprep.subr.mxu0 0.0
    %3644 = vmatpush2.msra.mxu0 0.0
    %3645 = vmatprep.subr.mxu0 0.0
    %3646 = vmatpush2.msra.mxu0 0.0
    %3647 = vmatprep.subr.mxu0 0.0
    %3648 = vmatpush2.msra.mxu0 0.0
    %3649 = vmatprep.subr.mxu0 0.0
    %3650 = vmatpush2.msra.mxu0 0.0
    %3651 = vmatprep.subr.mxu0 0.0
    %3652 = vmatpush2.msra.mxu0 0.0
    %3653 = vmatprep.subr.mxu0 0.0
    %3654 = vmatpush2.msra.mxu0 0.0
    %3655 = vmatprep.subr.mxu0 0.0
    %3656 = vmatpush2.msra.mxu0 0.0
    %3657 = vmatprep.subr.mxu0 0.0
    %3658 = vmatpush2.msra.mxu0 0.0
    %3659 = vmatprep.subr.mxu0 0.0
    %3660 = vmatpush2.msra.mxu0 0.0
    %3661 = vmatprep.subr.mxu0 0.0
    %3662 = vmatpush2.msra.mxu0 0.0
    %3663 = vmatprep.subr.mxu0 0.0
    %3664 = vmatpush2.msra.mxu0 0.0
    %3665 = vmatprep.subr.mxu0 0.0
    %3666 = vmatpush2.msra.mxu0 0.0
    %3667 = vmatprep.subr.mxu0 0.0
    %3668 = vmatpush2.msra.mxu0 0.0
    %3669 = vmatprep.subr.mxu0 0.0
    %3670 = vmatpush2.msra.mxu0 0.0
    %3671 = vmatprep.subr.mxu0 0.0
    %3672 = vmatpush2.msra.mxu0 0.0
    %3673 = vmatprep.subr.mxu0 0.0
    %3674 = vmatpush2.msra.mxu0 0.0
    %3675 = vmatprep.mubr.f32.mxu0 0.0
    %3676 = vmatmul.mubr.f32.gmra.mxu0 0.0
    %v3677 = vpop.f32.mrf.mxu0
    %v3678 = vadd.f32 0.0, %v3677
    %v3679 = vpop.f32.mrf.mxu0
    %v3680 = vadd.f32 0.0, %v3679
    %3681 = vdwg.mxu0
    %v3686 = vrot.slane %v3607, 1
    %v3687 = vrot.slane %v3609, 1
    %v3688 = vrot.slane %v3678, 1
    %v3689 = vrot.slane %v3680, 1
    %v3698 = vadd.f32 %v3084, %v3607
    %v3699 = vadd.f32 %v3086, %v3609
    %v3700 = vadd.f32 %v3161, %v3678
    %v3701 = vadd.f32 %v3163, %v3680
    %v3702 = vadd.f32 %v3090, %v3686
    %v3703 = vadd.f32 %v3092, %v3687
    %v3704 = vadd.f32 %v3167, %v3688
    %v3705 = vadd.f32 %v3169, %v3689
    %v3706 = vxor.u32 %v3698, 2147483648
    %v3707 = vxor.u32 %v3699, 2147483648
    %v3708 = vxor.u32 %v3700, 2147483648
    %v3709 = vxor.u32 %v3702, 2147483648
    %v3710 = vxor.u32 %v3703, 2147483648
    %v3711 = vxor.u32 %v3704, 2147483648
    %v3712 = vmul.f32 %v3706, 1.442695
    %v3713 = vpow.pop %v3712
    %v3714 = vmul.f32 %v3707, 1.442695
    %v3715 = vpow.pop %v3714
    %v3716 = vmul.f32 %v3708, 1.442695
    %v3717 = vpow.pop %v3716
    %v3718 = vmul.f32 %v3709, 1.442695
    %v3719 = vpow.pop %v3718
    %v3720 = vmul.f32 %v3710, 1.442695
    %v3721 = vpow.pop %v3720
    %v3722 = vmul.f32 %v3711, 1.442695
    %v3723 = vpow.pop %v3722
    %v3724 = vadd.f32 %v3713, 1.0
    %v3725 = vadd.f32 %v3715, 1.0
    %v3726 = vadd.f32 %v3717, 1.0
    %v3727 = vadd.f32 %v3719, 1.0
    %v3728 = vadd.f32 %v3721, 1.0
    %v3729 = vadd.f32 %v3723, 1.0
    %v3730 = vrcp.pop %v3724
    %v3731 = vmul.f32 1.0, %v3730
    %v3732 = vrcp.pop %v3725
    %v3733 = vmul.f32 1.0, %v3732
    %v3734 = vrcp.pop %v3726
    %v3735 = vmul.f32 1.0, %v3734
    %v3736 = vrcp.pop %v3727
    %v3737 = vmul.f32 1.0, %v3736
    %v3738 = vrcp.pop %v3728
    %v3739 = vmul.f32 1.0, %v3738
    %v3740 = vrcp.pop %v3729
    %v3741 = vmul.f32 1.0, %v3740
    %v3742 = vtanh.pop %v3701
    %v3743 = vtanh.pop %v3705
    %v3744 = vmul.f32 %v3733, 0.0
    %v3745 = vmul.f32 %v3739, 0.0
    %v3746 = vmul.f32 %v3731, %v3742
    %v3747 = vmul.f32 %v3737, %v3743
    %v3748 = vadd.f32 %v3744, %v3746
    %v3749 = vadd.f32 %v3745, %v3747
    %v3750 = vtanh.pop %v3748
    %v3751 = vtanh.pop %v3749
    %v3752 = vmul.f32 %v3735, %v3750
    %v3753 = vmul.f32 %v3741, %v3751
    %v3756 = vrot.slane %v3753, 7
    %vm3757 = vcmask 1041409
    %v3758 = vsel %vm3757, %v3756, %v3752
    %3760 = vmatprep.subr.mxu0 %v3309
    %3761 = vmatpush1.msra.mxu0 %v3308
    %3762 = vmatprep.subr.mxu0 %v3305
    %3763 = vmatpush1.msra.mxu0 %v3304
    %3764 = vmatprep.subr.mxu0 %v3301
    %3765 = vmatpush1.msra.mxu0 %v3300
    %3766 = vmatprep.subr.mxu0 %v3297
    %3767 = vmatpush1.msra.mxu0 %v3296
    %3768 = vmatprep.subr.mxu0 %v3293
    %3769 = vmatpush1.msra.mxu0 %v3292
    %3770 = vmatprep.subr.mxu0 %v3289
    %3771 = vmatpush1.msra.mxu0 %v3288
    %3772 = vmatprep.subr.mxu0 %v3285
    %3773 = vmatpush1.msra.mxu0 %v3284
    %3774 = vmatprep.subr.mxu0 %v3281
    %3775 = vmatpush1.msra.mxu0 %v3280
    %3776 = vmatprep.subr.mxu0 %v3277
    %3777 = vmatpush1.msra.mxu0 %v3276
    %3778 = vmatprep.subr.mxu0 %v3273
    %3779 = vmatpush1.msra.mxu0 %v3272
    %3780 = vmatprep.subr.mxu0 %v3269
    %3781 = vmatpush1.msra.mxu0 %v3268
    %3782 = vmatprep.subr.mxu0 %v3265
    %3783 = vmatpush1.msra.mxu0 %v3264
    %3784 = vmatprep.subr.mxu0 %v3261
    %3785 = vmatpush1.msra.mxu0 %v3260
    %3786 = vmatprep.subr.mxu0 %v3257
    %3787 = vmatpush1.msra.mxu0 %v3256
    %3788 = vmatprep.subr.mxu0 %v3253
    %3789 = vmatpush1.msra.mxu0 %v3252
    %3790 = vmatprep.subr.mxu0 %v3249
    %3791 = vmatpush1.msra.mxu0 %v3248
    %3792 = vmatprep.subr.mxu0 0.0
    %3793 = vmatpush2.msra.mxu0 0.0
    %3794 = vmatprep.subr.mxu0 0.0
    %3795 = vmatpush2.msra.mxu0 0.0
    %3796 = vmatprep.subr.mxu0 0.0
    %3797 = vmatpush2.msra.mxu0 0.0
    %3798 = vmatprep.subr.mxu0 0.0
    %3799 = vmatpush2.msra.mxu0 0.0
    %3800 = vmatprep.subr.mxu0 0.0
    %3801 = vmatpush2.msra.mxu0 0.0
    %3802 = vmatprep.subr.mxu0 0.0
    %3803 = vmatpush2.msra.mxu0 0.0
    %3804 = vmatprep.subr.mxu0 0.0
    %3805 = vmatpush2.msra.mxu0 0.0
    %3806 = vmatprep.subr.mxu0 0.0
    %3807 = vmatpush2.msra.mxu0 0.0
    %3808 = vmatprep.subr.mxu0 0.0
    %3809 = vmatpush2.msra.mxu0 0.0
    %3810 = vmatprep.subr.mxu0 0.0
    %3811 = vmatpush2.msra.mxu0 0.0
    %3812 = vmatprep.subr.mxu0 0.0
    %3813 = vmatpush2.msra.mxu0 0.0
    %3814 = vmatprep.subr.mxu0 0.0
    %3815 = vmatpush2.msra.mxu0 0.0
    %3816 = vmatprep.subr.mxu0 0.0
    %3817 = vmatpush2.msra.mxu0 0.0
    %3818 = vmatprep.subr.mxu0 0.0
    %3819 = vmatpush2.msra.mxu0 0.0
    %3820 = vmatprep.subr.mxu0 0.0
    %3821 = vmatpush2.msra.mxu0 0.0
    %3822 = vmatprep.subr.mxu0 0.0
    %3823 = vmatpush2.msra.mxu0 0.0
    %3824 = vmatprep.mubr.f32.mxu0 0.0
    %3825 = vmatmul.mubr.f32.gmra.mxu0 %v3758
    %v3826 = vpop.f32.mrf.mxu0
    %v3827 = vadd.f32 %v3465, %v3826
    %v3828 = vpop.f32.mrf.mxu0
    %v3829 = vadd.f32 %v3467, %v3828
    %3830 = vdwg.mxu0
    %3831 = vmatprep.subr.mxu0 %v3311
    %3832 = vmatpush1.msra.mxu0 %v3310
    %3833 = vmatprep.subr.mxu0 %v3307
    %3834 = vmatpush1.msra.mxu0 %v3306
    %3835 = vmatprep.subr.mxu0 %v3303
    %3836 = vmatpush1.msra.mxu0 %v3302
    %3837 = vmatprep.subr.mxu0 %v3299
    %3838 = vmatpush1.msra.mxu0 %v3298
    %3839 = vmatprep.subr.mxu0 %v3295
    %3840 = vmatpush1.msra.mxu0 %v3294
    %3841 = vmatprep.subr.mxu0 %v3291
    %3842 = vmatpush1.msra.mxu0 %v3290
    %3843 = vmatprep.subr.mxu0 %v3287
    %3844 = vmatpush1.msra.mxu0 %v3286
    %3845 = vmatprep.subr.mxu0 %v3283
    %3846 = vmatpush1.msra.mxu0 %v3282
    %3847 = vmatprep.subr.mxu0 %v3279
    %3848 = vmatpush1.msra.mxu0 %v3278
    %3849 = vmatprep.subr.mxu0 %v3275
    %3850 = vmatpush1.msra.mxu0 %v3274
    %3851 = vmatprep.subr.mxu0 %v3271
    %3852 = vmatpush1.msra.mxu0 %v3270
    %3853 = vmatprep.subr.mxu0 %v3267
    %3854 = vmatpush1.msra.mxu0 %v3266
    %3855 = vmatprep.subr.mxu0 %v3263
    %3856 = vmatpush1.msra.mxu0 %v3262
    %3857 = vmatprep.subr.mxu0 %v3259
    %3858 = vmatpush1.msra.mxu0 %v3258
    %3859 = vmatprep.subr.mxu0 %v3255
    %3860 = vmatpush1.msra.mxu0 %v3254
    %3861 = vmatprep.subr.mxu0 %v3251
    %3862 = vmatpush1.msra.mxu0 %v3250
    %3863 = vmatprep.subr.mxu0 0.0
    %3864 = vmatpush2.msra.mxu0 0.0
    %3865 = vmatprep.subr.mxu0 0.0
    %3866 = vmatpush2.msra.mxu0 0.0
    %3867 = vmatprep.subr.mxu0 0.0
    %3868 = vmatpush2.msra.mxu0 0.0
    %3869 = vmatprep.subr.mxu0 0.0
    %3870 = vmatpush2.msra.mxu0 0.0
    %3871 = vmatprep.subr.mxu0 0.0
    %3872 = vmatpush2.msra.mxu0 0.0
    %3873 = vmatprep.subr.mxu0 0.0
    %3874 = vmatpush2.msra.mxu0 0.0
    %3875 = vmatprep.subr.mxu0 0.0
    %3876 = vmatpush2.msra.mxu0 0.0
    %3877 = vmatprep.subr.mxu0 0.0
    %3878 = vmatpush2.msra.mxu0 0.0
    %3879 = vmatprep.subr.mxu0 0.0
    %3880 = vmatpush2.msra.mxu0 0.0
    %3881 = vmatprep.subr.mxu0 0.0
    %3882 = vmatpush2.msra.mxu0 0.0
    %3883 = vmatprep.subr.mxu0 0.0
    %3884 = vmatpush2.msra.mxu0 0.0
    %3885 = vmatprep.subr.mxu0 0.0
    %3886 = vmatpush2.msra.mxu0 0.0
    %3887 = vmatprep.subr.mxu0 0.0
    %3888 = vmatpush2.msra.mxu0 0.0
    %3889 = vmatprep.subr.mxu0 0.0
    %3890 = vmatpush2.msra.mxu0 0.0
    %3891 = vmatprep.subr.mxu0 0.0
    %3892 = vmatpush2.msra.mxu0 0.0
    %3893 = vmatprep.subr.mxu0 0.0
    %3894 = vmatpush2.msra.mxu0 0.0
    %3895 = vmatprep.mubr.f32.mxu0 0.0
    %3896 = vmatmul.mubr.f32.gmra.mxu0 %v3758
    %v3897 = vpop.f32.mrf.mxu0
    %v3898 = vadd.f32 %v3536, %v3897
    %v3899 = vpop.f32.mrf.mxu0
    %v3900 = vadd.f32 %v3538, %v3899
    %3901 = vdwg.mxu0
    %v3902 = vadd.f32 %v3827, %v3381
    %v3903 = vadd.f32 %v3829, %v3385
    %v3904 = vadd.f32 %v3898, %v3389
    %v3905 = vadd.f32 %v3900, %v3393
    %v3906 = vxor.u32 %v3902, 2147483648
    %v3907 = vxor.u32 %v3903, 2147483648
    %v3908 = vxor.u32 %v3904, 2147483648
    %v3909 = vmul.f32 %v3906, 1.442695
    %v3910 = vpow.pop %v3909
    %v3911 = vmul.f32 %v3907, 1.442695
    %v3912 = vpow.pop %v3911
    %v3913 = vmul.f32 %v3908, 1.442695
    %v3914 = vpow.pop %v3913
    %v3915 = vadd.f32 %v3910, 1.0
    %v3916 = vadd.f32 %v3912, 1.0
    %v3917 = vadd.f32 %v3914, 1.0
    %v3918 = vrcp.pop %v3915
    %v3919 = vmul.f32 1.0, %v3918
    %v3920 = vrcp.pop %v3916
    %v3921 = vmul.f32 1.0, %v3920
    %v3922 = vrcp.pop %v3917
    %v3923 = vmul.f32 1.0, %v3922
    %v3924 = vtanh.pop %v3905
    %v3925 = vmul.f32 %v3921, 0.0
    %v3926 = vmul.f32 %v3919, %v3924
    %v3927 = vadd.f32 %v3925, %v3926
    %v3928 = vtanh.pop %v3927
    %v3929 = vmul.f32 %v3923, %v3928
    %vm3930 = vcmp.eq.f32.partialorder %v3183, 0.0
    %v3931 = vsel %vm3930, 1, 0
    %vm3932 = vcmp.eq.s32.totalorder %v3931, 1
    %v3933 = vsel %vm3932, %v3929, 0.0
    %3934 = vmatprep.subr.mxu0 %v3373
    %3935 = vmatpush1.msra.mxu0 %v3372
    %3936 = vmatprep.subr.mxu0 %v3369
    %3937 = vmatpush1.msra.mxu0 %v3368
    %3938 = vmatprep.subr.mxu0 %v3365
    %3939 = vmatpush1.msra.mxu0 %v3364
    %3940 = vmatprep.subr.mxu0 %v3361
    %3941 = vmatpush1.msra.mxu0 %v3360
    %3942 = vmatprep.subr.mxu0 %v3357
    %3943 = vmatpush1.msra.mxu0 %v3356
    %3944 = vmatprep.subr.mxu0 %v3353
    %3945 = vmatpush1.msra.mxu0 %v3352
    %3946 = vmatprep.subr.mxu0 %v3349
    %3947 = vmatpush1.msra.mxu0 %v3348
    %3948 = vmatprep.subr.mxu0 %v3345
    %3949 = vmatpush1.msra.mxu0 %v3344
    %3950 = vmatprep.subr.mxu0 %v3341
    %3951 = vmatpush1.msra.mxu0 %v3340
    %3952 = vmatprep.subr.mxu0 %v3337
    %3953 = vmatpush1.msra.mxu0 %v3336
    %3954 = vmatprep.subr.mxu0 %v3333
    %3955 = vmatpush1.msra.mxu0 %v3332
    %3956 = vmatprep.subr.mxu0 %v3329
    %3957 = vmatpush1.msra.mxu0 %v3328
    %3958 = vmatprep.subr.mxu0 %v3325
    %3959 = vmatpush1.msra.mxu0 %v3324
    %3960 = vmatprep.subr.mxu0 %v3321
    %3961 = vmatpush1.msra.mxu0 %v3320
    %3962 = vmatprep.subr.mxu0 %v3317
    %3963 = vmatpush1.msra.mxu0 %v3316
    %3964 = vmatprep.subr.mxu0 %v3313
    %3965 = vmatpush1.msra.mxu0 %v3312
    %3966 = vmatprep.subr.mxu0 0.0
    %3967 = vmatpush2.msra.mxu0 0.0
    %3968 = vmatprep.subr.mxu0 0.0
    %3969 = vmatpush2.msra.mxu0 0.0
    %3970 = vmatprep.subr.mxu0 0.0
    %3971 = vmatpush2.msra.mxu0 0.0
    %3972 = vmatprep.subr.mxu0 0.0
    %3973 = vmatpush2.msra.mxu0 0.0
    %3974 = vmatprep.subr.mxu0 0.0
    %3975 = vmatpush2.msra.mxu0 0.0
    %3976 = vmatprep.subr.mxu0 0.0
    %3977 = vmatpush2.msra.mxu0 0.0
    %3978 = vmatprep.subr.mxu0 0.0
    %3979 = vmatpush2.msra.mxu0 0.0
    %3980 = vmatprep.subr.mxu0 0.0
    %3981 = vmatpush2.msra.mxu0 0.0
    %3982 = vmatprep.subr.mxu0 0.0
    %3983 = vmatpush2.msra.mxu0 0.0
    %3984 = vmatprep.subr.mxu0 0.0
    %3985 = vmatpush2.msra.mxu0 0.0
    %3986 = vmatprep.subr.mxu0 0.0
    %3987 = vmatpush2.msra.mxu0 0.0
    %3988 = vmatprep.subr.mxu0 0.0
    %3989 = vmatpush2.msra.mxu0 0.0
    %3990 = vmatprep.subr.mxu0 0.0
    %3991 = vmatpush2.msra.mxu0 0.0
    %3992 = vmatprep.subr.mxu0 0.0
    %3993 = vmatpush2.msra.mxu0 0.0
    %3994 = vmatprep.subr.mxu0 0.0
    %3995 = vmatpush2.msra.mxu0 0.0
    %3996 = vmatprep.subr.mxu0 0.0
    %3997 = vmatpush2.msra.mxu0 0.0
    %3998 = vmatprep.mubr.f32.mxu0 0.0
    %3999 = vmatmul.mubr.f32.gmra.mxu0 %v3929
    %v4000 = vpop.f32.mrf.mxu0
    %v4001 = vadd.f32 0.0, %v4000
    %v4002 = vpop.f32.mrf.mxu0
    %v4003 = vadd.f32 0.0, %v4002
    %4004 = vdwg.mxu0
    %4005 = vmatprep.subr.mxu0 %v3375
    %4006 = vmatpush1.msra.mxu0 %v3374
    %4007 = vmatprep.subr.mxu0 %v3371
    %4008 = vmatpush1.msra.mxu0 %v3370
    %4009 = vmatprep.subr.mxu0 %v3367
    %4010 = vmatpush1.msra.mxu0 %v3366
    %4011 = vmatprep.subr.mxu0 %v3363
    %4012 = vmatpush1.msra.mxu0 %v3362
    %4013 = vmatprep.subr.mxu0 %v3359
    %4014 = vmatpush1.msra.mxu0 %v3358
    %4015 = vmatprep.subr.mxu0 %v3355
    %4016 = vmatpush1.msra.mxu0 %v3354
    %4017 = vmatprep.subr.mxu0 %v3351
    %4018 = vmatpush1.msra.mxu0 %v3350
    %4019 = vmatprep.subr.mxu0 %v3347
    %4020 = vmatpush1.msra.mxu0 %v3346
    %4021 = vmatprep.subr.mxu0 %v3343
    %4022 = vmatpush1.msra.mxu0 %v3342
    %4023 = vmatprep.subr.mxu0 %v3339
    %4024 = vmatpush1.msra.mxu0 %v3338
    %4025 = vmatprep.subr.mxu0 %v3335
    %4026 = vmatpush1.msra.mxu0 %v3334
    %4027 = vmatprep.subr.mxu0 %v3331
    %4028 = vmatpush1.msra.mxu0 %v3330
    %4029 = vmatprep.subr.mxu0 %v3327
    %4030 = vmatpush1.msra.mxu0 %v3326
    %4031 = vmatprep.subr.mxu0 %v3323
    %4032 = vmatpush1.msra.mxu0 %v3322
    %4033 = vmatprep.subr.mxu0 %v3319
    %4034 = vmatpush1.msra.mxu0 %v3318
    %4035 = vmatprep.subr.mxu0 %v3315
    %4036 = vmatpush1.msra.mxu0 %v3314
    %4037 = vmatprep.subr.mxu0 0.0
    %4038 = vmatpush2.msra.mxu0 0.0
    %4039 = vmatprep.subr.mxu0 0.0
    %4040 = vmatpush2.msra.mxu0 0.0
    %4041 = vmatprep.subr.mxu0 0.0
    %4042 = vmatpush2.msra.mxu0 0.0
    %4043 = vmatprep.subr.mxu0 0.0
    %4044 = vmatpush2.msra.mxu0 0.0
    %4045 = vmatprep.subr.mxu0 0.0
    %4046 = vmatpush2.msra.mxu0 0.0
    %4047 = vmatprep.subr.mxu0 0.0
    %4048 = vmatpush2.msra.mxu0 0.0
    %4049 = vmatprep.subr.mxu0 0.0
    %4050 = vmatpush2.msra.mxu0 0.0
    %4051 = vmatprep.subr.mxu0 0.0
    %4052 = vmatpush2.msra.mxu0 0.0
    %4053 = vmatprep.subr.mxu0 0.0
    %4054 = vmatpush2.msra.mxu0 0.0
    %4055 = vmatprep.subr.mxu0 0.0
    %4056 = vmatpush2.msra.mxu0 0.0
    %4057 = vmatprep.subr.mxu0 0.0
    %4058 = vmatpush2.msra.mxu0 0.0
    %4059 = vmatprep.subr.mxu0 0.0
    %4060 = vmatpush2.msra.mxu0 0.0
    %4061 = vmatprep.subr.mxu0 0.0
    %4062 = vmatpush2.msra.mxu0 0.0
    %4063 = vmatprep.subr.mxu0 0.0
    %4064 = vmatpush2.msra.mxu0 0.0
    %4065 = vmatprep.subr.mxu0 0.0
    %4066 = vmatpush2.msra.mxu0 0.0
    %4067 = vmatprep.subr.mxu0 0.0
    %4068 = vmatpush2.msra.mxu0 0.0
    %4069 = vmatprep.mubr.f32.mxu0 0.0
    %4070 = vmatmul.mubr.f32.gmra.mxu0 %v3929
    %v4071 = vpop.f32.mrf.mxu0
    %v4072 = vadd.f32 0.0, %v4071
    %v4073 = vpop.f32.mrf.mxu0
    %v4074 = vadd.f32 0.0, %v4073
    %4075 = vdwg.mxu0
    %4076 = vmatprep.subr.mxu0 %v3245
    %4077 = vmatpush1.msra.mxu0 %v3244
    %4078 = vmatprep.subr.mxu0 %v3241
    %4079 = vmatpush1.msra.mxu0 %v3240
    %4080 = vmatprep.subr.mxu0 %v3237
    %4081 = vmatpush1.msra.mxu0 %v3236
    %4082 = vmatprep.subr.mxu0 %v3233
    %4083 = vmatpush1.msra.mxu0 %v3232
    %4084 = vmatprep.subr.mxu0 %v3229
    %4085 = vmatpush1.msra.mxu0 %v3228
    %4086 = vmatprep.subr.mxu0 %v3225
    %4087 = vmatpush1.msra.mxu0 %v3224
    %4088 = vmatprep.subr.mxu0 %v3221
    %4089 = vmatpush1.msra.mxu0 %v3220
    %4090 = vmatprep.subr.mxu0 %v3217
    %4091 = vmatpush1.msra.mxu0 %v3216
    %4092 = vmatprep.subr.mxu0 %v3213
    %4093 = vmatpush1.msra.mxu0 %v3212
    %4094 = vmatprep.subr.mxu0 %v3209
    %4095 = vmatpush1.msra.mxu0 %v3208
    %4096 = vmatprep.subr.mxu0 %v3205
    %4097 = vmatpush1.msra.mxu0 %v3204
    %4098 = vmatprep.subr.mxu0 %v3201
    %4099 = vmatpush1.msra.mxu0 %v3200
    %4100 = vmatprep.subr.mxu0 %v3197
    %4101 = vmatpush1.msra.mxu0 %v3196
    %4102 = vmatprep.subr.mxu0 %v3193
    %4103 = vmatpush1.msra.mxu0 %v3192
    %4104 = vmatprep.subr.mxu0 %v3189
    %4105 = vmatpush1.msra.mxu0 %v3188
    %4106 = vmatprep.subr.mxu0 %v3185
    %4107 = vmatpush1.msra.mxu0 %v3184
    %4108 = vmatprep.subr.mxu0 0.0
    %4109 = vmatpush2.msra.mxu0 0.0
    %4110 = vmatprep.subr.mxu0 0.0
    %4111 = vmatpush2.msra.mxu0 0.0
    %4112 = vmatprep.subr.mxu0 0.0
    %4113 = vmatpush2.msra.mxu0 0.0
    %4114 = vmatprep.subr.mxu0 0.0
    %4115 = vmatpush2.msra.mxu0 0.0
    %4116 = vmatprep.subr.mxu0 0.0
    %4117 = vmatpush2.msra.mxu0 0.0
    %4118 = vmatprep.subr.mxu0 0.0
    %4119 = vmatpush2.msra.mxu0 0.0
    %4120 = vmatprep.subr.mxu0 0.0
    %4121 = vmatpush2.msra.mxu0 0.0
    %4122 = vmatprep.subr.mxu0 0.0
    %4123 = vmatpush2.msra.mxu0 0.0
    %4124 = vmatprep.subr.mxu0 0.0
    %4125 = vmatpush2.msra.mxu0 0.0
    %4126 = vmatprep.subr.mxu0 0.0
    %4127 = vmatpush2.msra.mxu0 0.0
    %4128 = vmatprep.subr.mxu0 0.0
    %4129 = vmatpush2.msra.mxu0 0.0
    %4130 = vmatprep.subr.mxu0 0.0
    %4131 = vmatpush2.msra.mxu0 0.0
    %4132 = vmatprep.subr.mxu0 0.0
    %4133 = vmatpush2.msra.mxu0 0.0
    %4134 = vmatprep.subr.mxu0 0.0
    %4135 = vmatpush2.msra.mxu0 0.0
    %4136 = vmatprep.subr.mxu0 0.0
    %4137 = vmatpush2.msra.mxu0 0.0
    %4138 = vmatprep.subr.mxu0 0.0
    %4139 = vmatpush2.msra.mxu0 0.0
    %4140 = vmatprep.mubr.f32.mxu0 0.0
    %4141 = vmatmul.mubr.f32.gmra.mxu0 %v3758
    %v4142 = vpop.f32.mrf.mxu0
    %v4143 = vadd.f32 0.0, %v4142
    %v4144 = vpop.f32.mrf.mxu0
    %v4145 = vadd.f32 0.0, %v4144
    %4146 = vdwg.mxu0
    %4147 = vmatprep.subr.mxu0 %v3247
    %4148 = vmatpush1.msra.mxu0 %v3246
    %4149 = vmatprep.subr.mxu0 %v3243
    %4150 = vmatpush1.msra.mxu0 %v3242
    %4151 = vmatprep.subr.mxu0 %v3239
    %4152 = vmatpush1.msra.mxu0 %v3238
    %4153 = vmatprep.subr.mxu0 %v3235
    %4154 = vmatpush1.msra.mxu0 %v3234
    %4155 = vmatprep.subr.mxu0 %v3231
    %4156 = vmatpush1.msra.mxu0 %v3230
    %4157 = vmatprep.subr.mxu0 %v3227
    %4158 = vmatpush1.msra.mxu0 %v3226
    %4159 = vmatprep.subr.mxu0 %v3223
    %4160 = vmatpush1.msra.mxu0 %v3222
    %4161 = vmatprep.subr.mxu0 %v3219
    %4162 = vmatpush1.msra.mxu0 %v3218
    %4163 = vmatprep.subr.mxu0 %v3215
    %4164 = vmatpush1.msra.mxu0 %v3214
    %4165 = vmatprep.subr.mxu0 %v3211
    %4166 = vmatpush1.msra.mxu0 %v3210
    %4167 = vmatprep.subr.mxu0 %v3207
    %4168 = vmatpush1.msra.mxu0 %v3206
    %4169 = vmatprep.subr.mxu0 %v3203
    %4170 = vmatpush1.msra.mxu0 %v3202
    %4171 = vmatprep.subr.mxu0 %v3199
    %4172 = vmatpush1.msra.mxu0 %v3198
    %4173 = vmatprep.subr.mxu0 %v3195
    %4174 = vmatpush1.msra.mxu0 %v3194
    %4175 = vmatprep.subr.mxu0 %v3191
    %4176 = vmatpush1.msra.mxu0 %v3190
    %4177 = vmatprep.subr.mxu0 %v3187
    %4178 = vmatpush1.msra.mxu0 %v3186
    %4179 = vmatprep.subr.mxu0 0.0
    %4180 = vmatpush2.msra.mxu0 0.0
    %4181 = vmatprep.subr.mxu0 0.0
    %4182 = vmatpush2.msra.mxu0 0.0
    %4183 = vmatprep.subr.mxu0 0.0
    %4184 = vmatpush2.msra.mxu0 0.0
    %4185 = vmatprep.subr.mxu0 0.0
    %4186 = vmatpush2.msra.mxu0 0.0
    %4187 = vmatprep.subr.mxu0 0.0
    %4188 = vmatpush2.msra.mxu0 0.0
    %4189 = vmatprep.subr.mxu0 0.0
    %4190 = vmatpush2.msra.mxu0 0.0
    %4191 = vmatprep.subr.mxu0 0.0
    %4192 = vmatpush2.msra.mxu0 0.0
    %4193 = vmatprep.subr.mxu0 0.0
    %4194 = vmatpush2.msra.mxu0 0.0
    %4195 = vmatprep.subr.mxu0 0.0
    %4196 = vmatpush2.msra.mxu0 0.0
    %4197 = vmatprep.subr.mxu0 0.0
    %4198 = vmatpush2.msra.mxu0 0.0
    %4199 = vmatprep.subr.mxu0 0.0
    %4200 = vmatpush2.msra.mxu0 0.0
    %4201 = vmatprep.subr.mxu0 0.0
    %4202 = vmatpush2.msra.mxu0 0.0
    %4203 = vmatprep.subr.mxu0 0.0
    %4204 = vmatpush2.msra.mxu0 0.0
    %4205 = vmatprep.subr.mxu0 0.0
    %4206 = vmatpush2.msra.mxu0 0.0
    %4207 = vmatprep.subr.mxu0 0.0
    %4208 = vmatpush2.msra.mxu0 0.0
    %4209 = vmatprep.subr.mxu0 0.0
    %4210 = vmatpush2.msra.mxu0 0.0
    %4211 = vmatprep.mubr.f32.mxu0 0.0
    %4212 = vmatmul.mubr.f32.gmra.mxu0 %v3758
    %v4213 = vpop.f32.mrf.mxu0
    %v4214 = vadd.f32 0.0, %v4213
    %v4215 = vpop.f32.mrf.mxu0
    %v4216 = vadd.f32 0.0, %v4215
    %4217 = vdwg.mxu0
    %v4222 = vrot.slane %v4143, 7
    %v4223 = vrot.slane %v4145, 7
    %v4224 = vrot.slane %v4214, 7
    %v4225 = vrot.slane %v4216, 7
    %v4234 = vadd.f32 %v3084, %v4222
    %v4235 = vadd.f32 %v3086, %v4223
    %v4236 = vadd.f32 %v3161, %v4224
    %v4237 = vadd.f32 %v3163, %v4225
    %v4238 = vadd.f32 %v3090, %v4143
    %v4239 = vadd.f32 %v3092, %v4145
    %v4240 = vadd.f32 %v3167, %v4214
    %v4241 = vadd.f32 %v3169, %v4216
    %v4242 = vxor.u32 %v4234, 2147483648
    %v4243 = vxor.u32 %v4235, 2147483648
    %v4244 = vxor.u32 %v4236, 2147483648
    %v4245 = vxor.u32 %v4238, 2147483648
    %v4246 = vxor.u32 %v4239, 2147483648
    %v4247 = vxor.u32 %v4240, 2147483648
    %v4248 = vmul.f32 %v4242, 1.442695
    %v4249 = vpow.pop %v4248
    %v4250 = vmul.f32 %v4243, 1.442695
    %v4251 = vpow.pop %v4250
    %v4252 = vmul.f32 %v4244, 1.442695
    %v4253 = vpow.pop %v4252
    %v4254 = vmul.f32 %v4245, 1.442695
    %v4255 = vpow.pop %v4254
    %v4256 = vmul.f32 %v4246, 1.442695
    %v4257 = vpow.pop %v4256
    %v4258 = vmul.f32 %v4247, 1.442695
    %v4259 = vpow.pop %v4258
    %v4260 = vadd.f32 %v4249, 1.0
    %v4261 = vadd.f32 %v4251, 1.0
    %v4262 = vadd.f32 %v4253, 1.0
    %v4263 = vadd.f32 %v4255, 1.0
    %v4264 = vadd.f32 %v4257, 1.0
    %v4265 = vadd.f32 %v4259, 1.0
    %v4266 = vrcp.pop %v4260
    %v4267 = vmul.f32 1.0, %v4266
    %v4268 = vrcp.pop %v4261
    %v4269 = vmul.f32 1.0, %v4268
    %v4270 = vrcp.pop %v4262
    %v4271 = vmul.f32 1.0, %v4270
    %v4272 = vrcp.pop %v4263
    %v4273 = vmul.f32 1.0, %v4272
    %v4274 = vrcp.pop %v4264
    %v4275 = vmul.f32 1.0, %v4274
    %v4276 = vrcp.pop %v4265
    %v4277 = vmul.f32 1.0, %v4276
    %v4278 = vtanh.pop %v4237
    %v4279 = vtanh.pop %v4241
    %v4282 = vrot.slane %v3748, 7
    %v4283 = vrot.slane %v3749, 7
    %v4286 = vmul.f32 %v4269, %v4282
    %v4287 = vmul.f32 %v4275, %v4283
    %v4288 = vmul.f32 %v4267, %v4278
    %v4289 = vmul.f32 %v4273, %v4279
    %v4290 = vadd.f32 %v4286, %v4288
    %v4291 = vadd.f32 %v4287, %v4289
    %v4292 = vtanh.pop %v4290
    %v4293 = vtanh.pop %v4291
    %v4294 = vmul.f32 %v4271, %v4292
    %v4295 = vmul.f32 %v4277, %v4293
    %v4298 = vrot.slane %v4294, 1
    %v4299 = vsel %vm3757, %v4295, %v4298
    %4301 = vmatprep.subr.mxu0 %v3309
    %4302 = vmatpush1.msra.mxu0 %v3308
    %4303 = vmatprep.subr.mxu0 %v3305
    %4304 = vmatpush1.msra.mxu0 %v3304
    %4305 = vmatprep.subr.mxu0 %v3301
    %4306 = vmatpush1.msra.mxu0 %v3300
    %4307 = vmatprep.subr.mxu0 %v3297
    %4308 = vmatpush1.msra.mxu0 %v3296
    %4309 = vmatprep.subr.mxu0 %v3293
    %4310 = vmatpush1.msra.mxu0 %v3292
    %4311 = vmatprep.subr.mxu0 %v3289
    %4312 = vmatpush1.msra.mxu0 %v3288
    %4313 = vmatprep.subr.mxu0 %v3285
    %4314 = vmatpush1.msra.mxu0 %v3284
    %4315 = vmatprep.subr.mxu0 %v3281
    %4316 = vmatpush1.msra.mxu0 %v3280
    %4317 = vmatprep.subr.mxu0 %v3277
    %4318 = vmatpush1.msra.mxu0 %v3276
    %4319 = vmatprep.subr.mxu0 %v3273
    %4320 = vmatpush1.msra.mxu0 %v3272
    %4321 = vmatprep.subr.mxu0 %v3269
    %4322 = vmatpush1.msra.mxu0 %v3268
    %4323 = vmatprep.subr.mxu0 %v3265
    %4324 = vmatpush1.msra.mxu0 %v3264
    %4325 = vmatprep.subr.mxu0 %v3261
    %4326 = vmatpush1.msra.mxu0 %v3260
    %4327 = vmatprep.subr.mxu0 %v3257
    %4328 = vmatpush1.msra.mxu0 %v3256
    %4329 = vmatprep.subr.mxu0 %v3253
    %4330 = vmatpush1.msra.mxu0 %v3252
    %4331 = vmatprep.subr.mxu0 %v3249
    %4332 = vmatpush1.msra.mxu0 %v3248
    %4333 = vmatprep.subr.mxu0 0.0
    %4334 = vmatpush2.msra.mxu0 0.0
    %4335 = vmatprep.subr.mxu0 0.0
    %4336 = vmatpush2.msra.mxu0 0.0
    %4337 = vmatprep.subr.mxu0 0.0
    %4338 = vmatpush2.msra.mxu0 0.0
    %4339 = vmatprep.subr.mxu0 0.0
    %4340 = vmatpush2.msra.mxu0 0.0
    %4341 = vmatprep.subr.mxu0 0.0
    %4342 = vmatpush2.msra.mxu0 0.0
    %4343 = vmatprep.subr.mxu0 0.0
    %4344 = vmatpush2.msra.mxu0 0.0
    %4345 = vmatprep.subr.mxu0 0.0
    %4346 = vmatpush2.msra.mxu0 0.0
    %4347 = vmatprep.subr.mxu0 0.0
    %4348 = vmatpush2.msra.mxu0 0.0
    %4349 = vmatprep.subr.mxu0 0.0
    %4350 = vmatpush2.msra.mxu0 0.0
    %4351 = vmatprep.subr.mxu0 0.0
    %4352 = vmatpush2.msra.mxu0 0.0
    %4353 = vmatprep.subr.mxu0 0.0
    %4354 = vmatpush2.msra.mxu0 0.0
    %4355 = vmatprep.subr.mxu0 0.0
    %4356 = vmatpush2.msra.mxu0 0.0
    %4357 = vmatprep.subr.mxu0 0.0
    %4358 = vmatpush2.msra.mxu0 0.0
    %4359 = vmatprep.subr.mxu0 0.0
    %4360 = vmatpush2.msra.mxu0 0.0
    %4361 = vmatprep.subr.mxu0 0.0
    %4362 = vmatpush2.msra.mxu0 0.0
    %4363 = vmatprep.subr.mxu0 0.0
    %4364 = vmatpush2.msra.mxu0 0.0
    %4365 = vmatprep.mubr.f32.mxu0 0.0
    %4366 = vmatmul.mubr.f32.gmra.mxu0 %v4299
    %v4367 = vpop.f32.mrf.mxu0
    %v4368 = vadd.f32 %v4001, %v4367
    %v4369 = vpop.f32.mrf.mxu0
    %v4370 = vadd.f32 %v4003, %v4369
    %4371 = vdwg.mxu0
    %4372 = vmatprep.subr.mxu0 %v3311
    %4373 = vmatpush1.msra.mxu0 %v3310
    %4374 = vmatprep.subr.mxu0 %v3307
    %4375 = vmatpush1.msra.mxu0 %v3306
    %4376 = vmatprep.subr.mxu0 %v3303
    %4377 = vmatpush1.msra.mxu0 %v3302
    %4378 = vmatprep.subr.mxu0 %v3299
    %4379 = vmatpush1.msra.mxu0 %v3298
    %4380 = vmatprep.subr.mxu0 %v3295
    %4381 = vmatpush1.msra.mxu0 %v3294
    %4382 = vmatprep.subr.mxu0 %v3291
    %4383 = vmatpush1.msra.mxu0 %v3290
    %4384 = vmatprep.subr.mxu0 %v3287
    %4385 = vmatpush1.msra.mxu0 %v3286
    %4386 = vmatprep.subr.mxu0 %v3283
    %4387 = vmatpush1.msra.mxu0 %v3282
    %4388 = vmatprep.subr.mxu0 %v3279
    %4389 = vmatpush1.msra.mxu0 %v3278
    %4390 = vmatprep.subr.mxu0 %v3275
    %4391 = vmatpush1.msra.mxu0 %v3274
    %4392 = vmatprep.subr.mxu0 %v3271
    %4393 = vmatpush1.msra.mxu0 %v3270
    %4394 = vmatprep.subr.mxu0 %v3267
    %4395 = vmatpush1.msra.mxu0 %v3266
    %4396 = vmatprep.subr.mxu0 %v3263
    %4397 = vmatpush1.msra.mxu0 %v3262
    %4398 = vmatprep.subr.mxu0 %v3259
    %4399 = vmatpush1.msra.mxu0 %v3258
    %4400 = vmatprep.subr.mxu0 %v3255
    %4401 = vmatpush1.msra.mxu0 %v3254
    %4402 = vmatprep.subr.mxu0 %v3251
    %4403 = vmatpush1.msra.mxu0 %v3250
    %4404 = vmatprep.subr.mxu0 0.0
    %4405 = vmatpush2.msra.mxu0 0.0
    %4406 = vmatprep.subr.mxu0 0.0
    %4407 = vmatpush2.msra.mxu0 0.0
    %4408 = vmatprep.subr.mxu0 0.0
    %4409 = vmatpush2.msra.mxu0 0.0
    %4410 = vmatprep.subr.mxu0 0.0
    %4411 = vmatpush2.msra.mxu0 0.0
    %4412 = vmatprep.subr.mxu0 0.0
    %4413 = vmatpush2.msra.mxu0 0.0
    %4414 = vmatprep.subr.mxu0 0.0
    %4415 = vmatpush2.msra.mxu0 0.0
    %4416 = vmatprep.subr.mxu0 0.0
    %4417 = vmatpush2.msra.mxu0 0.0
    %4418 = vmatprep.subr.mxu0 0.0
    %4419 = vmatpush2.msra.mxu0 0.0
    %4420 = vmatprep.subr.mxu0 0.0
    %4421 = vmatpush2.msra.mxu0 0.0
    %4422 = vmatprep.subr.mxu0 0.0
    %4423 = vmatpush2.msra.mxu0 0.0
    %4424 = vmatprep.subr.mxu0 0.0
    %4425 = vmatpush2.msra.mxu0 0.0
    %4426 = vmatprep.subr.mxu0 0.0
    %4427 = vmatpush2.msra.mxu0 0.0
    %4428 = vmatprep.subr.mxu0 0.0
    %4429 = vmatpush2.msra.mxu0 0.0
    %4430 = vmatprep.subr.mxu0 0.0
    %4431 = vmatpush2.msra.mxu0 0.0
    %4432 = vmatprep.subr.mxu0 0.0
    %4433 = vmatpush2.msra.mxu0 0.0
    %4434 = vmatprep.subr.mxu0 0.0
    %4435 = vmatpush2.msra.mxu0 0.0
    %4436 = vmatprep.mubr.f32.mxu0 0.0
    %4437 = vmatmul.mubr.f32.gmra.mxu0 %v4299
    %v4438 = vpop.f32.mrf.mxu0
    %v4439 = vadd.f32 %v4072, %v4438
    %v4440 = vpop.f32.mrf.mxu0
    %v4441 = vadd.f32 %v4074, %v4440
    %4442 = vdwg.mxu0
    %v4443 = vadd.f32 %v4368, %v3381
    %v4444 = vadd.f32 %v4370, %v3385
    %v4445 = vadd.f32 %v4439, %v3389
    %v4446 = vadd.f32 %v4441, %v3393
    %v4447 = vxor.u32 %v4443, 2147483648
    %v4448 = vxor.u32 %v4444, 2147483648
    %v4449 = vxor.u32 %v4445, 2147483648
    %v4450 = vmul.f32 %v4447, 1.442695
    %v4451 = vpow.pop %v4450
    %v4452 = vmul.f32 %v4448, 1.442695
    %v4453 = vpow.pop %v4452
    %v4454 = vmul.f32 %v4449, 1.442695
    %v4455 = vpow.pop %v4454
    %v4456 = vadd.f32 %v4451, 1.0
    %v4457 = vadd.f32 %v4453, 1.0
    %v4458 = vadd.f32 %v4455, 1.0
    %v4459 = vrcp.pop %v4456
    %v4460 = vmul.f32 1.0, %v4459
    %v4461 = vrcp.pop %v4457
    %v4462 = vmul.f32 1.0, %v4461
    %v4463 = vrcp.pop %v4458
    %v4464 = vmul.f32 1.0, %v4463
    %v4465 = vtanh.pop %v4446
    %v4466 = vmul.f32 %v4462, %v3927
    %v4467 = vmul.f32 %v4460, %v4465
    %v4468 = vadd.f32 %v4466, %v4467
    %v4469 = vtanh.pop %v4468
    %v4470 = vmul.f32 %v4464, %v4469
    %vm4471 = vcmp.eq.f32.partialorder %v3183, 1.0
    %v4472 = vsel %vm4471, 1, 0
    %vm4473 = vcmp.eq.s32.totalorder %v4472, 1
    %v4474 = vsel %vm4473, %v4470, %v3933
    %4475 = vmatprep.subr.mxu0 %v3373
    %4476 = vmatpush1.msra.mxu0 %v3372
    %4477 = vmatprep.subr.mxu0 %v3369
    %4478 = vmatpush1.msra.mxu0 %v3368
    %4479 = vmatprep.subr.mxu0 %v3365
    %4480 = vmatpush1.msra.mxu0 %v3364
    %4481 = vmatprep.subr.mxu0 %v3361
    %4482 = vmatpush1.msra.mxu0 %v3360
    %4483 = vmatprep.subr.mxu0 %v3357
    %4484 = vmatpush1.msra.mxu0 %v3356
    %4485 = vmatprep.subr.mxu0 %v3353
    %4486 = vmatpush1.msra.mxu0 %v3352
    %4487 = vmatprep.subr.mxu0 %v3349
    %4488 = vmatpush1.msra.mxu0 %v3348
    %4489 = vmatprep.subr.mxu0 %v3345
    %4490 = vmatpush1.msra.mxu0 %v3344
    %4491 = vmatprep.subr.mxu0 %v3341
    %4492 = vmatpush1.msra.mxu0 %v3340
    %4493 = vmatprep.subr.mxu0 %v3337
    %4494 = vmatpush1.msra.mxu0 %v3336
    %4495 = vmatprep.subr.mxu0 %v3333
    %4496 = vmatpush1.msra.mxu0 %v3332
    %4497 = vmatprep.subr.mxu0 %v3329
    %4498 = vmatpush1.msra.mxu0 %v3328
    %4499 = vmatprep.subr.mxu0 %v3325
    %4500 = vmatpush1.msra.mxu0 %v3324
    %4501 = vmatprep.subr.mxu0 %v3321
    %4502 = vmatpush1.msra.mxu0 %v3320
    %4503 = vmatprep.subr.mxu0 %v3317
    %4504 = vmatpush1.msra.mxu0 %v3316
    %4505 = vmatprep.subr.mxu0 %v3313
    %4506 = vmatpush1.msra.mxu0 %v3312
    %4507 = vmatprep.subr.mxu0 0.0
    %4508 = vmatpush2.msra.mxu0 0.0
    %4509 = vmatprep.subr.mxu0 0.0
    %4510 = vmatpush2.msra.mxu0 0.0
    %4511 = vmatprep.subr.mxu0 0.0
    %4512 = vmatpush2.msra.mxu0 0.0
    %4513 = vmatprep.subr.mxu0 0.0
    %4514 = vmatpush2.msra.mxu0 0.0
    %4515 = vmatprep.subr.mxu0 0.0
    %4516 = vmatpush2.msra.mxu0 0.0
    %4517 = vmatprep.subr.mxu0 0.0
    %4518 = vmatpush2.msra.mxu0 0.0
    %4519 = vmatprep.subr.mxu0 0.0
    %4520 = vmatpush2.msra.mxu0 0.0
    %4521 = vmatprep.subr.mxu0 0.0
    %4522 = vmatpush2.msra.mxu0 0.0
    %4523 = vmatprep.subr.mxu0 0.0
    %4524 = vmatpush2.msra.mxu0 0.0
    %4525 = vmatprep.subr.mxu0 0.0
    %4526 = vmatpush2.msra.mxu0 0.0
    %4527 = vmatprep.subr.mxu0 0.0
    %4528 = vmatpush2.msra.mxu0 0.0
    %4529 = vmatprep.subr.mxu0 0.0
    %4530 = vmatpush2.msra.mxu0 0.0
    %4531 = vmatprep.subr.mxu0 0.0
    %4532 = vmatpush2.msra.mxu0 0.0
    %4533 = vmatprep.subr.mxu0 0.0
    %4534 = vmatpush2.msra.mxu0 0.0
    %4535 = vmatprep.subr.mxu0 0.0
    %4536 = vmatpush2.msra.mxu0 0.0
    %4537 = vmatprep.subr.mxu0 0.0
    %4538 = vmatpush2.msra.mxu0 0.0
    %4539 = vmatprep.mubr.f32.mxu0 0.0
    %4540 = vmatmul.mubr.f32.gmra.mxu0 %v4470
    %v4541 = vpop.f32.mrf.mxu0
    %v4542 = vadd.f32 0.0, %v4541
    %v4543 = vpop.f32.mrf.mxu0
    %v4544 = vadd.f32 0.0, %v4543
    %4545 = vdwg.mxu0
    %4546 = vmatprep.subr.mxu0 %v3375
    %4547 = vmatpush1.msra.mxu0 %v3374
    %4548 = vmatprep.subr.mxu0 %v3371
    %4549 = vmatpush1.msra.mxu0 %v3370
    %4550 = vmatprep.subr.mxu0 %v3367
    %4551 = vmatpush1.msra.mxu0 %v3366
    %4552 = vmatprep.subr.mxu0 %v3363
    %4553 = vmatpush1.msra.mxu0 %v3362
    %4554 = vmatprep.subr.mxu0 %v3359
    %4555 = vmatpush1.msra.mxu0 %v3358
    %4556 = vmatprep.subr.mxu0 %v3355
    %4557 = vmatpush1.msra.mxu0 %v3354
    %4558 = vmatprep.subr.mxu0 %v3351
    %4559 = vmatpush1.msra.mxu0 %v3350
    %4560 = vmatprep.subr.mxu0 %v3347
    %4561 = vmatpush1.msra.mxu0 %v3346
    %4562 = vmatprep.subr.mxu0 %v3343
    %4563 = vmatpush1.msra.mxu0 %v3342
    %4564 = vmatprep.subr.mxu0 %v3339
    %4565 = vmatpush1.msra.mxu0 %v3338
    %4566 = vmatprep.subr.mxu0 %v3335
    %4567 = vmatpush1.msra.mxu0 %v3334
    %4568 = vmatprep.subr.mxu0 %v3331
    %4569 = vmatpush1.msra.mxu0 %v3330
    %4570 = vmatprep.subr.mxu0 %v3327
    %4571 = vmatpush1.msra.mxu0 %v3326
    %4572 = vmatprep.subr.mxu0 %v3323
    %4573 = vmatpush1.msra.mxu0 %v3322
    %4574 = vmatprep.subr.mxu0 %v3319
    %4575 = vmatpush1.msra.mxu0 %v3318
    %4576 = vmatprep.subr.mxu0 %v3315
    %4577 = vmatpush1.msra.mxu0 %v3314
    %4578 = vmatprep.subr.mxu0 0.0
    %4579 = vmatpush2.msra.mxu0 0.0
    %4580 = vmatprep.subr.mxu0 0.0
    %4581 = vmatpush2.msra.mxu0 0.0
    %4582 = vmatprep.subr.mxu0 0.0
    %4583 = vmatpush2.msra.mxu0 0.0
    %4584 = vmatprep.subr.mxu0 0.0
    %4585 = vmatpush2.msra.mxu0 0.0
    %4586 = vmatprep.subr.mxu0 0.0
    %4587 = vmatpush2.msra.mxu0 0.0
    %4588 = vmatprep.subr.mxu0 0.0
    %4589 = vmatpush2.msra.mxu0 0.0
    %4590 = vmatprep.subr.mxu0 0.0
    %4591 = vmatpush2.msra.mxu0 0.0
    %4592 = vmatprep.subr.mxu0 0.0
    %4593 = vmatpush2.msra.mxu0 0.0
    %4594 = vmatprep.subr.mxu0 0.0
    %4595 = vmatpush2.msra.mxu0 0.0
    %4596 = vmatprep.subr.mxu0 0.0
    %4597 = vmatpush2.msra.mxu0 0.0
    %4598 = vmatprep.subr.mxu0 0.0
    %4599 = vmatpush2.msra.mxu0 0.0
    %4600 = vmatprep.subr.mxu0 0.0
    %4601 = vmatpush2.msra.mxu0 0.0
    %4602 = vmatprep.subr.mxu0 0.0
    %4603 = vmatpush2.msra.mxu0 0.0
    %4604 = vmatprep.subr.mxu0 0.0
    %4605 = vmatpush2.msra.mxu0 0.0
    %4606 = vmatprep.subr.mxu0 0.0
    %4607 = vmatpush2.msra.mxu0 0.0
    %4608 = vmatprep.subr.mxu0 0.0
    %4609 = vmatpush2.msra.mxu0 0.0
    %4610 = vmatprep.mubr.f32.mxu0 0.0
    %4611 = vmatmul.mubr.f32.gmra.mxu0 %v4470
    %v4612 = vpop.f32.mrf.mxu0
    %v4613 = vadd.f32 0.0, %v4612
    %v4614 = vpop.f32.mrf.mxu0
    %v4615 = vadd.f32 0.0, %v4614
    %4616 = vdwg.mxu0
    %4617 = vmatprep.subr.mxu0 %v3245
    %4618 = vmatpush1.msra.mxu0 %v3244
    %4619 = vmatprep.subr.mxu0 %v3241
    %4620 = vmatpush1.msra.mxu0 %v3240
    %4621 = vmatprep.subr.mxu0 %v3237
    %4622 = vmatpush1.msra.mxu0 %v3236
    %4623 = vmatprep.subr.mxu0 %v3233
    %4624 = vmatpush1.msra.mxu0 %v3232
    %4625 = vmatprep.subr.mxu0 %v3229
    %4626 = vmatpush1.msra.mxu0 %v3228
    %4627 = vmatprep.subr.mxu0 %v3225
    %4628 = vmatpush1.msra.mxu0 %v3224
    %4629 = vmatprep.subr.mxu0 %v3221
    %4630 = vmatpush1.msra.mxu0 %v3220
    %4631 = vmatprep.subr.mxu0 %v3217
    %4632 = vmatpush1.msra.mxu0 %v3216
    %4633 = vmatprep.subr.mxu0 %v3213
    %4634 = vmatpush1.msra.mxu0 %v3212
    %4635 = vmatprep.subr.mxu0 %v3209
    %4636 = vmatpush1.msra.mxu0 %v3208
    %4637 = vmatprep.subr.mxu0 %v3205
    %4638 = vmatpush1.msra.mxu0 %v3204
    %4639 = vmatprep.subr.mxu0 %v3201
    %4640 = vmatpush1.msra.mxu0 %v3200
    %4641 = vmatprep.subr.mxu0 %v3197
    %4642 = vmatpush1.msra.mxu0 %v3196
    %4643 = vmatprep.subr.mxu0 %v3193
    %4644 = vmatpush1.msra.mxu0 %v3192
    %4645 = vmatprep.subr.mxu0 %v3189
    %4646 = vmatpush1.msra.mxu0 %v3188
    %4647 = vmatprep.subr.mxu0 %v3185
    %4648 = vmatpush1.msra.mxu0 %v3184
    %4649 = vmatprep.subr.mxu0 0.0
    %4650 = vmatpush2.msra.mxu0 0.0
    %4651 = vmatprep.subr.mxu0 0.0
    %4652 = vmatpush2.msra.mxu0 0.0
    %4653 = vmatprep.subr.mxu0 0.0
    %4654 = vmatpush2.msra.mxu0 0.0
    %4655 = vmatprep.subr.mxu0 0.0
    %4656 = vmatpush2.msra.mxu0 0.0
    %4657 = vmatprep.subr.mxu0 0.0
    %4658 = vmatpush2.msra.mxu0 0.0
    %4659 = vmatprep.subr.mxu0 0.0
    %4660 = vmatpush2.msra.mxu0 0.0
    %4661 = vmatprep.subr.mxu0 0.0
    %4662 = vmatpush2.msra.mxu0 0.0
    %4663 = vmatprep.subr.mxu0 0.0
    %4664 = vmatpush2.msra.mxu0 0.0
    %4665 = vmatprep.subr.mxu0 0.0
    %4666 = vmatpush2.msra.mxu0 0.0
    %4667 = vmatprep.subr.mxu0 0.0
    %4668 = vmatpush2.msra.mxu0 0.0
    %4669 = vmatprep.subr.mxu0 0.0
    %4670 = vmatpush2.msra.mxu0 0.0
    %4671 = vmatprep.subr.mxu0 0.0
    %4672 = vmatpush2.msra.mxu0 0.0
    %4673 = vmatprep.subr.mxu0 0.0
    %4674 = vmatpush2.msra.mxu0 0.0
    %4675 = vmatprep.subr.mxu0 0.0
    %4676 = vmatpush2.msra.mxu0 0.0
    %4677 = vmatprep.subr.mxu0 0.0
    %4678 = vmatpush2.msra.mxu0 0.0
    %4679 = vmatprep.subr.mxu0 0.0
    %4680 = vmatpush2.msra.mxu0 0.0
    %4681 = vmatprep.mubr.f32.mxu0 0.0
    %4682 = vmatmul.mubr.f32.gmra.mxu0 %v4299
    %v4683 = vpop.f32.mrf.mxu0
    %v4684 = vadd.f32 0.0, %v4683
    %v4685 = vpop.f32.mrf.mxu0
    %v4686 = vadd.f32 0.0, %v4685
    %4687 = vdwg.mxu0
    %4688 = vmatprep.subr.mxu0 %v3247
    %4689 = vmatpush1.msra.mxu0 %v3246
    %4690 = vmatprep.subr.mxu0 %v3243
    %4691 = vmatpush1.msra.mxu0 %v3242
    %4692 = vmatprep.subr.mxu0 %v3239
    %4693 = vmatpush1.msra.mxu0 %v3238
    %4694 = vmatprep.subr.mxu0 %v3235
    %4695 = vmatpush1.msra.mxu0 %v3234
    %4696 = vmatprep.subr.mxu0 %v3231
    %4697 = vmatpush1.msra.mxu0 %v3230
    %4698 = vmatprep.subr.mxu0 %v3227
    %4699 = vmatpush1.msra.mxu0 %v3226
    %4700 = vmatprep.subr.mxu0 %v3223
    %4701 = vmatpush1.msra.mxu0 %v3222
    %4702 = vmatprep.subr.mxu0 %v3219
    %4703 = vmatpush1.msra.mxu0 %v3218
    %4704 = vmatprep.subr.mxu0 %v3215
    %4705 = vmatpush1.msra.mxu0 %v3214
    %4706 = vmatprep.subr.mxu0 %v3211
    %4707 = vmatpush1.msra.mxu0 %v3210
    %4708 = vmatprep.subr.mxu0 %v3207
    %4709 = vmatpush1.msra.mxu0 %v3206
    %4710 = vmatprep.subr.mxu0 %v3203
    %4711 = vmatpush1.msra.mxu0 %v3202
    %4712 = vmatprep.subr.mxu0 %v3199
    %4713 = vmatpush1.msra.mxu0 %v3198
    %4714 = vmatprep.subr.mxu0 %v3195
    %4715 = vmatpush1.msra.mxu0 %v3194
    %4716 = vmatprep.subr.mxu0 %v3191
    %4717 = vmatpush1.msra.mxu0 %v3190
    %4718 = vmatprep.subr.mxu0 %v3187
    %4719 = vmatpush1.msra.mxu0 %v3186
    %4720 = vmatprep.subr.mxu0 0.0
    %4721 = vmatpush2.msra.mxu0 0.0
    %4722 = vmatprep.subr.mxu0 0.0
    %4723 = vmatpush2.msra.mxu0 0.0
    %4724 = vmatprep.subr.mxu0 0.0
    %4725 = vmatpush2.msra.mxu0 0.0
    %4726 = vmatprep.subr.mxu0 0.0
    %4727 = vmatpush2.msra.mxu0 0.0
    %4728 = vmatprep.subr.mxu0 0.0
    %4729 = vmatpush2.msra.mxu0 0.0
    %4730 = vmatprep.subr.mxu0 0.0
    %4731 = vmatpush2.msra.mxu0 0.0
    %4732 = vmatprep.subr.mxu0 0.0
    %4733 = vmatpush2.msra.mxu0 0.0
    %4734 = vmatprep.subr.mxu0 0.0
    %4735 = vmatpush2.msra.mxu0 0.0
    %4736 = vmatprep.subr.mxu0 0.0
    %4737 = vmatpush2.msra.mxu0 0.0
    %4738 = vmatprep.subr.mxu0 0.0
    %4739 = vmatpush2.msra.mxu0 0.0
    %4740 = vmatprep.subr.mxu0 0.0
    %4741 = vmatpush2.msra.mxu0 0.0
    %4742 = vmatprep.subr.mxu0 0.0
    %4743 = vmatpush2.msra.mxu0 0.0
    %4744 = vmatprep.subr.mxu0 0.0
    %4745 = vmatpush2.msra.mxu0 0.0
    %4746 = vmatprep.subr.mxu0 0.0
    %4747 = vmatpush2.msra.mxu0 0.0
    %4748 = vmatprep.subr.mxu0 0.0
    %4749 = vmatpush2.msra.mxu0 0.0
    %4750 = vmatprep.subr.mxu0 0.0
    %4751 = vmatpush2.msra.mxu0 0.0
    %4752 = vmatprep.mubr.f32.mxu0 0.0
    %4753 = vmatmul.mubr.f32.gmra.mxu0 %v4299
    %v4754 = vpop.f32.mrf.mxu0
    %v4755 = vadd.f32 0.0, %v4754
    %v4756 = vpop.f32.mrf.mxu0
    %v4757 = vadd.f32 0.0, %v4756
    %4758 = vdwg.mxu0
    %v4763 = vrot.slane %v4684, 6
    %v4764 = vrot.slane %v4686, 6
    %v4765 = vrot.slane %v4755, 6
    %v4766 = vrot.slane %v4757, 6
    %v4767 = vrot.slane %v4684, 7
    %v4768 = vrot.slane %v4686, 7
    %v4769 = vrot.slane %v4755, 7
    %v4770 = vrot.slane %v4757, 7
    %v4779 = vadd.f32 %v3084, %v4763
    %v4780 = vadd.f32 %v3086, %v4764
    %v4781 = vadd.f32 %v3161, %v4765
    %v4782 = vadd.f32 %v3163, %v4766
    %v4783 = vadd.f32 %v3090, %v4767
    %v4784 = vadd.f32 %v3092, %v4768
    %v4785 = vadd.f32 %v3167, %v4769
    %v4786 = vadd.f32 %v3169, %v4770
    %v4787 = vxor.u32 %v4779, 2147483648
    %v4788 = vxor.u32 %v4780, 2147483648
    %v4789 = vxor.u32 %v4781, 2147483648
    %v4790 = vxor.u32 %v4783, 2147483648
    %v4791 = vxor.u32 %v4784, 2147483648
    %v4792 = vxor.u32 %v4785, 2147483648
    %v4793 = vmul.f32 %v4787, 1.442695
    %v4794 = vpow.pop %v4793
    %v4795 = vmul.f32 %v4788, 1.442695
    %v4796 = vpow.pop %v4795
    %v4797 = vmul.f32 %v4789, 1.442695
    %v4798 = vpow.pop %v4797
    %v4799 = vmul.f32 %v4790, 1.442695
    %v4800 = vpow.pop %v4799
    %v4801 = vmul.f32 %v4791, 1.442695
    %v4802 = vpow.pop %v4801
    %v4803 = vmul.f32 %v4792, 1.442695
    %v4804 = vpow.pop %v4803
    %v4805 = vadd.f32 %v4794, 1.0
    %v4806 = vadd.f32 %v4796, 1.0
    %v4807 = vadd.f32 %v4798, 1.0
    %v4808 = vadd.f32 %v4800, 1.0
    %v4809 = vadd.f32 %v4802, 1.0
    %v4810 = vadd.f32 %v4804, 1.0
    %v4811 = vrcp.pop %v4805
    %v4812 = vmul.f32 1.0, %v4811
    %v4813 = vrcp.pop %v4806
    %v4814 = vmul.f32 1.0, %v4813
    %v4815 = vrcp.pop %v4807
    %v4816 = vmul.f32 1.0, %v4815
    %v4817 = vrcp.pop %v4808
    %v4818 = vmul.f32 1.0, %v4817
    %v4819 = vrcp.pop %v4809
    %v4820 = vmul.f32 1.0, %v4819
    %v4821 = vrcp.pop %v4810
    %v4822 = vmul.f32 1.0, %v4821
    %v4823 = vtanh.pop %v4782
    %v4824 = vtanh.pop %v4786
    %v4827 = vrot.slane %v4290, 7
    %v4828 = vrot.slane %v4291, 7
    %v4831 = vmul.f32 %v4814, %v4827
    %v4832 = vmul.f32 %v4820, %v4828
    %v4833 = vmul.f32 %v4812, %v4823
    %v4834 = vmul.f32 %v4818, %v4824
    %v4835 = vadd.f32 %v4831, %v4833
    %v4836 = vadd.f32 %v4832, %v4834
    %v4837 = vtanh.pop %v4835
    %v4838 = vtanh.pop %v4836
    %v4839 = vmul.f32 %v4816, %v4837
    %v4840 = vmul.f32 %v4822, %v4838
    %v4843 = vrot.slane %v4839, 2
    %v4844 = vrot.slane %v4840, 1
    %v4845 = vsel %vm3757, %v4844, %v4843
    %4847 = vmatprep.subr.mxu0 %v3309
    %4848 = vmatpush1.msra.mxu0 %v3308
    %4849 = vmatprep.subr.mxu0 %v3305
    %4850 = vmatpush1.msra.mxu0 %v3304
    %4851 = vmatprep.subr.mxu0 %v3301
    %4852 = vmatpush1.msra.mxu0 %v3300
    %4853 = vmatprep.subr.mxu0 %v3297
    %4854 = vmatpush1.msra.mxu0 %v3296
    %4855 = vmatprep.subr.mxu0 %v3293
    %4856 = vmatpush1.msra.mxu0 %v3292
    %4857 = vmatprep.subr.mxu0 %v3289
    %4858 = vmatpush1.msra.mxu0 %v3288
    %4859 = vmatprep.subr.mxu0 %v3285
    %4860 = vmatpush1.msra.mxu0 %v3284
    %4861 = vmatprep.subr.mxu0 %v3281
    %4862 = vmatpush1.msra.mxu0 %v3280
    %4863 = vmatprep.subr.mxu0 %v3277
    %4864 = vmatpush1.msra.mxu0 %v3276
    %4865 = vmatprep.subr.mxu0 %v3273
    %4866 = vmatpush1.msra.mxu0 %v3272
    %4867 = vmatprep.subr.mxu0 %v3269
    %4868 = vmatpush1.msra.mxu0 %v3268
    %4869 = vmatprep.subr.mxu0 %v3265
    %4870 = vmatpush1.msra.mxu0 %v3264
    %4871 = vmatprep.subr.mxu0 %v3261
    %4872 = vmatpush1.msra.mxu0 %v3260
    %4873 = vmatprep.subr.mxu0 %v3257
    %4874 = vmatpush1.msra.mxu0 %v3256
    %4875 = vmatprep.subr.mxu0 %v3253
    %4876 = vmatpush1.msra.mxu0 %v3252
    %4877 = vmatprep.subr.mxu0 %v3249
    %4878 = vmatpush1.msra.mxu0 %v3248
    %4879 = vmatprep.subr.mxu0 0.0
    %4880 = vmatpush2.msra.mxu0 0.0
    %4881 = vmatprep.subr.mxu0 0.0
    %4882 = vmatpush2.msra.mxu0 0.0
    %4883 = vmatprep.subr.mxu0 0.0
    %4884 = vmatpush2.msra.mxu0 0.0
    %4885 = vmatprep.subr.mxu0 0.0
    %4886 = vmatpush2.msra.mxu0 0.0
    %4887 = vmatprep.subr.mxu0 0.0
    %4888 = vmatpush2.msra.mxu0 0.0
    %4889 = vmatprep.subr.mxu0 0.0
    %4890 = vmatpush2.msra.mxu0 0.0
    %4891 = vmatprep.subr.mxu0 0.0
    %4892 = vmatpush2.msra.mxu0 0.0
    %4893 = vmatprep.subr.mxu0 0.0
    %4894 = vmatpush2.msra.mxu0 0.0
    %4895 = vmatprep.subr.mxu0 0.0
    %4896 = vmatpush2.msra.mxu0 0.0
    %4897 = vmatprep.subr.mxu0 0.0
    %4898 = vmatpush2.msra.mxu0 0.0
    %4899 = vmatprep.subr.mxu0 0.0
    %4900 = vmatpush2.msra.mxu0 0.0
    %4901 = vmatprep.subr.mxu0 0.0
    %4902 = vmatpush2.msra.mxu0 0.0
    %4903 = vmatprep.subr.mxu0 0.0
    %4904 = vmatpush2.msra.mxu0 0.0
    %4905 = vmatprep.subr.mxu0 0.0
    %4906 = vmatpush2.msra.mxu0 0.0
    %4907 = vmatprep.subr.mxu0 0.0
    %4908 = vmatpush2.msra.mxu0 0.0
    %4909 = vmatprep.subr.mxu0 0.0
    %4910 = vmatpush2.msra.mxu0 0.0
    %4911 = vmatprep.mubr.f32.mxu0 0.0
    %4912 = vmatmul.mubr.f32.gmra.mxu0 %v4845
    %v4913 = vpop.f32.mrf.mxu0
    %v4914 = vadd.f32 %v4542, %v4913
    %v4915 = vpop.f32.mrf.mxu0
    %v4916 = vadd.f32 %v4544, %v4915
    %4917 = vdwg.mxu0
    %4918 = vmatprep.subr.mxu0 %v3311
    %4919 = vmatpush1.msra.mxu0 %v3310
    %4920 = vmatprep.subr.mxu0 %v3307
    %4921 = vmatpush1.msra.mxu0 %v3306
    %4922 = vmatprep.subr.mxu0 %v3303
    %4923 = vmatpush1.msra.mxu0 %v3302
    %4924 = vmatprep.subr.mxu0 %v3299
    %4925 = vmatpush1.msra.mxu0 %v3298
    %4926 = vmatprep.subr.mxu0 %v3295
    %4927 = vmatpush1.msra.mxu0 %v3294
    %4928 = vmatprep.subr.mxu0 %v3291
    %4929 = vmatpush1.msra.mxu0 %v3290
    %4930 = vmatprep.subr.mxu0 %v3287
    %4931 = vmatpush1.msra.mxu0 %v3286
    %4932 = vmatprep.subr.mxu0 %v3283
    %4933 = vmatpush1.msra.mxu0 %v3282
    %4934 = vmatprep.subr.mxu0 %v3279
    %4935 = vmatpush1.msra.mxu0 %v3278
    %4936 = vmatprep.subr.mxu0 %v3275
    %4937 = vmatpush1.msra.mxu0 %v3274
    %4938 = vmatprep.subr.mxu0 %v3271
    %4939 = vmatpush1.msra.mxu0 %v3270
    %4940 = vmatprep.subr.mxu0 %v3267
    %4941 = vmatpush1.msra.mxu0 %v3266
    %4942 = vmatprep.subr.mxu0 %v3263
    %4943 = vmatpush1.msra.mxu0 %v3262
    %4944 = vmatprep.subr.mxu0 %v3259
    %4945 = vmatpush1.msra.mxu0 %v3258
    %4946 = vmatprep.subr.mxu0 %v3255
    %4947 = vmatpush1.msra.mxu0 %v3254
    %4948 = vmatprep.subr.mxu0 %v3251
    %4949 = vmatpush1.msra.mxu0 %v3250
    %4950 = vmatprep.subr.mxu0 0.0
    %4951 = vmatpush2.msra.mxu0 0.0
    %4952 = vmatprep.subr.mxu0 0.0
    %4953 = vmatpush2.msra.mxu0 0.0
    %4954 = vmatprep.subr.mxu0 0.0
    %4955 = vmatpush2.msra.mxu0 0.0
    %4956 = vmatprep.subr.mxu0 0.0
    %4957 = vmatpush2.msra.mxu0 0.0
    %4958 = vmatprep.subr.mxu0 0.0
    %4959 = vmatpush2.msra.mxu0 0.0
    %4960 = vmatprep.subr.mxu0 0.0
    %4961 = vmatpush2.msra.mxu0 0.0
    %4962 = vmatprep.subr.mxu0 0.0
    %4963 = vmatpush2.msra.mxu0 0.0
    %4964 = vmatprep.subr.mxu0 0.0
    %4965 = vmatpush2.msra.mxu0 0.0
    %4966 = vmatprep.subr.mxu0 0.0
    %4967 = vmatpush2.msra.mxu0 0.0
    %4968 = vmatprep.subr.mxu0 0.0
    %4969 = vmatpush2.msra.mxu0 0.0
    %4970 = vmatprep.subr.mxu0 0.0
    %4971 = vmatpush2.msra.mxu0 0.0
    %4972 = vmatprep.subr.mxu0 0.0
    %4973 = vmatpush2.msra.mxu0 0.0
    %4974 = vmatprep.subr.mxu0 0.0
    %4975 = vmatpush2.msra.mxu0 0.0
    %4976 = vmatprep.subr.mxu0 0.0
    %4977 = vmatpush2.msra.mxu0 0.0
    %4978 = vmatprep.subr.mxu0 0.0
    %4979 = vmatpush2.msra.mxu0 0.0
    %4980 = vmatprep.subr.mxu0 0.0
    %4981 = vmatpush2.msra.mxu0 0.0
    %4982 = vmatprep.mubr.f32.mxu0 0.0
    %4983 = vmatmul.mubr.f32.gmra.mxu0 %v4845
    %v4984 = vpop.f32.mrf.mxu0
    %v4985 = vadd.f32 %v4613, %v4984
    %v4986 = vpop.f32.mrf.mxu0
    %v4987 = vadd.f32 %v4615, %v4986
    %4988 = vdwg.mxu0
    %v4989 = vadd.f32 %v4914, %v3381
    %v4990 = vadd.f32 %v4916, %v3385
    %v4991 = vadd.f32 %v4985, %v3389
    %v4992 = vadd.f32 %v4987, %v3393
    %v4993 = vxor.u32 %v4989, 2147483648
    %v4994 = vxor.u32 %v4990, 2147483648
    %v4995 = vxor.u32 %v4991, 2147483648
    %v4996 = vmul.f32 %v4993, 1.442695
    %v4997 = vpow.pop %v4996
    %v4998 = vmul.f32 %v4994, 1.442695
    %v4999 = vpow.pop %v4998
    %v5000 = vmul.f32 %v4995, 1.442695
    %v5001 = vpow.pop %v5000
    %v5002 = vadd.f32 %v4997, 1.0
    %v5003 = vadd.f32 %v4999, 1.0
    %v5004 = vadd.f32 %v5001, 1.0
    %v5005 = vrcp.pop %v5002
    %v5006 = vmul.f32 1.0, %v5005
    %v5007 = vrcp.pop %v5003
    %v5008 = vmul.f32 1.0, %v5007
    %v5009 = vrcp.pop %v5004
    %v5010 = vmul.f32 1.0, %v5009
    %v5011 = vtanh.pop %v4992
    %v5012 = vmul.f32 %v5008, %v4468
    %v5013 = vmul.f32 %v5006, %v5011
    %v5014 = vadd.f32 %v5012, %v5013
    %v5015 = vtanh.pop %v5014
    %v5016 = vmul.f32 %v5010, %v5015
    %vm5017 = vcmp.eq.f32.partialorder %v3183, 2.0
    %v5018 = vsel %vm5017, 1, 0
    %vm5019 = vcmp.eq.s32.totalorder %v5018, 1
    %v5020 = vsel %vm5019, %v5016, %v4474
    %5021 = vmatprep.subr.mxu0 %v3373
    %5022 = vmatpush1.msra.mxu0 %v3372
    %5023 = vmatprep.subr.mxu0 %v3369
    %5024 = vmatpush1.msra.mxu0 %v3368
    %5025 = vmatprep.subr.mxu0 %v3365
    %5026 = vmatpush1.msra.mxu0 %v3364
    %5027 = vmatprep.subr.mxu0 %v3361
    %5028 = vmatpush1.msra.mxu0 %v3360
    %5029 = vmatprep.subr.mxu0 %v3357
    %5030 = vmatpush1.msra.mxu0 %v3356
    %5031 = vmatprep.subr.mxu0 %v3353
    %5032 = vmatpush1.msra.mxu0 %v3352
    %5033 = vmatprep.subr.mxu0 %v3349
    %5034 = vmatpush1.msra.mxu0 %v3348
    %5035 = vmatprep.subr.mxu0 %v3345
    %5036 = vmatpush1.msra.mxu0 %v3344
    %5037 = vmatprep.subr.mxu0 %v3341
    %5038 = vmatpush1.msra.mxu0 %v3340
    %5039 = vmatprep.subr.mxu0 %v3337
    %5040 = vmatpush1.msra.mxu0 %v3336
    %5041 = vmatprep.subr.mxu0 %v3333
    %5042 = vmatpush1.msra.mxu0 %v3332
    %5043 = vmatprep.subr.mxu0 %v3329
    %5044 = vmatpush1.msra.mxu0 %v3328
    %5045 = vmatprep.subr.mxu0 %v3325
    %5046 = vmatpush1.msra.mxu0 %v3324
    %5047 = vmatprep.subr.mxu0 %v3321
    %5048 = vmatpush1.msra.mxu0 %v3320
    %5049 = vmatprep.subr.mxu0 %v3317
    %5050 = vmatpush1.msra.mxu0 %v3316
    %5051 = vmatprep.subr.mxu0 %v3313
    %5052 = vmatpush1.msra.mxu0 %v3312
    %5053 = vmatprep.subr.mxu0 0.0
    %5054 = vmatpush2.msra.mxu0 0.0
    %5055 = vmatprep.subr.mxu0 0.0
    %5056 = vmatpush2.msra.mxu0 0.0
    %5057 = vmatprep.subr.mxu0 0.0
    %5058 = vmatpush2.msra.mxu0 0.0
    %5059 = vmatprep.subr.mxu0 0.0
    %5060 = vmatpush2.msra.mxu0 0.0
    %5061 = vmatprep.subr.mxu0 0.0
    %5062 = vmatpush2.msra.mxu0 0.0
    %5063 = vmatprep.subr.mxu0 0.0
    %5064 = vmatpush2.msra.mxu0 0.0
    %5065 = vmatprep.subr.mxu0 0.0
    %5066 = vmatpush2.msra.mxu0 0.0
    %5067 = vmatprep.subr.mxu0 0.0
    %5068 = vmatpush2.msra.mxu0 0.0
    %5069 = vmatprep.subr.mxu0 0.0
    %5070 = vmatpush2.msra.mxu0 0.0
    %5071 = vmatprep.subr.mxu0 0.0
    %5072 = vmatpush2.msra.mxu0 0.0
    %5073 = vmatprep.subr.mxu0 0.0
    %5074 = vmatpush2.msra.mxu0 0.0
    %5075 = vmatprep.subr.mxu0 0.0
    %5076 = vmatpush2.msra.mxu0 0.0
    %5077 = vmatprep.subr.mxu0 0.0
    %5078 = vmatpush2.msra.mxu0 0.0
    %5079 = vmatprep.subr.mxu0 0.0
    %5080 = vmatpush2.msra.mxu0 0.0
    %5081 = vmatprep.subr.mxu0 0.0
    %5082 = vmatpush2.msra.mxu0 0.0
    %5083 = vmatprep.subr.mxu0 0.0
    %5084 = vmatpush2.msra.mxu0 0.0
    %5085 = vmatprep.mubr.f32.mxu0 0.0
    %5086 = vmatmul.mubr.f32.gmra.mxu0 %v5016
    %v5087 = vpop.f32.mrf.mxu0
    %v5088 = vadd.f32 0.0, %v5087
    %v5089 = vpop.f32.mrf.mxu0
    %v5090 = vadd.f32 0.0, %v5089
    %5091 = vdwg.mxu0
    %5092 = vmatprep.subr.mxu0 %v3375
    %5093 = vmatpush1.msra.mxu0 %v3374
    %5094 = vmatprep.subr.mxu0 %v3371
    %5095 = vmatpush1.msra.mxu0 %v3370
    %5096 = vmatprep.subr.mxu0 %v3367
    %5097 = vmatpush1.msra.mxu0 %v3366
    %5098 = vmatprep.subr.mxu0 %v3363
    %5099 = vmatpush1.msra.mxu0 %v3362
    %5100 = vmatprep.subr.mxu0 %v3359
    %5101 = vmatpush1.msra.mxu0 %v3358
    %5102 = vmatprep.subr.mxu0 %v3355
    %5103 = vmatpush1.msra.mxu0 %v3354
    %5104 = vmatprep.subr.mxu0 %v3351
    %5105 = vmatpush1.msra.mxu0 %v3350
    %5106 = vmatprep.subr.mxu0 %v3347
    %5107 = vmatpush1.msra.mxu0 %v3346
    %5108 = vmatprep.subr.mxu0 %v3343
    %5109 = vmatpush1.msra.mxu0 %v3342
    %5110 = vmatprep.subr.mxu0 %v3339
    %5111 = vmatpush1.msra.mxu0 %v3338
    %5112 = vmatprep.subr.mxu0 %v3335
    %5113 = vmatpush1.msra.mxu0 %v3334
    %5114 = vmatprep.subr.mxu0 %v3331
    %5115 = vmatpush1.msra.mxu0 %v3330
    %5116 = vmatprep.subr.mxu0 %v3327
    %5117 = vmatpush1.msra.mxu0 %v3326
    %5118 = vmatprep.subr.mxu0 %v3323
    %5119 = vmatpush1.msra.mxu0 %v3322
    %5120 = vmatprep.subr.mxu0 %v3319
    %5121 = vmatpush1.msra.mxu0 %v3318
    %5122 = vmatprep.subr.mxu0 %v3315
    %5123 = vmatpush1.msra.mxu0 %v3314
    %5124 = vmatprep.subr.mxu0 0.0
    %5125 = vmatpush2.msra.mxu0 0.0
    %5126 = vmatprep.subr.mxu0 0.0
    %5127 = vmatpush2.msra.mxu0 0.0
    %5128 = vmatprep.subr.mxu0 0.0
    %5129 = vmatpush2.msra.mxu0 0.0
    %5130 = vmatprep.subr.mxu0 0.0
    %5131 = vmatpush2.msra.mxu0 0.0
    %5132 = vmatprep.subr.mxu0 0.0
    %5133 = vmatpush2.msra.mxu0 0.0
    %5134 = vmatprep.subr.mxu0 0.0
    %5135 = vmatpush2.msra.mxu0 0.0
    %5136 = vmatprep.subr.mxu0 0.0
    %5137 = vmatpush2.msra.mxu0 0.0
    %5138 = vmatprep.subr.mxu0 0.0
    %5139 = vmatpush2.msra.mxu0 0.0
    %5140 = vmatprep.subr.mxu0 0.0
    %5141 = vmatpush2.msra.mxu0 0.0
    %5142 = vmatprep.subr.mxu0 0.0
    %5143 = vmatpush2.msra.mxu0 0.0
    %5144 = vmatprep.subr.mxu0 0.0
    %5145 = vmatpush2.msra.mxu0 0.0
    %5146 = vmatprep.subr.mxu0 0.0
    %5147 = vmatpush2.msra.mxu0 0.0
    %5148 = vmatprep.subr.mxu0 0.0
    %5149 = vmatpush2.msra.mxu0 0.0
    %5150 = vmatprep.subr.mxu0 0.0
    %5151 = vmatpush2.msra.mxu0 0.0
    %5152 = vmatprep.subr.mxu0 0.0
    %5153 = vmatpush2.msra.mxu0 0.0
    %5154 = vmatprep.subr.mxu0 0.0
    %5155 = vmatpush2.msra.mxu0 0.0
    %5156 = vmatprep.mubr.f32.mxu0 0.0
    %5157 = vmatmul.mubr.f32.gmra.mxu0 %v5016
    %v5158 = vpop.f32.mrf.mxu0
    %v5159 = vadd.f32 0.0, %v5158
    %v5160 = vpop.f32.mrf.mxu0
    %v5161 = vadd.f32 0.0, %v5160
    %5162 = vdwg.mxu0
    %5163 = vmatprep.subr.mxu0 %v3245
    %5164 = vmatpush1.msra.mxu0 %v3244
    %5165 = vmatprep.subr.mxu0 %v3241
    %5166 = vmatpush1.msra.mxu0 %v3240
    %5167 = vmatprep.subr.mxu0 %v3237
    %5168 = vmatpush1.msra.mxu0 %v3236
    %5169 = vmatprep.subr.mxu0 %v3233
    %5170 = vmatpush1.msra.mxu0 %v3232
    %5171 = vmatprep.subr.mxu0 %v3229
    %5172 = vmatpush1.msra.mxu0 %v3228
    %5173 = vmatprep.subr.mxu0 %v3225
    %5174 = vmatpush1.msra.mxu0 %v3224
    %5175 = vmatprep.subr.mxu0 %v3221
    %5176 = vmatpush1.msra.mxu0 %v3220
    %5177 = vmatprep.subr.mxu0 %v3217
    %5178 = vmatpush1.msra.mxu0 %v3216
    %5179 = vmatprep.subr.mxu0 %v3213
    %5180 = vmatpush1.msra.mxu0 %v3212
    %5181 = vmatprep.subr.mxu0 %v3209
    %5182 = vmatpush1.msra.mxu0 %v3208
    %5183 = vmatprep.subr.mxu0 %v3205
    %5184 = vmatpush1.msra.mxu0 %v3204
    %5185 = vmatprep.subr.mxu0 %v3201
    %5186 = vmatpush1.msra.mxu0 %v3200
    %5187 = vmatprep.subr.mxu0 %v3197
    %5188 = vmatpush1.msra.mxu0 %v3196
    %5189 = vmatprep.subr.mxu0 %v3193
    %5190 = vmatpush1.msra.mxu0 %v3192
    %5191 = vmatprep.subr.mxu0 %v3189
    %5192 = vmatpush1.msra.mxu0 %v3188
    %5193 = vmatprep.subr.mxu0 %v3185
    %5194 = vmatpush1.msra.mxu0 %v3184
    %5195 = vmatprep.subr.mxu0 0.0
    %5196 = vmatpush2.msra.mxu0 0.0
    %5197 = vmatprep.subr.mxu0 0.0
    %5198 = vmatpush2.msra.mxu0 0.0
    %5199 = vmatprep.subr.mxu0 0.0
    %5200 = vmatpush2.msra.mxu0 0.0
    %5201 = vmatprep.subr.mxu0 0.0
    %5202 = vmatpush2.msra.mxu0 0.0
    %5203 = vmatprep.subr.mxu0 0.0
    %5204 = vmatpush2.msra.mxu0 0.0
    %5205 = vmatprep.subr.mxu0 0.0
    %5206 = vmatpush2.msra.mxu0 0.0
    %5207 = vmatprep.subr.mxu0 0.0
    %5208 = vmatpush2.msra.mxu0 0.0
    %5209 = vmatprep.subr.mxu0 0.0
    %5210 = vmatpush2.msra.mxu0 0.0
    %5211 = vmatprep.subr.mxu0 0.0
    %5212 = vmatpush2.msra.mxu0 0.0
    %5213 = vmatprep.subr.mxu0 0.0
    %5214 = vmatpush2.msra.mxu0 0.0
    %5215 = vmatprep.subr.mxu0 0.0
    %5216 = vmatpush2.msra.mxu0 0.0
    %5217 = vmatprep.subr.mxu0 0.0
    %5218 = vmatpush2.msra.mxu0 0.0
    %5219 = vmatprep.subr.mxu0 0.0
    %5220 = vmatpush2.msra.mxu0 0.0
    %5221 = vmatprep.subr.mxu0 0.0
    %5222 = vmatpush2.msra.mxu0 0.0
    %5223 = vmatprep.subr.mxu0 0.0
    %5224 = vmatpush2.msra.mxu0 0.0
    %5225 = vmatprep.subr.mxu0 0.0
    %5226 = vmatpush2.msra.mxu0 0.0
    %5227 = vmatprep.mubr.f32.mxu0 0.0
    %5228 = vmatmul.mubr.f32.gmra.mxu0 %v4845
    %v5229 = vpop.f32.mrf.mxu0
    %v5230 = vadd.f32 0.0, %v5229
    %v5231 = vpop.f32.mrf.mxu0
    %v5232 = vadd.f32 0.0, %v5231
    %5233 = vdwg.mxu0
    %5234 = vmatprep.subr.mxu0 %v3247
    %5235 = vmatpush1.msra.mxu0 %v3246
    %5236 = vmatprep.subr.mxu0 %v3243
    %5237 = vmatpush1.msra.mxu0 %v3242
    %5238 = vmatprep.subr.mxu0 %v3239
    %5239 = vmatpush1.msra.mxu0 %v3238
    %5240 = vmatprep.subr.mxu0 %v3235
    %5241 = vmatpush1.msra.mxu0 %v3234
    %5242 = vmatprep.subr.mxu0 %v3231
    %5243 = vmatpush1.msra.mxu0 %v3230
    %5244 = vmatprep.subr.mxu0 %v3227
    %5245 = vmatpush1.msra.mxu0 %v3226
    %5246 = vmatprep.subr.mxu0 %v3223
    %5247 = vmatpush1.msra.mxu0 %v3222
    %5248 = vmatprep.subr.mxu0 %v3219
    %5249 = vmatpush1.msra.mxu0 %v3218
    %5250 = vmatprep.subr.mxu0 %v3215
    %5251 = vmatpush1.msra.mxu0 %v3214
    %5252 = vmatprep.subr.mxu0 %v3211
    %5253 = vmatpush1.msra.mxu0 %v3210
    %5254 = vmatprep.subr.mxu0 %v3207
    %5255 = vmatpush1.msra.mxu0 %v3206
    %5256 = vmatprep.subr.mxu0 %v3203
    %5257 = vmatpush1.msra.mxu0 %v3202
    %5258 = vmatprep.subr.mxu0 %v3199
    %5259 = vmatpush1.msra.mxu0 %v3198
    %5260 = vmatprep.subr.mxu0 %v3195
    %5261 = vmatpush1.msra.mxu0 %v3194
    %5262 = vmatprep.subr.mxu0 %v3191
    %5263 = vmatpush1.msra.mxu0 %v3190
    %5264 = vmatprep.subr.mxu0 %v3187
    %5265 = vmatpush1.msra.mxu0 %v3186
    %5266 = vmatprep.subr.mxu0 0.0
    %5267 = vmatpush2.msra.mxu0 0.0
    %5268 = vmatprep.subr.mxu0 0.0
    %5269 = vmatpush2.msra.mxu0 0.0
    %5270 = vmatprep.subr.mxu0 0.0
    %5271 = vmatpush2.msra.mxu0 0.0
    %5272 = vmatprep.subr.mxu0 0.0
    %5273 = vmatpush2.msra.mxu0 0.0
    %5274 = vmatprep.subr.mxu0 0.0
    %5275 = vmatpush2.msra.mxu0 0.0
    %5276 = vmatprep.subr.mxu0 0.0
    %5277 = vmatpush2.msra.mxu0 0.0
    %5278 = vmatprep.subr.mxu0 0.0
    %5279 = vmatpush2.msra.mxu0 0.0
    %5280 = vmatprep.subr.mxu0 0.0
    %5281 = vmatpush2.msra.mxu0 0.0
    %5282 = vmatprep.subr.mxu0 0.0
    %5283 = vmatpush2.msra.mxu0 0.0
    %5284 = vmatprep.subr.mxu0 0.0
    %5285 = vmatpush2.msra.mxu0 0.0
    %5286 = vmatprep.subr.mxu0 0.0
    %5287 = vmatpush2.msra.mxu0 0.0
    %5288 = vmatprep.subr.mxu0 0.0
    %5289 = vmatpush2.msra.mxu0 0.0
    %5290 = vmatprep.subr.mxu0 0.0
    %5291 = vmatpush2.msra.mxu0 0.0
    %5292 = vmatprep.subr.mxu0 0.0
    %5293 = vmatpush2.msra.mxu0 0.0
    %5294 = vmatprep.subr.mxu0 0.0
    %5295 = vmatpush2.msra.mxu0 0.0
    %5296 = vmatprep.subr.mxu0 0.0
    %5297 = vmatpush2.msra.mxu0 0.0
    %5298 = vmatprep.mubr.f32.mxu0 0.0
    %5299 = vmatmul.mubr.f32.gmra.mxu0 %v4845
    %v5300 = vpop.f32.mrf.mxu0
    %v5301 = vadd.f32 0.0, %v5300
    %v5302 = vpop.f32.mrf.mxu0
    %v5303 = vadd.f32 0.0, %v5302
    %5304 = vdwg.mxu0
    %v5309 = vrot.slane %v5230, 5
    %v5310 = vrot.slane %v5232, 5
    %v5311 = vrot.slane %v5301, 5
    %v5312 = vrot.slane %v5303, 5
    %v5313 = vrot.slane %v5230, 6
    %v5314 = vrot.slane %v5232, 6
    %v5315 = vrot.slane %v5301, 6
    %v5316 = vrot.slane %v5303, 6
    %v5325 = vadd.f32 %v3084, %v5309
    %v5326 = vadd.f32 %v3086, %v5310
    %v5327 = vadd.f32 %v3161, %v5311
    %v5328 = vadd.f32 %v3163, %v5312
    %v5329 = vadd.f32 %v3090, %v5313
    %v5330 = vadd.f32 %v3092, %v5314
    %v5331 = vadd.f32 %v3167, %v5315
    %v5332 = vadd.f32 %v3169, %v5316
    %v5333 = vxor.u32 %v5325, 2147483648
    %v5334 = vxor.u32 %v5326, 2147483648
    %v5335 = vxor.u32 %v5327, 2147483648
    %v5336 = vxor.u32 %v5329, 2147483648
    %v5337 = vxor.u32 %v5330, 2147483648
    %v5338 = vxor.u32 %v5331, 2147483648
    %v5339 = vmul.f32 %v5333, 1.442695
    %v5340 = vpow.pop %v5339
    %v5341 = vmul.f32 %v5334, 1.442695
    %v5342 = vpow.pop %v5341
    %v5343 = vmul.f32 %v5335, 1.442695
    %v5344 = vpow.pop %v5343
    %v5345 = vmul.f32 %v5336, 1.442695
    %v5346 = vpow.pop %v5345
    %v5347 = vmul.f32 %v5337, 1.442695
    %v5348 = vpow.pop %v5347
    %v5349 = vmul.f32 %v5338, 1.442695
    %v5350 = vpow.pop %v5349
    %v5351 = vadd.f32 %v5340, 1.0
    %v5352 = vadd.f32 %v5342, 1.0
    %v5353 = vadd.f32 %v5344, 1.0
    %v5354 = vadd.f32 %v5346, 1.0
    %v5355 = vadd.f32 %v5348, 1.0
    %v5356 = vadd.f32 %v5350, 1.0
    %v5357 = vrcp.pop %v5351
    %v5358 = vmul.f32 1.0, %v5357
    %v5359 = vrcp.pop %v5352
    %v5360 = vmul.f32 1.0, %v5359
    %v5361 = vrcp.pop %v5353
    %v5362 = vmul.f32 1.0, %v5361
    %v5363 = vrcp.pop %v5354
    %v5364 = vmul.f32 1.0, %v5363
    %v5365 = vrcp.pop %v5355
    %v5366 = vmul.f32 1.0, %v5365
    %v5367 = vrcp.pop %v5356
    %v5368 = vmul.f32 1.0, %v5367
    %v5369 = vtanh.pop %v5328
    %v5370 = vtanh.pop %v5332
    %v5373 = vrot.slane %v4835, 7
    %v5374 = vrot.slane %v4836, 7
    %v5377 = vmul.f32 %v5360, %v5373
    %v5378 = vmul.f32 %v5366, %v5374
    %v5379 = vmul.f32 %v5358, %v5369
    %v5380 = vmul.f32 %v5364, %v5370
    %v5381 = vadd.f32 %v5377, %v5379
    %v5382 = vadd.f32 %v5378, %v5380
    %v5383 = vtanh.pop %v5381
    %v5384 = vtanh.pop %v5382
    %v5385 = vmul.f32 %v5362, %v5383
    %v5386 = vmul.f32 %v5368, %v5384
    %v5389 = vrot.slane %v5385, 3
    %v5390 = vrot.slane %v5386, 2
    %v5391 = vsel %vm3757, %v5390, %v5389
    %5393 = vmatprep.subr.mxu0 %v3309
    %5394 = vmatpush1.msra.mxu0 %v3308
    %5395 = vmatprep.subr.mxu0 %v3305
    %5396 = vmatpush1.msra.mxu0 %v3304
    %5397 = vmatprep.subr.mxu0 %v3301
    %5398 = vmatpush1.msra.mxu0 %v3300
    %5399 = vmatprep.subr.mxu0 %v3297
    %5400 = vmatpush1.msra.mxu0 %v3296
    %5401 = vmatprep.subr.mxu0 %v3293
    %5402 = vmatpush1.msra.mxu0 %v3292
    %5403 = vmatprep.subr.mxu0 %v3289
    %5404 = vmatpush1.msra.mxu0 %v3288
    %5405 = vmatprep.subr.mxu0 %v3285
    %5406 = vmatpush1.msra.mxu0 %v3284
    %5407 = vmatprep.subr.mxu0 %v3281
    %5408 = vmatpush1.msra.mxu0 %v3280
    %5409 = vmatprep.subr.mxu0 %v3277
    %5410 = vmatpush1.msra.mxu0 %v3276
    %5411 = vmatprep.subr.mxu0 %v3273
    %5412 = vmatpush1.msra.mxu0 %v3272
    %5413 = vmatprep.subr.mxu0 %v3269
    %5414 = vmatpush1.msra.mxu0 %v3268
    %5415 = vmatprep.subr.mxu0 %v3265
    %5416 = vmatpush1.msra.mxu0 %v3264
    %5417 = vmatprep.subr.mxu0 %v3261
    %5418 = vmatpush1.msra.mxu0 %v3260
    %5419 = vmatprep.subr.mxu0 %v3257
    %5420 = vmatpush1.msra.mxu0 %v3256
    %5421 = vmatprep.subr.mxu0 %v3253
    %5422 = vmatpush1.msra.mxu0 %v3252
    %5423 = vmatprep.subr.mxu0 %v3249
    %5424 = vmatpush1.msra.mxu0 %v3248
    %5425 = vmatprep.subr.mxu0 0.0
    %5426 = vmatpush2.msra.mxu0 0.0
    %5427 = vmatprep.subr.mxu0 0.0
    %5428 = vmatpush2.msra.mxu0 0.0
    %5429 = vmatprep.subr.mxu0 0.0
    %5430 = vmatpush2.msra.mxu0 0.0
    %5431 = vmatprep.subr.mxu0 0.0
    %5432 = vmatpush2.msra.mxu0 0.0
    %5433 = vmatprep.subr.mxu0 0.0
    %5434 = vmatpush2.msra.mxu0 0.0
    %5435 = vmatprep.subr.mxu0 0.0
    %5436 = vmatpush2.msra.mxu0 0.0
    %5437 = vmatprep.subr.mxu0 0.0
    %5438 = vmatpush2.msra.mxu0 0.0
    %5439 = vmatprep.subr.mxu0 0.0
    %5440 = vmatpush2.msra.mxu0 0.0
    %5441 = vmatprep.subr.mxu0 0.0
    %5442 = vmatpush2.msra.mxu0 0.0
    %5443 = vmatprep.subr.mxu0 0.0
    %5444 = vmatpush2.msra.mxu0 0.0
    %5445 = vmatprep.subr.mxu0 0.0
    %5446 = vmatpush2.msra.mxu0 0.0
    %5447 = vmatprep.subr.mxu0 0.0
    %5448 = vmatpush2.msra.mxu0 0.0
    %5449 = vmatprep.subr.mxu0 0.0
    %5450 = vmatpush2.msra.mxu0 0.0
    %5451 = vmatprep.subr.mxu0 0.0
    %5452 = vmatpush2.msra.mxu0 0.0
    %5453 = vmatprep.subr.mxu0 0.0
    %5454 = vmatpush2.msra.mxu0 0.0
    %5455 = vmatprep.subr.mxu0 0.0
    %5456 = vmatpush2.msra.mxu0 0.0
    %5457 = vmatprep.mubr.f32.mxu0 0.0
    %5458 = vmatmul.mubr.f32.gmra.mxu0 %v5391
    %v5459 = vpop.f32.mrf.mxu0
    %v5460 = vadd.f32 %v5088, %v5459
    %v5461 = vpop.f32.mrf.mxu0
    %v5462 = vadd.f32 %v5090, %v5461
    %5463 = vdwg.mxu0
    %5464 = vmatprep.subr.mxu0 %v3311
    %5465 = vmatpush1.msra.mxu0 %v3310
    %5466 = vmatprep.subr.mxu0 %v3307
    %5467 = vmatpush1.msra.mxu0 %v3306
    %5468 = vmatprep.subr.mxu0 %v3303
    %5469 = vmatpush1.msra.mxu0 %v3302
    %5470 = vmatprep.subr.mxu0 %v3299
    %5471 = vmatpush1.msra.mxu0 %v3298
    %5472 = vmatprep.subr.mxu0 %v3295
    %5473 = vmatpush1.msra.mxu0 %v3294
    %5474 = vmatprep.subr.mxu0 %v3291
    %5475 = vmatpush1.msra.mxu0 %v3290
    %5476 = vmatprep.subr.mxu0 %v3287
    %5477 = vmatpush1.msra.mxu0 %v3286
    %5478 = vmatprep.subr.mxu0 %v3283
    %5479 = vmatpush1.msra.mxu0 %v3282
    %5480 = vmatprep.subr.mxu0 %v3279
    %5481 = vmatpush1.msra.mxu0 %v3278
    %5482 = vmatprep.subr.mxu0 %v3275
    %5483 = vmatpush1.msra.mxu0 %v3274
    %5484 = vmatprep.subr.mxu0 %v3271
    %5485 = vmatpush1.msra.mxu0 %v3270
    %5486 = vmatprep.subr.mxu0 %v3267
    %5487 = vmatpush1.msra.mxu0 %v3266
    %5488 = vmatprep.subr.mxu0 %v3263
    %5489 = vmatpush1.msra.mxu0 %v3262
    %5490 = vmatprep.subr.mxu0 %v3259
    %5491 = vmatpush1.msra.mxu0 %v3258
    %5492 = vmatprep.subr.mxu0 %v3255
    %5493 = vmatpush1.msra.mxu0 %v3254
    %5494 = vmatprep.subr.mxu0 %v3251
    %5495 = vmatpush1.msra.mxu0 %v3250
    %5496 = vmatprep.subr.mxu0 0.0
    %5497 = vmatpush2.msra.mxu0 0.0
    %5498 = vmatprep.subr.mxu0 0.0
    %5499 = vmatpush2.msra.mxu0 0.0
    %5500 = vmatprep.subr.mxu0 0.0
    %5501 = vmatpush2.msra.mxu0 0.0
    %5502 = vmatprep.subr.mxu0 0.0
    %5503 = vmatpush2.msra.mxu0 0.0
    %5504 = vmatprep.subr.mxu0 0.0
    %5505 = vmatpush2.msra.mxu0 0.0
    %5506 = vmatprep.subr.mxu0 0.0
    %5507 = vmatpush2.msra.mxu0 0.0
    %5508 = vmatprep.subr.mxu0 0.0
    %5509 = vmatpush2.msra.mxu0 0.0
    %5510 = vmatprep.subr.mxu0 0.0
    %5511 = vmatpush2.msra.mxu0 0.0
    %5512 = vmatprep.subr.mxu0 0.0
    %5513 = vmatpush2.msra.mxu0 0.0
    %5514 = vmatprep.subr.mxu0 0.0
    %5515 = vmatpush2.msra.mxu0 0.0
    %5516 = vmatprep.subr.mxu0 0.0
    %5517 = vmatpush2.msra.mxu0 0.0
    %5518 = vmatprep.subr.mxu0 0.0
    %5519 = vmatpush2.msra.mxu0 0.0
    %5520 = vmatprep.subr.mxu0 0.0
    %5521 = vmatpush2.msra.mxu0 0.0
    %5522 = vmatprep.subr.mxu0 0.0
    %5523 = vmatpush2.msra.mxu0 0.0
    %5524 = vmatprep.subr.mxu0 0.0
    %5525 = vmatpush2.msra.mxu0 0.0
    %5526 = vmatprep.subr.mxu0 0.0
    %5527 = vmatpush2.msra.mxu0 0.0
    %5528 = vmatprep.mubr.f32.mxu0 0.0
    %5529 = vmatmul.mubr.f32.gmra.mxu0 %v5391
    %v5530 = vpop.f32.mrf.mxu0
    %v5531 = vadd.f32 %v5159, %v5530
    %v5532 = vpop.f32.mrf.mxu0
    %v5533 = vadd.f32 %v5161, %v5532
    %5534 = vdwg.mxu0
    %v5535 = vadd.f32 %v5460, %v3381
    %v5536 = vadd.f32 %v5462, %v3385
    %v5537 = vadd.f32 %v5531, %v3389
    %v5538 = vadd.f32 %v5533, %v3393
    %v5539 = vxor.u32 %v5535, 2147483648
    %v5540 = vxor.u32 %v5536, 2147483648
    %v5541 = vxor.u32 %v5537, 2147483648
    %v5542 = vmul.f32 %v5539, 1.442695
    %v5543 = vpow.pop %v5542
    %v5544 = vmul.f32 %v5540, 1.442695
    %v5545 = vpow.pop %v5544
    %v5546 = vmul.f32 %v5541, 1.442695
    %v5547 = vpow.pop %v5546
    %v5548 = vadd.f32 %v5543, 1.0
    %v5549 = vadd.f32 %v5545, 1.0
    %v5550 = vadd.f32 %v5547, 1.0
    %v5551 = vrcp.pop %v5548
    %v5552 = vmul.f32 1.0, %v5551
    %v5553 = vrcp.pop %v5549
    %v5554 = vmul.f32 1.0, %v5553
    %v5555 = vrcp.pop %v5550
    %v5556 = vmul.f32 1.0, %v5555
    %v5557 = vtanh.pop %v5538
    %v5558 = vmul.f32 %v5554, %v5014
    %v5559 = vmul.f32 %v5552, %v5557
    %v5560 = vadd.f32 %v5558, %v5559
    %v5561 = vtanh.pop %v5560
    %v5562 = vmul.f32 %v5556, %v5561
    %vm5563 = vcmp.eq.f32.partialorder %v3183, 3.0
    %v5564 = vsel %vm5563, 1, 0
    %vm5565 = vcmp.eq.s32.totalorder %v5564, 1
    %v5566 = vsel %vm5565, %v5562, %v5020
    %5567 = vmatprep.subr.mxu0 %v3373
    %5568 = vmatpush1.msra.mxu0 %v3372
    %5569 = vmatprep.subr.mxu0 %v3369
    %5570 = vmatpush1.msra.mxu0 %v3368
    %5571 = vmatprep.subr.mxu0 %v3365
    %5572 = vmatpush1.msra.mxu0 %v3364
    %5573 = vmatprep.subr.mxu0 %v3361
    %5574 = vmatpush1.msra.mxu0 %v3360
    %5575 = vmatprep.subr.mxu0 %v3357
    %5576 = vmatpush1.msra.mxu0 %v3356
    %5577 = vmatprep.subr.mxu0 %v3353
    %5578 = vmatpush1.msra.mxu0 %v3352
    %5579 = vmatprep.subr.mxu0 %v3349
    %5580 = vmatpush1.msra.mxu0 %v3348
    %5581 = vmatprep.subr.mxu0 %v3345
    %5582 = vmatpush1.msra.mxu0 %v3344
    %5583 = vmatprep.subr.mxu0 %v3341
    %5584 = vmatpush1.msra.mxu0 %v3340
    %5585 = vmatprep.subr.mxu0 %v3337
    %5586 = vmatpush1.msra.mxu0 %v3336
    %5587 = vmatprep.subr.mxu0 %v3333
    %5588 = vmatpush1.msra.mxu0 %v3332
    %5589 = vmatprep.subr.mxu0 %v3329
    %5590 = vmatpush1.msra.mxu0 %v3328
    %5591 = vmatprep.subr.mxu0 %v3325
    %5592 = vmatpush1.msra.mxu0 %v3324
    %5593 = vmatprep.subr.mxu0 %v3321
    %5594 = vmatpush1.msra.mxu0 %v3320
    %5595 = vmatprep.subr.mxu0 %v3317
    %5596 = vmatpush1.msra.mxu0 %v3316
    %5597 = vmatprep.subr.mxu0 %v3313
    %5598 = vmatpush1.msra.mxu0 %v3312
    %5599 = vmatprep.subr.mxu0 0.0
    %5600 = vmatpush2.msra.mxu0 0.0
    %5601 = vmatprep.subr.mxu0 0.0
    %5602 = vmatpush2.msra.mxu0 0.0
    %5603 = vmatprep.subr.mxu0 0.0
    %5604 = vmatpush2.msra.mxu0 0.0
    %5605 = vmatprep.subr.mxu0 0.0
    %5606 = vmatpush2.msra.mxu0 0.0
    %5607 = vmatprep.subr.mxu0 0.0
    %5608 = vmatpush2.msra.mxu0 0.0
    %5609 = vmatprep.subr.mxu0 0.0
    %5610 = vmatpush2.msra.mxu0 0.0
    %5611 = vmatprep.subr.mxu0 0.0
    %5612 = vmatpush2.msra.mxu0 0.0
    %5613 = vmatprep.subr.mxu0 0.0
    %5614 = vmatpush2.msra.mxu0 0.0
    %5615 = vmatprep.subr.mxu0 0.0
    %5616 = vmatpush2.msra.mxu0 0.0
    %5617 = vmatprep.subr.mxu0 0.0
    %5618 = vmatpush2.msra.mxu0 0.0
    %5619 = vmatprep.subr.mxu0 0.0
    %5620 = vmatpush2.msra.mxu0 0.0
    %5621 = vmatprep.subr.mxu0 0.0
    %5622 = vmatpush2.msra.mxu0 0.0
    %5623 = vmatprep.subr.mxu0 0.0
    %5624 = vmatpush2.msra.mxu0 0.0
    %5625 = vmatprep.subr.mxu0 0.0
    %5626 = vmatpush2.msra.mxu0 0.0
    %5627 = vmatprep.subr.mxu0 0.0
    %5628 = vmatpush2.msra.mxu0 0.0
    %5629 = vmatprep.subr.mxu0 0.0
    %5630 = vmatpush2.msra.mxu0 0.0
    %5631 = vmatprep.mubr.f32.mxu0 0.0
    %5632 = vmatmul.mubr.f32.gmra.mxu0 %v5562
    %v5633 = vpop.f32.mrf.mxu0
    %v5634 = vadd.f32 0.0, %v5633
    %v5635 = vpop.f32.mrf.mxu0
    %v5636 = vadd.f32 0.0, %v5635
    %5637 = vdwg.mxu0
    %5638 = vmatprep.subr.mxu0 %v3375
    %5639 = vmatpush1.msra.mxu0 %v3374
    %5640 = vmatprep.subr.mxu0 %v3371
    %5641 = vmatpush1.msra.mxu0 %v3370
    %5642 = vmatprep.subr.mxu0 %v3367
    %5643 = vmatpush1.msra.mxu0 %v3366
    %5644 = vmatprep.subr.mxu0 %v3363
    %5645 = vmatpush1.msra.mxu0 %v3362
    %5646 = vmatprep.subr.mxu0 %v3359
    %5647 = vmatpush1.msra.mxu0 %v3358
    %5648 = vmatprep.subr.mxu0 %v3355
    %5649 = vmatpush1.msra.mxu0 %v3354
    %5650 = vmatprep.subr.mxu0 %v3351
    %5651 = vmatpush1.msra.mxu0 %v3350
    %5652 = vmatprep.subr.mxu0 %v3347
    %5653 = vmatpush1.msra.mxu0 %v3346
    %5654 = vmatprep.subr.mxu0 %v3343
    %5655 = vmatpush1.msra.mxu0 %v3342
    %5656 = vmatprep.subr.mxu0 %v3339
    %5657 = vmatpush1.msra.mxu0 %v3338
    %5658 = vmatprep.subr.mxu0 %v3335
    %5659 = vmatpush1.msra.mxu0 %v3334
    %5660 = vmatprep.subr.mxu0 %v3331
    %5661 = vmatpush1.msra.mxu0 %v3330
    %5662 = vmatprep.subr.mxu0 %v3327
    %5663 = vmatpush1.msra.mxu0 %v3326
    %5664 = vmatprep.subr.mxu0 %v3323
    %5665 = vmatpush1.msra.mxu0 %v3322
    %5666 = vmatprep.subr.mxu0 %v3319
    %5667 = vmatpush1.msra.mxu0 %v3318
    %5668 = vmatprep.subr.mxu0 %v3315
    %5669 = vmatpush1.msra.mxu0 %v3314
    %5670 = vmatprep.subr.mxu0 0.0
    %5671 = vmatpush2.msra.mxu0 0.0
    %5672 = vmatprep.subr.mxu0 0.0
    %5673 = vmatpush2.msra.mxu0 0.0
    %5674 = vmatprep.subr.mxu0 0.0
    %5675 = vmatpush2.msra.mxu0 0.0
    %5676 = vmatprep.subr.mxu0 0.0
    %5677 = vmatpush2.msra.mxu0 0.0
    %5678 = vmatprep.subr.mxu0 0.0
    %5679 = vmatpush2.msra.mxu0 0.0
    %5680 = vmatprep.subr.mxu0 0.0
    %5681 = vmatpush2.msra.mxu0 0.0
    %5682 = vmatprep.subr.mxu0 0.0
    %5683 = vmatpush2.msra.mxu0 0.0
    %5684 = vmatprep.subr.mxu0 0.0
    %5685 = vmatpush2.msra.mxu0 0.0
    %5686 = vmatprep.subr.mxu0 0.0
    %5687 = vmatpush2.msra.mxu0 0.0
    %5688 = vmatprep.subr.mxu0 0.0
    %5689 = vmatpush2.msra.mxu0 0.0
    %5690 = vmatprep.subr.mxu0 0.0
    %5691 = vmatpush2.msra.mxu0 0.0
    %5692 = vmatprep.subr.mxu0 0.0
    %5693 = vmatpush2.msra.mxu0 0.0
    %5694 = vmatprep.subr.mxu0 0.0
    %5695 = vmatpush2.msra.mxu0 0.0
    %5696 = vmatprep.subr.mxu0 0.0
    %5697 = vmatpush2.msra.mxu0 0.0
    %5698 = vmatprep.subr.mxu0 0.0
    %5699 = vmatpush2.msra.mxu0 0.0
    %5700 = vmatprep.subr.mxu0 0.0
    %5701 = vmatpush2.msra.mxu0 0.0
    %5702 = vmatprep.mubr.f32.mxu0 0.0
    %5703 = vmatmul.mubr.f32.gmra.mxu0 %v5562
    %v5704 = vpop.f32.mrf.mxu0
    %v5705 = vadd.f32 0.0, %v5704
    %v5706 = vpop.f32.mrf.mxu0
    %v5707 = vadd.f32 0.0, %v5706
    %5708 = vdwg.mxu0
    %5709 = vmatprep.subr.mxu0 %v3245
    %5710 = vmatpush1.msra.mxu0 %v3244
    %5711 = vmatprep.subr.mxu0 %v3241
    %5712 = vmatpush1.msra.mxu0 %v3240
    %5713 = vmatprep.subr.mxu0 %v3237
    %5714 = vmatpush1.msra.mxu0 %v3236
    %5715 = vmatprep.subr.mxu0 %v3233
    %5716 = vmatpush1.msra.mxu0 %v3232
    %5717 = vmatprep.subr.mxu0 %v3229
    %5718 = vmatpush1.msra.mxu0 %v3228
    %5719 = vmatprep.subr.mxu0 %v3225
    %5720 = vmatpush1.msra.mxu0 %v3224
    %5721 = vmatprep.subr.mxu0 %v3221
    %5722 = vmatpush1.msra.mxu0 %v3220
    %5723 = vmatprep.subr.mxu0 %v3217
    %5724 = vmatpush1.msra.mxu0 %v3216
    %5725 = vmatprep.subr.mxu0 %v3213
    %5726 = vmatpush1.msra.mxu0 %v3212
    %5727 = vmatprep.subr.mxu0 %v3209
    %5728 = vmatpush1.msra.mxu0 %v3208
    %5729 = vmatprep.subr.mxu0 %v3205
    %5730 = vmatpush1.msra.mxu0 %v3204
    %5731 = vmatprep.subr.mxu0 %v3201
    %5732 = vmatpush1.msra.mxu0 %v3200
    %5733 = vmatprep.subr.mxu0 %v3197
    %5734 = vmatpush1.msra.mxu0 %v3196
    %5735 = vmatprep.subr.mxu0 %v3193
    %5736 = vmatpush1.msra.mxu0 %v3192
    %5737 = vmatprep.subr.mxu0 %v3189
    %5738 = vmatpush1.msra.mxu0 %v3188
    %5739 = vmatprep.subr.mxu0 %v3185
    %5740 = vmatpush1.msra.mxu0 %v3184
    %5741 = vmatprep.subr.mxu0 0.0
    %5742 = vmatpush2.msra.mxu0 0.0
    %5743 = vmatprep.subr.mxu0 0.0
    %5744 = vmatpush2.msra.mxu0 0.0
    %5745 = vmatprep.subr.mxu0 0.0
    %5746 = vmatpush2.msra.mxu0 0.0
    %5747 = vmatprep.subr.mxu0 0.0
    %5748 = vmatpush2.msra.mxu0 0.0
    %5749 = vmatprep.subr.mxu0 0.0
    %5750 = vmatpush2.msra.mxu0 0.0
    %5751 = vmatprep.subr.mxu0 0.0
    %5752 = vmatpush2.msra.mxu0 0.0
    %5753 = vmatprep.subr.mxu0 0.0
    %5754 = vmatpush2.msra.mxu0 0.0
    %5755 = vmatprep.subr.mxu0 0.0
    %5756 = vmatpush2.msra.mxu0 0.0
    %5757 = vmatprep.subr.mxu0 0.0
    %5758 = vmatpush2.msra.mxu0 0.0
    %5759 = vmatprep.subr.mxu0 0.0
    %5760 = vmatpush2.msra.mxu0 0.0
    %5761 = vmatprep.subr.mxu0 0.0
    %5762 = vmatpush2.msra.mxu0 0.0
    %5763 = vmatprep.subr.mxu0 0.0
    %5764 = vmatpush2.msra.mxu0 0.0
    %5765 = vmatprep.subr.mxu0 0.0
    %5766 = vmatpush2.msra.mxu0 0.0
    %5767 = vmatprep.subr.mxu0 0.0
    %5768 = vmatpush2.msra.mxu0 0.0
    %5769 = vmatprep.subr.mxu0 0.0
    %5770 = vmatpush2.msra.mxu0 0.0
    %5771 = vmatprep.subr.mxu0 0.0
    %5772 = vmatpush2.msra.mxu0 0.0
    %5773 = vmatprep.mubr.f32.mxu0 0.0
    %5774 = vmatmul.mubr.f32.gmra.mxu0 %v5391
    %v5775 = vpop.f32.mrf.mxu0
    %v5776 = vadd.f32 0.0, %v5775
    %v5777 = vpop.f32.mrf.mxu0
    %v5778 = vadd.f32 0.0, %v5777
    %5779 = vdwg.mxu0
    %5780 = vmatprep.subr.mxu0 %v3247
    %5781 = vmatpush1.msra.mxu0 %v3246
    %5782 = vmatprep.subr.mxu0 %v3243
    %5783 = vmatpush1.msra.mxu0 %v3242
    %5784 = vmatprep.subr.mxu0 %v3239
    %5785 = vmatpush1.msra.mxu0 %v3238
    %5786 = vmatprep.subr.mxu0 %v3235
    %5787 = vmatpush1.msra.mxu0 %v3234
    %5788 = vmatprep.subr.mxu0 %v3231
    %5789 = vmatpush1.msra.mxu0 %v3230
    %5790 = vmatprep.subr.mxu0 %v3227
    %5791 = vmatpush1.msra.mxu0 %v3226
    %5792 = vmatprep.subr.mxu0 %v3223
    %5793 = vmatpush1.msra.mxu0 %v3222
    %5794 = vmatprep.subr.mxu0 %v3219
    %5795 = vmatpush1.msra.mxu0 %v3218
    %5796 = vmatprep.subr.mxu0 %v3215
    %5797 = vmatpush1.msra.mxu0 %v3214
    %5798 = vmatprep.subr.mxu0 %v3211
    %5799 = vmatpush1.msra.mxu0 %v3210
    %5800 = vmatprep.subr.mxu0 %v3207
    %5801 = vmatpush1.msra.mxu0 %v3206
    %5802 = vmatprep.subr.mxu0 %v3203
    %5803 = vmatpush1.msra.mxu0 %v3202
    %5804 = vmatprep.subr.mxu0 %v3199
    %5805 = vmatpush1.msra.mxu0 %v3198
    %5806 = vmatprep.subr.mxu0 %v3195
    %5807 = vmatpush1.msra.mxu0 %v3194
    %5808 = vmatprep.subr.mxu0 %v3191
    %5809 = vmatpush1.msra.mxu0 %v3190
    %5810 = vmatprep.subr.mxu0 %v3187
    %5811 = vmatpush1.msra.mxu0 %v3186
    %5812 = vmatprep.subr.mxu0 0.0
    %5813 = vmatpush2.msra.mxu0 0.0
    %5814 = vmatprep.subr.mxu0 0.0
    %5815 = vmatpush2.msra.mxu0 0.0
    %5816 = vmatprep.subr.mxu0 0.0
    %5817 = vmatpush2.msra.mxu0 0.0
    %5818 = vmatprep.subr.mxu0 0.0
    %5819 = vmatpush2.msra.mxu0 0.0
    %5820 = vmatprep.subr.mxu0 0.0
    %5821 = vmatpush2.msra.mxu0 0.0
    %5822 = vmatprep.subr.mxu0 0.0
    %5823 = vmatpush2.msra.mxu0 0.0
    %5824 = vmatprep.subr.mxu0 0.0
    %5825 = vmatpush2.msra.mxu0 0.0
    %5826 = vmatprep.subr.mxu0 0.0
    %5827 = vmatpush2.msra.mxu0 0.0
    %5828 = vmatprep.subr.mxu0 0.0
    %5829 = vmatpush2.msra.mxu0 0.0
    %5830 = vmatprep.subr.mxu0 0.0
    %5831 = vmatpush2.msra.mxu0 0.0
    %5832 = vmatprep.subr.mxu0 0.0
    %5833 = vmatpush2.msra.mxu0 0.0
    %5834 = vmatprep.subr.mxu0 0.0
    %5835 = vmatpush2.msra.mxu0 0.0
    %5836 = vmatprep.subr.mxu0 0.0
    %5837 = vmatpush2.msra.mxu0 0.0
    %5838 = vmatprep.subr.mxu0 0.0
    %5839 = vmatpush2.msra.mxu0 0.0
    %5840 = vmatprep.subr.mxu0 0.0
    %5841 = vmatpush2.msra.mxu0 0.0
    %5842 = vmatprep.subr.mxu0 0.0
    %5843 = vmatpush2.msra.mxu0 0.0
    %5844 = vmatprep.mubr.f32.mxu0 0.0
    %5845 = vmatmul.mubr.f32.gmra.mxu0 %v5391
    %v5846 = vpop.f32.mrf.mxu0
    %v5847 = vadd.f32 0.0, %v5846
    %v5848 = vpop.f32.mrf.mxu0
    %v5849 = vadd.f32 0.0, %v5848
    %5850 = vdwg.mxu0
    %v5855 = vrot.slane %v5776, 4
    %v5856 = vrot.slane %v5778, 4
    %v5857 = vrot.slane %v5847, 4
    %v5858 = vrot.slane %v5849, 4
    %v5859 = vrot.slane %v5776, 5
    %v5860 = vrot.slane %v5778, 5
    %v5861 = vrot.slane %v5847, 5
    %v5862 = vrot.slane %v5849, 5
    %v5871 = vadd.f32 %v3084, %v5855
    %v5872 = vadd.f32 %v3086, %v5856
    %v5873 = vadd.f32 %v3161, %v5857
    %v5874 = vadd.f32 %v3163, %v5858
    %v5875 = vadd.f32 %v3090, %v5859
    %v5876 = vadd.f32 %v3092, %v5860
    %v5877 = vadd.f32 %v3167, %v5861
    %v5878 = vadd.f32 %v3169, %v5862
    %v5879 = vxor.u32 %v5871, 2147483648
    %v5880 = vxor.u32 %v5872, 2147483648
    %v5881 = vxor.u32 %v5873, 2147483648
    %v5882 = vxor.u32 %v5875, 2147483648
    %v5883 = vxor.u32 %v5876, 2147483648
    %v5884 = vxor.u32 %v5877, 2147483648
    %v5885 = vmul.f32 %v5879, 1.442695
    %v5886 = vpow.pop %v5885
    %v5887 = vmul.f32 %v5880, 1.442695
    %v5888 = vpow.pop %v5887
    %v5889 = vmul.f32 %v5881, 1.442695
    %v5890 = vpow.pop %v5889
    %v5891 = vmul.f32 %v5882, 1.442695
    %v5892 = vpow.pop %v5891
    %v5893 = vmul.f32 %v5883, 1.442695
    %v5894 = vpow.pop %v5893
    %v5895 = vmul.f32 %v5884, 1.442695
    %v5896 = vpow.pop %v5895
    %v5897 = vadd.f32 %v5886, 1.0
    %v5898 = vadd.f32 %v5888, 1.0
    %v5899 = vadd.f32 %v5890, 1.0
    %v5900 = vadd.f32 %v5892, 1.0
    %v5901 = vadd.f32 %v5894, 1.0
    %v5902 = vadd.f32 %v5896, 1.0
    %v5903 = vrcp.pop %v5897
    %v5904 = vmul.f32 1.0, %v5903
    %v5905 = vrcp.pop %v5898
    %v5906 = vmul.f32 1.0, %v5905
    %v5907 = vrcp.pop %v5899
    %v5908 = vmul.f32 1.0, %v5907
    %v5909 = vrcp.pop %v5900
    %v5910 = vmul.f32 1.0, %v5909
    %v5911 = vrcp.pop %v5901
    %v5912 = vmul.f32 1.0, %v5911
    %v5913 = vrcp.pop %v5902
    %v5914 = vmul.f32 1.0, %v5913
    %v5915 = vtanh.pop %v5874
    %v5916 = vtanh.pop %v5878
    %v5919 = vrot.slane %v5381, 7
    %v5920 = vrot.slane %v5382, 7
    %v5923 = vmul.f32 %v5906, %v5919
    %v5924 = vmul.f32 %v5912, %v5920
    %v5925 = vmul.f32 %v5904, %v5915
    %v5926 = vmul.f32 %v5910, %v5916
    %v5927 = vadd.f32 %v5923, %v5925
    %v5928 = vadd.f32 %v5924, %v5926
    %v5929 = vtanh.pop %v5927
    %v5930 = vtanh.pop %v5928
    %v5931 = vmul.f32 %v5908, %v5929
    %v5932 = vmul.f32 %v5914, %v5930
    %v5935 = vrot.slane %v5931, 4
    %v5936 = vrot.slane %v5932, 3
    %v5937 = vsel %vm3757, %v5936, %v5935
    %5939 = vmatprep.subr.mxu0 %v3309
    %5940 = vmatpush1.msra.mxu0 %v3308
    %5941 = vmatprep.subr.mxu0 %v3305
    %5942 = vmatpush1.msra.mxu0 %v3304
    %5943 = vmatprep.subr.mxu0 %v3301
    %5944 = vmatpush1.msra.mxu0 %v3300
    %5945 = vmatprep.subr.mxu0 %v3297
    %5946 = vmatpush1.msra.mxu0 %v3296
    %5947 = vmatprep.subr.mxu0 %v3293
    %5948 = vmatpush1.msra.mxu0 %v3292
    %5949 = vmatprep.subr.mxu0 %v3289
    %5950 = vmatpush1.msra.mxu0 %v3288
    %5951 = vmatprep.subr.mxu0 %v3285
    %5952 = vmatpush1.msra.mxu0 %v3284
    %5953 = vmatprep.subr.mxu0 %v3281
    %5954 = vmatpush1.msra.mxu0 %v3280
    %5955 = vmatprep.subr.mxu0 %v3277
    %5956 = vmatpush1.msra.mxu0 %v3276
    %5957 = vmatprep.subr.mxu0 %v3273
    %5958 = vmatpush1.msra.mxu0 %v3272
    %5959 = vmatprep.subr.mxu0 %v3269
    %5960 = vmatpush1.msra.mxu0 %v3268
    %5961 = vmatprep.subr.mxu0 %v3265
    %5962 = vmatpush1.msra.mxu0 %v3264
    %5963 = vmatprep.subr.mxu0 %v3261
    %5964 = vmatpush1.msra.mxu0 %v3260
    %5965 = vmatprep.subr.mxu0 %v3257
    %5966 = vmatpush1.msra.mxu0 %v3256
    %5967 = vmatprep.subr.mxu0 %v3253
    %5968 = vmatpush1.msra.mxu0 %v3252
    %5969 = vmatprep.subr.mxu0 %v3249
    %5970 = vmatpush1.msra.mxu0 %v3248
    %5971 = vmatprep.subr.mxu0 0.0
    %5972 = vmatpush2.msra.mxu0 0.0
    %5973 = vmatprep.subr.mxu0 0.0
    %5974 = vmatpush2.msra.mxu0 0.0
    %5975 = vmatprep.subr.mxu0 0.0
    %5976 = vmatpush2.msra.mxu0 0.0
    %5977 = vmatprep.subr.mxu0 0.0
    %5978 = vmatpush2.msra.mxu0 0.0
    %5979 = vmatprep.subr.mxu0 0.0
    %5980 = vmatpush2.msra.mxu0 0.0
    %5981 = vmatprep.subr.mxu0 0.0
    %5982 = vmatpush2.msra.mxu0 0.0
    %5983 = vmatprep.subr.mxu0 0.0
    %5984 = vmatpush2.msra.mxu0 0.0
    %5985 = vmatprep.subr.mxu0 0.0
    %5986 = vmatpush2.msra.mxu0 0.0
    %5987 = vmatprep.subr.mxu0 0.0
    %5988 = vmatpush2.msra.mxu0 0.0
    %5989 = vmatprep.subr.mxu0 0.0
    %5990 = vmatpush2.msra.mxu0 0.0
    %5991 = vmatprep.subr.mxu0 0.0
    %5992 = vmatpush2.msra.mxu0 0.0
    %5993 = vmatprep.subr.mxu0 0.0
    %5994 = vmatpush2.msra.mxu0 0.0
    %5995 = vmatprep.subr.mxu0 0.0
    %5996 = vmatpush2.msra.mxu0 0.0
    %5997 = vmatprep.subr.mxu0 0.0
    %5998 = vmatpush2.msra.mxu0 0.0
    %5999 = vmatprep.subr.mxu0 0.0
    %6000 = vmatpush2.msra.mxu0 0.0
    %6001 = vmatprep.subr.mxu0 0.0
    %6002 = vmatpush2.msra.mxu0 0.0
    %6003 = vmatprep.mubr.f32.mxu0 0.0
    %6004 = vmatmul.mubr.f32.gmra.mxu0 %v5937
    %v6005 = vpop.f32.mrf.mxu0
    %v6006 = vadd.f32 %v5634, %v6005
    %v6007 = vpop.f32.mrf.mxu0
    %v6008 = vadd.f32 %v5636, %v6007
    %6009 = vdwg.mxu0
    %6010 = vmatprep.subr.mxu0 %v3311
    %6011 = vmatpush1.msra.mxu0 %v3310
    %6012 = vmatprep.subr.mxu0 %v3307
    %6013 = vmatpush1.msra.mxu0 %v3306
    %6014 = vmatprep.subr.mxu0 %v3303
    %6015 = vmatpush1.msra.mxu0 %v3302
    %6016 = vmatprep.subr.mxu0 %v3299
    %6017 = vmatpush1.msra.mxu0 %v3298
    %6018 = vmatprep.subr.mxu0 %v3295
    %6019 = vmatpush1.msra.mxu0 %v3294
    %6020 = vmatprep.subr.mxu0 %v3291
    %6021 = vmatpush1.msra.mxu0 %v3290
    %6022 = vmatprep.subr.mxu0 %v3287
    %6023 = vmatpush1.msra.mxu0 %v3286
    %6024 = vmatprep.subr.mxu0 %v3283
    %6025 = vmatpush1.msra.mxu0 %v3282
    %6026 = vmatprep.subr.mxu0 %v3279
    %6027 = vmatpush1.msra.mxu0 %v3278
    %6028 = vmatprep.subr.mxu0 %v3275
    %6029 = vmatpush1.msra.mxu0 %v3274
    %6030 = vmatprep.subr.mxu0 %v3271
    %6031 = vmatpush1.msra.mxu0 %v3270
    %6032 = vmatprep.subr.mxu0 %v3267
    %6033 = vmatpush1.msra.mxu0 %v3266
    %6034 = vmatprep.subr.mxu0 %v3263
    %6035 = vmatpush1.msra.mxu0 %v3262
    %6036 = vmatprep.subr.mxu0 %v3259
    %6037 = vmatpush1.msra.mxu0 %v3258
    %6038 = vmatprep.subr.mxu0 %v3255
    %6039 = vmatpush1.msra.mxu0 %v3254
    %6040 = vmatprep.subr.mxu0 %v3251
    %6041 = vmatpush1.msra.mxu0 %v3250
    %6042 = vmatprep.subr.mxu0 0.0
    %6043 = vmatpush2.msra.mxu0 0.0
    %6044 = vmatprep.subr.mxu0 0.0
    %6045 = vmatpush2.msra.mxu0 0.0
    %6046 = vmatprep.subr.mxu0 0.0
    %6047 = vmatpush2.msra.mxu0 0.0
    %6048 = vmatprep.subr.mxu0 0.0
    %6049 = vmatpush2.msra.mxu0 0.0
    %6050 = vmatprep.subr.mxu0 0.0
    %6051 = vmatpush2.msra.mxu0 0.0
    %6052 = vmatprep.subr.mxu0 0.0
    %6053 = vmatpush2.msra.mxu0 0.0
    %6054 = vmatprep.subr.mxu0 0.0
    %6055 = vmatpush2.msra.mxu0 0.0
    %6056 = vmatprep.subr.mxu0 0.0
    %6057 = vmatpush2.msra.mxu0 0.0
    %6058 = vmatprep.subr.mxu0 0.0
    %6059 = vmatpush2.msra.mxu0 0.0
    %6060 = vmatprep.subr.mxu0 0.0
    %6061 = vmatpush2.msra.mxu0 0.0
    %6062 = vmatprep.subr.mxu0 0.0
    %6063 = vmatpush2.msra.mxu0 0.0
    %6064 = vmatprep.subr.mxu0 0.0
    %6065 = vmatpush2.msra.mxu0 0.0
    %6066 = vmatprep.subr.mxu0 0.0
    %6067 = vmatpush2.msra.mxu0 0.0
    %6068 = vmatprep.subr.mxu0 0.0
    %6069 = vmatpush2.msra.mxu0 0.0
    %6070 = vmatprep.subr.mxu0 0.0
    %6071 = vmatpush2.msra.mxu0 0.0
    %6072 = vmatprep.subr.mxu0 0.0
    %6073 = vmatpush2.msra.mxu0 0.0
    %6074 = vmatprep.mubr.f32.mxu0 0.0
    %6075 = vmatmul.mubr.f32.gmra.mxu0 %v5937
    %v6076 = vpop.f32.mrf.mxu0
    %v6077 = vadd.f32 %v5705, %v6076
    %v6078 = vpop.f32.mrf.mxu0
    %v6079 = vadd.f32 %v5707, %v6078
    %6080 = vdwg.mxu0
    %v6081 = vadd.f32 %v6006, %v3381
    %v6082 = vadd.f32 %v6008, %v3385
    %v6083 = vadd.f32 %v6077, %v3389
    %v6084 = vadd.f32 %v6079, %v3393
    %v6085 = vxor.u32 %v6081, 2147483648
    %v6086 = vxor.u32 %v6082, 2147483648
    %v6087 = vxor.u32 %v6083, 2147483648
    %v6088 = vmul.f32 %v6085, 1.442695
    %v6089 = vpow.pop %v6088
    %v6090 = vmul.f32 %v6086, 1.442695
    %v6091 = vpow.pop %v6090
    %v6092 = vmul.f32 %v6087, 1.442695
    %v6093 = vpow.pop %v6092
    %v6094 = vadd.f32 %v6089, 1.0
    %v6095 = vadd.f32 %v6091, 1.0
    %v6096 = vadd.f32 %v6093, 1.0
    %v6097 = vrcp.pop %v6094
    %v6098 = vmul.f32 1.0, %v6097
    %v6099 = vrcp.pop %v6095
    %v6100 = vmul.f32 1.0, %v6099
    %v6101 = vrcp.pop %v6096
    %v6102 = vmul.f32 1.0, %v6101
    %v6103 = vtanh.pop %v6084
    %v6104 = vmul.f32 %v6100, %v5560
    %v6105 = vmul.f32 %v6098, %v6103
    %v6106 = vadd.f32 %v6104, %v6105
    %v6107 = vtanh.pop %v6106
    %v6108 = vmul.f32 %v6102, %v6107
    %vm6109 = vcmp.eq.f32.partialorder %v3183, 4.0
    %v6110 = vsel %vm6109, 1, 0
    %vm6111 = vcmp.eq.s32.totalorder %v6110, 1
    %v6112 = vsel %vm6111, %v6108, %v5566
    %6113 = vmatprep.subr.mxu0 %v3373
    %6114 = vmatpush1.msra.mxu0 %v3372
    %6115 = vmatprep.subr.mxu0 %v3369
    %6116 = vmatpush1.msra.mxu0 %v3368
    %6117 = vmatprep.subr.mxu0 %v3365
    %6118 = vmatpush1.msra.mxu0 %v3364
    %6119 = vmatprep.subr.mxu0 %v3361
    %6120 = vmatpush1.msra.mxu0 %v3360
    %6121 = vmatprep.subr.mxu0 %v3357
    %6122 = vmatpush1.msra.mxu0 %v3356
    %6123 = vmatprep.subr.mxu0 %v3353
    %6124 = vmatpush1.msra.mxu0 %v3352
    %6125 = vmatprep.subr.mxu0 %v3349
    %6126 = vmatpush1.msra.mxu0 %v3348
    %6127 = vmatprep.subr.mxu0 %v3345
    %6128 = vmatpush1.msra.mxu0 %v3344
    %6129 = vmatprep.subr.mxu0 %v3341
    %6130 = vmatpush1.msra.mxu0 %v3340
    %6131 = vmatprep.subr.mxu0 %v3337
    %6132 = vmatpush1.msra.mxu0 %v3336
    %6133 = vmatprep.subr.mxu0 %v3333
    %6134 = vmatpush1.msra.mxu0 %v3332
    %6135 = vmatprep.subr.mxu0 %v3329
    %6136 = vmatpush1.msra.mxu0 %v3328
    %6137 = vmatprep.subr.mxu0 %v3325
    %6138 = vmatpush1.msra.mxu0 %v3324
    %6139 = vmatprep.subr.mxu0 %v3321
    %6140 = vmatpush1.msra.mxu0 %v3320
    %6141 = vmatprep.subr.mxu0 %v3317
    %6142 = vmatpush1.msra.mxu0 %v3316
    %6143 = vmatprep.subr.mxu0 %v3313
    %6144 = vmatpush1.msra.mxu0 %v3312
    %6145 = vmatprep.subr.mxu0 0.0
    %6146 = vmatpush2.msra.mxu0 0.0
    %6147 = vmatprep.subr.mxu0 0.0
    %6148 = vmatpush2.msra.mxu0 0.0
    %6149 = vmatprep.subr.mxu0 0.0
    %6150 = vmatpush2.msra.mxu0 0.0
    %6151 = vmatprep.subr.mxu0 0.0
    %6152 = vmatpush2.msra.mxu0 0.0
    %6153 = vmatprep.subr.mxu0 0.0
    %6154 = vmatpush2.msra.mxu0 0.0
    %6155 = vmatprep.subr.mxu0 0.0
    %6156 = vmatpush2.msra.mxu0 0.0
    %6157 = vmatprep.subr.mxu0 0.0
    %6158 = vmatpush2.msra.mxu0 0.0
    %6159 = vmatprep.subr.mxu0 0.0
    %6160 = vmatpush2.msra.mxu0 0.0
    %6161 = vmatprep.subr.mxu0 0.0
    %6162 = vmatpush2.msra.mxu0 0.0
    %6163 = vmatprep.subr.mxu0 0.0
    %6164 = vmatpush2.msra.mxu0 0.0
    %6165 = vmatprep.subr.mxu0 0.0
    %6166 = vmatpush2.msra.mxu0 0.0
    %6167 = vmatprep.subr.mxu0 0.0
    %6168 = vmatpush2.msra.mxu0 0.0
    %6169 = vmatprep.subr.mxu0 0.0
    %6170 = vmatpush2.msra.mxu0 0.0
    %6171 = vmatprep.subr.mxu0 0.0
    %6172 = vmatpush2.msra.mxu0 0.0
    %6173 = vmatprep.subr.mxu0 0.0
    %6174 = vmatpush2.msra.mxu0 0.0
    %6175 = vmatprep.subr.mxu0 0.0
    %6176 = vmatpush2.msra.mxu0 0.0
    %6177 = vmatprep.mubr.f32.mxu0 0.0
    %6178 = vmatmul.mubr.f32.gmra.mxu0 %v6108
    %v6179 = vpop.f32.mrf.mxu0
    %v6180 = vadd.f32 0.0, %v6179
    %v6181 = vpop.f32.mrf.mxu0
    %v6182 = vadd.f32 0.0, %v6181
    %6183 = vdwg.mxu0
    %6184 = vmatprep.subr.mxu0 %v3375
    %6185 = vmatpush1.msra.mxu0 %v3374
    %6186 = vmatprep.subr.mxu0 %v3371
    %6187 = vmatpush1.msra.mxu0 %v3370
    %6188 = vmatprep.subr.mxu0 %v3367
    %6189 = vmatpush1.msra.mxu0 %v3366
    %6190 = vmatprep.subr.mxu0 %v3363
    %6191 = vmatpush1.msra.mxu0 %v3362
    %6192 = vmatprep.subr.mxu0 %v3359
    %6193 = vmatpush1.msra.mxu0 %v3358
    %6194 = vmatprep.subr.mxu0 %v3355
    %6195 = vmatpush1.msra.mxu0 %v3354
    %6196 = vmatprep.subr.mxu0 %v3351
    %6197 = vmatpush1.msra.mxu0 %v3350
    %6198 = vmatprep.subr.mxu0 %v3347
    %6199 = vmatpush1.msra.mxu0 %v3346
    %6200 = vmatprep.subr.mxu0 %v3343
    %6201 = vmatpush1.msra.mxu0 %v3342
    %6202 = vmatprep.subr.mxu0 %v3339
    %6203 = vmatpush1.msra.mxu0 %v3338
    %6204 = vmatprep.subr.mxu0 %v3335
    %6205 = vmatpush1.msra.mxu0 %v3334
    %6206 = vmatprep.subr.mxu0 %v3331
    %6207 = vmatpush1.msra.mxu0 %v3330
    %6208 = vmatprep.subr.mxu0 %v3327
    %6209 = vmatpush1.msra.mxu0 %v3326
    %6210 = vmatprep.subr.mxu0 %v3323
    %6211 = vmatpush1.msra.mxu0 %v3322
    %6212 = vmatprep.subr.mxu0 %v3319
    %6213 = vmatpush1.msra.mxu0 %v3318
    %6214 = vmatprep.subr.mxu0 %v3315
    %6215 = vmatpush1.msra.mxu0 %v3314
    %6216 = vmatprep.subr.mxu0 0.0
    %6217 = vmatpush2.msra.mxu0 0.0
    %6218 = vmatprep.subr.mxu0 0.0
    %6219 = vmatpush2.msra.mxu0 0.0
    %6220 = vmatprep.subr.mxu0 0.0
    %6221 = vmatpush2.msra.mxu0 0.0
    %6222 = vmatprep.subr.mxu0 0.0
    %6223 = vmatpush2.msra.mxu0 0.0
    %6224 = vmatprep.subr.mxu0 0.0
    %6225 = vmatpush2.msra.mxu0 0.0
    %6226 = vmatprep.subr.mxu0 0.0
    %6227 = vmatpush2.msra.mxu0 0.0
    %6228 = vmatprep.subr.mxu0 0.0
    %6229 = vmatpush2.msra.mxu0 0.0
    %6230 = vmatprep.subr.mxu0 0.0
    %6231 = vmatpush2.msra.mxu0 0.0
    %6232 = vmatprep.subr.mxu0 0.0
    %6233 = vmatpush2.msra.mxu0 0.0
    %6234 = vmatprep.subr.mxu0 0.0
    %6235 = vmatpush2.msra.mxu0 0.0
    %6236 = vmatprep.subr.mxu0 0.0
    %6237 = vmatpush2.msra.mxu0 0.0
    %6238 = vmatprep.subr.mxu0 0.0
    %6239 = vmatpush2.msra.mxu0 0.0
    %6240 = vmatprep.subr.mxu0 0.0
    %6241 = vmatpush2.msra.mxu0 0.0
    %6242 = vmatprep.subr.mxu0 0.0
    %6243 = vmatpush2.msra.mxu0 0.0
    %6244 = vmatprep.subr.mxu0 0.0
    %6245 = vmatpush2.msra.mxu0 0.0
    %6246 = vmatprep.subr.mxu0 0.0
    %6247 = vmatpush2.msra.mxu0 0.0
    %6248 = vmatprep.mubr.f32.mxu0 0.0
    %6249 = vmatmul.mubr.f32.gmra.mxu0 %v6108
    %v6250 = vpop.f32.mrf.mxu0
    %v6251 = vadd.f32 0.0, %v6250
    %v6252 = vpop.f32.mrf.mxu0
    %v6253 = vadd.f32 0.0, %v6252
    %6254 = vdwg.mxu0
    %6255 = vmatprep.subr.mxu0 %v3245
    %6256 = vmatpush1.msra.mxu0 %v3244
    %6257 = vmatprep.subr.mxu0 %v3241
    %6258 = vmatpush1.msra.mxu0 %v3240
    %6259 = vmatprep.subr.mxu0 %v3237
    %6260 = vmatpush1.msra.mxu0 %v3236
    %6261 = vmatprep.subr.mxu0 %v3233
    %6262 = vmatpush1.msra.mxu0 %v3232
    %6263 = vmatprep.subr.mxu0 %v3229
    %6264 = vmatpush1.msra.mxu0 %v3228
    %6265 = vmatprep.subr.mxu0 %v3225
    %6266 = vmatpush1.msra.mxu0 %v3224
    %6267 = vmatprep.subr.mxu0 %v3221
    %6268 = vmatpush1.msra.mxu0 %v3220
    %6269 = vmatprep.subr.mxu0 %v3217
    %6270 = vmatpush1.msra.mxu0 %v3216
    %6271 = vmatprep.subr.mxu0 %v3213
    %6272 = vmatpush1.msra.mxu0 %v3212
    %6273 = vmatprep.subr.mxu0 %v3209
    %6274 = vmatpush1.msra.mxu0 %v3208
    %6275 = vmatprep.subr.mxu0 %v3205
    %6276 = vmatpush1.msra.mxu0 %v3204
    %6277 = vmatprep.subr.mxu0 %v3201
    %6278 = vmatpush1.msra.mxu0 %v3200
    %6279 = vmatprep.subr.mxu0 %v3197
    %6280 = vmatpush1.msra.mxu0 %v3196
    %6281 = vmatprep.subr.mxu0 %v3193
    %6282 = vmatpush1.msra.mxu0 %v3192
    %6283 = vmatprep.subr.mxu0 %v3189
    %6284 = vmatpush1.msra.mxu0 %v3188
    %6285 = vmatprep.subr.mxu0 %v3185
    %6286 = vmatpush1.msra.mxu0 %v3184
    %6287 = vmatprep.subr.mxu0 0.0
    %6288 = vmatpush2.msra.mxu0 0.0
    %6289 = vmatprep.subr.mxu0 0.0
    %6290 = vmatpush2.msra.mxu0 0.0
    %6291 = vmatprep.subr.mxu0 0.0
    %6292 = vmatpush2.msra.mxu0 0.0
    %6293 = vmatprep.subr.mxu0 0.0
    %6294 = vmatpush2.msra.mxu0 0.0
    %6295 = vmatprep.subr.mxu0 0.0
    %6296 = vmatpush2.msra.mxu0 0.0
    %6297 = vmatprep.subr.mxu0 0.0
    %6298 = vmatpush2.msra.mxu0 0.0
    %6299 = vmatprep.subr.mxu0 0.0
    %6300 = vmatpush2.msra.mxu0 0.0
    %6301 = vmatprep.subr.mxu0 0.0
    %6302 = vmatpush2.msra.mxu0 0.0
    %6303 = vmatprep.subr.mxu0 0.0
    %6304 = vmatpush2.msra.mxu0 0.0
    %6305 = vmatprep.subr.mxu0 0.0
    %6306 = vmatpush2.msra.mxu0 0.0
    %6307 = vmatprep.subr.mxu0 0.0
    %6308 = vmatpush2.msra.mxu0 0.0
    %6309 = vmatprep.subr.mxu0 0.0
    %6310 = vmatpush2.msra.mxu0 0.0
    %6311 = vmatprep.subr.mxu0 0.0
    %6312 = vmatpush2.msra.mxu0 0.0
    %6313 = vmatprep.subr.mxu0 0.0
    %6314 = vmatpush2.msra.mxu0 0.0
    %6315 = vmatprep.subr.mxu0 0.0
    %6316 = vmatpush2.msra.mxu0 0.0
    %6317 = vmatprep.subr.mxu0 0.0
    %6318 = vmatpush2.msra.mxu0 0.0
    %6319 = vmatprep.mubr.f32.mxu0 0.0
    %6320 = vmatmul.mubr.f32.gmra.mxu0 %v5937
    %v6321 = vpop.f32.mrf.mxu0
    %v6322 = vadd.f32 0.0, %v6321
    %v6323 = vpop.f32.mrf.mxu0
    %v6324 = vadd.f32 0.0, %v6323
    %6325 = vdwg.mxu0
    %6326 = vmatprep.subr.mxu0 %v3247
    %6327 = vmatpush1.msra.mxu0 %v3246
    %6328 = vmatprep.subr.mxu0 %v3243
    %6329 = vmatpush1.msra.mxu0 %v3242
    %6330 = vmatprep.subr.mxu0 %v3239
    %6331 = vmatpush1.msra.mxu0 %v3238
    %6332 = vmatprep.subr.mxu0 %v3235
    %6333 = vmatpush1.msra.mxu0 %v3234
    %6334 = vmatprep.subr.mxu0 %v3231
    %6335 = vmatpush1.msra.mxu0 %v3230
    %6336 = vmatprep.subr.mxu0 %v3227
    %6337 = vmatpush1.msra.mxu0 %v3226
    %6338 = vmatprep.subr.mxu0 %v3223
    %6339 = vmatpush1.msra.mxu0 %v3222
    %6340 = vmatprep.subr.mxu0 %v3219
    %6341 = vmatpush1.msra.mxu0 %v3218
    %6342 = vmatprep.subr.mxu0 %v3215
    %6343 = vmatpush1.msra.mxu0 %v3214
    %6344 = vmatprep.subr.mxu0 %v3211
    %6345 = vmatpush1.msra.mxu0 %v3210
    %6346 = vmatprep.subr.mxu0 %v3207
    %6347 = vmatpush1.msra.mxu0 %v3206
    %6348 = vmatprep.subr.mxu0 %v3203
    %6349 = vmatpush1.msra.mxu0 %v3202
    %6350 = vmatprep.subr.mxu0 %v3199
    %6351 = vmatpush1.msra.mxu0 %v3198
    %6352 = vmatprep.subr.mxu0 %v3195
    %6353 = vmatpush1.msra.mxu0 %v3194
    %6354 = vmatprep.subr.mxu0 %v3191
    %6355 = vmatpush1.msra.mxu0 %v3190
    %6356 = vmatprep.subr.mxu0 %v3187
    %6357 = vmatpush1.msra.mxu0 %v3186
    %6358 = vmatprep.subr.mxu0 0.0
    %6359 = vmatpush2.msra.mxu0 0.0
    %6360 = vmatprep.subr.mxu0 0.0
    %6361 = vmatpush2.msra.mxu0 0.0
    %6362 = vmatprep.subr.mxu0 0.0
    %6363 = vmatpush2.msra.mxu0 0.0
    %6364 = vmatprep.subr.mxu0 0.0
    %6365 = vmatpush2.msra.mxu0 0.0
    %6366 = vmatprep.subr.mxu0 0.0
    %6367 = vmatpush2.msra.mxu0 0.0
    %6368 = vmatprep.subr.mxu0 0.0
    %6369 = vmatpush2.msra.mxu0 0.0
    %6370 = vmatprep.subr.mxu0 0.0
    %6371 = vmatpush2.msra.mxu0 0.0
    %6372 = vmatprep.subr.mxu0 0.0
    %6373 = vmatpush2.msra.mxu0 0.0
    %6374 = vmatprep.subr.mxu0 0.0
    %6375 = vmatpush2.msra.mxu0 0.0
    %6376 = vmatprep.subr.mxu0 0.0
    %6377 = vmatpush2.msra.mxu0 0.0
    %6378 = vmatprep.subr.mxu0 0.0
    %6379 = vmatpush2.msra.mxu0 0.0
    %6380 = vmatprep.subr.mxu0 0.0
    %6381 = vmatpush2.msra.mxu0 0.0
    %6382 = vmatprep.subr.mxu0 0.0
    %6383 = vmatpush2.msra.mxu0 0.0
    %6384 = vmatprep.subr.mxu0 0.0
    %6385 = vmatpush2.msra.mxu0 0.0
    %6386 = vmatprep.subr.mxu0 0.0
    %6387 = vmatpush2.msra.mxu0 0.0
    %6388 = vmatprep.subr.mxu0 0.0
    %6389 = vmatpush2.msra.mxu0 0.0
    %6390 = vmatprep.mubr.f32.mxu0 0.0
    %6391 = vmatmul.mubr.f32.gmra.mxu0 %v5937
    %v6392 = vpop.f32.mrf.mxu0
    %v6393 = vadd.f32 0.0, %v6392
    %v6394 = vpop.f32.mrf.mxu0
    %v6395 = vadd.f32 0.0, %v6394
    %6396 = vdwg.mxu0
    %v6401 = vrot.slane %v6322, 3
    %v6402 = vrot.slane %v6324, 3
    %v6403 = vrot.slane %v6393, 3
    %v6404 = vrot.slane %v6395, 3
    %v6405 = vrot.slane %v6322, 4
    %v6406 = vrot.slane %v6324, 4
    %v6407 = vrot.slane %v6393, 4
    %v6408 = vrot.slane %v6395, 4
    %v6417 = vadd.f32 %v3084, %v6401
    %v6418 = vadd.f32 %v3086, %v6402
    %v6419 = vadd.f32 %v3161, %v6403
    %v6420 = vadd.f32 %v3163, %v6404
    %v6421 = vadd.f32 %v3090, %v6405
    %v6422 = vadd.f32 %v3092, %v6406
    %v6423 = vadd.f32 %v3167, %v6407
    %v6424 = vadd.f32 %v3169, %v6408
    %v6425 = vxor.u32 %v6417, 2147483648
    %v6426 = vxor.u32 %v6418, 2147483648
    %v6427 = vxor.u32 %v6419, 2147483648
    %v6428 = vxor.u32 %v6421, 2147483648
    %v6429 = vxor.u32 %v6422, 2147483648
    %v6430 = vxor.u32 %v6423, 2147483648
    %v6431 = vmul.f32 %v6425, 1.442695
    %v6432 = vpow.pop %v6431
    %v6433 = vmul.f32 %v6426, 1.442695
    %v6434 = vpow.pop %v6433
    %v6435 = vmul.f32 %v6427, 1.442695
    %v6436 = vpow.pop %v6435
    %v6437 = vmul.f32 %v6428, 1.442695
    %v6438 = vpow.pop %v6437
    %v6439 = vmul.f32 %v6429, 1.442695
    %v6440 = vpow.pop %v6439
    %v6441 = vmul.f32 %v6430, 1.442695
    %v6442 = vpow.pop %v6441
    %v6443 = vadd.f32 %v6432, 1.0
    %v6444 = vadd.f32 %v6434, 1.0
    %v6445 = vadd.f32 %v6436, 1.0
    %v6446 = vadd.f32 %v6438, 1.0
    %v6447 = vadd.f32 %v6440, 1.0
    %v6448 = vadd.f32 %v6442, 1.0
    %v6449 = vrcp.pop %v6443
    %v6450 = vmul.f32 1.0, %v6449
    %v6451 = vrcp.pop %v6444
    %v6452 = vmul.f32 1.0, %v6451
    %v6453 = vrcp.pop %v6445
    %v6454 = vmul.f32 1.0, %v6453
    %v6455 = vrcp.pop %v6446
    %v6456 = vmul.f32 1.0, %v6455
    %v6457 = vrcp.pop %v6447
    %v6458 = vmul.f32 1.0, %v6457
    %v6459 = vrcp.pop %v6448
    %v6460 = vmul.f32 1.0, %v6459
    %v6461 = vtanh.pop %v6420
    %v6462 = vtanh.pop %v6424
    %v6465 = vrot.slane %v5927, 7
    %v6466 = vrot.slane %v5928, 7
    %v6469 = vmul.f32 %v6452, %v6465
    %v6470 = vmul.f32 %v6458, %v6466
    %v6471 = vmul.f32 %v6450, %v6461
    %v6472 = vmul.f32 %v6456, %v6462
    %v6473 = vadd.f32 %v6469, %v6471
    %v6474 = vadd.f32 %v6470, %v6472
    %v6475 = vtanh.pop %v6473
    %v6476 = vtanh.pop %v6474
    %v6477 = vmul.f32 %v6454, %v6475
    %v6478 = vmul.f32 %v6460, %v6476
    %v6481 = vrot.slane %v6477, 5
    %v6482 = vrot.slane %v6478, 4
    %v6483 = vsel %vm3757, %v6482, %v6481
    %6485 = vmatprep.subr.mxu0 %v3309
    %6486 = vmatpush1.msra.mxu0 %v3308
    %6487 = vmatprep.subr.mxu0 %v3305
    %6488 = vmatpush1.msra.mxu0 %v3304
    %6489 = vmatprep.subr.mxu0 %v3301
    %6490 = vmatpush1.msra.mxu0 %v3300
    %6491 = vmatprep.subr.mxu0 %v3297
    %6492 = vmatpush1.msra.mxu0 %v3296
    %6493 = vmatprep.subr.mxu0 %v3293
    %6494 = vmatpush1.msra.mxu0 %v3292
    %6495 = vmatprep.subr.mxu0 %v3289
    %6496 = vmatpush1.msra.mxu0 %v3288
    %6497 = vmatprep.subr.mxu0 %v3285
    %6498 = vmatpush1.msra.mxu0 %v3284
    %6499 = vmatprep.subr.mxu0 %v3281
    %6500 = vmatpush1.msra.mxu0 %v3280
    %6501 = vmatprep.subr.mxu0 %v3277
    %6502 = vmatpush1.msra.mxu0 %v3276
    %6503 = vmatprep.subr.mxu0 %v3273
    %6504 = vmatpush1.msra.mxu0 %v3272
    %6505 = vmatprep.subr.mxu0 %v3269
    %6506 = vmatpush1.msra.mxu0 %v3268
    %6507 = vmatprep.subr.mxu0 %v3265
    %6508 = vmatpush1.msra.mxu0 %v3264
    %6509 = vmatprep.subr.mxu0 %v3261
    %6510 = vmatpush1.msra.mxu0 %v3260
    %6511 = vmatprep.subr.mxu0 %v3257
    %6512 = vmatpush1.msra.mxu0 %v3256
    %6513 = vmatprep.subr.mxu0 %v3253
    %6514 = vmatpush1.msra.mxu0 %v3252
    %6515 = vmatprep.subr.mxu0 %v3249
    %6516 = vmatpush1.msra.mxu0 %v3248
    %6517 = vmatprep.subr.mxu0 0.0
    %6518 = vmatpush2.msra.mxu0 0.0
    %6519 = vmatprep.subr.mxu0 0.0
    %6520 = vmatpush2.msra.mxu0 0.0
    %6521 = vmatprep.subr.mxu0 0.0
    %6522 = vmatpush2.msra.mxu0 0.0
    %6523 = vmatprep.subr.mxu0 0.0
    %6524 = vmatpush2.msra.mxu0 0.0
    %6525 = vmatprep.subr.mxu0 0.0
    %6526 = vmatpush2.msra.mxu0 0.0
    %6527 = vmatprep.subr.mxu0 0.0
    %6528 = vmatpush2.msra.mxu0 0.0
    %6529 = vmatprep.subr.mxu0 0.0
    %6530 = vmatpush2.msra.mxu0 0.0
    %6531 = vmatprep.subr.mxu0 0.0
    %6532 = vmatpush2.msra.mxu0 0.0
    %6533 = vmatprep.subr.mxu0 0.0
    %6534 = vmatpush2.msra.mxu0 0.0
    %6535 = vmatprep.subr.mxu0 0.0
    %6536 = vmatpush2.msra.mxu0 0.0
    %6537 = vmatprep.subr.mxu0 0.0
    %6538 = vmatpush2.msra.mxu0 0.0
    %6539 = vmatprep.subr.mxu0 0.0
    %6540 = vmatpush2.msra.mxu0 0.0
    %6541 = vmatprep.subr.mxu0 0.0
    %6542 = vmatpush2.msra.mxu0 0.0
    %6543 = vmatprep.subr.mxu0 0.0
    %6544 = vmatpush2.msra.mxu0 0.0
    %6545 = vmatprep.subr.mxu0 0.0
    %6546 = vmatpush2.msra.mxu0 0.0
    %6547 = vmatprep.subr.mxu0 0.0
    %6548 = vmatpush2.msra.mxu0 0.0
    %6549 = vmatprep.mubr.f32.mxu0 0.0
    %6550 = vmatmul.mubr.f32.gmra.mxu0 %v6483
    %v6551 = vpop.f32.mrf.mxu0
    %v6552 = vadd.f32 %v6180, %v6551
    %v6553 = vpop.f32.mrf.mxu0
    %v6554 = vadd.f32 %v6182, %v6553
    %6555 = vdwg.mxu0
    %6556 = vmatprep.subr.mxu0 %v3311
    %6557 = vmatpush1.msra.mxu0 %v3310
    %6558 = vmatprep.subr.mxu0 %v3307
    %6559 = vmatpush1.msra.mxu0 %v3306
    %6560 = vmatprep.subr.mxu0 %v3303
    %6561 = vmatpush1.msra.mxu0 %v3302
    %6562 = vmatprep.subr.mxu0 %v3299
    %6563 = vmatpush1.msra.mxu0 %v3298
    %6564 = vmatprep.subr.mxu0 %v3295
    %6565 = vmatpush1.msra.mxu0 %v3294
    %6566 = vmatprep.subr.mxu0 %v3291
    %6567 = vmatpush1.msra.mxu0 %v3290
    %6568 = vmatprep.subr.mxu0 %v3287
    %6569 = vmatpush1.msra.mxu0 %v3286
    %6570 = vmatprep.subr.mxu0 %v3283
    %6571 = vmatpush1.msra.mxu0 %v3282
    %6572 = vmatprep.subr.mxu0 %v3279
    %6573 = vmatpush1.msra.mxu0 %v3278
    %6574 = vmatprep.subr.mxu0 %v3275
    %6575 = vmatpush1.msra.mxu0 %v3274
    %6576 = vmatprep.subr.mxu0 %v3271
    %6577 = vmatpush1.msra.mxu0 %v3270
    %6578 = vmatprep.subr.mxu0 %v3267
    %6579 = vmatpush1.msra.mxu0 %v3266
    %6580 = vmatprep.subr.mxu0 %v3263
    %6581 = vmatpush1.msra.mxu0 %v3262
    %6582 = vmatprep.subr.mxu0 %v3259
    %6583 = vmatpush1.msra.mxu0 %v3258
    %6584 = vmatprep.subr.mxu0 %v3255
    %6585 = vmatpush1.msra.mxu0 %v3254
    %6586 = vmatprep.subr.mxu0 %v3251
    %6587 = vmatpush1.msra.mxu0 %v3250
    %6588 = vmatprep.subr.mxu0 0.0
    %6589 = vmatpush2.msra.mxu0 0.0
    %6590 = vmatprep.subr.mxu0 0.0
    %6591 = vmatpush2.msra.mxu0 0.0
    %6592 = vmatprep.subr.mxu0 0.0
    %6593 = vmatpush2.msra.mxu0 0.0
    %6594 = vmatprep.subr.mxu0 0.0
    %6595 = vmatpush2.msra.mxu0 0.0
    %6596 = vmatprep.subr.mxu0 0.0
    %6597 = vmatpush2.msra.mxu0 0.0
    %6598 = vmatprep.subr.mxu0 0.0
    %6599 = vmatpush2.msra.mxu0 0.0
    %6600 = vmatprep.subr.mxu0 0.0
    %6601 = vmatpush2.msra.mxu0 0.0
    %6602 = vmatprep.subr.mxu0 0.0
    %6603 = vmatpush2.msra.mxu0 0.0
    %6604 = vmatprep.subr.mxu0 0.0
    %6605 = vmatpush2.msra.mxu0 0.0
    %6606 = vmatprep.subr.mxu0 0.0
    %6607 = vmatpush2.msra.mxu0 0.0
    %6608 = vmatprep.subr.mxu0 0.0
    %6609 = vmatpush2.msra.mxu0 0.0
    %6610 = vmatprep.subr.mxu0 0.0
    %6611 = vmatpush2.msra.mxu0 0.0
    %6612 = vmatprep.subr.mxu0 0.0
    %6613 = vmatpush2.msra.mxu0 0.0
    %6614 = vmatprep.subr.mxu0 0.0
    %6615 = vmatpush2.msra.mxu0 0.0
    %6616 = vmatprep.subr.mxu0 0.0
    %6617 = vmatpush2.msra.mxu0 0.0
    %6618 = vmatprep.subr.mxu0 0.0
    %6619 = vmatpush2.msra.mxu0 0.0
    %6620 = vmatprep.mubr.f32.mxu0 0.0
    %6621 = vmatmul.mubr.f32.gmra.mxu0 %v6483
    %v6622 = vpop.f32.mrf.mxu0
    %v6623 = vadd.f32 %v6251, %v6622
    %v6624 = vpop.f32.mrf.mxu0
    %v6625 = vadd.f32 %v6253, %v6624
    %6626 = vdwg.mxu0
    %v6627 = vadd.f32 %v6552, %v3381
    %v6628 = vadd.f32 %v6554, %v3385
    %v6629 = vadd.f32 %v6623, %v3389
    %v6630 = vadd.f32 %v6625, %v3393
    %v6631 = vxor.u32 %v6627, 2147483648
    %v6632 = vxor.u32 %v6628, 2147483648
    %v6633 = vxor.u32 %v6629, 2147483648
    %v6634 = vmul.f32 %v6631, 1.442695
    %v6635 = vpow.pop %v6634
    %v6636 = vmul.f32 %v6632, 1.442695
    %v6637 = vpow.pop %v6636
    %v6638 = vmul.f32 %v6633, 1.442695
    %v6639 = vpow.pop %v6638
    %v6640 = vadd.f32 %v6635, 1.0
    %v6641 = vadd.f32 %v6637, 1.0
    %v6642 = vadd.f32 %v6639, 1.0
    %v6643 = vrcp.pop %v6640
    %v6644 = vmul.f32 1.0, %v6643
    %v6645 = vrcp.pop %v6641
    %v6646 = vmul.f32 1.0, %v6645
    %v6647 = vrcp.pop %v6642
    %v6648 = vmul.f32 1.0, %v6647
    %v6649 = vtanh.pop %v6630
    %v6650 = vmul.f32 %v6646, %v6106
    %v6651 = vmul.f32 %v6644, %v6649
    %v6652 = vadd.f32 %v6650, %v6651
    %v6653 = vtanh.pop %v6652
    %v6654 = vmul.f32 %v6648, %v6653
    %vm6655 = vcmp.eq.f32.partialorder %v3183, 5.0
    %v6656 = vsel %vm6655, 1, 0
    %vm6657 = vcmp.eq.s32.totalorder %v6656, 1
    %v6658 = vsel %vm6657, %v6654, %v6112
    %6659 = vmatprep.subr.mxu0 %v3373
    %6660 = vmatpush1.msra.mxu0 %v3372
    %6661 = vmatprep.subr.mxu0 %v3369
    %6662 = vmatpush1.msra.mxu0 %v3368
    %6663 = vmatprep.subr.mxu0 %v3365
    %6664 = vmatpush1.msra.mxu0 %v3364
    %6665 = vmatprep.subr.mxu0 %v3361
    %6666 = vmatpush1.msra.mxu0 %v3360
    %6667 = vmatprep.subr.mxu0 %v3357
    %6668 = vmatpush1.msra.mxu0 %v3356
    %6669 = vmatprep.subr.mxu0 %v3353
    %6670 = vmatpush1.msra.mxu0 %v3352
    %6671 = vmatprep.subr.mxu0 %v3349
    %6672 = vmatpush1.msra.mxu0 %v3348
    %6673 = vmatprep.subr.mxu0 %v3345
    %6674 = vmatpush1.msra.mxu0 %v3344
    %6675 = vmatprep.subr.mxu0 %v3341
    %6676 = vmatpush1.msra.mxu0 %v3340
    %6677 = vmatprep.subr.mxu0 %v3337
    %6678 = vmatpush1.msra.mxu0 %v3336
    %6679 = vmatprep.subr.mxu0 %v3333
    %6680 = vmatpush1.msra.mxu0 %v3332
    %6681 = vmatprep.subr.mxu0 %v3329
    %6682 = vmatpush1.msra.mxu0 %v3328
    %6683 = vmatprep.subr.mxu0 %v3325
    %6684 = vmatpush1.msra.mxu0 %v3324
    %6685 = vmatprep.subr.mxu0 %v3321
    %6686 = vmatpush1.msra.mxu0 %v3320
    %6687 = vmatprep.subr.mxu0 %v3317
    %6688 = vmatpush1.msra.mxu0 %v3316
    %6689 = vmatprep.subr.mxu0 %v3313
    %6690 = vmatpush1.msra.mxu0 %v3312
    %6691 = vmatprep.subr.mxu0 0.0
    %6692 = vmatpush2.msra.mxu0 0.0
    %6693 = vmatprep.subr.mxu0 0.0
    %6694 = vmatpush2.msra.mxu0 0.0
    %6695 = vmatprep.subr.mxu0 0.0
    %6696 = vmatpush2.msra.mxu0 0.0
    %6697 = vmatprep.subr.mxu0 0.0
    %6698 = vmatpush2.msra.mxu0 0.0
    %6699 = vmatprep.subr.mxu0 0.0
    %6700 = vmatpush2.msra.mxu0 0.0
    %6701 = vmatprep.subr.mxu0 0.0
    %6702 = vmatpush2.msra.mxu0 0.0
    %6703 = vmatprep.subr.mxu0 0.0
    %6704 = vmatpush2.msra.mxu0 0.0
    %6705 = vmatprep.subr.mxu0 0.0
    %6706 = vmatpush2.msra.mxu0 0.0
    %6707 = vmatprep.subr.mxu0 0.0
    %6708 = vmatpush2.msra.mxu0 0.0
    %6709 = vmatprep.subr.mxu0 0.0
    %6710 = vmatpush2.msra.mxu0 0.0
    %6711 = vmatprep.subr.mxu0 0.0
    %6712 = vmatpush2.msra.mxu0 0.0
    %6713 = vmatprep.subr.mxu0 0.0
    %6714 = vmatpush2.msra.mxu0 0.0
    %6715 = vmatprep.subr.mxu0 0.0
    %6716 = vmatpush2.msra.mxu0 0.0
    %6717 = vmatprep.subr.mxu0 0.0
    %6718 = vmatpush2.msra.mxu0 0.0
    %6719 = vmatprep.subr.mxu0 0.0
    %6720 = vmatpush2.msra.mxu0 0.0
    %6721 = vmatprep.subr.mxu0 0.0
    %6722 = vmatpush2.msra.mxu0 0.0
    %6723 = vmatprep.mubr.f32.mxu0 0.0
    %6724 = vmatmul.mubr.f32.gmra.mxu0 %v6654
    %v6725 = vpop.f32.mrf.mxu0
    %v6726 = vadd.f32 0.0, %v6725
    %v6727 = vpop.f32.mrf.mxu0
    %v6728 = vadd.f32 0.0, %v6727
    %6729 = vdwg.mxu0
    %6730 = vmatprep.subr.mxu0 %v3375
    %6731 = vmatpush1.msra.mxu0 %v3374
    %6732 = vmatprep.subr.mxu0 %v3371
    %6733 = vmatpush1.msra.mxu0 %v3370
    %6734 = vmatprep.subr.mxu0 %v3367
    %6735 = vmatpush1.msra.mxu0 %v3366
    %6736 = vmatprep.subr.mxu0 %v3363
    %6737 = vmatpush1.msra.mxu0 %v3362
    %6738 = vmatprep.subr.mxu0 %v3359
    %6739 = vmatpush1.msra.mxu0 %v3358
    %6740 = vmatprep.subr.mxu0 %v3355
    %6741 = vmatpush1.msra.mxu0 %v3354
    %6742 = vmatprep.subr.mxu0 %v3351
    %6743 = vmatpush1.msra.mxu0 %v3350
    %6744 = vmatprep.subr.mxu0 %v3347
    %6745 = vmatpush1.msra.mxu0 %v3346
    %6746 = vmatprep.subr.mxu0 %v3343
    %6747 = vmatpush1.msra.mxu0 %v3342
    %6748 = vmatprep.subr.mxu0 %v3339
    %6749 = vmatpush1.msra.mxu0 %v3338
    %6750 = vmatprep.subr.mxu0 %v3335
    %6751 = vmatpush1.msra.mxu0 %v3334
    %6752 = vmatprep.subr.mxu0 %v3331
    %6753 = vmatpush1.msra.mxu0 %v3330
    %6754 = vmatprep.subr.mxu0 %v3327
    %6755 = vmatpush1.msra.mxu0 %v3326
    %6756 = vmatprep.subr.mxu0 %v3323
    %6757 = vmatpush1.msra.mxu0 %v3322
    %6758 = vmatprep.subr.mxu0 %v3319
    %6759 = vmatpush1.msra.mxu0 %v3318
    %6760 = vmatprep.subr.mxu0 %v3315
    %6761 = vmatpush1.msra.mxu0 %v3314
    %6762 = vmatprep.subr.mxu0 0.0
    %6763 = vmatpush2.msra.mxu0 0.0
    %6764 = vmatprep.subr.mxu0 0.0
    %6765 = vmatpush2.msra.mxu0 0.0
    %6766 = vmatprep.subr.mxu0 0.0
    %6767 = vmatpush2.msra.mxu0 0.0
    %6768 = vmatprep.subr.mxu0 0.0
    %6769 = vmatpush2.msra.mxu0 0.0
    %6770 = vmatprep.subr.mxu0 0.0
    %6771 = vmatpush2.msra.mxu0 0.0
    %6772 = vmatprep.subr.mxu0 0.0
    %6773 = vmatpush2.msra.mxu0 0.0
    %6774 = vmatprep.subr.mxu0 0.0
    %6775 = vmatpush2.msra.mxu0 0.0
    %6776 = vmatprep.subr.mxu0 0.0
    %6777 = vmatpush2.msra.mxu0 0.0
    %6778 = vmatprep.subr.mxu0 0.0
    %6779 = vmatpush2.msra.mxu0 0.0
    %6780 = vmatprep.subr.mxu0 0.0
    %6781 = vmatpush2.msra.mxu0 0.0
    %6782 = vmatprep.subr.mxu0 0.0
    %6783 = vmatpush2.msra.mxu0 0.0
    %6784 = vmatprep.subr.mxu0 0.0
    %6785 = vmatpush2.msra.mxu0 0.0
    %6786 = vmatprep.subr.mxu0 0.0
    %6787 = vmatpush2.msra.mxu0 0.0
    %6788 = vmatprep.subr.mxu0 0.0
    %6789 = vmatpush2.msra.mxu0 0.0
    %6790 = vmatprep.subr.mxu0 0.0
    %6791 = vmatpush2.msra.mxu0 0.0
    %6792 = vmatprep.subr.mxu0 0.0
    %6793 = vmatpush2.msra.mxu0 0.0
    %6794 = vmatprep.mubr.f32.mxu0 0.0
    %6795 = vmatmul.mubr.f32.gmra.mxu0 %v6654
    %v6796 = vpop.f32.mrf.mxu0
    %v6797 = vadd.f32 0.0, %v6796
    %v6798 = vpop.f32.mrf.mxu0
    %v6799 = vadd.f32 0.0, %v6798
    %6800 = vdwg.mxu0
    %6801 = vmatprep.subr.mxu0 %v3245
    %6802 = vmatpush1.msra.mxu0 %v3244
    %6803 = vmatprep.subr.mxu0 %v3241
    %6804 = vmatpush1.msra.mxu0 %v3240
    %6805 = vmatprep.subr.mxu0 %v3237
    %6806 = vmatpush1.msra.mxu0 %v3236
    %6807 = vmatprep.subr.mxu0 %v3233
    %6808 = vmatpush1.msra.mxu0 %v3232
    %6809 = vmatprep.subr.mxu0 %v3229
    %6810 = vmatpush1.msra.mxu0 %v3228
    %6811 = vmatprep.subr.mxu0 %v3225
    %6812 = vmatpush1.msra.mxu0 %v3224
    %6813 = vmatprep.subr.mxu0 %v3221
    %6814 = vmatpush1.msra.mxu0 %v3220
    %6815 = vmatprep.subr.mxu0 %v3217
    %6816 = vmatpush1.msra.mxu0 %v3216
    %6817 = vmatprep.subr.mxu0 %v3213
    %6818 = vmatpush1.msra.mxu0 %v3212
    %6819 = vmatprep.subr.mxu0 %v3209
    %6820 = vmatpush1.msra.mxu0 %v3208
    %6821 = vmatprep.subr.mxu0 %v3205
    %6822 = vmatpush1.msra.mxu0 %v3204
    %6823 = vmatprep.subr.mxu0 %v3201
    %6824 = vmatpush1.msra.mxu0 %v3200
    %6825 = vmatprep.subr.mxu0 %v3197
    %6826 = vmatpush1.msra.mxu0 %v3196
    %6827 = vmatprep.subr.mxu0 %v3193
    %6828 = vmatpush1.msra.mxu0 %v3192
    %6829 = vmatprep.subr.mxu0 %v3189
    %6830 = vmatpush1.msra.mxu0 %v3188
    %6831 = vmatprep.subr.mxu0 %v3185
    %6832 = vmatpush1.msra.mxu0 %v3184
    %6833 = vmatprep.subr.mxu0 0.0
    %6834 = vmatpush2.msra.mxu0 0.0
    %6835 = vmatprep.subr.mxu0 0.0
    %6836 = vmatpush2.msra.mxu0 0.0
    %6837 = vmatprep.subr.mxu0 0.0
    %6838 = vmatpush2.msra.mxu0 0.0
    %6839 = vmatprep.subr.mxu0 0.0
    %6840 = vmatpush2.msra.mxu0 0.0
    %6841 = vmatprep.subr.mxu0 0.0
    %6842 = vmatpush2.msra.mxu0 0.0
    %6843 = vmatprep.subr.mxu0 0.0
    %6844 = vmatpush2.msra.mxu0 0.0
    %6845 = vmatprep.subr.mxu0 0.0
    %6846 = vmatpush2.msra.mxu0 0.0
    %6847 = vmatprep.subr.mxu0 0.0
    %6848 = vmatpush2.msra.mxu0 0.0
    %6849 = vmatprep.subr.mxu0 0.0
    %6850 = vmatpush2.msra.mxu0 0.0
    %6851 = vmatprep.subr.mxu0 0.0
    %6852 = vmatpush2.msra.mxu0 0.0
    %6853 = vmatprep.subr.mxu0 0.0
    %6854 = vmatpush2.msra.mxu0 0.0
    %6855 = vmatprep.subr.mxu0 0.0
    %6856 = vmatpush2.msra.mxu0 0.0
    %6857 = vmatprep.subr.mxu0 0.0
    %6858 = vmatpush2.msra.mxu0 0.0
    %6859 = vmatprep.subr.mxu0 0.0
    %6860 = vmatpush2.msra.mxu0 0.0
    %6861 = vmatprep.subr.mxu0 0.0
    %6862 = vmatpush2.msra.mxu0 0.0
    %6863 = vmatprep.subr.mxu0 0.0
    %6864 = vmatpush2.msra.mxu0 0.0
    %6865 = vmatprep.mubr.f32.mxu0 0.0
    %6866 = vmatmul.mubr.f32.gmra.mxu0 %v6483
    %v6867 = vpop.f32.mrf.mxu0
    %v6868 = vadd.f32 0.0, %v6867
    %v6869 = vpop.f32.mrf.mxu0
    %v6870 = vadd.f32 0.0, %v6869
    %6871 = vdwg.mxu0
    %6872 = vmatprep.subr.mxu0 %v3247
    %6873 = vmatpush1.msra.mxu0 %v3246
    %6874 = vmatprep.subr.mxu0 %v3243
    %6875 = vmatpush1.msra.mxu0 %v3242
    %6876 = vmatprep.subr.mxu0 %v3239
    %6877 = vmatpush1.msra.mxu0 %v3238
    %6878 = vmatprep.subr.mxu0 %v3235
    %6879 = vmatpush1.msra.mxu0 %v3234
    %6880 = vmatprep.subr.mxu0 %v3231
    %6881 = vmatpush1.msra.mxu0 %v3230
    %6882 = vmatprep.subr.mxu0 %v3227
    %6883 = vmatpush1.msra.mxu0 %v3226
    %6884 = vmatprep.subr.mxu0 %v3223
    %6885 = vmatpush1.msra.mxu0 %v3222
    %6886 = vmatprep.subr.mxu0 %v3219
    %6887 = vmatpush1.msra.mxu0 %v3218
    %6888 = vmatprep.subr.mxu0 %v3215
    %6889 = vmatpush1.msra.mxu0 %v3214
    %6890 = vmatprep.subr.mxu0 %v3211
    %6891 = vmatpush1.msra.mxu0 %v3210
    %6892 = vmatprep.subr.mxu0 %v3207
    %6893 = vmatpush1.msra.mxu0 %v3206
    %6894 = vmatprep.subr.mxu0 %v3203
    %6895 = vmatpush1.msra.mxu0 %v3202
    %6896 = vmatprep.subr.mxu0 %v3199
    %6897 = vmatpush1.msra.mxu0 %v3198
    %6898 = vmatprep.subr.mxu0 %v3195
    %6899 = vmatpush1.msra.mxu0 %v3194
    %6900 = vmatprep.subr.mxu0 %v3191
    %6901 = vmatpush1.msra.mxu0 %v3190
    %6902 = vmatprep.subr.mxu0 %v3187
    %6903 = vmatpush1.msra.mxu0 %v3186
    %6904 = vmatprep.subr.mxu0 0.0
    %6905 = vmatpush2.msra.mxu0 0.0
    %6906 = vmatprep.subr.mxu0 0.0
    %6907 = vmatpush2.msra.mxu0 0.0
    %6908 = vmatprep.subr.mxu0 0.0
    %6909 = vmatpush2.msra.mxu0 0.0
    %6910 = vmatprep.subr.mxu0 0.0
    %6911 = vmatpush2.msra.mxu0 0.0
    %6912 = vmatprep.subr.mxu0 0.0
    %6913 = vmatpush2.msra.mxu0 0.0
    %6914 = vmatprep.subr.mxu0 0.0
    %6915 = vmatpush2.msra.mxu0 0.0
    %6916 = vmatprep.subr.mxu0 0.0
    %6917 = vmatpush2.msra.mxu0 0.0
    %6918 = vmatprep.subr.mxu0 0.0
    %6919 = vmatpush2.msra.mxu0 0.0
    %6920 = vmatprep.subr.mxu0 0.0
    %6921 = vmatpush2.msra.mxu0 0.0
    %6922 = vmatprep.subr.mxu0 0.0
    %6923 = vmatpush2.msra.mxu0 0.0
    %6924 = vmatprep.subr.mxu0 0.0
    %6925 = vmatpush2.msra.mxu0 0.0
    %6926 = vmatprep.subr.mxu0 0.0
    %6927 = vmatpush2.msra.mxu0 0.0
    %6928 = vmatprep.subr.mxu0 0.0
    %6929 = vmatpush2.msra.mxu0 0.0
    %6930 = vmatprep.subr.mxu0 0.0
    %6931 = vmatpush2.msra.mxu0 0.0
    %6932 = vmatprep.subr.mxu0 0.0
    %6933 = vmatpush2.msra.mxu0 0.0
    %6934 = vmatprep.subr.mxu0 0.0
    %6935 = vmatpush2.msra.mxu0 0.0
    %6936 = vmatprep.mubr.f32.mxu0 0.0
    %6937 = vmatmul.mubr.f32.gmra.mxu0 %v6483
    %v6938 = vpop.f32.mrf.mxu0
    %v6939 = vadd.f32 0.0, %v6938
    %v6940 = vpop.f32.mrf.mxu0
    %v6941 = vadd.f32 0.0, %v6940
    %6942 = vdwg.mxu0
    %v6947 = vrot.slane %v6868, 2
    %v6948 = vrot.slane %v6870, 2
    %v6949 = vrot.slane %v6939, 2
    %v6950 = vrot.slane %v6941, 2
    %v6951 = vrot.slane %v6868, 3
    %v6952 = vrot.slane %v6870, 3
    %v6953 = vrot.slane %v6939, 3
    %v6954 = vrot.slane %v6941, 3
    %v6963 = vadd.f32 %v3084, %v6947
    %v6964 = vadd.f32 %v3086, %v6948
    %v6965 = vadd.f32 %v3161, %v6949
    %v6966 = vadd.f32 %v3163, %v6950
    %v6967 = vadd.f32 %v3090, %v6951
    %v6968 = vadd.f32 %v3092, %v6952
    %v6969 = vadd.f32 %v3167, %v6953
    %v6970 = vadd.f32 %v3169, %v6954
    %v6971 = vxor.u32 %v6963, 2147483648
    %v6972 = vxor.u32 %v6964, 2147483648
    %v6973 = vxor.u32 %v6965, 2147483648
    %v6974 = vxor.u32 %v6967, 2147483648
    %v6975 = vxor.u32 %v6968, 2147483648
    %v6976 = vxor.u32 %v6969, 2147483648
    %v6977 = vmul.f32 %v6971, 1.442695
    %v6978 = vpow.pop %v6977
    %v6979 = vmul.f32 %v6972, 1.442695
    %v6980 = vpow.pop %v6979
    %v6981 = vmul.f32 %v6973, 1.442695
    %v6982 = vpow.pop %v6981
    %v6983 = vmul.f32 %v6974, 1.442695
    %v6984 = vpow.pop %v6983
    %v6985 = vmul.f32 %v6975, 1.442695
    %v6986 = vpow.pop %v6985
    %v6987 = vmul.f32 %v6976, 1.442695
    %v6988 = vpow.pop %v6987
    %v6989 = vadd.f32 %v6978, 1.0
    %v6990 = vadd.f32 %v6980, 1.0
    %v6991 = vadd.f32 %v6982, 1.0
    %v6992 = vadd.f32 %v6984, 1.0
    %v6993 = vadd.f32 %v6986, 1.0
    %v6994 = vadd.f32 %v6988, 1.0
    %v6995 = vrcp.pop %v6989
    %v6996 = vmul.f32 1.0, %v6995
    %v6997 = vrcp.pop %v6990
    %v6998 = vmul.f32 1.0, %v6997
    %v6999 = vrcp.pop %v6991
    %v7000 = vmul.f32 1.0, %v6999
    %v7001 = vrcp.pop %v6992
    %v7002 = vmul.f32 1.0, %v7001
    %v7003 = vrcp.pop %v6993
    %v7004 = vmul.f32 1.0, %v7003
    %v7005 = vrcp.pop %v6994
    %v7006 = vmul.f32 1.0, %v7005
    %v7007 = vtanh.pop %v6966
    %v7008 = vtanh.pop %v6970
    %v7011 = vrot.slane %v6473, 7
    %v7012 = vrot.slane %v6474, 7
    %v7015 = vmul.f32 %v6998, %v7011
    %v7016 = vmul.f32 %v7004, %v7012
    %v7017 = vmul.f32 %v6996, %v7007
    %v7018 = vmul.f32 %v7002, %v7008
    %v7019 = vadd.f32 %v7015, %v7017
    %v7020 = vadd.f32 %v7016, %v7018
    %v7021 = vtanh.pop %v7019
    %v7022 = vtanh.pop %v7020
    %v7023 = vmul.f32 %v7000, %v7021
    %v7024 = vmul.f32 %v7006, %v7022
    %v7027 = vrot.slane %v7023, 6
    %v7028 = vrot.slane %v7024, 5
    %v7029 = vsel %vm3757, %v7028, %v7027
    %7031 = vmatprep.subr.mxu0 %v3309
    %7032 = vmatpush1.msra.mxu0 %v3308
    %7033 = vmatprep.subr.mxu0 %v3305
    %7034 = vmatpush1.msra.mxu0 %v3304
    %7035 = vmatprep.subr.mxu0 %v3301
    %7036 = vmatpush1.msra.mxu0 %v3300
    %7037 = vmatprep.subr.mxu0 %v3297
    %7038 = vmatpush1.msra.mxu0 %v3296
    %7039 = vmatprep.subr.mxu0 %v3293
    %7040 = vmatpush1.msra.mxu0 %v3292
    %7041 = vmatprep.subr.mxu0 %v3289
    %7042 = vmatpush1.msra.mxu0 %v3288
    %7043 = vmatprep.subr.mxu0 %v3285
    %7044 = vmatpush1.msra.mxu0 %v3284
    %7045 = vmatprep.subr.mxu0 %v3281
    %7046 = vmatpush1.msra.mxu0 %v3280
    %7047 = vmatprep.subr.mxu0 %v3277
    %7048 = vmatpush1.msra.mxu0 %v3276
    %7049 = vmatprep.subr.mxu0 %v3273
    %7050 = vmatpush1.msra.mxu0 %v3272
    %7051 = vmatprep.subr.mxu0 %v3269
    %7052 = vmatpush1.msra.mxu0 %v3268
    %7053 = vmatprep.subr.mxu0 %v3265
    %7054 = vmatpush1.msra.mxu0 %v3264
    %7055 = vmatprep.subr.mxu0 %v3261
    %7056 = vmatpush1.msra.mxu0 %v3260
    %7057 = vmatprep.subr.mxu0 %v3257
    %7058 = vmatpush1.msra.mxu0 %v3256
    %7059 = vmatprep.subr.mxu0 %v3253
    %7060 = vmatpush1.msra.mxu0 %v3252
    %7061 = vmatprep.subr.mxu0 %v3249
    %7062 = vmatpush1.msra.mxu0 %v3248
    %7063 = vmatprep.subr.mxu0 0.0
    %7064 = vmatpush2.msra.mxu0 0.0
    %7065 = vmatprep.subr.mxu0 0.0
    %7066 = vmatpush2.msra.mxu0 0.0
    %7067 = vmatprep.subr.mxu0 0.0
    %7068 = vmatpush2.msra.mxu0 0.0
    %7069 = vmatprep.subr.mxu0 0.0
    %7070 = vmatpush2.msra.mxu0 0.0
    %7071 = vmatprep.subr.mxu0 0.0
    %7072 = vmatpush2.msra.mxu0 0.0
    %7073 = vmatprep.subr.mxu0 0.0
    %7074 = vmatpush2.msra.mxu0 0.0
    %7075 = vmatprep.subr.mxu0 0.0
    %7076 = vmatpush2.msra.mxu0 0.0
    %7077 = vmatprep.subr.mxu0 0.0
    %7078 = vmatpush2.msra.mxu0 0.0
    %7079 = vmatprep.subr.mxu0 0.0
    %7080 = vmatpush2.msra.mxu0 0.0
    %7081 = vmatprep.subr.mxu0 0.0
    %7082 = vmatpush2.msra.mxu0 0.0
    %7083 = vmatprep.subr.mxu0 0.0
    %7084 = vmatpush2.msra.mxu0 0.0
    %7085 = vmatprep.subr.mxu0 0.0
    %7086 = vmatpush2.msra.mxu0 0.0
    %7087 = vmatprep.subr.mxu0 0.0
    %7088 = vmatpush2.msra.mxu0 0.0
    %7089 = vmatprep.subr.mxu0 0.0
    %7090 = vmatpush2.msra.mxu0 0.0
    %7091 = vmatprep.subr.mxu0 0.0
    %7092 = vmatpush2.msra.mxu0 0.0
    %7093 = vmatprep.subr.mxu0 0.0
    %7094 = vmatpush2.msra.mxu0 0.0
    %7095 = vmatprep.mubr.f32.mxu0 0.0
    %7096 = vmatmul.mubr.f32.gmra.mxu0 %v7029
    %v7097 = vpop.f32.mrf.mxu0
    %v7098 = vadd.f32 %v6726, %v7097
    %v7099 = vpop.f32.mrf.mxu0
    %v7100 = vadd.f32 %v6728, %v7099
    %7101 = vdwg.mxu0
    %7102 = vmatprep.subr.mxu0 %v3311
    %7103 = vmatpush1.msra.mxu0 %v3310
    %7104 = vmatprep.subr.mxu0 %v3307
    %7105 = vmatpush1.msra.mxu0 %v3306
    %7106 = vmatprep.subr.mxu0 %v3303
    %7107 = vmatpush1.msra.mxu0 %v3302
    %7108 = vmatprep.subr.mxu0 %v3299
    %7109 = vmatpush1.msra.mxu0 %v3298
    %7110 = vmatprep.subr.mxu0 %v3295
    %7111 = vmatpush1.msra.mxu0 %v3294
    %7112 = vmatprep.subr.mxu0 %v3291
    %7113 = vmatpush1.msra.mxu0 %v3290
    %7114 = vmatprep.subr.mxu0 %v3287
    %7115 = vmatpush1.msra.mxu0 %v3286
    %7116 = vmatprep.subr.mxu0 %v3283
    %7117 = vmatpush1.msra.mxu0 %v3282
    %7118 = vmatprep.subr.mxu0 %v3279
    %7119 = vmatpush1.msra.mxu0 %v3278
    %7120 = vmatprep.subr.mxu0 %v3275
    %7121 = vmatpush1.msra.mxu0 %v3274
    %7122 = vmatprep.subr.mxu0 %v3271
    %7123 = vmatpush1.msra.mxu0 %v3270
    %7124 = vmatprep.subr.mxu0 %v3267
    %7125 = vmatpush1.msra.mxu0 %v3266
    %7126 = vmatprep.subr.mxu0 %v3263
    %7127 = vmatpush1.msra.mxu0 %v3262
    %7128 = vmatprep.subr.mxu0 %v3259
    %7129 = vmatpush1.msra.mxu0 %v3258
    %7130 = vmatprep.subr.mxu0 %v3255
    %7131 = vmatpush1.msra.mxu0 %v3254
    %7132 = vmatprep.subr.mxu0 %v3251
    %7133 = vmatpush1.msra.mxu0 %v3250
    %7134 = vmatprep.subr.mxu0 0.0
    %7135 = vmatpush2.msra.mxu0 0.0
    %7136 = vmatprep.subr.mxu0 0.0
    %7137 = vmatpush2.msra.mxu0 0.0
    %7138 = vmatprep.subr.mxu0 0.0
    %7139 = vmatpush2.msra.mxu0 0.0
    %7140 = vmatprep.subr.mxu0 0.0
    %7141 = vmatpush2.msra.mxu0 0.0
    %7142 = vmatprep.subr.mxu0 0.0
    %7143 = vmatpush2.msra.mxu0 0.0
    %7144 = vmatprep.subr.mxu0 0.0
    %7145 = vmatpush2.msra.mxu0 0.0
    %7146 = vmatprep.subr.mxu0 0.0
    %7147 = vmatpush2.msra.mxu0 0.0
    %7148 = vmatprep.subr.mxu0 0.0
    %7149 = vmatpush2.msra.mxu0 0.0
    %7150 = vmatprep.subr.mxu0 0.0
    %7151 = vmatpush2.msra.mxu0 0.0
    %7152 = vmatprep.subr.mxu0 0.0
    %7153 = vmatpush2.msra.mxu0 0.0
    %7154 = vmatprep.subr.mxu0 0.0
    %7155 = vmatpush2.msra.mxu0 0.0
    %7156 = vmatprep.subr.mxu0 0.0
    %7157 = vmatpush2.msra.mxu0 0.0
    %7158 = vmatprep.subr.mxu0 0.0
    %7159 = vmatpush2.msra.mxu0 0.0
    %7160 = vmatprep.subr.mxu0 0.0
    %7161 = vmatpush2.msra.mxu0 0.0
    %7162 = vmatprep.subr.mxu0 0.0
    %7163 = vmatpush2.msra.mxu0 0.0
    %7164 = vmatprep.subr.mxu0 0.0
    %7165 = vmatpush2.msra.mxu0 0.0
    %7166 = vmatprep.mubr.f32.mxu0 0.0
    %7167 = vmatmul.mubr.f32.gmra.mxu0 %v7029
    %v7168 = vpop.f32.mrf.mxu0
    %v7169 = vadd.f32 %v6797, %v7168
    %v7170 = vpop.f32.mrf.mxu0
    %v7171 = vadd.f32 %v6799, %v7170
    %7172 = vdwg.mxu0
    %v7173 = vadd.f32 %v7098, %v3381
    %v7174 = vadd.f32 %v7100, %v3385
    %v7175 = vadd.f32 %v7169, %v3389
    %v7176 = vadd.f32 %v7171, %v3393
    %v7177 = vxor.u32 %v7173, 2147483648
    %v7178 = vxor.u32 %v7174, 2147483648
    %v7179 = vxor.u32 %v7175, 2147483648
    %v7180 = vmul.f32 %v7177, 1.442695
    %v7181 = vpow.pop %v7180
    %v7182 = vmul.f32 %v7178, 1.442695
    %v7183 = vpow.pop %v7182
    %v7184 = vmul.f32 %v7179, 1.442695
    %v7185 = vpow.pop %v7184
    %v7186 = vadd.f32 %v7181, 1.0
    %v7187 = vadd.f32 %v7183, 1.0
    %v7188 = vadd.f32 %v7185, 1.0
    %v7189 = vrcp.pop %v7186
    %v7190 = vmul.f32 1.0, %v7189
    %v7191 = vrcp.pop %v7187
    %v7192 = vmul.f32 1.0, %v7191
    %v7193 = vrcp.pop %v7188
    %v7194 = vmul.f32 1.0, %v7193
    %v7195 = vtanh.pop %v7176
    %v7196 = vmul.f32 %v7192, %v6652
    %v7197 = vmul.f32 %v7190, %v7195
    %v7198 = vadd.f32 %v7196, %v7197
    %v7199 = vtanh.pop %v7198
    %v7200 = vmul.f32 %v7194, %v7199
    %vm7201 = vcmp.eq.f32.partialorder %v3183, 6.0
    %v7202 = vsel %vm7201, 1, 0
    %vm7203 = vcmp.eq.s32.totalorder %v7202, 1
    %v7204 = vsel %vm7203, %v7200, %v6658
    %7205 = vmatprep.subr.mxu0 %v3373
    %7206 = vmatpush1.msra.mxu0 %v3372
    %7207 = vmatprep.subr.mxu0 %v3369
    %7208 = vmatpush1.msra.mxu0 %v3368
    %7209 = vmatprep.subr.mxu0 %v3365
    %7210 = vmatpush1.msra.mxu0 %v3364
    %7211 = vmatprep.subr.mxu0 %v3361
    %7212 = vmatpush1.msra.mxu0 %v3360
    %7213 = vmatprep.subr.mxu0 %v3357
    %7214 = vmatpush1.msra.mxu0 %v3356
    %7215 = vmatprep.subr.mxu0 %v3353
    %7216 = vmatpush1.msra.mxu0 %v3352
    %7217 = vmatprep.subr.mxu0 %v3349
    %7218 = vmatpush1.msra.mxu0 %v3348
    %7219 = vmatprep.subr.mxu0 %v3345
    %7220 = vmatpush1.msra.mxu0 %v3344
    %7221 = vmatprep.subr.mxu0 %v3341
    %7222 = vmatpush1.msra.mxu0 %v3340
    %7223 = vmatprep.subr.mxu0 %v3337
    %7224 = vmatpush1.msra.mxu0 %v3336
    %7225 = vmatprep.subr.mxu0 %v3333
    %7226 = vmatpush1.msra.mxu0 %v3332
    %7227 = vmatprep.subr.mxu0 %v3329
    %7228 = vmatpush1.msra.mxu0 %v3328
    %7229 = vmatprep.subr.mxu0 %v3325
    %7230 = vmatpush1.msra.mxu0 %v3324
    %7231 = vmatprep.subr.mxu0 %v3321
    %7232 = vmatpush1.msra.mxu0 %v3320
    %7233 = vmatprep.subr.mxu0 %v3317
    %7234 = vmatpush1.msra.mxu0 %v3316
    %7235 = vmatprep.subr.mxu0 %v3313
    %7236 = vmatpush1.msra.mxu0 %v3312
    %7237 = vmatprep.subr.mxu0 0.0
    %7238 = vmatpush2.msra.mxu0 0.0
    %7239 = vmatprep.subr.mxu0 0.0
    %7240 = vmatpush2.msra.mxu0 0.0
    %7241 = vmatprep.subr.mxu0 0.0
    %7242 = vmatpush2.msra.mxu0 0.0
    %7243 = vmatprep.subr.mxu0 0.0
    %7244 = vmatpush2.msra.mxu0 0.0
    %7245 = vmatprep.subr.mxu0 0.0
    %7246 = vmatpush2.msra.mxu0 0.0
    %7247 = vmatprep.subr.mxu0 0.0
    %7248 = vmatpush2.msra.mxu0 0.0
    %7249 = vmatprep.subr.mxu0 0.0
    %7250 = vmatpush2.msra.mxu0 0.0
    %7251 = vmatprep.subr.mxu0 0.0
    %7252 = vmatpush2.msra.mxu0 0.0
    %7253 = vmatprep.subr.mxu0 0.0
    %7254 = vmatpush2.msra.mxu0 0.0
    %7255 = vmatprep.subr.mxu0 0.0
    %7256 = vmatpush2.msra.mxu0 0.0
    %7257 = vmatprep.subr.mxu0 0.0
    %7258 = vmatpush2.msra.mxu0 0.0
    %7259 = vmatprep.subr.mxu0 0.0
    %7260 = vmatpush2.msra.mxu0 0.0
    %7261 = vmatprep.subr.mxu0 0.0
    %7262 = vmatpush2.msra.mxu0 0.0
    %7263 = vmatprep.subr.mxu0 0.0
    %7264 = vmatpush2.msra.mxu0 0.0
    %7265 = vmatprep.subr.mxu0 0.0
    %7266 = vmatpush2.msra.mxu0 0.0
    %7267 = vmatprep.subr.mxu0 0.0
    %7268 = vmatpush2.msra.mxu0 0.0
    %7269 = vmatprep.mubr.f32.mxu0 0.0
    %7270 = vmatmul.mubr.f32.gmra.mxu0 %v7200
    %v7271 = vpop.f32.mrf.mxu0
    %v7272 = vadd.f32 0.0, %v7271
    %v7273 = vpop.f32.mrf.mxu0
    %v7274 = vadd.f32 0.0, %v7273
    %7275 = vdwg.mxu0
    %7276 = vmatprep.subr.mxu0 %v3375
    %7277 = vmatpush1.msra.mxu0 %v3374
    %7278 = vmatprep.subr.mxu0 %v3371
    %7279 = vmatpush1.msra.mxu0 %v3370
    %7280 = vmatprep.subr.mxu0 %v3367
    %7281 = vmatpush1.msra.mxu0 %v3366
    %7282 = vmatprep.subr.mxu0 %v3363
    %7283 = vmatpush1.msra.mxu0 %v3362
    %7284 = vmatprep.subr.mxu0 %v3359
    %7285 = vmatpush1.msra.mxu0 %v3358
    %7286 = vmatprep.subr.mxu0 %v3355
    %7287 = vmatpush1.msra.mxu0 %v3354
    %7288 = vmatprep.subr.mxu0 %v3351
    %7289 = vmatpush1.msra.mxu0 %v3350
    %7290 = vmatprep.subr.mxu0 %v3347
    %7291 = vmatpush1.msra.mxu0 %v3346
    %7292 = vmatprep.subr.mxu0 %v3343
    %7293 = vmatpush1.msra.mxu0 %v3342
    %7294 = vmatprep.subr.mxu0 %v3339
    %7295 = vmatpush1.msra.mxu0 %v3338
    %7296 = vmatprep.subr.mxu0 %v3335
    %7297 = vmatpush1.msra.mxu0 %v3334
    %7298 = vmatprep.subr.mxu0 %v3331
    %7299 = vmatpush1.msra.mxu0 %v3330
    %7300 = vmatprep.subr.mxu0 %v3327
    %7301 = vmatpush1.msra.mxu0 %v3326
    %7302 = vmatprep.subr.mxu0 %v3323
    %7303 = vmatpush1.msra.mxu0 %v3322
    %7304 = vmatprep.subr.mxu0 %v3319
    %7305 = vmatpush1.msra.mxu0 %v3318
    %7306 = vmatprep.subr.mxu0 %v3315
    %7307 = vmatpush1.msra.mxu0 %v3314
    %7308 = vmatprep.subr.mxu0 0.0
    %7309 = vmatpush2.msra.mxu0 0.0
    %7310 = vmatprep.subr.mxu0 0.0
    %7311 = vmatpush2.msra.mxu0 0.0
    %7312 = vmatprep.subr.mxu0 0.0
    %7313 = vmatpush2.msra.mxu0 0.0
    %7314 = vmatprep.subr.mxu0 0.0
    %7315 = vmatpush2.msra.mxu0 0.0
    %7316 = vmatprep.subr.mxu0 0.0
    %7317 = vmatpush2.msra.mxu0 0.0
    %7318 = vmatprep.subr.mxu0 0.0
    %7319 = vmatpush2.msra.mxu0 0.0
    %7320 = vmatprep.subr.mxu0 0.0
    %7321 = vmatpush2.msra.mxu0 0.0
    %7322 = vmatprep.subr.mxu0 0.0
    %7323 = vmatpush2.msra.mxu0 0.0
    %7324 = vmatprep.subr.mxu0 0.0
    %7325 = vmatpush2.msra.mxu0 0.0
    %7326 = vmatprep.subr.mxu0 0.0
    %7327 = vmatpush2.msra.mxu0 0.0
    %7328 = vmatprep.subr.mxu0 0.0
    %7329 = vmatpush2.msra.mxu0 0.0
    %7330 = vmatprep.subr.mxu0 0.0
    %7331 = vmatpush2.msra.mxu0 0.0
    %7332 = vmatprep.subr.mxu0 0.0
    %7333 = vmatpush2.msra.mxu0 0.0
    %7334 = vmatprep.subr.mxu0 0.0
    %7335 = vmatpush2.msra.mxu0 0.0
    %7336 = vmatprep.subr.mxu0 0.0
    %7337 = vmatpush2.msra.mxu0 0.0
    %7338 = vmatprep.subr.mxu0 0.0
    %7339 = vmatpush2.msra.mxu0 0.0
    %7340 = vmatprep.mubr.f32.mxu0 0.0
    %7341 = vmatmul.mubr.f32.gmra.mxu0 %v7200
    %v7342 = vpop.f32.mrf.mxu0
    %v7343 = vadd.f32 0.0, %v7342
    %v7344 = vpop.f32.mrf.mxu0
    %v7345 = vadd.f32 0.0, %v7344
    %7346 = vdwg.mxu0
    %7347 = vmatprep.subr.mxu0 %v3245
    %7348 = vmatpush1.msra.mxu0 %v3244
    %7349 = vmatprep.subr.mxu0 %v3241
    %7350 = vmatpush1.msra.mxu0 %v3240
    %7351 = vmatprep.subr.mxu0 %v3237
    %7352 = vmatpush1.msra.mxu0 %v3236
    %7353 = vmatprep.subr.mxu0 %v3233
    %7354 = vmatpush1.msra.mxu0 %v3232
    %7355 = vmatprep.subr.mxu0 %v3229
    %7356 = vmatpush1.msra.mxu0 %v3228
    %7357 = vmatprep.subr.mxu0 %v3225
    %7358 = vmatpush1.msra.mxu0 %v3224
    %7359 = vmatprep.subr.mxu0 %v3221
    %7360 = vmatpush1.msra.mxu0 %v3220
    %7361 = vmatprep.subr.mxu0 %v3217
    %7362 = vmatpush1.msra.mxu0 %v3216
    %7363 = vmatprep.subr.mxu0 %v3213
    %7364 = vmatpush1.msra.mxu0 %v3212
    %7365 = vmatprep.subr.mxu0 %v3209
    %7366 = vmatpush1.msra.mxu0 %v3208
    %7367 = vmatprep.subr.mxu0 %v3205
    %7368 = vmatpush1.msra.mxu0 %v3204
    %7369 = vmatprep.subr.mxu0 %v3201
    %7370 = vmatpush1.msra.mxu0 %v3200
    %7371 = vmatprep.subr.mxu0 %v3197
    %7372 = vmatpush1.msra.mxu0 %v3196
    %7373 = vmatprep.subr.mxu0 %v3193
    %7374 = vmatpush1.msra.mxu0 %v3192
    %7375 = vmatprep.subr.mxu0 %v3189
    %7376 = vmatpush1.msra.mxu0 %v3188
    %7377 = vmatprep.subr.mxu0 %v3185
    %7378 = vmatpush1.msra.mxu0 %v3184
    %7379 = vmatprep.subr.mxu0 0.0
    %7380 = vmatpush2.msra.mxu0 0.0
    %7381 = vmatprep.subr.mxu0 0.0
    %7382 = vmatpush2.msra.mxu0 0.0
    %7383 = vmatprep.subr.mxu0 0.0
    %7384 = vmatpush2.msra.mxu0 0.0
    %7385 = vmatprep.subr.mxu0 0.0
    %7386 = vmatpush2.msra.mxu0 0.0
    %7387 = vmatprep.subr.mxu0 0.0
    %7388 = vmatpush2.msra.mxu0 0.0
    %7389 = vmatprep.subr.mxu0 0.0
    %7390 = vmatpush2.msra.mxu0 0.0
    %7391 = vmatprep.subr.mxu0 0.0
    %7392 = vmatpush2.msra.mxu0 0.0
    %7393 = vmatprep.subr.mxu0 0.0
    %7394 = vmatpush2.msra.mxu0 0.0
    %7395 = vmatprep.subr.mxu0 0.0
    %7396 = vmatpush2.msra.mxu0 0.0
    %7397 = vmatprep.subr.mxu0 0.0
    %7398 = vmatpush2.msra.mxu0 0.0
    %7399 = vmatprep.subr.mxu0 0.0
    %7400 = vmatpush2.msra.mxu0 0.0
    %7401 = vmatprep.subr.mxu0 0.0
    %7402 = vmatpush2.msra.mxu0 0.0
    %7403 = vmatprep.subr.mxu0 0.0
    %7404 = vmatpush2.msra.mxu0 0.0
    %7405 = vmatprep.subr.mxu0 0.0
    %7406 = vmatpush2.msra.mxu0 0.0
    %7407 = vmatprep.subr.mxu0 0.0
    %7408 = vmatpush2.msra.mxu0 0.0
    %7409 = vmatprep.subr.mxu0 0.0
    %7410 = vmatpush2.msra.mxu0 0.0
    %7411 = vmatprep.mubr.f32.mxu0 0.0
    %7412 = vmatmul.mubr.f32.gmra.mxu0 %v7029
    %v7413 = vpop.f32.mrf.mxu0
    %v7414 = vadd.f32 0.0, %v7413
    %v7415 = vpop.f32.mrf.mxu0
    %v7416 = vadd.f32 0.0, %v7415
    %7417 = vdwg.mxu0
    %7418 = vmatprep.subr.mxu0 %v3247
    %7419 = vmatpush1.msra.mxu0 %v3246
    %7420 = vmatprep.subr.mxu0 %v3243
    %7421 = vmatpush1.msra.mxu0 %v3242
    %7422 = vmatprep.subr.mxu0 %v3239
    %7423 = vmatpush1.msra.mxu0 %v3238
    %7424 = vmatprep.subr.mxu0 %v3235
    %7425 = vmatpush1.msra.mxu0 %v3234
    %7426 = vmatprep.subr.mxu0 %v3231
    %7427 = vmatpush1.msra.mxu0 %v3230
    %7428 = vmatprep.subr.mxu0 %v3227
    %7429 = vmatpush1.msra.mxu0 %v3226
    %7430 = vmatprep.subr.mxu0 %v3223
    %7431 = vmatpush1.msra.mxu0 %v3222
    %7432 = vmatprep.subr.mxu0 %v3219
    %7433 = vmatpush1.msra.mxu0 %v3218
    %7434 = vmatprep.subr.mxu0 %v3215
    %7435 = vmatpush1.msra.mxu0 %v3214
    %7436 = vmatprep.subr.mxu0 %v3211
    %7437 = vmatpush1.msra.mxu0 %v3210
    %7438 = vmatprep.subr.mxu0 %v3207
    %7439 = vmatpush1.msra.mxu0 %v3206
    %7440 = vmatprep.subr.mxu0 %v3203
    %7441 = vmatpush1.msra.mxu0 %v3202
    %7442 = vmatprep.subr.mxu0 %v3199
    %7443 = vmatpush1.msra.mxu0 %v3198
    %7444 = vmatprep.subr.mxu0 %v3195
    %7445 = vmatpush1.msra.mxu0 %v3194
    %7446 = vmatprep.subr.mxu0 %v3191
    %7447 = vmatpush1.msra.mxu0 %v3190
    %7448 = vmatprep.subr.mxu0 %v3187
    %7449 = vmatpush1.msra.mxu0 %v3186
    %7450 = vmatprep.subr.mxu0 0.0
    %7451 = vmatpush2.msra.mxu0 0.0
    %7452 = vmatprep.subr.mxu0 0.0
    %7453 = vmatpush2.msra.mxu0 0.0
    %7454 = vmatprep.subr.mxu0 0.0
    %7455 = vmatpush2.msra.mxu0 0.0
    %7456 = vmatprep.subr.mxu0 0.0
    %7457 = vmatpush2.msra.mxu0 0.0
    %7458 = vmatprep.subr.mxu0 0.0
    %7459 = vmatpush2.msra.mxu0 0.0
    %7460 = vmatprep.subr.mxu0 0.0
    %7461 = vmatpush2.msra.mxu0 0.0
    %7462 = vmatprep.subr.mxu0 0.0
    %7463 = vmatpush2.msra.mxu0 0.0
    %7464 = vmatprep.subr.mxu0 0.0
    %7465 = vmatpush2.msra.mxu0 0.0
    %7466 = vmatprep.subr.mxu0 0.0
    %7467 = vmatpush2.msra.mxu0 0.0
    %7468 = vmatprep.subr.mxu0 0.0
    %7469 = vmatpush2.msra.mxu0 0.0
    %7470 = vmatprep.subr.mxu0 0.0
    %7471 = vmatpush2.msra.mxu0 0.0
    %7472 = vmatprep.subr.mxu0 0.0
    %7473 = vmatpush2.msra.mxu0 0.0
    %7474 = vmatprep.subr.mxu0 0.0
    %7475 = vmatpush2.msra.mxu0 0.0
    %7476 = vmatprep.subr.mxu0 0.0
    %7477 = vmatpush2.msra.mxu0 0.0
    %7478 = vmatprep.subr.mxu0 0.0
    %7479 = vmatpush2.msra.mxu0 0.0
    %7480 = vmatprep.subr.mxu0 0.0
    %7481 = vmatpush2.msra.mxu0 0.0
    %7482 = vmatprep.mubr.f32.mxu0 0.0
    %7483 = vmatmul.mubr.f32.gmra.mxu0 %v7029
    %v7484 = vpop.f32.mrf.mxu0
    %v7485 = vadd.f32 0.0, %v7484
    %v7486 = vpop.f32.mrf.mxu0
    %v7487 = vadd.f32 0.0, %v7486
    %7488 = vdwg.mxu0
    %v7493 = vrot.slane %v7414, 1
    %v7494 = vrot.slane %v7416, 1
    %v7495 = vrot.slane %v7485, 1
    %v7496 = vrot.slane %v7487, 1
    %v7497 = vrot.slane %v7414, 2
    %v7498 = vrot.slane %v7416, 2
    %v7499 = vrot.slane %v7485, 2
    %v7500 = vrot.slane %v7487, 2
    %v7509 = vadd.f32 %v3084, %v7493
    %v7510 = vadd.f32 %v3086, %v7494
    %v7511 = vadd.f32 %v3161, %v7495
    %v7512 = vadd.f32 %v3163, %v7496
    %v7513 = vadd.f32 %v3090, %v7497
    %v7514 = vadd.f32 %v3092, %v7498
    %v7515 = vadd.f32 %v3167, %v7499
    %v7516 = vadd.f32 %v3169, %v7500
    %v7517 = vxor.u32 %v7509, 2147483648
    %v7518 = vxor.u32 %v7510, 2147483648
    %v7519 = vxor.u32 %v7511, 2147483648
    %v7520 = vxor.u32 %v7513, 2147483648
    %v7521 = vxor.u32 %v7514, 2147483648
    %v7522 = vxor.u32 %v7515, 2147483648
    %v7523 = vmul.f32 %v7517, 1.442695
    %v7524 = vpow.pop %v7523
    %v7525 = vmul.f32 %v7518, 1.442695
    %v7526 = vpow.pop %v7525
    %v7527 = vmul.f32 %v7519, 1.442695
    %v7528 = vpow.pop %v7527
    %v7529 = vmul.f32 %v7520, 1.442695
    %v7530 = vpow.pop %v7529
    %v7531 = vmul.f32 %v7521, 1.442695
    %v7532 = vpow.pop %v7531
    %v7533 = vmul.f32 %v7522, 1.442695
    %v7534 = vpow.pop %v7533
    %v7535 = vadd.f32 %v7524, 1.0
    %v7536 = vadd.f32 %v7526, 1.0
    %v7537 = vadd.f32 %v7528, 1.0
    %v7538 = vadd.f32 %v7530, 1.0
    %v7539 = vadd.f32 %v7532, 1.0
    %v7540 = vadd.f32 %v7534, 1.0
    %v7541 = vrcp.pop %v7535
    %v7542 = vmul.f32 1.0, %v7541
    %v7543 = vrcp.pop %v7536
    %v7544 = vmul.f32 1.0, %v7543
    %v7545 = vrcp.pop %v7537
    %v7546 = vmul.f32 1.0, %v7545
    %v7547 = vrcp.pop %v7538
    %v7548 = vmul.f32 1.0, %v7547
    %v7549 = vrcp.pop %v7539
    %v7550 = vmul.f32 1.0, %v7549
    %v7551 = vrcp.pop %v7540
    %v7552 = vmul.f32 1.0, %v7551
    %v7553 = vtanh.pop %v7512
    %v7554 = vtanh.pop %v7516
    %v7557 = vrot.slane %v7019, 7
    %v7558 = vrot.slane %v7020, 7
    %v7561 = vmul.f32 %v7544, %v7557
    %v7562 = vmul.f32 %v7550, %v7558
    %v7563 = vmul.f32 %v7542, %v7553
    %v7564 = vmul.f32 %v7548, %v7554
    %v7565 = vadd.f32 %v7561, %v7563
    %v7566 = vadd.f32 %v7562, %v7564
    %v7567 = vtanh.pop %v7565
    %v7568 = vtanh.pop %v7566
    %v7569 = vmul.f32 %v7546, %v7567
    %v7570 = vmul.f32 %v7552, %v7568
    %v7573 = vrot.slane %v7569, 7
    %v7574 = vrot.slane %v7570, 6
    %v7575 = vsel %vm3757, %v7574, %v7573
    %7577 = vmatprep.subr.mxu0 %v3309
    %7578 = vmatpush1.msra.mxu0 %v3308
    %7579 = vmatprep.subr.mxu0 %v3305
    %7580 = vmatpush1.msra.mxu0 %v3304
    %7581 = vmatprep.subr.mxu0 %v3301
    %7582 = vmatpush1.msra.mxu0 %v3300
    %7583 = vmatprep.subr.mxu0 %v3297
    %7584 = vmatpush1.msra.mxu0 %v3296
    %7585 = vmatprep.subr.mxu0 %v3293
    %7586 = vmatpush1.msra.mxu0 %v3292
    %7587 = vmatprep.subr.mxu0 %v3289
    %7588 = vmatpush1.msra.mxu0 %v3288
    %7589 = vmatprep.subr.mxu0 %v3285
    %7590 = vmatpush1.msra.mxu0 %v3284
    %7591 = vmatprep.subr.mxu0 %v3281
    %7592 = vmatpush1.msra.mxu0 %v3280
    %7593 = vmatprep.subr.mxu0 %v3277
    %7594 = vmatpush1.msra.mxu0 %v3276
    %7595 = vmatprep.subr.mxu0 %v3273
    %7596 = vmatpush1.msra.mxu0 %v3272
    %7597 = vmatprep.subr.mxu0 %v3269
    %7598 = vmatpush1.msra.mxu0 %v3268
    %7599 = vmatprep.subr.mxu0 %v3265
    %7600 = vmatpush1.msra.mxu0 %v3264
    %7601 = vmatprep.subr.mxu0 %v3261
    %7602 = vmatpush1.msra.mxu0 %v3260
    %7603 = vmatprep.subr.mxu0 %v3257
    %7604 = vmatpush1.msra.mxu0 %v3256
    %7605 = vmatprep.subr.mxu0 %v3253
    %7606 = vmatpush1.msra.mxu0 %v3252
    %7607 = vmatprep.subr.mxu0 %v3249
    %7608 = vmatpush1.msra.mxu0 %v3248
    %7609 = vmatprep.subr.mxu0 0.0
    %7610 = vmatpush2.msra.mxu0 0.0
    %7611 = vmatprep.subr.mxu0 0.0
    %7612 = vmatpush2.msra.mxu0 0.0
    %7613 = vmatprep.subr.mxu0 0.0
    %7614 = vmatpush2.msra.mxu0 0.0
    %7615 = vmatprep.subr.mxu0 0.0
    %7616 = vmatpush2.msra.mxu0 0.0
    %7617 = vmatprep.subr.mxu0 0.0
    %7618 = vmatpush2.msra.mxu0 0.0
    %7619 = vmatprep.subr.mxu0 0.0
    %7620 = vmatpush2.msra.mxu0 0.0
    %7621 = vmatprep.subr.mxu0 0.0
    %7622 = vmatpush2.msra.mxu0 0.0
    %7623 = vmatprep.subr.mxu0 0.0
    %7624 = vmatpush2.msra.mxu0 0.0
    %7625 = vmatprep.subr.mxu0 0.0
    %7626 = vmatpush2.msra.mxu0 0.0
    %7627 = vmatprep.subr.mxu0 0.0
    %7628 = vmatpush2.msra.mxu0 0.0
    %7629 = vmatprep.subr.mxu0 0.0
    %7630 = vmatpush2.msra.mxu0 0.0
    %7631 = vmatprep.subr.mxu0 0.0
    %7632 = vmatpush2.msra.mxu0 0.0
    %7633 = vmatprep.subr.mxu0 0.0
    %7634 = vmatpush2.msra.mxu0 0.0
    %7635 = vmatprep.subr.mxu0 0.0
    %7636 = vmatpush2.msra.mxu0 0.0
    %7637 = vmatprep.subr.mxu0 0.0
    %7638 = vmatpush2.msra.mxu0 0.0
    %7639 = vmatprep.subr.mxu0 0.0
    %7640 = vmatpush2.msra.mxu0 0.0
    %7641 = vmatprep.mubr.f32.mxu0 0.0
    %7642 = vmatmul.mubr.f32.gmra.mxu0 %v7575
    %v7643 = vpop.f32.mrf.mxu0
    %v7644 = vadd.f32 %v7272, %v7643
    %v7645 = vpop.f32.mrf.mxu0
    %v7646 = vadd.f32 %v7274, %v7645
    %7647 = vdwg.mxu0
    %7648 = vmatprep.subr.mxu0 %v3311
    %7649 = vmatpush1.msra.mxu0 %v3310
    %7650 = vmatprep.subr.mxu0 %v3307
    %7651 = vmatpush1.msra.mxu0 %v3306
    %7652 = vmatprep.subr.mxu0 %v3303
    %7653 = vmatpush1.msra.mxu0 %v3302
    %7654 = vmatprep.subr.mxu0 %v3299
    %7655 = vmatpush1.msra.mxu0 %v3298
    %7656 = vmatprep.subr.mxu0 %v3295
    %7657 = vmatpush1.msra.mxu0 %v3294
    %7658 = vmatprep.subr.mxu0 %v3291
    %7659 = vmatpush1.msra.mxu0 %v3290
    %7660 = vmatprep.subr.mxu0 %v3287
    %7661 = vmatpush1.msra.mxu0 %v3286
    %7662 = vmatprep.subr.mxu0 %v3283
    %7663 = vmatpush1.msra.mxu0 %v3282
    %7664 = vmatprep.subr.mxu0 %v3279
    %7665 = vmatpush1.msra.mxu0 %v3278
    %7666 = vmatprep.subr.mxu0 %v3275
    %7667 = vmatpush1.msra.mxu0 %v3274
    %7668 = vmatprep.subr.mxu0 %v3271
    %7669 = vmatpush1.msra.mxu0 %v3270
    %7670 = vmatprep.subr.mxu0 %v3267
    %7671 = vmatpush1.msra.mxu0 %v3266
    %7672 = vmatprep.subr.mxu0 %v3263
    %7673 = vmatpush1.msra.mxu0 %v3262
    %7674 = vmatprep.subr.mxu0 %v3259
    %7675 = vmatpush1.msra.mxu0 %v3258
    %7676 = vmatprep.subr.mxu0 %v3255
    %7677 = vmatpush1.msra.mxu0 %v3254
    %7678 = vmatprep.subr.mxu0 %v3251
    %7679 = vmatpush1.msra.mxu0 %v3250
    %7680 = vmatprep.subr.mxu0 0.0
    %7681 = vmatpush2.msra.mxu0 0.0
    %7682 = vmatprep.subr.mxu0 0.0
    %7683 = vmatpush2.msra.mxu0 0.0
    %7684 = vmatprep.subr.mxu0 0.0
    %7685 = vmatpush2.msra.mxu0 0.0
    %7686 = vmatprep.subr.mxu0 0.0
    %7687 = vmatpush2.msra.mxu0 0.0
    %7688 = vmatprep.subr.mxu0 0.0
    %7689 = vmatpush2.msra.mxu0 0.0
    %7690 = vmatprep.subr.mxu0 0.0
    %7691 = vmatpush2.msra.mxu0 0.0
    %7692 = vmatprep.subr.mxu0 0.0
    %7693 = vmatpush2.msra.mxu0 0.0
    %7694 = vmatprep.subr.mxu0 0.0
    %7695 = vmatpush2.msra.mxu0 0.0
    %7696 = vmatprep.subr.mxu0 0.0
    %7697 = vmatpush2.msra.mxu0 0.0
    %7698 = vmatprep.subr.mxu0 0.0
    %7699 = vmatpush2.msra.mxu0 0.0
    %7700 = vmatprep.subr.mxu0 0.0
    %7701 = vmatpush2.msra.mxu0 0.0
    %7702 = vmatprep.subr.mxu0 0.0
    %7703 = vmatpush2.msra.mxu0 0.0
    %7704 = vmatprep.subr.mxu0 0.0
    %7705 = vmatpush2.msra.mxu0 0.0
    %7706 = vmatprep.subr.mxu0 0.0
    %7707 = vmatpush2.msra.mxu0 0.0
    %7708 = vmatprep.subr.mxu0 0.0
    %7709 = vmatpush2.msra.mxu0 0.0
    %7710 = vmatprep.subr.mxu0 0.0
    %7711 = vmatpush2.msra.mxu0 0.0
    %7712 = vmatprep.mubr.f32.mxu0 0.0
    %7713 = vmatmul.mubr.f32.gmra.mxu0 %v7575
    %v7714 = vpop.f32.mrf.mxu0
    %v7715 = vadd.f32 %v7343, %v7714
    %v7716 = vpop.f32.mrf.mxu0
    %v7717 = vadd.f32 %v7345, %v7716
    %7718 = vdwg.mxu0
    %v7719 = vadd.f32 %v7644, %v3381
    %v7720 = vadd.f32 %v7646, %v3385
    %v7721 = vadd.f32 %v7715, %v3389
    %v7722 = vadd.f32 %v7717, %v3393
    %v7723 = vxor.u32 %v7719, 2147483648
    %v7724 = vxor.u32 %v7720, 2147483648
    %v7725 = vxor.u32 %v7721, 2147483648
    %v7726 = vmul.f32 %v7723, 1.442695
    %v7727 = vpow.pop %v7726
    %v7728 = vmul.f32 %v7724, 1.442695
    %v7729 = vpow.pop %v7728
    %v7730 = vmul.f32 %v7725, 1.442695
    %v7731 = vpow.pop %v7730
    %v7732 = vadd.f32 %v7727, 1.0
    %v7733 = vadd.f32 %v7729, 1.0
    %v7734 = vadd.f32 %v7731, 1.0
    %v7735 = vrcp.pop %v7732
    %v7736 = vmul.f32 1.0, %v7735
    %v7737 = vrcp.pop %v7733
    %v7738 = vmul.f32 1.0, %v7737
    %v7739 = vrcp.pop %v7734
    %v7740 = vmul.f32 1.0, %v7739
    %v7741 = vtanh.pop %v7722
    %v7742 = vmul.f32 %v7738, %v7198
    %v7743 = vmul.f32 %v7736, %v7741
    %v7744 = vadd.f32 %v7742, %v7743
    %v7745 = vtanh.pop %v7744
    %v7746 = vmul.f32 %v7740, %v7745
    %vm7747 = vcmp.eq.f32.partialorder %v3183, 7.0
    %v7748 = vsel %vm7747, 1, 0
    %vm7749 = vcmp.eq.s32.totalorder %v7748, 1
    %v7750 = vsel %vm7749, %v7746, %v7204
    %v7751 = vld [vmem:[%s13] sm:$0xff]
    %v7752 = vld [vmem:[%s13 + $0x8] sm:$0xff]
    %v7753 = vld [vmem:[%s13 + $0x10] sm:$0xff]
    %v7754 = vld [vmem:[%s13 + $0x18] sm:$0xff]
    %v7755 = vld [vmem:[%s13 + $0x20] sm:$0xff]
    %v7756 = vld [vmem:[%s13 + $0x28] sm:$0xff]
    %v7757 = vld [vmem:[%s13 + $0x30] sm:$0xff]
    %v7758 = vld [vmem:[%s13 + $0x38] sm:$0xff]
    %v7759 = vld [vmem:[%s14] sm:$0x1]
    %v7761 = vlaneseq
    %v7762 = vshrl.u32 %v7761, 7
    %v7763 = vsub.s32 0, %v7762
    %v7764 = vrot.slane %v7759, %v7763
    %v7767 = vsel %vm2644, %v7750, 0
    %7769 = vmatprep.subr.mxu0 0.0
    %7770 = vmatpush1.msra.mxu0 0.0
    %7771 = vmatprep.subr.mxu0 0.0
    %7772 = vmatpush1.msra.mxu0 0.0
    %7773 = vmatprep.subr.mxu0 0.0
    %7774 = vmatpush1.msra.mxu0 0.0
    %7775 = vmatprep.subr.mxu0 0.0
    %7776 = vmatpush1.msra.mxu0 0.0
    %7777 = vmatprep.subr.mxu0 0.0
    %7778 = vmatpush1.msra.mxu0 0.0
    %7779 = vmatprep.subr.mxu0 0.0
    %7780 = vmatpush1.msra.mxu0 0.0
    %7781 = vmatprep.subr.mxu0 0.0
    %7782 = vmatpush1.msra.mxu0 0.0
    %7783 = vmatprep.subr.mxu0 0.0
    %7784 = vmatpush1.msra.mxu0 0.0
    %7785 = vmatprep.subr.mxu0 0.0
    %7786 = vmatpush1.msra.mxu0 %v7758
    %7787 = vmatprep.subr.mxu0 0.0
    %7788 = vmatpush1.msra.mxu0 %v7757
    %7789 = vmatprep.subr.mxu0 0.0
    %7790 = vmatpush1.msra.mxu0 %v7756
    %7791 = vmatprep.subr.mxu0 0.0
    %7792 = vmatpush1.msra.mxu0 %v7755
    %7793 = vmatprep.subr.mxu0 0.0
    %7794 = vmatpush1.msra.mxu0 %v7754
    %7795 = vmatprep.subr.mxu0 0.0
    %7796 = vmatpush1.msra.mxu0 %v7753
    %7797 = vmatprep.subr.mxu0 0.0
    %7798 = vmatpush1.msra.mxu0 %v7752
    %7799 = vmatprep.subr.mxu0 0.0
    %7800 = vmatpush1.msra.mxu0 %v7751
    %7801 = vmatprep.subr.mxu0 0.0
    %7802 = vmatpush2.msra.mxu0 0.0
    %7803 = vmatprep.subr.mxu0 0.0
    %7804 = vmatpush2.msra.mxu0 0.0
    %7805 = vmatprep.subr.mxu0 0.0
    %7806 = vmatpush2.msra.mxu0 0.0
    %7807 = vmatprep.subr.mxu0 0.0
    %7808 = vmatpush2.msra.mxu0 0.0
    %7809 = vmatprep.subr.mxu0 0.0
    %7810 = vmatpush2.msra.mxu0 0.0
    %7811 = vmatprep.subr.mxu0 0.0
    %7812 = vmatpush2.msra.mxu0 0.0
    %7813 = vmatprep.subr.mxu0 0.0
    %7814 = vmatpush2.msra.mxu0 0.0
    %7815 = vmatprep.subr.mxu0 0.0
    %7816 = vmatpush2.msra.mxu0 0.0
    %7817 = vmatprep.subr.mxu0 0.0
    %7818 = vmatpush2.msra.mxu0 0.0
    %7819 = vmatprep.subr.mxu0 0.0
    %7820 = vmatpush2.msra.mxu0 0.0
    %7821 = vmatprep.subr.mxu0 0.0
    %7822 = vmatpush2.msra.mxu0 0.0
    %7823 = vmatprep.subr.mxu0 0.0
    %7824 = vmatpush2.msra.mxu0 0.0
    %7825 = vmatprep.subr.mxu0 0.0
    %7826 = vmatpush2.msra.mxu0 0.0
    %7827 = vmatprep.subr.mxu0 0.0
    %7828 = vmatpush2.msra.mxu0 0.0
    %7829 = vmatprep.subr.mxu0 0.0
    %7830 = vmatpush2.msra.mxu0 0.0
    %7831 = vmatprep.subr.mxu0 0.0
    %7832 = vmatpush2.msra.mxu0 0.0
    %7833 = vmatprep.mubr.f32.mxu0 0.0
    %7834 = vmatmul.mubr.f32.gmra.mxu0 %v7767
    %v7835 = vpop.f32.mrf.mxu0
    %v7836 = vadd.f32 %v7764, %v7835
    %v7837 = vpop.f32.mrf.mxu0
    %7838 = vdwg.mxu0
    %v7839 = vtanh.pop %v2724
    %v7840 = vtanh.pop %v2729
    %v7841 = vtanh.pop %v2734
    %v7842 = vtanh.pop %v2739
    %v7843 = vld [vmem:[%s15] sm:$0xff]
    %v7844 = vld [vmem:[%s15 + $0x8] sm:$0xff]
    %v7845 = vld [vmem:[%s15 + $0x10] sm:$0xff]
    %v7846 = vld [vmem:[%s15 + $0x18] sm:$0xff]
    %v7847 = vld [vmem:[%s15 + $0x20] sm:$0xff]
    %v7848 = vld [vmem:[%s15 + $0x28] sm:$0xff]
    %v7849 = vld [vmem:[%s15 + $0x30] sm:$0xff]
    %v7850 = vld [vmem:[%s15 + $0x38] sm:$0xff]
    %v7852 = vsel %vm2644, %v7839, 0
    %v7855 = vsel %vm2644, %v7840, 0
    %v7858 = vsel %vm2644, %v7841, 0
    %v7861 = vsel %vm2644, %v7842, 0
    %7863 = vmatprep.subr.mxu0 0.0
    %7864 = vmatpush1.msra.mxu0 0.0
    %7865 = vmatprep.subr.mxu0 0.0
    %7866 = vmatpush1.msra.mxu0 0.0
    %7867 = vmatprep.subr.mxu0 0.0
    %7868 = vmatpush1.msra.mxu0 0.0
    %7869 = vmatprep.subr.mxu0 0.0
    %7870 = vmatpush1.msra.mxu0 0.0
    %7871 = vmatprep.subr.mxu0 0.0
    %7872 = vmatpush1.msra.mxu0 0.0
    %7873 = vmatprep.subr.mxu0 0.0
    %7874 = vmatpush1.msra.mxu0 0.0
    %7875 = vmatprep.subr.mxu0 0.0
    %7876 = vmatpush1.msra.mxu0 0.0
    %7877 = vmatprep.subr.mxu0 0.0
    %7878 = vmatpush1.msra.mxu0 0.0
    %7879 = vmatprep.subr.mxu0 0.0
    %7880 = vmatpush1.msra.mxu0 %v7850
    %7881 = vmatprep.subr.mxu0 0.0
    %7882 = vmatpush1.msra.mxu0 %v7849
    %7883 = vmatprep.subr.mxu0 0.0
    %7884 = vmatpush1.msra.mxu0 %v7848
    %7885 = vmatprep.subr.mxu0 0.0
    %7886 = vmatpush1.msra.mxu0 %v7847
    %7887 = vmatprep.subr.mxu0 0.0
    %7888 = vmatpush1.msra.mxu0 %v7846
    %7889 = vmatprep.subr.mxu0 0.0
    %7890 = vmatpush1.msra.mxu0 %v7845
    %7891 = vmatprep.subr.mxu0 0.0
    %7892 = vmatpush1.msra.mxu0 %v7844
    %7893 = vmatprep.subr.mxu0 0.0
    %7894 = vmatpush1.msra.mxu0 %v7843
    %7895 = vmatprep.subr.mxu0 0.0
    %7896 = vmatpush2.msra.mxu0 0.0
    %7897 = vmatprep.subr.mxu0 0.0
    %7898 = vmatpush2.msra.mxu0 0.0
    %7899 = vmatprep.subr.mxu0 0.0
    %7900 = vmatpush2.msra.mxu0 0.0
    %7901 = vmatprep.subr.mxu0 0.0
    %7902 = vmatpush2.msra.mxu0 0.0
    %7903 = vmatprep.subr.mxu0 0.0
    %7904 = vmatpush2.msra.mxu0 0.0
    %7905 = vmatprep.subr.mxu0 0.0
    %7906 = vmatpush2.msra.mxu0 0.0
    %7907 = vmatprep.subr.mxu0 0.0
    %7908 = vmatpush2.msra.mxu0 0.0
    %7909 = vmatprep.subr.mxu0 0.0
    %7910 = vmatpush2.msra.mxu0 0.0
    %7911 = vmatprep.subr.mxu0 0.0
    %7912 = vmatpush2.msra.mxu0 0.0
    %7913 = vmatprep.subr.mxu0 0.0
    %7914 = vmatpush2.msra.mxu0 0.0
    %7915 = vmatprep.subr.mxu0 0.0
    %7916 = vmatpush2.msra.mxu0 0.0
    %7917 = vmatprep.subr.mxu0 0.0
    %7918 = vmatpush2.msra.mxu0 0.0
    %7919 = vmatprep.subr.mxu0 0.0
    %7920 = vmatpush2.msra.mxu0 0.0
    %7921 = vmatprep.subr.mxu0 0.0
    %7922 = vmatpush2.msra.mxu0 0.0
    %7923 = vmatprep.subr.mxu0 0.0
    %7924 = vmatpush2.msra.mxu0 0.0
    %7925 = vmatprep.subr.mxu0 0.0
    %7926 = vmatpush2.msra.mxu0 0.0
    %7927 = vmatprep.mubr.f32.mxu0 0.0
    %7928 = vmatmul.mubr.f32.gmra.mxu0 %v7852
    %v7929 = vpop.f32.mrf.mxu0
    %v7930 = vadd.f32 0.0, %v7929
    %v7931 = vpop.f32.mrf.mxu0
    %7932 = vmatprep.mubr.f32.mxu0 0.0
    %7933 = vmatmul.mubr.f32.gmra.mxu0 %v7855
    %v7934 = vpop.f32.mrf.mxu0
    %v7935 = vadd.f32 0.0, %v7934
    %v7936 = vpop.f32.mrf.mxu0
    %7937 = vmatprep.mubr.f32.mxu0 0.0
    %7938 = vmatmul.mubr.f32.gmra.mxu0 %v7858
    %v7939 = vpop.f32.mrf.mxu0
    %v7940 = vadd.f32 0.0, %v7939
    %v7941 = vpop.f32.mrf.mxu0
    %7942 = vmatprep.mubr.f32.mxu0 0.0
    %7943 = vmatmul.mubr.f32.gmra.mxu0 %v7861
    %v7944 = vpop.f32.mrf.mxu0
    %v7945 = vadd.f32 0.0, %v7944
    %v7946 = vpop.f32.mrf.mxu0
    %7947 = vdwg.mxu0
    %v7948 = vtanh.pop %v7836
    %v7949 = vld [vmem:[%s16] sm:$0xff]
    %v7950 = vld [vmem:[%s16 + $0x8] sm:$0xff]
    %v7951 = vld [vmem:[%s16 + $0x10] sm:$0xff]
    %v7952 = vld [vmem:[%s16 + $0x18] sm:$0xff]
    %v7953 = vld [vmem:[%s16 + $0x20] sm:$0xff]
    %v7954 = vld [vmem:[%s16 + $0x28] sm:$0xff]
    %v7955 = vld [vmem:[%s16 + $0x30] sm:$0xff]
    %v7956 = vld [vmem:[%s16 + $0x38] sm:$0xff]
    %v7958 = vsel %vm2644, %v7948, 0
    %7960 = vmatprep.subr.mxu0 0.0
    %7961 = vmatpush1.msra.mxu0 0.0
    %7962 = vmatprep.subr.mxu0 0.0
    %7963 = vmatpush1.msra.mxu0 0.0
    %7964 = vmatprep.subr.mxu0 0.0
    %7965 = vmatpush1.msra.mxu0 0.0
    %7966 = vmatprep.subr.mxu0 0.0
    %7967 = vmatpush1.msra.mxu0 0.0
    %7968 = vmatprep.subr.mxu0 0.0
    %7969 = vmatpush1.msra.mxu0 0.0
    %7970 = vmatprep.subr.mxu0 0.0
    %7971 = vmatpush1.msra.mxu0 0.0
    %7972 = vmatprep.subr.mxu0 0.0
    %7973 = vmatpush1.msra.mxu0 0.0
    %7974 = vmatprep.subr.mxu0 0.0
    %7975 = vmatpush1.msra.mxu0 0.0
    %7976 = vmatprep.subr.mxu0 0.0
    %7977 = vmatpush1.msra.mxu0 %v7956
    %7978 = vmatprep.subr.mxu0 0.0
    %7979 = vmatpush1.msra.mxu0 %v7955
    %7980 = vmatprep.subr.mxu0 0.0
    %7981 = vmatpush1.msra.mxu0 %v7954
    %7982 = vmatprep.subr.mxu0 0.0
    %7983 = vmatpush1.msra.mxu0 %v7953
    %7984 = vmatprep.subr.mxu0 0.0
    %7985 = vmatpush1.msra.mxu0 %v7952
    %7986 = vmatprep.subr.mxu0 0.0
    %7987 = vmatpush1.msra.mxu0 %v7951
    %7988 = vmatprep.subr.mxu0 0.0
    %7989 = vmatpush1.msra.mxu0 %v7950
    %7990 = vmatprep.subr.mxu0 0.0
    %7991 = vmatpush1.msra.mxu0 %v7949
    %7992 = vmatprep.subr.mxu0 0.0
    %7993 = vmatpush2.msra.mxu0 0.0
    %7994 = vmatprep.subr.mxu0 0.0
    %7995 = vmatpush2.msra.mxu0 0.0
    %7996 = vmatprep.subr.mxu0 0.0
    %7997 = vmatpush2.msra.mxu0 0.0
    %7998 = vmatprep.subr.mxu0 0.0
    %7999 = vmatpush2.msra.mxu0 0.0
    %8000 = vmatprep.subr.mxu0 0.0
    %8001 = vmatpush2.msra.mxu0 0.0
    %8002 = vmatprep.subr.mxu0 0.0
    %8003 = vmatpush2.msra.mxu0 0.0
    %8004 = vmatprep.subr.mxu0 0.0
    %8005 = vmatpush2.msra.mxu0 0.0
    %8006 = vmatprep.subr.mxu0 0.0
    %8007 = vmatpush2.msra.mxu0 0.0
    %8008 = vmatprep.subr.mxu0 0.0
    %8009 = vmatpush2.msra.mxu0 0.0
    %8010 = vmatprep.subr.mxu0 0.0
    %8011 = vmatpush2.msra.mxu0 0.0
    %8012 = vmatprep.subr.mxu0 0.0
    %8013 = vmatpush2.msra.mxu0 0.0
    %8014 = vmatprep.subr.mxu0 0.0
    %8015 = vmatpush2.msra.mxu0 0.0
    %8016 = vmatprep.subr.mxu0 0.0
    %8017 = vmatpush2.msra.mxu0 0.0
    %8018 = vmatprep.subr.mxu0 0.0
    %8019 = vmatpush2.msra.mxu0 0.0
    %8020 = vmatprep.subr.mxu0 0.0
    %8021 = vmatpush2.msra.mxu0 0.0
    %8022 = vmatprep.subr.mxu0 0.0
    %8023 = vmatpush2.msra.mxu0 0.0
    %8024 = vmatprep.mubr.f32.mxu0 0.0
    %8025 = vmatmul.mubr.f32.gmra.mxu0 %v7958
    %v8026 = vpop.f32.mrf.mxu0
    %v8027 = vadd.f32 0.0, %v8026
    %v8028 = vpop.f32.mrf.mxu0
    %8029 = vdwg.mxu0
    %v8032 = vunpack.c.l.s4 1966171168
    %v8033 = vunpack.c.0.s8 %v8032
    %v8034 = vlaneseq
    %v8035 = vshrl.u32 %v8034, 7
    %v8036 = vsub.s32 %v8033, %v8035
    %v8037 = vrot.slane %v8027, %v8036
    %v8038 = vcombine.high %v8037, %v8037
    %v8040 = vunpack.c.l.s4 1966171168
    %v8041 = vunpack.c.0.s8 %v8040
    %v8042 = vlaneseq
    %v8043 = vshrl.u32 %v8042, 7
    %v8044 = vsub.s32 %v8041, %v8043
    %v8045 = vrot.slane %v8037, %v8044
    %v8047 = vunpack.c.l.s4 1966171168
    %v8048 = vunpack.c.0.s8 %v8047
    %v8049 = vlaneseq
    %v8050 = vshrl.u32 %v8049, 7
    %v8051 = vsub.s32 %v8048, %v8050
    %v8052 = vrot.slane %v8038, %v8051
    %v8053 = vlaneseq
    %v8054 = vshrl.u32 %v8053, 7
    %v8055 = vsub.s32 0, %v8054
    %v8056 = vrot.slane %v8045, %v8055
    %v8057 = vlaneseq
    %v8058 = vshrl.u32 %v8057, 7
    %v8059 = vsub.s32 0, %v8058
    %v8060 = vrot.slane %v8052, %v8059
    %v8063 = vadd.f32 %v7930, %v8056
    %v8064 = vadd.f32 %v7935, %v8056
    %v8065 = vadd.f32 %v7940, %v8060
    %v8066 = vadd.f32 %v7945, %v8060
    %v8067 = vld [vmem:[#allocation2] sm:$0x1]
    %v8069 = vlaneseq
    %v8070 = vshrl.u32 %v8069, 7
    %v8071 = vsub.s32 0, %v8070
    %v8072 = vrot.slane %v8067, %v8071
    %v8074 = vadd.f32 %v8063, %v8072
    %v8075 = vadd.f32 %v8064, %v8072
    %v8076 = vadd.f32 %v8065, %v8072
    %v8077 = vadd.f32 %v8066, %v8072
    %v8078 = vlaneseq
    %v8079 = vshrl.u32 %v8078, 7
    %v8080 = vadd.s32 %v8079, 8
    %vm8081 = vcmp.lt.s32.totalorder %v8079, 15
    %vm8082 = vcmp.lt.s32.totalorder %v8080, 15
    %v8083 = vsel %vm8081, %v8074, -1e+30
    %v8084 = vsel %vm8082, %v8075, -1e+30
    %v8085 = vsel %vm8081, %v8076, -1e+30
    %v8086 = vsel %vm8082, %v8077, -1e+30
    %vm8087 = vcmask 7168
    %v8088 = vsel %vm8087, %v8083, -inf
    %v8089 = vsel %vm8087, %v8084, -inf
    %v8090 = vmax.f32 %v8088, %v8089
    %v8091 = vrot.slane %v8090, 4
    %v8092 = vmax.f32 %v8090, %v8091
    %v8093 = vrot.slane %v8092, 2
    %v8094 = vmax.f32 %v8092, %v8093
    %v8095 = vrot.slane %v8094, 1
    %v8096 = vmax.f32 %v8094, %v8095
    %v8097 = vsel %vm8087, %v8085, -inf
    %v8098 = vsel %vm8087, %v8086, -inf
    %v8099 = vmax.f32 %v8097, %v8098
    %v8100 = vrot.slane %v8099, 4
    %v8101 = vmax.f32 %v8099, %v8100
    %v8102 = vrot.slane %v8101, 2
    %v8103 = vmax.f32 %v8101, %v8102
    %v8104 = vrot.slane %v8103, 1
    %v8105 = vmax.f32 %v8103, %v8104
    %v8106 = vsub.f32 %v8083, %v8096
    %v8107 = vsub.f32 %v8084, %v8096
    %v8108 = vsub.f32 %v8085, %v8105
    %v8109 = vsub.f32 %v8086, %v8105
    %v8110 = vmul.f32 %v8106, 1.442695
    %v8111 = vpow.pop %v8110
    %v8112 = vmul.f32 %v8107, 1.442695
    %v8113 = vpow.pop %v8112
    %v8114 = vmul.f32 %v8108, 1.442695
    %v8115 = vpow.pop %v8114
    %v8116 = vmul.f32 %v8109, 1.442695
    %v8117 = vpow.pop %v8116
    %v8118 = vsel %vm8087, %v8111, 0.0
    %v8119 = vsel %vm8087, %v8113, 0.0
    %v8120 = vadd.f32 %v8118, %v8119
    %v8121 = vrot.slane %v8120, 4
    %v8122 = vadd.f32 %v8120, %v8121
    %v8123 = vrot.slane %v8122, 2
    %v8124 = vadd.f32 %v8122, %v8123
    %v8125 = vrot.slane %v8124, 1
    %v8126 = vadd.f32 %v8124, %v8125
    %v8127 = vsel %vm8087, %v8115, 0.0
    %v8128 = vsel %vm8087, %v8117, 0.0
    %v8129 = vadd.f32 %v8127, %v8128
    %v8130 = vrot.slane %v8129, 4
    %v8131 = vadd.f32 %v8129, %v8130
    %v8132 = vrot.slane %v8131, 2
    %v8133 = vadd.f32 %v8131, %v8132
    %v8134 = vrot.slane %v8133, 1
    %v8135 = vadd.f32 %v8133, %v8134
    %v8136 = vrcp.pop %v8126
    %v8137 = vrcp.pop %v8135
    %v8138 = vmul.f32 %v8111, %v8136
    %v8139 = vmul.f32 %v8113, %v8136
    %v8140 = vmul.f32 %v8115, %v8137
    %v8141 = vmul.f32 %v8117, %v8137
    %8142 = vst.msk [vmem:[%s23] sm:$0xff] %vm8087, %v8138
    %8143 = vst.msk [vmem:[%s23 + $0x8] sm:$0xff] %vm8087, %v8139
    %8144 = vst.msk [vmem:[%s23 + $0x10] sm:$0xff] %vm8087, %v8140
    %8145 = vst.msk [vmem:[%s23 + $0x18] sm:$0xff] %vm8087, %v8141
    %8147 = vset.pattern.permute.xlu0 0
    %8148 = vperm.xlu0 %8147, %v8138
    %v8149 = vpop.permute.xlu0 %8148
    %8152 = vset.pattern.permute.xlu0 0
    %8153 = vperm.xlu0 %8152, %v8139
    %v8154 = vpop.permute.xlu0 %8153
    %8157 = vset.pattern.permute.xlu0 0
    %8158 = vperm.xlu0 %8157, %v8140
    %v8159 = vpop.permute.xlu0 %8158
    %8162 = vset.pattern.permute.xlu0 0
    %8163 = vperm.xlu0 %8162, %v8141
    %v8164 = vpop.permute.xlu0 %8163
    %v8166 = vmul.f32 %v8149, %v2625
    %v8167 = vmul.f32 %v8154, %v2626
    %v8168 = vmul.f32 %v8159, %v2627
    %v8169 = vmul.f32 %v8164, %v2628
    %v8170 = vsel %vm2644, %v8166, 0.0
    %v8171 = vsel %vm2644, %v8167, 0.0
    %v8172 = vadd.f32 %v8170, %v8171
    %v8173 = vrot.slane %v8172, 4
    %v8174 = vadd.f32 %v8172, %v8173
    %v8175 = vrot.slane %v8174, 2
    %v8176 = vadd.f32 %v8174, %v8175
    %v8177 = vrot.slane %v8176, 1
    %v8178 = vadd.f32 %v8176, %v8177
    %v8179 = vsel %vm2644, %v8168, 0.0
    %v8180 = vsel %vm2644, %v8169, 0.0
    %v8181 = vadd.f32 %v8179, %v8180
    %v8182 = vrot.slane %v8181, 4
    %v8183 = vadd.f32 %v8181, %v8182
    %v8184 = vrot.slane %v8183, 2
    %v8185 = vadd.f32 %v8183, %v8184
    %v8186 = vrot.slane %v8185, 1
    %v8187 = vadd.f32 %v8185, %v8186
    %v8190 = vsel %vm3757, %v8187, %v8178
    %v8192 = vmul.f32 %v7750, %v8190
    %v8193 = vld [vmem:[%s18] sm:$0xff]
    %v8194 = vld [vmem:[%s18 + $0x8] sm:$0xff]
    %v8195 = vld [vmem:[%s18 + $0x10] sm:$0xff]
    %v8196 = vld [vmem:[%s18 + $0x18] sm:$0xff]
    %v8197 = vld [vmem:[%s18 + $0x20] sm:$0xff]
    %v8198 = vld [vmem:[%s18 + $0x28] sm:$0xff]
    %v8199 = vld [vmem:[%s18 + $0x30] sm:$0xff]
    %v8200 = vld [vmem:[%s18 + $0x38] sm:$0xff]
    %v8201 = vld [vmem:[%s19] sm:$0x1]
    %v8203 = vlaneseq
    %v8204 = vshrl.u32 %v8203, 7
    %v8205 = vsub.s32 0, %v8204
    %v8206 = vrot.slane %v8201, %v8205
    %v8209 = vsel %vm2644, %v8192, 0
    %8211 = vmatprep.subr.mxu0 0.0
    %8212 = vmatpush1.msra.mxu0 0.0
    %8213 = vmatprep.subr.mxu0 0.0
    %8214 = vmatpush1.msra.mxu0 0.0
    %8215 = vmatprep.subr.mxu0 0.0
    %8216 = vmatpush1.msra.mxu0 0.0
    %8217 = vmatprep.subr.mxu0 0.0
    %8218 = vmatpush1.msra.mxu0 0.0
    %8219 = vmatprep.subr.mxu0 0.0
    %8220 = vmatpush1.msra.mxu0 0.0
    %8221 = vmatprep.subr.mxu0 0.0
    %8222 = vmatpush1.msra.mxu0 0.0
    %8223 = vmatprep.subr.mxu0 0.0
    %8224 = vmatpush1.msra.mxu0 0.0
    %8225 = vmatprep.subr.mxu0 0.0
    %8226 = vmatpush1.msra.mxu0 0.0
    %8227 = vmatprep.subr.mxu0 0.0
    %8228 = vmatpush1.msra.mxu0 %v8200
    %8229 = vmatprep.subr.mxu0 0.0
    %8230 = vmatpush1.msra.mxu0 %v8199
    %8231 = vmatprep.subr.mxu0 0.0
    %8232 = vmatpush1.msra.mxu0 %v8198
    %8233 = vmatprep.subr.mxu0 0.0
    %8234 = vmatpush1.msra.mxu0 %v8197
    %8235 = vmatprep.subr.mxu0 0.0
    %8236 = vmatpush1.msra.mxu0 %v8196
    %8237 = vmatprep.subr.mxu0 0.0
    %8238 = vmatpush1.msra.mxu0 %v8195
    %8239 = vmatprep.subr.mxu0 0.0
    %8240 = vmatpush1.msra.mxu0 %v8194
    %8241 = vmatprep.subr.mxu0 0.0
    %8242 = vmatpush1.msra.mxu0 %v8193
    %8243 = vmatprep.subr.mxu0 0.0
    %8244 = vmatpush2.msra.mxu0 0.0
    %8245 = vmatprep.subr.mxu0 0.0
    %8246 = vmatpush2.msra.mxu0 0.0
    %8247 = vmatprep.subr.mxu0 0.0
    %8248 = vmatpush2.msra.mxu0 0.0
    %8249 = vmatprep.subr.mxu0 0.0
    %8250 = vmatpush2.msra.mxu0 0.0
    %8251 = vmatprep.subr.mxu0 0.0
    %8252 = vmatpush2.msra.mxu0 0.0
    %8253 = vmatprep.subr.mxu0 0.0
    %8254 = vmatpush2.msra.mxu0 0.0
    %8255 = vmatprep.subr.mxu0 0.0
    %8256 = vmatpush2.msra.mxu0 0.0
    %8257 = vmatprep.subr.mxu0 0.0
    %8258 = vmatpush2.msra.mxu0 0.0
    %8259 = vmatprep.subr.mxu0 0.0
    %8260 = vmatpush2.msra.mxu0 0.0
    %8261 = vmatprep.subr.mxu0 0.0
    %8262 = vmatpush2.msra.mxu0 0.0
    %8263 = vmatprep.subr.mxu0 0.0
    %8264 = vmatpush2.msra.mxu0 0.0
    %8265 = vmatprep.subr.mxu0 0.0
    %8266 = vmatpush2.msra.mxu0 0.0
    %8267 = vmatprep.subr.mxu0 0.0
    %8268 = vmatpush2.msra.mxu0 0.0
    %8269 = vmatprep.subr.mxu0 0.0
    %8270 = vmatpush2.msra.mxu0 0.0
    %8271 = vmatprep.subr.mxu0 0.0
    %8272 = vmatpush2.msra.mxu0 0.0
    %8273 = vmatprep.subr.mxu0 0.0
    %8274 = vmatpush2.msra.mxu0 0.0
    %8275 = vmatprep.mubr.f32.mxu0 0.0
    %8276 = vmatmul.mubr.f32.gmra.mxu0 %v8209
    %v8277 = vpop.f32.mrf.mxu0
    %v8278 = vadd.f32 %v8206, %v8277
    %v8279 = vpop.f32.mrf.mxu0
    %8280 = vdwg.mxu0
    %v8281 = vmax.f32 %v8278, 0.0
    %v8282 = vld [vmem:[%s20] sm:$0xff]
    %v8283 = vld [vmem:[%s20 + $0x8] sm:$0xff]
    %v8284 = vld [vmem:[%s20 + $0x10] sm:$0xff]
    %v8285 = vld [vmem:[%s20 + $0x18] sm:$0xff]
    %v8286 = vld [vmem:[%s20 + $0x20] sm:$0xff]
    %v8287 = vld [vmem:[%s20 + $0x28] sm:$0xff]
    %v8288 = vld [vmem:[%s20 + $0x30] sm:$0xff]
    %v8289 = vld [vmem:[%s20 + $0x38] sm:$0xff]
    %v8290 = vld [vmem:[%s21] sm:$0x1]
    %v8292 = vlaneseq
    %v8293 = vshrl.u32 %v8292, 7
    %v8294 = vsub.s32 0, %v8293
    %v8295 = vrot.slane %v8290, %v8294
    %v8298 = vsel %vm2644, %v8281, 0
    %8300 = vmatprep.subr.mxu0 0.0
    %8301 = vmatpush1.msra.mxu0 0.0
    %8302 = vmatprep.subr.mxu0 0.0
    %8303 = vmatpush1.msra.mxu0 0.0
    %8304 = vmatprep.subr.mxu0 0.0
    %8305 = vmatpush1.msra.mxu0 0.0
    %8306 = vmatprep.subr.mxu0 0.0
    %8307 = vmatpush1.msra.mxu0 0.0
    %8308 = vmatprep.subr.mxu0 0.0
    %8309 = vmatpush1.msra.mxu0 0.0
    %8310 = vmatprep.subr.mxu0 0.0
    %8311 = vmatpush1.msra.mxu0 0.0
    %8312 = vmatprep.subr.mxu0 0.0
    %8313 = vmatpush1.msra.mxu0 0.0
    %8314 = vmatprep.subr.mxu0 0.0
    %8315 = vmatpush1.msra.mxu0 0.0
    %8316 = vmatprep.subr.mxu0 0.0
    %8317 = vmatpush1.msra.mxu0 %v8289
    %8318 = vmatprep.subr.mxu0 0.0
    %8319 = vmatpush1.msra.mxu0 %v8288
    %8320 = vmatprep.subr.mxu0 0.0
    %8321 = vmatpush1.msra.mxu0 %v8287
    %8322 = vmatprep.subr.mxu0 0.0
    %8323 = vmatpush1.msra.mxu0 %v8286
    %8324 = vmatprep.subr.mxu0 0.0
    %8325 = vmatpush1.msra.mxu0 %v8285
    %8326 = vmatprep.subr.mxu0 0.0
    %8327 = vmatpush1.msra.mxu0 %v8284
    %8328 = vmatprep.subr.mxu0 0.0
    %8329 = vmatpush1.msra.mxu0 %v8283
    %8330 = vmatprep.subr.mxu0 0.0
    %8331 = vmatpush1.msra.mxu0 %v8282
    %8332 = vmatprep.subr.mxu0 0.0
    %8333 = vmatpush2.msra.mxu0 0.0
    %8334 = vmatprep.subr.mxu0 0.0
    %8335 = vmatpush2.msra.mxu0 0.0
    %8336 = vmatprep.subr.mxu0 0.0
    %8337 = vmatpush2.msra.mxu0 0.0
    %8338 = vmatprep.subr.mxu0 0.0
    %8339 = vmatpush2.msra.mxu0 0.0
    %8340 = vmatprep.subr.mxu0 0.0
    %8341 = vmatpush2.msra.mxu0 0.0
    %8342 = vmatprep.subr.mxu0 0.0
    %8343 = vmatpush2.msra.mxu0 0.0
    %8344 = vmatprep.subr.mxu0 0.0
    %8345 = vmatpush2.msra.mxu0 0.0
    %8346 = vmatprep.subr.mxu0 0.0
    %8347 = vmatpush2.msra.mxu0 0.0
    %8348 = vmatprep.subr.mxu0 0.0
    %8349 = vmatpush2.msra.mxu0 0.0
    %8350 = vmatprep.subr.mxu0 0.0
    %8351 = vmatpush2.msra.mxu0 0.0
    %8352 = vmatprep.subr.mxu0 0.0
    %8353 = vmatpush2.msra.mxu0 0.0
    %8354 = vmatprep.subr.mxu0 0.0
    %8355 = vmatpush2.msra.mxu0 0.0
    %8356 = vmatprep.subr.mxu0 0.0
    %8357 = vmatpush2.msra.mxu0 0.0
    %8358 = vmatprep.subr.mxu0 0.0
    %8359 = vmatpush2.msra.mxu0 0.0
    %8360 = vmatprep.subr.mxu0 0.0
    %8361 = vmatpush2.msra.mxu0 0.0
    %8362 = vmatprep.subr.mxu0 0.0
    %8363 = vmatpush2.msra.mxu0 0.0
    %8364 = vmatprep.mubr.f32.mxu0 0.0
    %8365 = vmatmul.mubr.f32.gmra.mxu0 %v8298
    %v8366 = vpop.f32.mrf.mxu0
    %v8367 = vadd.f32 %v8295, %v8366
    %v8368 = vpop.f32.mrf.mxu0
    %8369 = vdwg.mxu0
    %vm8370 = vcmask 74752
    %8371 = vst.msk [vmem:[#allocation3] sm:$0x3] %vm8370, %v8367
    // Predicated region
    $region90: #{vqa_forward.1} parent=1 // pred_check
      _
    $region91: #{vqa_forward.1} parent=1 // pred_check_branch
      %8373 = sbr.rel (0) target = $region93
    $region92: #{vqa_forward.1} parent=1 // pred_region
      %s8375 = ssub.s32 32, 32
      %8376 = vsyncadd [#allocation4], %s8375
      %s8378 = sshll.u32 [#allocation3], 4
      %s8379 = int_to_ptr.vmem [resolvable:$true] %s8378
      %8381 = dma.vmem_to_hbm [thread:$0]  %s8379, 32, %s22, [#allocation4]
    $region93: #{vqa_forward.1} parent=1 // pred_fallthru
      _
    // Predicated region
    $region94: #{vqa_forward.1} parent=1 // pred_check
      _
    $region95: #{vqa_forward.1} parent=1 // pred_check_branch
      %8383 = sbr.rel (0) target = $region97
    $region96: #{vqa_forward.1} parent=1 // pred_region
      _
    $region97: #{vqa_forward.1} parent=1 // pred_fallthru
      _
    // Predicated region
    $region98: #{vqa_forward.1} parent=1 // pred_check
      _
    $region99: #{vqa_forward.1} parent=1 // pred_check_branch
      %8385 = sbr.rel (0) target = $region101
    $region100: #{vqa_forward.1} parent=1 // pred_region
      %8386 = dma.done [#allocation4], 32
    $region101: #{vqa_forward.1} parent=1 // pred_fallthru
      _
    // Predicated region
    $region102: #{vqa_forward.1} parent=1 // pred_check
      _
    $region103: #{vqa_forward.1} parent=1 // pred_check_branch
      %8388 = sbr.rel (0) target = $region105
    $region104: #{vqa_forward.1} parent=1 // pred_region
      _
    $region105: #{vqa_forward.1} parent=1 // pred_fallthru
      _
    %8389 = vsyncpa [#allocation4], 1

</llo_original>
